<compile_context>
chip_gen: v6e
topology: v6e:2x2x1
jax: 0.10.0
libtpu: 0.0.40
codegen_flags: <defaults>
</compile_context>

<pallas_src>
import functools

import jax
import jax.numpy as jnp
from jax.experimental import pallas as pl
from jax.experimental.pallas import tpu as pltpu


def _round_up(x, m):
    return (x + m - 1) // m * m


# ----------------------------------------------------------------------------
# Kernel 1: tiled matmul + bias (+ optional fused LeakyReLU)
# ----------------------------------------------------------------------------

def _matmul_bias_kernel(a_ref, b_ref, bias_ref, o_ref, acc_ref, *,
                        apply_lrelu, nk):
    k = pl.program_id(2)

    @pl.when(k == 0)
    def _init():
        # Bias add folded into accumulator init (once per (i, j) tile).
        acc_ref[...] = jnp.broadcast_to(bias_ref[...], acc_ref.shape)

    acc_ref[...] += jnp.dot(a_ref[...], b_ref[...],
                            preferred_element_type=jnp.float32)

    @pl.when(k == nk - 1)
    def _finalize():
        y = acc_ref[...]
        if apply_lrelu:
            y = jnp.where(y >= 0.0, y, 0.2 * y)
        o_ref[...] = y


def matmul_bias_act(a, w2d, bias, *, apply_lrelu, tm=256, tn=128, tk=512):
    """a: (M, K), w2d: (K, Cout), bias: (Cout,) -> (M, Cout) float32."""
    M, K = a.shape
    Cout = w2d.shape[1]
    # 128-aligned tiles (v5e-friendly), clamped to the (padded) problem size.
    tm = min(tm, _round_up(M, 128))
    tn = min(tn, _round_up(Cout, 128))
    tk = min(tk, _round_up(K, 128))
    Mp, Kp, Np = _round_up(M, tm), _round_up(K, tk), _round_up(Cout, tn)

    # Zero padding keeps the matmul exact; padded rows/cols are sliced off.
    a_p = jnp.pad(a.astype(jnp.bfloat16), ((0, Mp - M), (0, Kp - K)))
    w_p = jnp.pad(w2d.astype(jnp.bfloat16), ((0, Kp - K), (0, Np - Cout)))
    b_p = jnp.pad(bias.astype(jnp.float32), (0, Np - Cout)).reshape(1, Np)

    nk = Kp // tk
    kernel = functools.partial(_matmul_bias_kernel,
                               apply_lrelu=apply_lrelu, nk=nk)
    out = pl.pallas_call(
        kernel,
        out_shape=jax.ShapeDtypeStruct((Mp, Np), jnp.float32),
        grid=(Mp // tm, Np // tn, nk),
        in_specs=[
            pl.BlockSpec((tm, tk), lambda i, j, k: (i, k)),
            pl.BlockSpec((tk, tn), lambda i, j, k: (k, j)),
            pl.BlockSpec((1, tn), lambda i, j, k: (0, j)),
        ],
        out_specs=pl.BlockSpec((tm, tn), lambda i, j, k: (i, j)),
        scratch_shapes=[pltpu.VMEM((tm, tn), jnp.float32)],
        compiler_params=pltpu.CompilerParams(
            dimension_semantics=("parallel", "parallel", "arbitrary")),
    )(a_p, w_p, b_p)
    return out[:M, :Cout]


# ----------------------------------------------------------------------------
# Kernel 2: InstanceNorm2d(affine=False, eps=1e-5) + LeakyReLU(0.2)
# ----------------------------------------------------------------------------

def _instnorm_lrelu_kernel(x_ref, o_ref):
    v = x_ref[...]                                     # (1, S, Ct) f32
    mean = jnp.mean(v, axis=1, keepdims=True)
    meansq = jnp.mean(v * v, axis=1, keepdims=True)
    var = jnp.maximum(meansq - mean * mean, 0.0)       # one-pass, biased var
    y = (v - mean) * jax.lax.rsqrt(var + 1e-5)
    o_ref[...] = jnp.where(y >= 0.0, y, 0.2 * y)


def instnorm_lrelu(x_nsc):
    N, S, C = x_nsc.shape
    ct = 128 if C % 128 == 0 else C
    return pl.pallas_call(
        _instnorm_lrelu_kernel,
        out_shape=jax.ShapeDtypeStruct((N, S, C), jnp.float32),
        grid=(N, C // ct),
        in_specs=[pl.BlockSpec((1, S, ct), lambda n, c: (n, 0, c))],
        out_specs=pl.BlockSpec((1, S, ct), lambda n, c: (n, 0, c)),
        compiler_params=pltpu.CompilerParams(
            dimension_semantics=("parallel", "parallel")),
    )(x_nsc)


# ----------------------------------------------------------------------------
# Kernel 3: fused final Conv2d(512->1, k4, s1, p1) + full-extent avg_pool2d
#   avg_pool over the whole spatial output is linear, so:
#   mean_s(patch[n, s, :] @ w + b) == (mean_s patch[n, s, :]) @ w + b
# ----------------------------------------------------------------------------

def _conv_final_avgpool_kernel(p_ref, w_ref, b_ref, o_ref, *, inv_s):
    p = p_ref[...].astype(jnp.float32)                 # (N, S, K)
    w = w_ref[...].astype(jnp.float32)                 # (1, K)
    contrib = p * w[None, :, :]                        # (N, S, K)
    colsum = jnp.sum(contrib, axis=1)                  # (N, K)
    o_ref[...] = jnp.sum(colsum, axis=1, keepdims=True) * inv_s + b_ref[...]


def conv_final_avgpool(x_nhwc, w_ochw, bias):
    Cout, Cin, KH, KW = w_ochw.shape
    assert Cout == 1
    patches, OH, OW = im2col(x_nhwc.astype(jnp.bfloat16), KH, 1, 1)
    N = x_nhwc.shape[0]
    S, K = OH * OW, KH * KW * Cin
    p = patches.reshape(N, S, K)
    w_row = jnp.transpose(w_ochw, (2, 3, 1, 0)).reshape(1, K).astype(jnp.bfloat16)
    b = bias.astype(jnp.float32).reshape(1, 1)
    kernel = functools.partial(_conv_final_avgpool_kernel, inv_s=1.0 / S)
    return pl.pallas_call(
        kernel,
        out_shape=jax.ShapeDtypeStruct((N, 1), jnp.float32),
        grid=(1,),
        in_specs=[
            pl.BlockSpec((N, S, K), lambda i: (0, 0, 0)),
            pl.BlockSpec((1, K), lambda i: (0, 0)),
            pl.BlockSpec((1, 1), lambda i: (0, 0)),
        ],
        out_specs=pl.BlockSpec((N, 1), lambda i: (0, 0)),
    )(p, w_row, b)


# ----------------------------------------------------------------------------
# Glue: im2col + conv wrapper + parameter setup
# ----------------------------------------------------------------------------

def im2col(x_nhwc, k, stride, pad):
    """Extract k x k patches -> (N, OH, OW, k*k*C), flattened (kh, kw, c)."""
    # TODO(synk): fold patch extraction into the matmul kernel (pl.Element /
    # scalar-prefetched offsets over the padded input) to avoid the k*k-fold
    # HBM blowup of activations; for now patches are materialized in bf16.
    x = jnp.pad(x_nhwc, ((0, 0), (pad, pad), (pad, pad), (0, 0)))
    N, H, W, C = x.shape
    OH = (H - k) // stride + 1
    OW = (W - k) // stride + 1
    patches = []
    for i in range(k):
        for j in range(k):
            patches.append(x[:, i:i + stride * OH:stride,
                              j:j + stride * OW:stride, :])
    p = jnp.stack(patches, axis=3)               # (N, OH, OW, k*k, C)
    return p.reshape(N, OH, OW, k * k * C), OH, OW


def conv2d_pallas(x_nhwc, w_ochw, bias, *, stride, pad, apply_lrelu):
    """Conv2d via im2col + tiled Pallas matmul; w is PyTorch (Cout,Cin,K,K)."""
    Cout, Cin, KH, KW = w_ochw.shape
    patches, OH, OW = im2col(x_nhwc.astype(jnp.bfloat16), KH, stride, pad)
    N = x_nhwc.shape[0]
    a = patches.reshape(N * OH * OW, KH * KW * Cin)
    # (Cout, Cin, KH, KW) -> (KH, KW, Cin, Cout) to match patch flatten order.
    w2d = jnp.transpose(w_ochw, (2, 3, 1, 0)).reshape(KH * KW * Cin, Cout)
    y = matmul_bias_act(a, w2d, bias, apply_lrelu=apply_lrelu)
    return y.reshape(N, OH, OW, Cout)


def make_params(input_nc, key):
    """Deterministic synthetic weights, PyTorch shapes (Cout, Cin, K, K)."""
    specs = [(64, input_nc), (128, 64), (256, 128), (512, 256), (1, 512)]
    params = []
    for idx, (co, ci) in enumerate(specs):
        kw, kb = jax.random.split(jax.random.fold_in(key, idx))
        fan_in = ci * 4 * 4
        scale = 1.0 / jnp.sqrt(fan_in)
        w = jax.random.uniform(kw, (co, ci, 4, 4), jnp.float32, -scale, scale)
        b = jax.random.uniform(kb, (co,), jnp.float32, -scale, scale)
        params.append((w, b))
    return params


def discriminator_forward(x_nchw, params):
    """Forward pass matching the PyTorch Discriminator.forward semantics."""
    x = jnp.transpose(x_nchw, (0, 2, 3, 1)).astype(jnp.float32)  # NCHW -> NHWC
    (w1, b1), (w2, b2), (w3, b3), (w4, b4), (w5, b5) = params

    # layer 1: Conv(stride 2) + LeakyReLU (fused into matmul finalize)
    x = conv2d_pallas(x, w1, b1, stride=2, pad=1, apply_lrelu=True)

    # layers 2-4: Conv + InstanceNorm + LeakyReLU
    for (w, b), stride in (((w2, b2), 2), ((w3, b3), 2), ((w4, b4), 1)):
        x = conv2d_pallas(x, w, b, stride=stride, pad=1, apply_lrelu=False)
        N, OH, OW, C = x.shape
        x = instnorm_lrelu(x.reshape(N, OH * OW, C)).reshape(N, OH, OW, C)

    # layer 5 (Cout=1) + F.avg_pool2d over full spatial extent, fused exactly.
    return conv_final_avgpool(x, w5, b5)          # (N, 1)


if __name__ == "__main__":
    key = jax.random.PRNGKey(0)
    k_in, k_par = jax.random.split(key)

    # 32x32 is the minimum-ish spatial size that survives the 5 conv layers:
    # 32 -> 16 -> 8 -> 4 -> 3 -> 2, then global avg-pool over 2x2.
    batch, input_nc, spatial = 2, 4, 32
    x = jax.random.normal(k_in, (batch, input_nc, spatial, spatial), jnp.float32)

    params = make_params(input_nc, k_par)
    fwd = jax.jit(discriminator_forward)
    out = jax.block_until_ready(fwd(x, params))
    assert out.shape == (batch, 1), out.shape
    print("KERNEL_OK")
</pallas_src>

<mosaic_0001>
module attributes {stable_mosaic.version = 11 : i64} {
  func.func @_matmul_bias_kernel(%arg0: i32, %arg1: i32, %arg2: i32, %arg3: memref<256x128xbf16, #tpu.memory_space<vmem>>, %arg4: memref<128x128xbf16, #tpu.memory_space<vmem>>, %arg5: memref<1x128xf32, #tpu.memory_space<vmem>>, %arg6: memref<256x128xf32, #tpu.memory_space<vmem>>, %arg7: memref<256x128xf32, #tpu.memory_space<vmem>>) attributes {dimension_semantics = [#tpu.dimension_semantics<parallel>, #tpu.dimension_semantics<parallel>, #tpu.dimension_semantics<arbitrary>], iteration_bounds = array<i64: 2, 1, 1>, scalar_prefetch = 0 : i64, scratch_operands = 1 : i64, tpu.core_type = #tpu.core_type<tc>, window_params = [{transform_indices = @transform_0, window_bounds = array<i64: 256, 128>}, {transform_indices = @transform_1, window_bounds = array<i64: 128, 128>}, {transform_indices = @transform_2, window_bounds = array<i64: 1, 128>}, {transform_indices = @transform_3, window_bounds = array<i64: 256, 128>}]} {
    %c0_i32 = arith.constant 0 : i32
    %0 = arith.cmpi eq, %arg2, %c0_i32 : i32
    %1 = arith.extui %0 : i1 to i32
    %c0_i32_0 = arith.constant 0 : i32
    %2 = arith.cmpi ne, %1, %c0_i32_0 : i32
    scf.if %2 {
      %c0_10 = arith.constant 0 : index
      %c0_11 = arith.constant 0 : index
      %12 = vector.load %arg5[%c0_10, %c0_11] : memref<1x128xf32, #tpu.memory_space<vmem>>, vector<1x128xf32>
      %13 = vector.shape_cast %12 : vector<1x128xf32> to vector<1x128xf32>
      %14 = vector.broadcast %13 : vector<1x128xf32> to vector<256x128xf32>
      %c0_12 = arith.constant 0 : index
      %c0_13 = arith.constant 0 : index
      %15 = vector.load %arg7[%c0_12, %c0_13] : memref<256x128xf32, #tpu.memory_space<vmem>>, vector<256x128xf32>
      tpu.vector_store %arg7[%c0_12, %c0_13], %14 {strides = array<i32>} : memref<256x128xf32, #tpu.memory_space<vmem>>, vector<256x128xf32>,
    } else {
    }
    %c0 = arith.constant 0 : index
    %c0_1 = arith.constant 0 : index
    %3 = vector.load %arg7[%c0, %c0_1] : memref<256x128xf32, #tpu.memory_space<vmem>>, vector<256x128xf32>
    %c0_2 = arith.constant 0 : index
    %c0_3 = arith.constant 0 : index
    %4 = vector.load %arg3[%c0_2, %c0_3] : memref<256x128xbf16, #tpu.memory_space<vmem>>, vector<256x128xbf16>
    %c0_4 = arith.constant 0 : index
    %c0_5 = arith.constant 0 : index
    %5 = vector.load %arg4[%c0_4, %c0_5] : memref<128x128xbf16, #tpu.memory_space<vmem>>, vector<128x128xbf16>
    %cst = arith.constant dense<0.000000e+00> : vector<256x128xf32>
    %6 = tpu.matmul %4, %5, %cst {dimension_numbers = #tpu.dot_dimension_numbers<[1], [0], [0], [1], [0, 0, 1, 1], [], []>} : vector<256x128xbf16>, vector<128x128xbf16>, vector<256x128xf32> -> vector<256x128xf32>
    %7 = arith.addf %3, %6 : vector<256x128xf32>
    %c0_6 = arith.constant 0 : index
    %c0_7 = arith.constant 0 : index
    %8 = vector.load %arg7[%c0_6, %c0_7] : memref<256x128xf32, #tpu.memory_space<vmem>>, vector<256x128xf32>
    tpu.vector_store %arg7[%c0_6, %c0_7], %7 {strides = array<i32>} : memref<256x128xf32, #tpu.memory_space<vmem>>, vector<256x128xf32>,
    %c0_i32_8 = arith.constant 0 : i32
    %9 = arith.cmpi eq, %arg2, %c0_i32_8 : i32
    %10 = arith.extui %9 : i1 to i32
    %c0_i32_9 = arith.constant 0 : i32
    %11 = arith.cmpi ne, %10, %c0_i32_9 : i32
    scf.if %11 {
      %c0_10 = arith.constant 0 : index
      %c0_11 = arith.constant 0 : index
      %12 = vector.load %arg7[%c0_10, %c0_11] : memref<256x128xf32, #tpu.memory_space<vmem>>, vector<256x128xf32>
      %cst_12 = arith.constant 0.000000e+00 : f32
      %13 = vector.broadcast %cst_12 : f32 to vector<256x128xf32>
      %14 = arith.cmpf oge, %12, %13 : vector<256x128xf32>
      %cst_13 = arith.constant 2.000000e-01 : f32
      %15 = vector.broadcast %cst_13 : f32 to vector<256x128xf32>
      %16 = arith.mulf %15, %12 : vector<256x128xf32>
      %17 = arith.select %14, %12, %16 : vector<256x128xi1>, vector<256x128xf32>
      %c0_14 = arith.constant 0 : index
      %c0_15 = arith.constant 0 : index
      %18 = vector.load %arg6[%c0_14, %c0_15] : memref<256x128xf32, #tpu.memory_space<vmem>>, vector<256x128xf32>
      tpu.vector_store %arg6[%c0_14, %c0_15], %17 {strides = array<i32>} : memref<256x128xf32, #tpu.memory_space<vmem>>, vector<256x128xf32>,
    } else {
    }
    return
  }
  func.func @transform_0(%arg0: i32, %arg1: i32, %arg2: i32) -> (i32, i32) {
    %c0_i32 = arith.constant 0 : i32
    return %arg0, %arg2 : i32, i32
  }
  func.func @transform_1(%arg0: i32, %arg1: i32, %arg2: i32) -> (i32, i32) {
    %c0_i32 = arith.constant 0 : i32
    return %arg2, %arg1 : i32, i32
  }
  func.func @transform_2(%arg0: i32, %arg1: i32, %arg2: i32) -> (i32, i32) {
    %c0_i32 = arith.constant 0 : i32
    %c0_i32_0 = arith.constant 0 : i32
    return %c0_i32, %arg1 : i32, i32
  }
  func.func @transform_3(%arg0: i32, %arg1: i32, %arg2: i32) -> (i32, i32) {
    %c0_i32 = arith.constant 0 : i32
    return %arg0, %arg1 : i32, i32
  }
}

module attributes {stable_mosaic.version = 11 : i64} {
  func.func @_matmul_bias_kernel(%arg0: i32, %arg1: i32, %arg2: i32, %arg3: memref<128x512xbf16, #tpu.memory_space<vmem>>, %arg4: memref<512x128xbf16, #tpu.memory_space<vmem>>, %arg5: memref<1x128xf32, #tpu.memory_space<vmem>>, %arg6: memref<128x128xf32, #tpu.memory_space<vmem>>, %arg7: memref<128x128xf32, #tpu.memory_space<vmem>>) attributes {dimension_semantics = [#tpu.dimension_semantics<parallel>, #tpu.dimension_semantics<parallel>, #tpu.dimension_semantics<arbitrary>], iteration_bounds = array<i64: 1, 1, 2>, scalar_prefetch = 0 : i64, scratch_operands = 1 : i64, tpu.core_type = #tpu.core_type<tc>, window_params = [{transform_indices = @transform_0, window_bounds = array<i64: 128, 512>}, {transform_indices = @transform_1, window_bounds = array<i64: 512, 128>}, {transform_indices = @transform_2, window_bounds = array<i64: 1, 128>}, {transform_indices = @transform_3, window_bounds = array<i64: 128, 128>}]} {
    %c0_i32 = arith.constant 0 : i32
    %0 = arith.cmpi eq, %arg2, %c0_i32 : i32
    %1 = arith.extui %0 : i1 to i32
    %c0_i32_0 = arith.constant 0 : i32
    %2 = arith.cmpi ne, %1, %c0_i32_0 : i32
    scf.if %2 {
      %c0_9 = arith.constant 0 : index
      %c0_10 = arith.constant 0 : index
      %12 = vector.load %arg5[%c0_9, %c0_10] : memref<1x128xf32, #tpu.memory_space<vmem>>, vector<1x128xf32>
      %13 = vector.shape_cast %12 : vector<1x128xf32> to vector<1x128xf32>
      %14 = vector.broadcast %13 : vector<1x128xf32> to vector<128x128xf32>
      %c0_11 = arith.constant 0 : index
      %c0_12 = arith.constant 0 : index
      %15 = vector.load %arg7[%c0_11, %c0_12] : memref<128x128xf32, #tpu.memory_space<vmem>>, vector<128x128xf32>
      tpu.vector_store %arg7[%c0_11, %c0_12], %14 {strides = array<i32>} : memref<128x128xf32, #tpu.memory_space<vmem>>, vector<128x128xf32>,
    } else {
    }
    %c0 = arith.constant 0 : index
    %c0_1 = arith.constant 0 : index
    %3 = vector.load %arg7[%c0, %c0_1] : memref<128x128xf32, #tpu.memory_space<vmem>>, vector<128x128xf32>
    %c0_2 = arith.constant 0 : index
    %c0_3 = arith.constant 0 : index
    %4 = vector.load %arg3[%c0_2, %c0_3] : memref<128x512xbf16, #tpu.memory_space<vmem>>, vector<128x512xbf16>
    %c0_4 = arith.constant 0 : index
    %c0_5 = arith.constant 0 : index
    %5 = vector.load %arg4[%c0_4, %c0_5] : memref<512x128xbf16, #tpu.memory_space<vmem>>, vector<512x128xbf16>
    %cst = arith.constant dense<0.000000e+00> : vector<128x128xf32>
    %6 = tpu.matmul %4, %5, %cst {dimension_numbers = #tpu.dot_dimension_numbers<[1], [0], [0], [1], [0, 0, 1, 1], [], []>} : vector<128x512xbf16>, vector<512x128xbf16>, vector<128x128xf32> -> vector<128x128xf32>
    %7 = arith.addf %3, %6 : vector<128x128xf32>
    %c0_6 = arith.constant 0 : index
    %c0_7 = arith.constant 0 : index
    %8 = vector.load %arg7[%c0_6, %c0_7] : memref<128x128xf32, #tpu.memory_space<vmem>>, vector<128x128xf32>
    tpu.vector_store %arg7[%c0_6, %c0_7], %7 {strides = array<i32>} : memref<128x128xf32, #tpu.memory_space<vmem>>, vector<128x128xf32>,
    %c1_i32 = arith.constant 1 : i32
    %9 = arith.cmpi eq, %arg2, %c1_i32 : i32
    %10 = arith.extui %9 : i1 to i32
    %c0_i32_8 = arith.constant 0 : i32
    %11 = arith.cmpi ne, %10, %c0_i32_8 : i32
    scf.if %11 {
      %c0_9 = arith.constant 0 : index
      %c0_10 = arith.constant 0 : index
      %12 = vector.load %arg7[%c0_9, %c0_10] : memref<128x128xf32, #tpu.memory_space<vmem>>, vector<128x128xf32>
      %c0_11 = arith.constant 0 : index
      %c0_12 = arith.constant 0 : index
      %13 = vector.load %arg6[%c0_11, %c0_12] : memref<128x128xf32, #tpu.memory_space<vmem>>, vector<128x128xf32>
      tpu.vector_store %arg6[%c0_11, %c0_12], %12 {strides = array<i32>} : memref<128x128xf32, #tpu.memory_space<vmem>>, vector<128x128xf32>,
    } else {
    }
    return
  }
  func.func @transform_0(%arg0: i32, %arg1: i32, %arg2: i32) -> (i32, i32) {
    %c0_i32 = arith.constant 0 : i32
    return %arg0, %arg2 : i32, i32
  }
  func.func @transform_1(%arg0: i32, %arg1: i32, %arg2: i32) -> (i32, i32) {
    %c0_i32 = arith.constant 0 : i32
    return %arg2, %arg1 : i32, i32
  }
  func.func @transform_2(%arg0: i32, %arg1: i32, %arg2: i32) -> (i32, i32) {
    %c0_i32 = arith.constant 0 : i32
    %c0_i32_0 = arith.constant 0 : i32
    return %c0_i32, %arg1 : i32, i32
  }
  func.func @transform_3(%arg0: i32, %arg1: i32, %arg2: i32) -> (i32, i32) {
    %c0_i32 = arith.constant 0 : i32
    return %arg0, %arg1 : i32, i32
  }
}

module attributes {stable_mosaic.version = 11 : i64} {
  func.func @_instnorm_lrelu_kernel(%arg0: i32, %arg1: i32, %arg2: memref<1x64x128xf32, #tpu.memory_space<vmem>>, %arg3: memref<1x64x128xf32, #tpu.memory_space<vmem>>) attributes {dimension_semantics = [#tpu.dimension_semantics<parallel>, #tpu.dimension_semantics<parallel>], iteration_bounds = array<i64: 2, 1>, scalar_prefetch = 0 : i64, scratch_operands = 0 : i64, tpu.core_type = #tpu.core_type<tc>, window_params = [{transform_indices = @transform_0, window_bounds = array<i64: 1, 64, 128>}, {transform_indices = @transform_1, window_bounds = array<i64: 1, 64, 128>}]} {
    %c0 = arith.constant 0 : index
    %c0_0 = arith.constant 0 : index
    %c0_1 = arith.constant 0 : index
    %0 = vector.load %arg2[%c0, %c0_0, %c0_1] : memref<1x64x128xf32, #tpu.memory_space<vmem>>, vector<1x64x128xf32>
    %cst = arith.constant dense<0.000000e+00> : vector<1x128xf32>
    %1 = vector.multi_reduction <add>, %0, %cst [1] : vector<1x64x128xf32> to vector<1x128xf32>
    %2 = vector.shape_cast %1 : vector<1x128xf32> to vector<1x1x128xf32>
    %cst_2 = arith.constant 6.400000e+01 : f32
    %3 = vector.broadcast %cst_2 : f32 to vector<1x1x128xf32>
    %4 = arith.divf %2, %3 : vector<1x1x128xf32>
    %5 = arith.mulf %0, %0 : vector<1x64x128xf32>
    %cst_3 = arith.constant dense<0.000000e+00> : vector<1x128xf32>
    %6 = vector.multi_reduction <add>, %5, %cst_3 [1] : vector<1x64x128xf32> to vector<1x128xf32>
    %7 = vector.shape_cast %6 : vector<1x128xf32> to vector<1x1x128xf32>
    %cst_4 = arith.constant 6.400000e+01 : f32
    %8 = vector.broadcast %cst_4 : f32 to vector<1x1x128xf32>
    %9 = arith.divf %7, %8 : vector<1x1x128xf32>
    %10 = arith.mulf %4, %4 : vector<1x1x128xf32>
    %11 = arith.subf %9, %10 : vector<1x1x128xf32>
    %cst_5 = arith.constant 0.000000e+00 : f32
    %12 = vector.broadcast %cst_5 : f32 to vector<1x1x128xf32>
    %13 = arith.maximumf %11, %12 : vector<1x1x128xf32>
    %14 = vector.broadcast %4 : vector<1x1x128xf32> to vector<1x64x128xf32>
    %15 = arith.subf %0, %14 : vector<1x64x128xf32>
    %cst_6 = arith.constant 9.99999974E-6 : f32
    %16 = vector.broadcast %cst_6 : f32 to vector<1x1x128xf32>
    %17 = arith.addf %13, %16 : vector<1x1x128xf32>
    %18 = math.rsqrt %17 : vector<1x1x128xf32>
    %19 = vector.broadcast %18 : vector<1x1x128xf32> to vector<1x64x128xf32>
    %20 = arith.mulf %15, %19 : vector<1x64x128xf32>
    %cst_7 = arith.constant 0.000000e+00 : f32
    %21 = vector.broadcast %cst_7 : f32 to vector<1x64x128xf32>
    %22 = arith.cmpf oge, %20, %21 : vector<1x64x128xf32>
    %cst_8 = arith.constant 2.000000e-01 : f32
    %23 = vector.broadcast %cst_8 : f32 to vector<1x64x128xf32>
    %24 = arith.mulf %23, %20 : vector<1x64x128xf32>
    %25 = arith.select %22, %20, %24 : vector<1x64x128xi1>, vector<1x64x128xf32>
    %c0_9 = arith.constant 0 : index
    %c0_10 = arith.constant 0 : index
    %c0_11 = arith.constant 0 : index
    %26 = vector.load %arg3[%c0_9, %c0_10, %c0_11] : memref<1x64x128xf32, #tpu.memory_space<vmem>>, vector<1x64x128xf32>
    tpu.vector_store %arg3[%c0_9, %c0_10, %c0_11], %25 {strides = array<i32>} : memref<1x64x128xf32, #tpu.memory_space<vmem>>, vector<1x64x128xf32>,
    return
  }
  func.func @transform_0(%arg0: i32, %arg1: i32) -> (i32, i32, i32) {
    %c0_i32 = arith.constant 0 : i32
    %c0_i32_0 = arith.constant 0 : i32
    return %arg0, %c0_i32, %arg1 : i32, i32, i32
  }
  func.func @transform_1(%arg0: i32, %arg1: i32) -> (i32, i32, i32) {
    %c0_i32 = arith.constant 0 : i32
    %c0_i32_0 = arith.constant 0 : i32
    return %arg0, %c0_i32, %arg1 : i32, i32, i32
  }
}

module attributes {stable_mosaic.version = 11 : i64} {
  func.func @_matmul_bias_kernel(%arg0: i32, %arg1: i32, %arg2: i32, %arg3: memref<128x512xbf16, #tpu.memory_space<vmem>>, %arg4: memref<512x128xbf16, #tpu.memory_space<vmem>>, %arg5: memref<1x128xf32, #tpu.memory_space<vmem>>, %arg6: memref<128x128xf32, #tpu.memory_space<vmem>>, %arg7: memref<128x128xf32, #tpu.memory_space<vmem>>) attributes {dimension_semantics = [#tpu.dimension_semantics<parallel>, #tpu.dimension_semantics<parallel>, #tpu.dimension_semantics<arbitrary>], iteration_bounds = array<i64: 1, 2, 4>, scalar_prefetch = 0 : i64, scratch_operands = 1 : i64, tpu.core_type = #tpu.core_type<tc>, window_params = [{transform_indices = @transform_0, window_bounds = array<i64: 128, 512>}, {transform_indices = @transform_1, window_bounds = array<i64: 512, 128>}, {transform_indices = @transform_2, window_bounds = array<i64: 1, 128>}, {transform_indices = @transform_3, window_bounds = array<i64: 128, 128>}]} {
    %c0_i32 = arith.constant 0 : i32
    %0 = arith.cmpi eq, %arg2, %c0_i32 : i32
    %1 = arith.extui %0 : i1 to i32
    %c0_i32_0 = arith.constant 0 : i32
    %2 = arith.cmpi ne, %1, %c0_i32_0 : i32
    scf.if %2 {
      %c0_9 = arith.constant 0 : index
      %c0_10 = arith.constant 0 : index
      %12 = vector.load %arg5[%c0_9, %c0_10] : memref<1x128xf32, #tpu.memory_space<vmem>>, vector<1x128xf32>
      %13 = vector.shape_cast %12 : vector<1x128xf32> to vector<1x128xf32>
      %14 = vector.broadcast %13 : vector<1x128xf32> to vector<128x128xf32>
      %c0_11 = arith.constant 0 : index
      %c0_12 = arith.constant 0 : index
      %15 = vector.load %arg7[%c0_11, %c0_12] : memref<128x128xf32, #tpu.memory_space<vmem>>, vector<128x128xf32>
      tpu.vector_store %arg7[%c0_11, %c0_12], %14 {strides = array<i32>} : memref<128x128xf32, #tpu.memory_space<vmem>>, vector<128x128xf32>,
    } else {
    }
    %c0 = arith.constant 0 : index
    %c0_1 = arith.constant 0 : index
    %3 = vector.load %arg7[%c0, %c0_1] : memref<128x128xf32, #tpu.memory_space<vmem>>, vector<128x128xf32>
    %c0_2 = arith.constant 0 : index
    %c0_3 = arith.constant 0 : index
    %4 = vector.load %arg3[%c0_2, %c0_3] : memref<128x512xbf16, #tpu.memory_space<vmem>>, vector<128x512xbf16>
    %c0_4 = arith.constant 0 : index
    %c0_5 = arith.constant 0 : index
    %5 = vector.load %arg4[%c0_4, %c0_5] : memref<512x128xbf16, #tpu.memory_space<vmem>>, vector<512x128xbf16>
    %cst = arith.constant dense<0.000000e+00> : vector<128x128xf32>
    %6 = tpu.matmul %4, %5, %cst {dimension_numbers = #tpu.dot_dimension_numbers<[1], [0], [0], [1], [0, 0, 1, 1], [], []>} : vector<128x512xbf16>, vector<512x128xbf16>, vector<128x128xf32> -> vector<128x128xf32>
    %7 = arith.addf %3, %6 : vector<128x128xf32>
    %c0_6 = arith.constant 0 : index
    %c0_7 = arith.constant 0 : index
    %8 = vector.load %arg7[%c0_6, %c0_7] : memref<128x128xf32, #tpu.memory_space<vmem>>, vector<128x128xf32>
    tpu.vector_store %arg7[%c0_6, %c0_7], %7 {strides = array<i32>} : memref<128x128xf32, #tpu.memory_space<vmem>>, vector<128x128xf32>,
    %c3_i32 = arith.constant 3 : i32
    %9 = arith.cmpi eq, %arg2, %c3_i32 : i32
    %10 = arith.extui %9 : i1 to i32
    %c0_i32_8 = arith.constant 0 : i32
    %11 = arith.cmpi ne, %10, %c0_i32_8 : i32
    scf.if %11 {
      %c0_9 = arith.constant 0 : index
      %c0_10 = arith.constant 0 : index
      %12 = vector.load %arg7[%c0_9, %c0_10] : memref<128x128xf32, #tpu.memory_space<vmem>>, vector<128x128xf32>
      %c0_11 = arith.constant 0 : index
      %c0_12 = arith.constant 0 : index
      %13 = vector.load %arg6[%c0_11, %c0_12] : memref<128x128xf32, #tpu.memory_space<vmem>>, vector<128x128xf32>
      tpu.vector_store %arg6[%c0_11, %c0_12], %12 {strides = array<i32>} : memref<128x128xf32, #tpu.memory_space<vmem>>, vector<128x128xf32>,
    } else {
    }
    return
  }
  func.func @transform_0(%arg0: i32, %arg1: i32, %arg2: i32) -> (i32, i32) {
    %c0_i32 = arith.constant 0 : i32
    return %arg0, %arg2 : i32, i32
  }
  func.func @transform_1(%arg0: i32, %arg1: i32, %arg2: i32) -> (i32, i32) {
    %c0_i32 = arith.constant 0 : i32
    return %arg2, %arg1 : i32, i32
  }
  func.func @transform_2(%arg0: i32, %arg1: i32, %arg2: i32) -> (i32, i32) {
    %c0_i32 = arith.constant 0 : i32
    %c0_i32_0 = arith.constant 0 : i32
    return %c0_i32, %arg1 : i32, i32
  }
  func.func @transform_3(%arg0: i32, %arg1: i32, %arg2: i32) -> (i32, i32) {
    %c0_i32 = arith.constant 0 : i32
    return %arg0, %arg1 : i32, i32
  }
}

module attributes {stable_mosaic.version = 11 : i64} {
  func.func @_instnorm_lrelu_kernel(%arg0: i32, %arg1: i32, %arg2: memref<1x16x128xf32, #tpu.memory_space<vmem>>, %arg3: memref<1x16x128xf32, #tpu.memory_space<vmem>>) attributes {dimension_semantics = [#tpu.dimension_semantics<parallel>, #tpu.dimension_semantics<parallel>], iteration_bounds = array<i64: 2, 2>, scalar_prefetch = 0 : i64, scratch_operands = 0 : i64, tpu.core_type = #tpu.core_type<tc>, window_params = [{transform_indices = @transform_0, window_bounds = array<i64: 1, 16, 128>}, {transform_indices = @transform_1, window_bounds = array<i64: 1, 16, 128>}]} {
    %c0 = arith.constant 0 : index
    %c0_0 = arith.constant 0 : index
    %c0_1 = arith.constant 0 : index
    %0 = vector.load %arg2[%c0, %c0_0, %c0_1] : memref<1x16x128xf32, #tpu.memory_space<vmem>>, vector<1x16x128xf32>
    %cst = arith.constant dense<0.000000e+00> : vector<1x128xf32>
    %1 = vector.multi_reduction <add>, %0, %cst [1] : vector<1x16x128xf32> to vector<1x128xf32>
    %2 = vector.shape_cast %1 : vector<1x128xf32> to vector<1x1x128xf32>
    %cst_2 = arith.constant 1.600000e+01 : f32
    %3 = vector.broadcast %cst_2 : f32 to vector<1x1x128xf32>
    %4 = arith.divf %2, %3 : vector<1x1x128xf32>
    %5 = arith.mulf %0, %0 : vector<1x16x128xf32>
    %cst_3 = arith.constant dense<0.000000e+00> : vector<1x128xf32>
    %6 = vector.multi_reduction <add>, %5, %cst_3 [1] : vector<1x16x128xf32> to vector<1x128xf32>
    %7 = vector.shape_cast %6 : vector<1x128xf32> to vector<1x1x128xf32>
    %cst_4 = arith.constant 1.600000e+01 : f32
    %8 = vector.broadcast %cst_4 : f32 to vector<1x1x128xf32>
    %9 = arith.divf %7, %8 : vector<1x1x128xf32>
    %10 = arith.mulf %4, %4 : vector<1x1x128xf32>
    %11 = arith.subf %9, %10 : vector<1x1x128xf32>
    %cst_5 = arith.constant 0.000000e+00 : f32
    %12 = vector.broadcast %cst_5 : f32 to vector<1x1x128xf32>
    %13 = arith.maximumf %11, %12 : vector<1x1x128xf32>
    %14 = vector.broadcast %4 : vector<1x1x128xf32> to vector<1x16x128xf32>
    %15 = arith.subf %0, %14 : vector<1x16x128xf32>
    %cst_6 = arith.constant 9.99999974E-6 : f32
    %16 = vector.broadcast %cst_6 : f32 to vector<1x1x128xf32>
    %17 = arith.addf %13, %16 : vector<1x1x128xf32>
    %18 = math.rsqrt %17 : vector<1x1x128xf32>
    %19 = vector.broadcast %18 : vector<1x1x128xf32> to vector<1x16x128xf32>
    %20 = arith.mulf %15, %19 : vector<1x16x128xf32>
    %cst_7 = arith.constant 0.000000e+00 : f32
    %21 = vector.broadcast %cst_7 : f32 to vector<1x16x128xf32>
    %22 = arith.cmpf oge, %20, %21 : vector<1x16x128xf32>
    %cst_8 = arith.constant 2.000000e-01 : f32
    %23 = vector.broadcast %cst_8 : f32 to vector<1x16x128xf32>
    %24 = arith.mulf %23, %20 : vector<1x16x128xf32>
    %25 = arith.select %22, %20, %24 : vector<1x16x128xi1>, vector<1x16x128xf32>
    %c0_9 = arith.constant 0 : index
    %c0_10 = arith.constant 0 : index
    %c0_11 = arith.constant 0 : index
    %26 = vector.load %arg3[%c0_9, %c0_10, %c0_11] : memref<1x16x128xf32, #tpu.memory_space<vmem>>, vector<1x16x128xf32>
    tpu.vector_store %arg3[%c0_9, %c0_10, %c0_11], %25 {strides = array<i32>} : memref<1x16x128xf32, #tpu.memory_space<vmem>>, vector<1x16x128xf32>,
    return
  }
  func.func @transform_0(%arg0: i32, %arg1: i32) -> (i32, i32, i32) {
    %c0_i32 = arith.constant 0 : i32
    %c0_i32_0 = arith.constant 0 : i32
    return %arg0, %c0_i32, %arg1 : i32, i32, i32
  }
  func.func @transform_1(%arg0: i32, %arg1: i32) -> (i32, i32, i32) {
    %c0_i32 = arith.constant 0 : i32
    %c0_i32_0 = arith.constant 0 : i32
    return %arg0, %c0_i32, %arg1 : i32, i32, i32
  }
}

module attributes {stable_mosaic.version = 11 : i64} {
  func.func @_matmul_bias_kernel(%arg0: i32, %arg1: i32, %arg2: i32, %arg3: memref<128x512xbf16, #tpu.memory_space<vmem>>, %arg4: memref<512x128xbf16, #tpu.memory_space<vmem>>, %arg5: memref<1x128xf32, #tpu.memory_space<vmem>>, %arg6: memref<128x128xf32, #tpu.memory_space<vmem>>, %arg7: memref<128x128xf32, #tpu.memory_space<vmem>>) attributes {dimension_semantics = [#tpu.dimension_semantics<parallel>, #tpu.dimension_semantics<parallel>, #tpu.dimension_semantics<arbitrary>], iteration_bounds = array<i64: 1, 4, 8>, scalar_prefetch = 0 : i64, scratch_operands = 1 : i64, tpu.core_type = #tpu.core_type<tc>, window_params = [{transform_indices = @transform_0, window_bounds = array<i64: 128, 512>}, {transform_indices = @transform_1, window_bounds = array<i64: 512, 128>}, {transform_indices = @transform_2, window_bounds = array<i64: 1, 128>}, {transform_indices = @transform_3, window_bounds = array<i64: 128, 128>}]} {
    %c0_i32 = arith.constant 0 : i32
    %0 = arith.cmpi eq, %arg2, %c0_i32 : i32
    %1 = arith.extui %0 : i1 to i32
    %c0_i32_0 = arith.constant 0 : i32
    %2 = arith.cmpi ne, %1, %c0_i32_0 : i32
    scf.if %2 {
      %c0_9 = arith.constant 0 : index
      %c0_10 = arith.constant 0 : index
      %12 = vector.load %arg5[%c0_9, %c0_10] : memref<1x128xf32, #tpu.memory_space<vmem>>, vector<1x128xf32>
      %13 = vector.shape_cast %12 : vector<1x128xf32> to vector<1x128xf32>
      %14 = vector.broadcast %13 : vector<1x128xf32> to vector<128x128xf32>
      %c0_11 = arith.constant 0 : index
      %c0_12 = arith.constant 0 : index
      %15 = vector.load %arg7[%c0_11, %c0_12] : memref<128x128xf32, #tpu.memory_space<vmem>>, vector<128x128xf32>
      tpu.vector_store %arg7[%c0_11, %c0_12], %14 {strides = array<i32>} : memref<128x128xf32, #tpu.memory_space<vmem>>, vector<128x128xf32>,
    } else {
    }
    %c0 = arith.constant 0 : index
    %c0_1 = arith.constant 0 : index
    %3 = vector.load %arg7[%c0, %c0_1] : memref<128x128xf32, #tpu.memory_space<vmem>>, vector<128x128xf32>
    %c0_2 = arith.constant 0 : index
    %c0_3 = arith.constant 0 : index
    %4 = vector.load %arg3[%c0_2, %c0_3] : memref<128x512xbf16, #tpu.memory_space<vmem>>, vector<128x512xbf16>
    %c0_4 = arith.constant 0 : index
    %c0_5 = arith.constant 0 : index
    %5 = vector.load %arg4[%c0_4, %c0_5] : memref<512x128xbf16, #tpu.memory_space<vmem>>, vector<512x128xbf16>
    %cst = arith.constant dense<0.000000e+00> : vector<128x128xf32>
    %6 = tpu.matmul %4, %5, %cst {dimension_numbers = #tpu.dot_dimension_numbers<[1], [0], [0], [1], [0, 0, 1, 1], [], []>} : vector<128x512xbf16>, vector<512x128xbf16>, vector<128x128xf32> -> vector<128x128xf32>
    %7 = arith.addf %3, %6 : vector<128x128xf32>
    %c0_6 = arith.constant 0 : index
    %c0_7 = arith.constant 0 : index
    %8 = vector.load %arg7[%c0_6, %c0_7] : memref<128x128xf32, #tpu.memory_space<vmem>>, vector<128x128xf32>
    tpu.vector_store %arg7[%c0_6, %c0_7], %7 {strides = array<i32>} : memref<128x128xf32, #tpu.memory_space<vmem>>, vector<128x128xf32>,
    %c7_i32 = arith.constant 7 : i32
    %9 = arith.cmpi eq, %arg2, %c7_i32 : i32
    %10 = arith.extui %9 : i1 to i32
    %c0_i32_8 = arith.constant 0 : i32
    %11 = arith.cmpi ne, %10, %c0_i32_8 : i32
    scf.if %11 {
      %c0_9 = arith.constant 0 : index
      %c0_10 = arith.constant 0 : index
      %12 = vector.load %arg7[%c0_9, %c0_10] : memref<128x128xf32, #tpu.memory_space<vmem>>, vector<128x128xf32>
      %c0_11 = arith.constant 0 : index
      %c0_12 = arith.constant 0 : index
      %13 = vector.load %arg6[%c0_11, %c0_12] : memref<128x128xf32, #tpu.memory_space<vmem>>, vector<128x128xf32>
      tpu.vector_store %arg6[%c0_11, %c0_12], %12 {strides = array<i32>} : memref<128x128xf32, #tpu.memory_space<vmem>>, vector<128x128xf32>,
    } else {
    }
    return
  }
  func.func @transform_0(%arg0: i32, %arg1: i32, %arg2: i32) -> (i32, i32) {
    %c0_i32 = arith.constant 0 : i32
    return %arg0, %arg2 : i32, i32
  }
  func.func @transform_1(%arg0: i32, %arg1: i32, %arg2: i32) -> (i32, i32) {
    %c0_i32 = arith.constant 0 : i32
    return %arg2, %arg1 : i32, i32
  }
  func.func @transform_2(%arg0: i32, %arg1: i32, %arg2: i32) -> (i32, i32) {
    %c0_i32 = arith.constant 0 : i32
    %c0_i32_0 = arith.constant 0 : i32
    return %c0_i32, %arg1 : i32, i32
  }
  func.func @transform_3(%arg0: i32, %arg1: i32, %arg2: i32) -> (i32, i32) {
    %c0_i32 = arith.constant 0 : i32
    return %arg0, %arg1 : i32, i32
  }
}

module attributes {stable_mosaic.version = 11 : i64} {
  func.func @_instnorm_lrelu_kernel(%arg0: i32, %arg1: i32, %arg2: memref<1x9x128xf32, #tpu.memory_space<vmem>>, %arg3: memref<1x9x128xf32, #tpu.memory_space<vmem>>) attributes {dimension_semantics = [#tpu.dimension_semantics<parallel>, #tpu.dimension_semantics<parallel>], iteration_bounds = array<i64: 2, 4>, scalar_prefetch = 0 : i64, scratch_operands = 0 : i64, tpu.core_type = #tpu.core_type<tc>, window_params = [{transform_indices = @transform_0, window_bounds = array<i64: 1, 9, 128>}, {transform_indices = @transform_1, window_bounds = array<i64: 1, 9, 128>}]} {
    %c0 = arith.constant 0 : index
    %c0_0 = arith.constant 0 : index
    %c0_1 = arith.constant 0 : index
    %0 = vector.load %arg2[%c0, %c0_0, %c0_1] : memref<1x9x128xf32, #tpu.memory_space<vmem>>, vector<1x9x128xf32>
    %cst = arith.constant dense<0.000000e+00> : vector<1x128xf32>
    %1 = vector.multi_reduction <add>, %0, %cst [1] : vector<1x9x128xf32> to vector<1x128xf32>
    %2 = vector.shape_cast %1 : vector<1x128xf32> to vector<1x1x128xf32>
    %cst_2 = arith.constant 9.000000e+00 : f32
    %3 = vector.broadcast %cst_2 : f32 to vector<1x1x128xf32>
    %4 = arith.divf %2, %3 : vector<1x1x128xf32>
    %5 = arith.mulf %0, %0 : vector<1x9x128xf32>
    %cst_3 = arith.constant dense<0.000000e+00> : vector<1x128xf32>
    %6 = vector.multi_reduction <add>, %5, %cst_3 [1] : vector<1x9x128xf32> to vector<1x128xf32>
    %7 = vector.shape_cast %6 : vector<1x128xf32> to vector<1x1x128xf32>
    %cst_4 = arith.constant 9.000000e+00 : f32
    %8 = vector.broadcast %cst_4 : f32 to vector<1x1x128xf32>
    %9 = arith.divf %7, %8 : vector<1x1x128xf32>
    %10 = arith.mulf %4, %4 : vector<1x1x128xf32>
    %11 = arith.subf %9, %10 : vector<1x1x128xf32>
    %cst_5 = arith.constant 0.000000e+00 : f32
    %12 = vector.broadcast %cst_5 : f32 to vector<1x1x128xf32>
    %13 = arith.maximumf %11, %12 : vector<1x1x128xf32>
    %14 = vector.broadcast %4 : vector<1x1x128xf32> to vector<1x9x128xf32>
    %15 = arith.subf %0, %14 : vector<1x9x128xf32>
    %cst_6 = arith.constant 9.99999974E-6 : f32
    %16 = vector.broadcast %cst_6 : f32 to vector<1x1x128xf32>
    %17 = arith.addf %13, %16 : vector<1x1x128xf32>
    %18 = math.rsqrt %17 : vector<1x1x128xf32>
    %19 = vector.broadcast %18 : vector<1x1x128xf32> to vector<1x9x128xf32>
    %20 = arith.mulf %15, %19 : vector<1x9x128xf32>
    %cst_7 = arith.constant 0.000000e+00 : f32
    %21 = vector.broadcast %cst_7 : f32 to vector<1x9x128xf32>
    %22 = arith.cmpf oge, %20, %21 : vector<1x9x128xf32>
    %cst_8 = arith.constant 2.000000e-01 : f32
    %23 = vector.broadcast %cst_8 : f32 to vector<1x9x128xf32>
    %24 = arith.mulf %23, %20 : vector<1x9x128xf32>
    %25 = arith.select %22, %20, %24 : vector<1x9x128xi1>, vector<1x9x128xf32>
    %c0_9 = arith.constant 0 : index
    %c0_10 = arith.constant 0 : index
    %c0_11 = arith.constant 0 : index
    %26 = vector.load %arg3[%c0_9, %c0_10, %c0_11] : memref<1x9x128xf32, #tpu.memory_space<vmem>>, vector<1x9x128xf32>
    tpu.vector_store %arg3[%c0_9, %c0_10, %c0_11], %25 {strides = array<i32>} : memref<1x9x128xf32, #tpu.memory_space<vmem>>, vector<1x9x128xf32>,
    return
  }
  func.func @transform_0(%arg0: i32, %arg1: i32) -> (i32, i32, i32) {
    %c0_i32 = arith.constant 0 : i32
    %c0_i32_0 = arith.constant 0 : i32
    return %arg0, %c0_i32, %arg1 : i32, i32, i32
  }
  func.func @transform_1(%arg0: i32, %arg1: i32) -> (i32, i32, i32) {
    %c0_i32 = arith.constant 0 : i32
    %c0_i32_0 = arith.constant 0 : i32
    return %arg0, %c0_i32, %arg1 : i32, i32, i32
  }
}

module attributes {stable_mosaic.version = 11 : i64} {
  func.func @_conv_final_avgpool_kernel(%arg0: i32, %arg1: memref<2x4x8192xbf16, #tpu.memory_space<vmem>>, %arg2: memref<1x8192xbf16, #tpu.memory_space<vmem>>, %arg3: memref<1x1xf32, #tpu.memory_space<vmem>>, %arg4: memref<2x1xf32, #tpu.memory_space<vmem>>) attributes {dimension_semantics = [#tpu.dimension_semantics<arbitrary>], iteration_bounds = array<i64: 1>, scalar_prefetch = 0 : i64, scratch_operands = 0 : i64, tpu.core_type = #tpu.core_type<tc>, window_params = [{pipeline_mode = #tpu.pipeline_mode<synchronous>, transform_indices = @transform_0, window_bounds = array<i64: 2, 4, 8192>}, {pipeline_mode = #tpu.pipeline_mode<synchronous>, transform_indices = @transform_1, window_bounds = array<i64: 1, 8192>}, {pipeline_mode = #tpu.pipeline_mode<synchronous>, transform_indices = @transform_2, window_bounds = array<i64: 1, 1>}, {pipeline_mode = #tpu.pipeline_mode<synchronous>, transform_indices = @transform_3, window_bounds = array<i64: 2, 1>}]} {
    %c0 = arith.constant 0 : index
    %c0_0 = arith.constant 0 : index
    %c0_1 = arith.constant 0 : index
    %0 = vector.load %arg1[%c0, %c0_0, %c0_1] : memref<2x4x8192xbf16, #tpu.memory_space<vmem>>, vector<2x4x8192xbf16>
    %1 = arith.extf %0 : vector<2x4x8192xbf16> to vector<2x4x8192xf32>
    %c0_2 = arith.constant 0 : index
    %c0_3 = arith.constant 0 : index
    %2 = vector.load %arg2[%c0_2, %c0_3] : memref<1x8192xbf16, #tpu.memory_space<vmem>>, vector<1x8192xbf16>
    %3 = arith.extf %2 : vector<1x8192xbf16> to vector<1x8192xf32>
    %4 = vector.shape_cast %3 : vector<1x8192xf32> to vector<1x1x8192xf32>
    %5 = vector.broadcast %4 : vector<1x1x8192xf32> to vector<2x4x8192xf32>
    %6 = arith.mulf %1, %5 : vector<2x4x8192xf32>
    %cst = arith.constant dense<0.000000e+00> : vector<2x8192xf32>
    %7 = vector.multi_reduction <add>, %6, %cst [1] : vector<2x4x8192xf32> to vector<2x8192xf32>
    %cst_4 = arith.constant dense<0.000000e+00> : vector<2xf32>
    %8 = vector.multi_reduction <add>, %7, %cst_4 [1] : vector<2x8192xf32> to vector<2xf32>
    %9 = vector.shape_cast %8 : vector<2xf32> to vector<2x1xf32>
    %cst_5 = arith.constant 2.500000e-01 : f32
    %10 = vector.broadcast %cst_5 : f32 to vector<2x1xf32>
    %11 = arith.mulf %9, %10 : vector<2x1xf32>
    %c0_6 = arith.constant 0 : index
    %c0_7 = arith.constant 0 : index
    %12 = vector.load %arg3[%c0_6, %c0_7] : memref<1x1xf32, #tpu.memory_space<vmem>>, vector<1x1xf32>
    %13 = vector.broadcast %12 : vector<1x1xf32> to vector<2x1xf32>
    %14 = arith.addf %11, %13 : vector<2x1xf32>
    %c0_8 = arith.constant 0 : index
    %c0_9 = arith.constant 0 : index
    %15 = vector.load %arg4[%c0_8, %c0_9] : memref<2x1xf32, #tpu.memory_space<vmem>>, vector<2x1xf32>
    tpu.vector_store %arg4[%c0_8, %c0_9], %14 {strides = array<i32>} : memref<2x1xf32, #tpu.memory_space<vmem>>, vector<2x1xf32>,
    return
  }
  func.func @transform_0(%arg0: i32) -> (i32, i32, i32) {
    %c0_i32 = arith.constant 0 : i32
    %c0_i32_0 = arith.constant 0 : i32
    %c0_i32_1 = arith.constant 0 : i32
    %c0_i32_2 = arith.constant 0 : i32
    return %c0_i32, %c0_i32_0, %c0_i32_1 : i32, i32, i32
  }
  func.func @transform_1(%arg0: i32) -> (i32, i32) {
    %c0_i32 = arith.constant 0 : i32
    %c0_i32_0 = arith.constant 0 : i32
    %c0_i32_1 = arith.constant 0 : i32
    return %c0_i32, %c0_i32_0 : i32, i32
  }
  func.func @transform_2(%arg0: i32) -> (i32, i32) {
    %c0_i32 = arith.constant 0 : i32
    %c0_i32_0 = arith.constant 0 : i32
    %c0_i32_1 = arith.constant 0 : i32
    return %c0_i32, %c0_i32_0 : i32, i32
  }
  func.func @transform_3(%arg0: i32) -> (i32, i32) {
    %c0_i32 = arith.constant 0 : i32
    %c0_i32_0 = arith.constant 0 : i32
    %c0_i32_1 = arith.constant 0 : i32
    return %c0_i32, %c0_i32_0 : i32, i32
  }
}

</mosaic_0001>

<llo_original>
// kernel: discriminator_forward.8
$region0: #{discriminator_forward.8}
  #allocation0 [shape = 'u32[]', space=smem, size = 0x4, offset = 0x4, fixed_abs, tag = 'smem constant byte address 0x4 - core index']
  #allocation1 [shape = 'u32[144,128]{1,0:T(1,128)}', space=vmem, size = 0x12000, scoped, tag = 'internal scratch']
  #allocation2 [shape = 'f32[256,128]{1,0:T(8,128)}', space=vmem, size = 0x20000, scoped, tag = 'scratch operand']
  %s0 = inlined_call_operand.vmem [shape: bf16[512,128], index: 0, kind: input, shape index: {}]
  %s1 = inlined_call_operand.vmem [shape: bf16[128,128], index: 1, kind: input, shape index: {}]
  %s2 = inlined_call_operand.vmem [shape: f32[1,128], index: 2, kind: input, shape index: {}]
  %s3 = inlined_call_operand.vmem [shape: f32[512,128], index: 3, kind: output, shape index: {}]
  %s4 = sld [smem:[#allocation0]]
  $region53: #{discriminator_forward.8} parent=0
    _
  %s6 = ssub.s32 1, %s4
  %s7 = scalar_select 0, %s6, %s4
  loop: start=0, step=1, limit=4
  $region2: #{discriminator_forward.8} parent=0 // loop_pre_header
    _
  $region3: #{discriminator_forward.8} parent=0 // loop_header
    %s9 = sphi 0, %s13
    %p10 = scmp.ge.s32.totalorder %s9, 4
    %s16 = sphi 0, %s35
    %s17 = sphi 0, %s31
    %s18 = sphi 0, %s27
    %s19 = sphi 0, %s16
    %s20 = sphi 0, %s17
    %s21 = sphi 0, %s18
    %s22 = sphi 0, %s19
    %s23 = sphi 0, %s20
    %s24 = sphi 0, %s21
    %s40 = sphi 0, %s42
    %s43 = sphi 0, %s40
    %s44 = sphi 0, %s43
    %s60 = sphi 0, %s44
    %s68 = sphi 0, %s70
    %s71 = sphi 0, %s68
    %s72 = sphi 0, %s71
    %s88 = sphi 0, %s72
    %s94 = sphi 0, %s96
    %s97 = sphi 0, %s94
    %s98 = sphi 0, %s97
    %s114 = sphi 0, %s98
    %s122 = sphi 0, %s124
    %s125 = sphi 0, %s122
    %s126 = sphi 0, %s125
    %s142 = sphi 0, %s126
  $region4: #{discriminator_forward.8} parent=0 // loop_header_branch
    %12 = sbr.rel (%p10) target = $region8
  $region5: #{discriminator_forward.8} parent=0 // loop_body
    %s14 = ssub.s32 %s9, 1
    %s15 = ssub.s32 %s9, 2
    %s25 = sadd.s32 1, %s18
    %p26 = scmp.ge.s32.totalorder %s25, 1
    %s27 = scalar_select %p26, 0, %s25
    %s28 = sadd.s32 1, %s17
    %s29 = scalar_select %p26, %s28, %s17
    %p30 = scmp.ge.s32.totalorder %s29, 1
    %s31 = scalar_select %p30, 0, %s29
    %s32 = sadd.s32 1, %s16
    %s33 = scalar_select %p30, %s32, %s16
    %p34 = scmp.ge.s32.totalorder %s33, 2
    %s35 = scalar_select %p34, 0, %s33
    %s36 = ssub.s32 %s16, %s35
    %s37 = ssub.s32 %s18, %s27
    %s38 = sor.u32 %s36, %s37
    %p39 = scmp.eq.s32.totalorder %s38, 0
    %s41 = sadd.s32 %s40, 1
    %s42 = scalar_select %p39, %s40, %s41
    %p45 = pneg %p39
    %p46 = scmp.eq.s32.totalorder %s9, 1
    %p47 = por %p45, %p46
    %p48 = scmp.ne.s32.totalorder %s40, %s43
    %p49 = scmp.eq.s32.totalorder %s9, 0
    %p50 = por %p48, %p49
    %p51 = scmp.ne.s32.totalorder %s40, %s43
    %p52 = scmp.eq.s32.totalorder %s14, 1
    %p53 = por %p51, %p52
    %p54 = scmp.ne.s32.totalorder %s43, %s44
    %p55 = scmp.eq.s32.totalorder %s14, 0
    %p56 = por %p54, %p55
    %p57 = scmp.ne.s32.totalorder %s43, %s44
    %p58 = scmp.eq.s32.totalorder %s15, 1
    %p59 = por %p57, %p58
    %p61 = scmp.ne.s32.totalorder %s44, %s60
    %p62 = scmp.eq.s32.totalorder %s15, 0
    %p63 = por %p61, %p62
    %s64 = ssub.s32 %s18, %s27
    %s65 = ssub.s32 %s17, %s31
    %s66 = sor.u32 %s64, %s65
    %p67 = scmp.eq.s32.totalorder %s66, 0
    %s69 = sadd.s32 %s68, 1
    %s70 = scalar_select %p67, %s68, %s69
    %p73 = pneg %p67
    %p74 = scmp.eq.s32.totalorder %s9, 1
    %p75 = por %p73, %p74
    %p76 = scmp.ne.s32.totalorder %s68, %s71
    %p77 = scmp.eq.s32.totalorder %s9, 0
    %p78 = por %p76, %p77
    %p79 = scmp.ne.s32.totalorder %s68, %s71
    %p80 = scmp.eq.s32.totalorder %s14, 1
    %p81 = por %p79, %p80
    %p82 = scmp.ne.s32.totalorder %s71, %s72
    %p83 = scmp.eq.s32.totalorder %s14, 0
    %p84 = por %p82, %p83
    %p85 = scmp.ne.s32.totalorder %s71, %s72
    %p86 = scmp.eq.s32.totalorder %s15, 1
    %p87 = por %p85, %p86
    %p89 = scmp.ne.s32.totalorder %s72, %s88
    %p90 = scmp.eq.s32.totalorder %s15, 0
    %p91 = por %p89, %p90
    %s92 = ssub.s32 %s17, %s31
    %p93 = scmp.eq.s32.totalorder %s92, 0
    %s95 = sadd.s32 %s94, 1
    %s96 = scalar_select %p93, %s94, %s95
    %p99 = pneg %p93
    %p100 = scmp.eq.s32.totalorder %s9, 1
    %p101 = por %p99, %p100
    %p102 = scmp.ne.s32.totalorder %s94, %s97
    %p103 = scmp.eq.s32.totalorder %s9, 0
    %p104 = por %p102, %p103
    %p105 = scmp.ne.s32.totalorder %s94, %s97
    %p106 = scmp.eq.s32.totalorder %s14, 1
    %p107 = por %p105, %p106
    %p108 = scmp.ne.s32.totalorder %s97, %s98
    %p109 = scmp.eq.s32.totalorder %s14, 0
    %p110 = por %p108, %p109
    %p111 = scmp.ne.s32.totalorder %s97, %s98
    %p112 = scmp.eq.s32.totalorder %s15, 1
    %p113 = por %p111, %p112
    %p115 = scmp.ne.s32.totalorder %s98, %s114
    %p116 = scmp.eq.s32.totalorder %s15, 0
    %p117 = por %p115, %p116
    %s118 = ssub.s32 %s16, %s35
    %s119 = ssub.s32 %s17, %s31
    %s120 = sor.u32 %s118, %s119
    %p121 = scmp.eq.s32.totalorder %s120, 0
    %s123 = sadd.s32 %s122, 1
    %s124 = scalar_select %p121, %s122, %s123
    %p127 = pneg %p121
    %p128 = scmp.eq.s32.totalorder %s9, 1
    %p129 = por %p127, %p128
    %p130 = scmp.ne.s32.totalorder %s122, %s125
    %p131 = scmp.eq.s32.totalorder %s9, 0
    %p132 = por %p130, %p131
    %p133 = scmp.ne.s32.totalorder %s122, %s125
    %p134 = scmp.eq.s32.totalorder %s14, 1
    %p135 = por %p133, %p134
    %p136 = scmp.ne.s32.totalorder %s125, %s126
    %p137 = scmp.eq.s32.totalorder %s14, 0
    %p138 = por %p136, %p137
    %p139 = scmp.ne.s32.totalorder %s125, %s126
    %p140 = scmp.eq.s32.totalorder %s15, 1
    %p141 = por %p139, %p140
    %p143 = scmp.ne.s32.totalorder %s126, %s142
    %p144 = scmp.eq.s32.totalorder %s15, 0
    %p145 = por %p143, %p144
    %p146 = scmp.le.s32.totalorder 1, %s9
    %p147 = scmp.lt.s32.totalorder %s9, 3
    %p148 = pnand %p146, %p147
    %p149 = pneg %p148
    // Predicated region
    $region9: #{discriminator_forward.8} parent=5 // pred_check
      _
    $region10: #{discriminator_forward.8} parent=5 // pred_check_branch
      %151 = sbr.rel (%p148) target = $region12
    $region11: #{discriminator_forward.8} parent=5 // pred_region
      %s152 = ssub.s32 %s9, 1
      // Predicated region
      $region13: #{discriminator_forward.8} parent=11 // pred_check
        %p153 = pneg %p84
      $region14: #{discriminator_forward.8} parent=11 // pred_check_branch
        %155 = sbr.rel (%p153) target = $region16
      $region15: #{discriminator_forward.8} parent=11 // pred_region
        %s156 = smul.u32 16, %s21
        %p157 = scmp.lt.s32.totalorder %s156, 15
        %s158 = scalar_select %p157, %s156, 15
        %p159 = scmp.lt.s32.totalorder %s20, 0
        %s160 = scalar_select %p159, %s20, 0
        %s161 = sadd.s32 %s160, %s158
        %s162 = smul.addr %s161, 4
        %s163 = scalar_lea.vmem %s1, %s162
        %s164 = smul.u32 16, %s21
      $region16: #{discriminator_forward.8} parent=11 // pred_fallthru
        _
      // Predicated region
      $region17: #{discriminator_forward.8} parent=11 // pred_check
        %p165 = pneg %p110
      $region18: #{discriminator_forward.8} parent=11 // pred_check_branch
        %167 = sbr.rel (%p165) target = $region20
      $region19: #{discriminator_forward.8} parent=11 // pred_region
        %p168 = scmp.lt.s32.totalorder %s20, 0
        %s169 = scalar_select %p168, %s20, 0
        %s170 = scalar_lea.vmem %s2, %s169
      $region20: #{discriminator_forward.8} parent=11 // pred_fallthru
        _
    $region12: #{discriminator_forward.8} parent=5 // pred_fallthru
      _
    %p171 = scmp.lt.s32.totalorder %s9, 2
    // Predicated region
    $region21: #{discriminator_forward.8} parent=5 // pred_check
      %p172 = pneg %p171
    $region22: #{discriminator_forward.8} parent=5 // pred_check_branch
      %174 = sbr.rel (%p172) target = $region24
    $region23: #{discriminator_forward.8} parent=5 // pred_region
      // Predicated region
      $region25: #{discriminator_forward.8} parent=23 // pred_check
        %p175 = pneg %p50
      $region26: #{discriminator_forward.8} parent=23 // pred_check_branch
        %177 = sbr.rel (%p175) target = $region28
      $region27: #{discriminator_forward.8} parent=23 // pred_region
        %s178 = smul.u32 32, %s16
        %p179 = scmp.lt.s32.totalorder %s178, 63
        %s180 = scalar_select %p179, %s178, 63
        %p181 = scmp.lt.s32.totalorder %s18, 0
        %s182 = scalar_select %p181, %s18, 0
        %s183 = sadd.s32 %s182, %s180
        %s184 = smul.addr %s183, 4
        %s185 = scalar_lea.vmem %s0, %s184
        %s186 = smul.u32 32, %s16
      $region28: #{discriminator_forward.8} parent=23 // pred_fallthru
        _
    $region24: #{discriminator_forward.8} parent=5 // pred_fallthru
      _
    %p187 = scmp.le.s32.totalorder 1, %s9
    %p188 = scmp.lt.s32.totalorder %s9, 3
    %p189 = pnand %p187, %p188
    %p190 = pneg %p189
    // Predicated region
    $region29: #{discriminator_forward.8} parent=5 // pred_check
      _
    $region30: #{discriminator_forward.8} parent=5 // pred_check_branch
      %192 = sbr.rel (%p189) target = $region32
    $region31: #{discriminator_forward.8} parent=5 // pred_region
      %s193 = ssub.s32 %s9, 1
      %s194 = smul.u32 32, %s19
      %p195 = scmp.lt.s32.totalorder %s194, 63
      %s196 = scalar_select %p195, %s194, 63
      %p197 = scmp.lt.s32.totalorder %s21, 0
      %s198 = scalar_select %p197, %s21, 0
      %s199 = sadd.s32 %s198, %s196
      %s200 = smul.addr %s199, 4
      %s201 = scalar_lea.vmem %s0, %s200
      %p202 = pneg %p56
      %p203 = pneg %p53
      %s204 = smul.u32 16, %s21
      %p205 = scmp.lt.s32.totalorder %s204, 15
      %s206 = scalar_select %p205, %s204, 15
      %p207 = scmp.lt.s32.totalorder %s20, 0
      %s208 = scalar_select %p207, %s20, 0
      %s209 = sadd.s32 %s208, %s206
      %s210 = smul.addr %s209, 4
      %s211 = scalar_lea.vmem %s1, %s210
      %p212 = pneg %p84
      %p213 = pneg %p81
      %p214 = scmp.lt.s32.totalorder %s20, 0
      %s215 = scalar_select %p214, %s20, 0
      %s216 = scalar_lea.vmem %s2, %s215
      %p217 = pneg %p110
      %p218 = pneg %p107
      %p219 = pneg %p138
      %p220 = pneg %p135
      %s221 = smul.u32 32, %s19
      %p222 = scmp.lt.s32.totalorder %s221, 63
      %s223 = scalar_select %p222, %s221, 63
      %p224 = scmp.lt.s32.totalorder %s20, 0
      %s225 = scalar_select %p224, %s20, 0
      %s226 = sadd.s32 %s225, %s223
      %s227 = smul.addr %s226, 8
      %s228 = scalar_lea.vmem %s3, %s227
      %s229 = smul.u32 32, %s19
      %p230 = scmp.lt.s32.totalorder %s229, 63
      %s231 = scalar_select %p230, %s229, 63
      %p232 = scmp.lt.s32.totalorder %s21, 0
      %s233 = scalar_select %p232, %s21, 0
      %s234 = sadd.s32 %s233, %s231
      %s235 = smul.addr %s234, 4
      %s236 = scalar_lea.vmem %s0, %s235
      %s237 = smul.u32 32, %s19
      %s238 = smul.u32 16, %s21
      %p239 = scmp.lt.s32.totalorder %s238, 15
      %s240 = scalar_select %p239, %s238, 15
      %p241 = scmp.lt.s32.totalorder %s20, 0
      %s242 = scalar_select %p241, %s20, 0
      %s243 = sadd.s32 %s242, %s240
      %s244 = smul.addr %s243, 4
      %s245 = scalar_lea.vmem %s1, %s244
      %s246 = smul.u32 16, %s21
      %p247 = scmp.lt.s32.totalorder %s20, 0
      %s248 = scalar_select %p247, %s20, 0
      %s249 = scalar_lea.vmem %s2, %s248
      %s250 = smul.u32 32, %s19
      %p251 = scmp.lt.s32.totalorder %s250, 63
      %s252 = scalar_select %p251, %s250, 63
      %p253 = scmp.lt.s32.totalorder %s20, 0
      %s254 = scalar_select %p253, %s20, 0
      %s255 = sadd.s32 %s254, %s252
      %s256 = smul.addr %s255, 8
      %s257 = scalar_lea.vmem %s3, %s256
      %s258 = smul.u32 32, %s19
      %p260 = scmp.eq.s32.totalorder %s21, 0
      // Predicated region
      $region33: #{discriminator_forward.8} parent=31 // pred_check
        %p261 = pneg %p260
      $region34: #{discriminator_forward.8} parent=31 // pred_check_branch
        %263 = sbr.rel (%p261) target = $region36
      $region35: #{discriminator_forward.8} parent=31 // pred_region
        %v264 = vld [vmem:[%s249] sm:$0x1]
        %v266 = vlaneseq
        %v267 = vshrl.u32 %v266, 7
        %v268 = vsub.s32 0, %v267
        %v269 = vrot.slane %v264, %v268
        %271 = vst [vmem:[#allocation2] sm:$0xff] %v269
        %272 = vst [vmem:[#allocation2 + $0x8] sm:$0xff] %v269
        %273 = vst [vmem:[#allocation2 + $0x10] sm:$0xff] %v269
        %274 = vst [vmem:[#allocation2 + $0x18] sm:$0xff] %v269
        %275 = vst [vmem:[#allocation2 + $0x20] sm:$0xff] %v269
        %276 = vst [vmem:[#allocation2 + $0x28] sm:$0xff] %v269
        %277 = vst [vmem:[#allocation2 + $0x30] sm:$0xff] %v269
        %278 = vst [vmem:[#allocation2 + $0x38] sm:$0xff] %v269
        %279 = vst [vmem:[#allocation2 + $0x40] sm:$0xff] %v269
        %280 = vst [vmem:[#allocation2 + $0x48] sm:$0xff] %v269
        %281 = vst [vmem:[#allocation2 + $0x50] sm:$0xff] %v269
        %282 = vst [vmem:[#allocation2 + $0x58] sm:$0xff] %v269
        %283 = vst [vmem:[#allocation2 + $0x60] sm:$0xff] %v269
        %284 = vst [vmem:[#allocation2 + $0x68] sm:$0xff] %v269
        %285 = vst [vmem:[#allocation2 + $0x70] sm:$0xff] %v269
        %286 = vst [vmem:[#allocation2 + $0x78] sm:$0xff] %v269
        %287 = vst [vmem:[#allocation2 + $0x80] sm:$0xff] %v269
        %288 = vst [vmem:[#allocation2 + $0x88] sm:$0xff] %v269
        %289 = vst [vmem:[#allocation2 + $0x90] sm:$0xff] %v269
        %290 = vst [vmem:[#allocation2 + $0x98] sm:$0xff] %v269
        %291 = vst [vmem:[#allocation2 + $0xa0] sm:$0xff] %v269
        %292 = vst [vmem:[#allocation2 + $0xa8] sm:$0xff] %v269
        %293 = vst [vmem:[#allocation2 + $0xb0] sm:$0xff] %v269
        %294 = vst [vmem:[#allocation2 + $0xb8] sm:$0xff] %v269
        %295 = vst [vmem:[#allocation2 + $0xc0] sm:$0xff] %v269
        %296 = vst [vmem:[#allocation2 + $0xc8] sm:$0xff] %v269
        %297 = vst [vmem:[#allocation2 + $0xd0] sm:$0xff] %v269
        %298 = vst [vmem:[#allocation2 + $0xd8] sm:$0xff] %v269
        %299 = vst [vmem:[#allocation2 + $0xe0] sm:$0xff] %v269
        %300 = vst [vmem:[#allocation2 + $0xe8] sm:$0xff] %v269
        %301 = vst [vmem:[#allocation2 + $0xf0] sm:$0xff] %v269
        %302 = vst [vmem:[#allocation2 + $0xf8] sm:$0xff] %v269
      $region36: #{discriminator_forward.8} parent=31 // pred_fallthru
        _
      %v303 = vld [vmem:[#allocation2] sm:$0xff]
      %v304 = vld [vmem:[#allocation2 + $0x8] sm:$0xff]
      %v305 = vld [vmem:[#allocation2 + $0x10] sm:$0xff]
      %v306 = vld [vmem:[#allocation2 + $0x18] sm:$0xff]
      %v307 = vld [vmem:[#allocation2 + $0x20] sm:$0xff]
      %v308 = vld [vmem:[#allocation2 + $0x28] sm:$0xff]
      %v309 = vld [vmem:[#allocation2 + $0x30] sm:$0xff]
      %v310 = vld [vmem:[#allocation2 + $0x38] sm:$0xff]
      %v311 = vld [vmem:[#allocation2 + $0x40] sm:$0xff]
      %v312 = vld [vmem:[#allocation2 + $0x48] sm:$0xff]
      %v313 = vld [vmem:[#allocation2 + $0x50] sm:$0xff]
      %v314 = vld [vmem:[#allocation2 + $0x58] sm:$0xff]
      %v315 = vld [vmem:[#allocation2 + $0x60] sm:$0xff]
      %v316 = vld [vmem:[#allocation2 + $0x68] sm:$0xff]
      %v317 = vld [vmem:[#allocation2 + $0x70] sm:$0xff]
      %v318 = vld [vmem:[#allocation2 + $0x78] sm:$0xff]
      %v319 = vld [vmem:[#allocation2 + $0x80] sm:$0xff]
      %v320 = vld [vmem:[#allocation2 + $0x88] sm:$0xff]
      %v321 = vld [vmem:[#allocation2 + $0x90] sm:$0xff]
      %v322 = vld [vmem:[#allocation2 + $0x98] sm:$0xff]
      %v323 = vld [vmem:[#allocation2 + $0xa0] sm:$0xff]
      %v324 = vld [vmem:[#allocation2 + $0xa8] sm:$0xff]
      %v325 = vld [vmem:[#allocation2 + $0xb0] sm:$0xff]
      %v326 = vld [vmem:[#allocation2 + $0xb8] sm:$0xff]
      %v327 = vld [vmem:[#allocation2 + $0xc0] sm:$0xff]
      %v328 = vld [vmem:[#allocation2 + $0xc8] sm:$0xff]
      %v329 = vld [vmem:[#allocation2 + $0xd0] sm:$0xff]
      %v330 = vld [vmem:[#allocation2 + $0xd8] sm:$0xff]
      %v331 = vld [vmem:[#allocation2 + $0xe0] sm:$0xff]
      %v332 = vld [vmem:[#allocation2 + $0xe8] sm:$0xff]
      %v333 = vld [vmem:[#allocation2 + $0xf0] sm:$0xff]
      %v334 = vld [vmem:[#allocation2 + $0xf8] sm:$0xff]
      %v335 = vld [vmem:[%s236] sm:$0xf]
      %v336 = vld [vmem:[%s236 + $0x4] sm:$0xf]
      %v337 = vld [vmem:[%s236 + $0x8] sm:$0xf]
      %v338 = vld [vmem:[%s236 + $0xc] sm:$0xf]
      %v339 = vld [vmem:[%s236 + $0x10] sm:$0xf]
      %v340 = vld [vmem:[%s236 + $0x14] sm:$0xf]
      %v341 = vld [vmem:[%s236 + $0x18] sm:$0xf]
      %v342 = vld [vmem:[%s236 + $0x1c] sm:$0xf]
      %v343 = vld [vmem:[%s236 + $0x20] sm:$0xf]
      %v344 = vld [vmem:[%s236 + $0x24] sm:$0xf]
      %v345 = vld [vmem:[%s236 + $0x28] sm:$0xf]
      %v346 = vld [vmem:[%s236 + $0x2c] sm:$0xf]
      %v347 = vld [vmem:[%s236 + $0x30] sm:$0xf]
      %v348 = vld [vmem:[%s236 + $0x34] sm:$0xf]
      %v349 = vld [vmem:[%s236 + $0x38] sm:$0xf]
      %v350 = vld [vmem:[%s236 + $0x3c] sm:$0xf]
      %v351 = vld [vmem:[%s236 + $0x40] sm:$0xf]
      %v352 = vld [vmem:[%s236 + $0x44] sm:$0xf]
      %v353 = vld [vmem:[%s236 + $0x48] sm:$0xf]
      %v354 = vld [vmem:[%s236 + $0x4c] sm:$0xf]
      %v355 = vld [vmem:[%s236 + $0x50] sm:$0xf]
      %v356 = vld [vmem:[%s236 + $0x54] sm:$0xf]
      %v357 = vld [vmem:[%s236 + $0x58] sm:$0xf]
      %v358 = vld [vmem:[%s236 + $0x5c] sm:$0xf]
      %v359 = vld [vmem:[%s236 + $0x60] sm:$0xf]
      %v360 = vld [vmem:[%s236 + $0x64] sm:$0xf]
      %v361 = vld [vmem:[%s236 + $0x68] sm:$0xf]
      %v362 = vld [vmem:[%s236 + $0x6c] sm:$0xf]
      %v363 = vld [vmem:[%s236 + $0x70] sm:$0xf]
      %v364 = vld [vmem:[%s236 + $0x74] sm:$0xf]
      %v365 = vld [vmem:[%s236 + $0x78] sm:$0xf]
      %v366 = vld [vmem:[%s236 + $0x7c] sm:$0xf]
      %v367 = vld [vmem:[%s245] sm:$0xf]
      %v368 = vld [vmem:[%s245 + $0x4] sm:$0xf]
      %v369 = vld [vmem:[%s245 + $0x8] sm:$0xf]
      %v370 = vld [vmem:[%s245 + $0xc] sm:$0xf]
      %v371 = vld [vmem:[%s245 + $0x10] sm:$0xf]
      %v372 = vld [vmem:[%s245 + $0x14] sm:$0xf]
      %v373 = vld [vmem:[%s245 + $0x18] sm:$0xf]
      %v374 = vld [vmem:[%s245 + $0x1c] sm:$0xf]
      %v375 = vld [vmem:[%s245 + $0x20] sm:$0xf]
      %v376 = vld [vmem:[%s245 + $0x24] sm:$0xf]
      %v377 = vld [vmem:[%s245 + $0x28] sm:$0xf]
      %v378 = vld [vmem:[%s245 + $0x2c] sm:$0xf]
      %v379 = vld [vmem:[%s245 + $0x30] sm:$0xf]
      %v380 = vld [vmem:[%s245 + $0x34] sm:$0xf]
      %v381 = vld [vmem:[%s245 + $0x38] sm:$0xf]
      %v382 = vld [vmem:[%s245 + $0x3c] sm:$0xf]
      %v415 = vunpack.c.l.b16 %v335
      %v416 = vunpack.c.l.b16 %v336
      %v417 = vunpack.c.l.b16 %v337
      %v418 = vunpack.c.l.b16 %v338
      %v419 = vunpack.c.l.b16 %v339
      %v420 = vunpack.c.l.b16 %v340
      %v421 = vunpack.c.l.b16 %v341
      %v422 = vunpack.c.l.b16 %v342
      %v423 = vunpack.c.l.b16 %v343
      %v424 = vunpack.c.l.b16 %v344
      %v425 = vunpack.c.l.b16 %v345
      %v426 = vunpack.c.l.b16 %v346
      %v427 = vunpack.c.l.b16 %v347
      %v428 = vunpack.c.l.b16 %v348
      %v429 = vunpack.c.l.b16 %v349
      %v430 = vunpack.c.l.b16 %v350
      %v431 = vunpack.c.l.b16 %v351
      %v432 = vunpack.c.l.b16 %v352
      %v433 = vunpack.c.l.b16 %v353
      %v434 = vunpack.c.l.b16 %v354
      %v435 = vunpack.c.l.b16 %v355
      %v436 = vunpack.c.l.b16 %v356
      %v437 = vunpack.c.l.b16 %v357
      %v438 = vunpack.c.l.b16 %v358
      %v439 = vunpack.c.l.b16 %v359
      %v440 = vunpack.c.l.b16 %v360
      %v441 = vunpack.c.l.b16 %v361
      %v442 = vunpack.c.l.b16 %v362
      %v443 = vunpack.c.l.b16 %v363
      %v444 = vunpack.c.l.b16 %v364
      %v445 = vunpack.c.l.b16 %v365
      %v446 = vunpack.c.l.b16 %v366
      %v447 = vpack.c.b16 %v416, %v415
      %v448 = vpack.c.b16 %v418, %v417
      %v449 = vpack.c.b16 %v420, %v419
      %v450 = vpack.c.b16 %v422, %v421
      %v451 = vpack.c.b16 %v424, %v423
      %v452 = vpack.c.b16 %v426, %v425
      %v453 = vpack.c.b16 %v428, %v427
      %v454 = vpack.c.b16 %v430, %v429
      %v455 = vpack.c.b16 %v432, %v431
      %v456 = vpack.c.b16 %v434, %v433
      %v457 = vpack.c.b16 %v436, %v435
      %v458 = vpack.c.b16 %v438, %v437
      %v459 = vpack.c.b16 %v440, %v439
      %v460 = vpack.c.b16 %v442, %v441
      %v461 = vpack.c.b16 %v444, %v443
      %v462 = vpack.c.b16 %v446, %v445
      %v495 = vunpack.c.l.b16 %v367
      %v496 = vunpack.c.l.b16 %v368
      %v497 = vunpack.c.l.b16 %v369
      %v498 = vunpack.c.l.b16 %v370
      %v499 = vunpack.c.l.b16 %v371
      %v500 = vunpack.c.l.b16 %v372
      %v501 = vunpack.c.l.b16 %v373
      %v502 = vunpack.c.l.b16 %v374
      %v503 = vunpack.c.l.b16 %v375
      %v504 = vunpack.c.l.b16 %v376
      %v505 = vunpack.c.l.b16 %v377
      %v506 = vunpack.c.l.b16 %v378
      %v507 = vunpack.c.l.b16 %v379
      %v508 = vunpack.c.l.b16 %v380
      %v509 = vunpack.c.l.b16 %v381
      %v510 = vunpack.c.l.b16 %v382
      %v511 = vpack.c.b16 %v496, %v495
      %v512 = vpack.c.b16 %v498, %v497
      %v513 = vpack.c.b16 %v500, %v499
      %v514 = vpack.c.b16 %v502, %v501
      %v515 = vpack.c.b16 %v504, %v503
      %v516 = vpack.c.b16 %v506, %v505
      %v517 = vpack.c.b16 %v508, %v507
      %v518 = vpack.c.b16 %v510, %v509
      %527 = vmatprep.subr.bf16.mxu0 0
      %528 = vmatpush1.bf16.msra.mxu0 %v518
      %529 = vmatprep.subr.bf16.mxu0 0
      %530 = vmatpush1.bf16.msra.mxu0 %v517
      %531 = vmatprep.subr.bf16.mxu0 0
      %532 = vmatpush1.bf16.msra.mxu0 %v516
      %533 = vmatprep.subr.bf16.mxu0 0
      %534 = vmatpush1.bf16.msra.mxu0 %v515
      %535 = vmatprep.subr.bf16.mxu0 0
      %536 = vmatpush1.bf16.msra.mxu0 %v514
      %537 = vmatprep.subr.bf16.mxu0 0
      %538 = vmatpush1.bf16.msra.mxu0 %v513
      %539 = vmatprep.subr.bf16.mxu0 0
      %540 = vmatpush1.bf16.msra.mxu0 %v512
      %541 = vmatprep.subr.bf16.mxu0 0
      %542 = vmatpush1.bf16.msra.mxu0 %v511
      %543 = vmatprep.subr.bf16.mxu0 0
      %544 = vmatpush2.bf16.msra.mxu0 0
      %545 = vmatprep.subr.bf16.mxu0 0
      %546 = vmatpush2.bf16.msra.mxu0 0
      %547 = vmatprep.subr.bf16.mxu0 0
      %548 = vmatpush2.bf16.msra.mxu0 0
      %549 = vmatprep.subr.bf16.mxu0 0
      %550 = vmatpush2.bf16.msra.mxu0 0
      %551 = vmatprep.subr.bf16.mxu0 0
      %552 = vmatpush2.bf16.msra.mxu0 0
      %553 = vmatprep.subr.bf16.mxu0 0
      %554 = vmatpush2.bf16.msra.mxu0 0
      %555 = vmatprep.subr.bf16.mxu0 0
      %556 = vmatpush2.bf16.msra.mxu0 0
      %557 = vmatprep.subr.bf16.mxu0 0
      %558 = vmatpush2.bf16.msra.mxu0 0
      %559 = vmatprep.mubr.bf16.mxu0 0
      %560 = vmatmul.mubr.bf16.gmra.mxu0 %v447
      %v561 = vpop.f32.mrf.mxu0
      %v562 = vadd.f32 0.0, %v561
      %v563 = vpop.f32.mrf.mxu0
      %v564 = vpop.f32.mrf.mxu0
      %v565 = vadd.f32 0.0, %v564
      %v566 = vpop.f32.mrf.mxu0
      %567 = vmatprep.mubr.bf16.mxu0 0
      %568 = vmatmul.mubr.bf16.gmra.mxu0 %v448
      %v569 = vpop.f32.mrf.mxu0
      %v570 = vadd.f32 0.0, %v569
      %v571 = vpop.f32.mrf.mxu0
      %v572 = vpop.f32.mrf.mxu0
      %v573 = vadd.f32 0.0, %v572
      %v574 = vpop.f32.mrf.mxu0
      %575 = vmatprep.mubr.bf16.mxu0 0
      %576 = vmatmul.mubr.bf16.gmra.mxu0 %v449
      %v577 = vpop.f32.mrf.mxu0
      %v578 = vadd.f32 0.0, %v577
      %v579 = vpop.f32.mrf.mxu0
      %v580 = vpop.f32.mrf.mxu0
      %v581 = vadd.f32 0.0, %v580
      %v582 = vpop.f32.mrf.mxu0
      %583 = vmatprep.mubr.bf16.mxu0 0
      %584 = vmatmul.mubr.bf16.gmra.mxu0 %v450
      %v585 = vpop.f32.mrf.mxu0
      %v586 = vadd.f32 0.0, %v585
      %v587 = vpop.f32.mrf.mxu0
      %v588 = vpop.f32.mrf.mxu0
      %v589 = vadd.f32 0.0, %v588
      %v590 = vpop.f32.mrf.mxu0
      %591 = vmatprep.mubr.bf16.mxu0 0
      %592 = vmatmul.mubr.bf16.gmra.mxu0 %v451
      %v593 = vpop.f32.mrf.mxu0
      %v594 = vadd.f32 0.0, %v593
      %v595 = vpop.f32.mrf.mxu0
      %v596 = vpop.f32.mrf.mxu0
      %v597 = vadd.f32 0.0, %v596
      %v598 = vpop.f32.mrf.mxu0
      %599 = vmatprep.mubr.bf16.mxu0 0
      %600 = vmatmul.mubr.bf16.gmra.mxu0 %v452
      %v601 = vpop.f32.mrf.mxu0
      %v602 = vadd.f32 0.0, %v601
      %v603 = vpop.f32.mrf.mxu0
      %v604 = vpop.f32.mrf.mxu0
      %v605 = vadd.f32 0.0, %v604
      %v606 = vpop.f32.mrf.mxu0
      %607 = vmatprep.mubr.bf16.mxu0 0
      %608 = vmatmul.mubr.bf16.gmra.mxu0 %v453
      %v609 = vpop.f32.mrf.mxu0
      %v610 = vadd.f32 0.0, %v609
      %v611 = vpop.f32.mrf.mxu0
      %v612 = vpop.f32.mrf.mxu0
      %v613 = vadd.f32 0.0, %v612
      %v614 = vpop.f32.mrf.mxu0
      %615 = vmatprep.mubr.bf16.mxu0 0
      %616 = vmatmul.mubr.bf16.gmra.mxu0 %v454
      %v617 = vpop.f32.mrf.mxu0
      %v618 = vadd.f32 0.0, %v617
      %v619 = vpop.f32.mrf.mxu0
      %v620 = vpop.f32.mrf.mxu0
      %v621 = vadd.f32 0.0, %v620
      %v622 = vpop.f32.mrf.mxu0
      %623 = vmatprep.mubr.bf16.mxu0 0
      %624 = vmatmul.mubr.bf16.gmra.mxu0 %v455
      %v625 = vpop.f32.mrf.mxu0
      %v626 = vadd.f32 0.0, %v625
      %v627 = vpop.f32.mrf.mxu0
      %v628 = vpop.f32.mrf.mxu0
      %v629 = vadd.f32 0.0, %v628
      %v630 = vpop.f32.mrf.mxu0
      %631 = vmatprep.mubr.bf16.mxu0 0
      %632 = vmatmul.mubr.bf16.gmra.mxu0 %v456
      %v633 = vpop.f32.mrf.mxu0
      %v634 = vadd.f32 0.0, %v633
      %v635 = vpop.f32.mrf.mxu0
      %v636 = vpop.f32.mrf.mxu0
      %v637 = vadd.f32 0.0, %v636
      %v638 = vpop.f32.mrf.mxu0
      %639 = vmatprep.mubr.bf16.mxu0 0
      %640 = vmatmul.mubr.bf16.gmra.mxu0 %v457
      %v641 = vpop.f32.mrf.mxu0
      %v642 = vadd.f32 0.0, %v641
      %v643 = vpop.f32.mrf.mxu0
      %v644 = vpop.f32.mrf.mxu0
      %v645 = vadd.f32 0.0, %v644
      %v646 = vpop.f32.mrf.mxu0
      %647 = vmatprep.mubr.bf16.mxu0 0
      %648 = vmatmul.mubr.bf16.gmra.mxu0 %v458
      %v649 = vpop.f32.mrf.mxu0
      %v650 = vadd.f32 0.0, %v649
      %v651 = vpop.f32.mrf.mxu0
      %v652 = vpop.f32.mrf.mxu0
      %v653 = vadd.f32 0.0, %v652
      %v654 = vpop.f32.mrf.mxu0
      %655 = vmatprep.mubr.bf16.mxu0 0
      %656 = vmatmul.mubr.bf16.gmra.mxu0 %v459
      %v657 = vpop.f32.mrf.mxu0
      %v658 = vadd.f32 0.0, %v657
      %v659 = vpop.f32.mrf.mxu0
      %v660 = vpop.f32.mrf.mxu0
      %v661 = vadd.f32 0.0, %v660
      %v662 = vpop.f32.mrf.mxu0
      %663 = vmatprep.mubr.bf16.mxu0 0
      %664 = vmatmul.mubr.bf16.gmra.mxu0 %v460
      %v665 = vpop.f32.mrf.mxu0
      %v666 = vadd.f32 0.0, %v665
      %v667 = vpop.f32.mrf.mxu0
      %v668 = vpop.f32.mrf.mxu0
      %v669 = vadd.f32 0.0, %v668
      %v670 = vpop.f32.mrf.mxu0
      %671 = vmatprep.mubr.bf16.mxu0 0
      %672 = vmatmul.mubr.bf16.gmra.mxu0 %v461
      %v673 = vpop.f32.mrf.mxu0
      %v674 = vadd.f32 0.0, %v673
      %v675 = vpop.f32.mrf.mxu0
      %v676 = vpop.f32.mrf.mxu0
      %v677 = vadd.f32 0.0, %v676
      %v678 = vpop.f32.mrf.mxu0
      %679 = vmatprep.mubr.bf16.mxu0 0
      %680 = vmatmul.mubr.bf16.gmra.mxu0 %v462
      %v681 = vpop.f32.mrf.mxu0
      %v682 = vadd.f32 0.0, %v681
      %v683 = vpop.f32.mrf.mxu0
      %v684 = vpop.f32.mrf.mxu0
      %v685 = vadd.f32 0.0, %v684
      %v686 = vpop.f32.mrf.mxu0
      %687 = vdwg.mxu0
      %v688 = vadd.f32 %v303, %v562
      %v689 = vadd.f32 %v304, %v565
      %v690 = vadd.f32 %v305, %v570
      %v691 = vadd.f32 %v306, %v573
      %v692 = vadd.f32 %v307, %v578
      %v693 = vadd.f32 %v308, %v581
      %v694 = vadd.f32 %v309, %v586
      %v695 = vadd.f32 %v310, %v589
      %v696 = vadd.f32 %v311, %v594
      %v697 = vadd.f32 %v312, %v597
      %v698 = vadd.f32 %v313, %v602
      %v699 = vadd.f32 %v314, %v605
      %v700 = vadd.f32 %v315, %v610
      %v701 = vadd.f32 %v316, %v613
      %v702 = vadd.f32 %v317, %v618
      %v703 = vadd.f32 %v318, %v621
      %v704 = vadd.f32 %v319, %v626
      %v705 = vadd.f32 %v320, %v629
      %v706 = vadd.f32 %v321, %v634
      %v707 = vadd.f32 %v322, %v637
      %v708 = vadd.f32 %v323, %v642
      %v709 = vadd.f32 %v324, %v645
      %v710 = vadd.f32 %v325, %v650
      %v711 = vadd.f32 %v326, %v653
      %v712 = vadd.f32 %v327, %v658
      %v713 = vadd.f32 %v328, %v661
      %v714 = vadd.f32 %v329, %v666
      %v715 = vadd.f32 %v330, %v669
      %v716 = vadd.f32 %v331, %v674
      %v717 = vadd.f32 %v332, %v677
      %v718 = vadd.f32 %v333, %v682
      %v719 = vadd.f32 %v334, %v685
      %720 = vst [vmem:[#allocation2] sm:$0xff] %v688
      %721 = vst [vmem:[#allocation2 + $0x8] sm:$0xff] %v689
      %722 = vst [vmem:[#allocation2 + $0x10] sm:$0xff] %v690
      %723 = vst [vmem:[#allocation2 + $0x18] sm:$0xff] %v691
      %724 = vst [vmem:[#allocation2 + $0x20] sm:$0xff] %v692
      %725 = vst [vmem:[#allocation2 + $0x28] sm:$0xff] %v693
      %726 = vst [vmem:[#allocation2 + $0x30] sm:$0xff] %v694
      %727 = vst [vmem:[#allocation2 + $0x38] sm:$0xff] %v695
      %728 = vst [vmem:[#allocation2 + $0x40] sm:$0xff] %v696
      %729 = vst [vmem:[#allocation2 + $0x48] sm:$0xff] %v697
      %730 = vst [vmem:[#allocation2 + $0x50] sm:$0xff] %v698
      %731 = vst [vmem:[#allocation2 + $0x58] sm:$0xff] %v699
      %732 = vst [vmem:[#allocation2 + $0x60] sm:$0xff] %v700
      %733 = vst [vmem:[#allocation2 + $0x68] sm:$0xff] %v701
      %734 = vst [vmem:[#allocation2 + $0x70] sm:$0xff] %v702
      %735 = vst [vmem:[#allocation2 + $0x78] sm:$0xff] %v703
      %736 = vst [vmem:[#allocation2 + $0x80] sm:$0xff] %v704
      %737 = vst [vmem:[#allocation2 + $0x88] sm:$0xff] %v705
      %738 = vst [vmem:[#allocation2 + $0x90] sm:$0xff] %v706
      %739 = vst [vmem:[#allocation2 + $0x98] sm:$0xff] %v707
      %740 = vst [vmem:[#allocation2 + $0xa0] sm:$0xff] %v708
      %741 = vst [vmem:[#allocation2 + $0xa8] sm:$0xff] %v709
      %742 = vst [vmem:[#allocation2 + $0xb0] sm:$0xff] %v710
      %743 = vst [vmem:[#allocation2 + $0xb8] sm:$0xff] %v711
      %744 = vst [vmem:[#allocation2 + $0xc0] sm:$0xff] %v712
      %745 = vst [vmem:[#allocation2 + $0xc8] sm:$0xff] %v713
      %746 = vst [vmem:[#allocation2 + $0xd0] sm:$0xff] %v714
      %747 = vst [vmem:[#allocation2 + $0xd8] sm:$0xff] %v715
      %748 = vst [vmem:[#allocation2 + $0xe0] sm:$0xff] %v716
      %749 = vst [vmem:[#allocation2 + $0xe8] sm:$0xff] %v717
      %750 = vst [vmem:[#allocation2 + $0xf0] sm:$0xff] %v718
      %751 = vst [vmem:[#allocation2 + $0xf8] sm:$0xff] %v719
      // Predicated region
      $region37: #{discriminator_forward.8} parent=31 // pred_check
        %p752 = pneg %p260
      $region38: #{discriminator_forward.8} parent=31 // pred_check_branch
        %754 = sbr.rel (%p752) target = $region40
      $region39: #{discriminator_forward.8} parent=31 // pred_region
        %v755 = vld [vmem:[#allocation2] sm:$0xff]
        %v756 = vld [vmem:[#allocation2 + $0x8] sm:$0xff]
        %v757 = vld [vmem:[#allocation2 + $0x10] sm:$0xff]
        %v758 = vld [vmem:[#allocation2 + $0x18] sm:$0xff]
        %v759 = vld [vmem:[#allocation2 + $0x20] sm:$0xff]
        %v760 = vld [vmem:[#allocation2 + $0x28] sm:$0xff]
        %v761 = vld [vmem:[#allocation2 + $0x30] sm:$0xff]
        %v762 = vld [vmem:[#allocation2 + $0x38] sm:$0xff]
        %v763 = vld [vmem:[#allocation2 + $0x40] sm:$0xff]
        %v764 = vld [vmem:[#allocation2 + $0x48] sm:$0xff]
        %v765 = vld [vmem:[#allocation2 + $0x50] sm:$0xff]
        %v766 = vld [vmem:[#allocation2 + $0x58] sm:$0xff]
        %v767 = vld [vmem:[#allocation2 + $0x60] sm:$0xff]
        %v768 = vld [vmem:[#allocation2 + $0x68] sm:$0xff]
        %v769 = vld [vmem:[#allocation2 + $0x70] sm:$0xff]
        %v770 = vld [vmem:[#allocation2 + $0x78] sm:$0xff]
        %v771 = vld [vmem:[#allocation2 + $0x80] sm:$0xff]
        %v772 = vld [vmem:[#allocation2 + $0x88] sm:$0xff]
        %v773 = vld [vmem:[#allocation2 + $0x90] sm:$0xff]
        %v774 = vld [vmem:[#allocation2 + $0x98] sm:$0xff]
        %v775 = vld [vmem:[#allocation2 + $0xa0] sm:$0xff]
        %v776 = vld [vmem:[#allocation2 + $0xa8] sm:$0xff]
        %v777 = vld [vmem:[#allocation2 + $0xb0] sm:$0xff]
        %v778 = vld [vmem:[#allocation2 + $0xb8] sm:$0xff]
        %v779 = vld [vmem:[#allocation2 + $0xc0] sm:$0xff]
        %v780 = vld [vmem:[#allocation2 + $0xc8] sm:$0xff]
        %v781 = vld [vmem:[#allocation2 + $0xd0] sm:$0xff]
        %v782 = vld [vmem:[#allocation2 + $0xd8] sm:$0xff]
        %v783 = vld [vmem:[#allocation2 + $0xe0] sm:$0xff]
        %v784 = vld [vmem:[#allocation2 + $0xe8] sm:$0xff]
        %v785 = vld [vmem:[#allocation2 + $0xf0] sm:$0xff]
        %v786 = vld [vmem:[#allocation2 + $0xf8] sm:$0xff]
        %vm787 = vcmp.ge.f32.partialorder %v755, 0.0
        %vm788 = vcmp.ge.f32.partialorder %v756, 0.0
        %vm789 = vcmp.ge.f32.partialorder %v757, 0.0
        %vm790 = vcmp.ge.f32.partialorder %v758, 0.0
        %vm791 = vcmp.ge.f32.partialorder %v759, 0.0
        %vm792 = vcmp.ge.f32.partialorder %v760, 0.0
        %vm793 = vcmp.ge.f32.partialorder %v761, 0.0
        %vm794 = vcmp.ge.f32.partialorder %v762, 0.0
        %vm795 = vcmp.ge.f32.partialorder %v763, 0.0
        %vm796 = vcmp.ge.f32.partialorder %v764, 0.0
        %vm797 = vcmp.ge.f32.partialorder %v765, 0.0
        %vm798 = vcmp.ge.f32.partialorder %v766, 0.0
        %vm799 = vcmp.ge.f32.partialorder %v767, 0.0
        %vm800 = vcmp.ge.f32.partialorder %v768, 0.0
        %vm801 = vcmp.ge.f32.partialorder %v769, 0.0
        %vm802 = vcmp.ge.f32.partialorder %v770, 0.0
        %vm803 = vcmp.ge.f32.partialorder %v771, 0.0
        %vm804 = vcmp.ge.f32.partialorder %v772, 0.0
        %vm805 = vcmp.ge.f32.partialorder %v773, 0.0
        %vm806 = vcmp.ge.f32.partialorder %v774, 0.0
        %vm807 = vcmp.ge.f32.partialorder %v775, 0.0
        %vm808 = vcmp.ge.f32.partialorder %v776, 0.0
        %vm809 = vcmp.ge.f32.partialorder %v777, 0.0
        %vm810 = vcmp.ge.f32.partialorder %v778, 0.0
        %vm811 = vcmp.ge.f32.partialorder %v779, 0.0
        %vm812 = vcmp.ge.f32.partialorder %v780, 0.0
        %vm813 = vcmp.ge.f32.partialorder %v781, 0.0
        %vm814 = vcmp.ge.f32.partialorder %v782, 0.0
        %vm815 = vcmp.ge.f32.partialorder %v783, 0.0
        %vm816 = vcmp.ge.f32.partialorder %v784, 0.0
        %vm817 = vcmp.ge.f32.partialorder %v785, 0.0
        %vm818 = vcmp.ge.f32.partialorder %v786, 0.0
        %v819 = vmul.f32 %v755, 0.2
        %v820 = vmul.f32 %v756, 0.2
        %v821 = vmul.f32 %v757, 0.2
        %v822 = vmul.f32 %v758, 0.2
        %v823 = vmul.f32 %v759, 0.2
        %v824 = vmul.f32 %v760, 0.2
        %v825 = vmul.f32 %v761, 0.2
        %v826 = vmul.f32 %v762, 0.2
        %v827 = vmul.f32 %v763, 0.2
        %v828 = vmul.f32 %v764, 0.2
        %v829 = vmul.f32 %v765, 0.2
        %v830 = vmul.f32 %v766, 0.2
        %v831 = vmul.f32 %v767, 0.2
        %v832 = vmul.f32 %v768, 0.2
        %v833 = vmul.f32 %v769, 0.2
        %v834 = vmul.f32 %v770, 0.2
        %v835 = vmul.f32 %v771, 0.2
        %v836 = vmul.f32 %v772, 0.2
        %v837 = vmul.f32 %v773, 0.2
        %v838 = vmul.f32 %v774, 0.2
        %v839 = vmul.f32 %v775, 0.2
        %v840 = vmul.f32 %v776, 0.2
        %v841 = vmul.f32 %v777, 0.2
        %v842 = vmul.f32 %v778, 0.2
        %v843 = vmul.f32 %v779, 0.2
        %v844 = vmul.f32 %v780, 0.2
        %v845 = vmul.f32 %v781, 0.2
        %v846 = vmul.f32 %v782, 0.2
        %v847 = vmul.f32 %v783, 0.2
        %v848 = vmul.f32 %v784, 0.2
        %v849 = vmul.f32 %v785, 0.2
        %v850 = vmul.f32 %v786, 0.2
        %v851 = vsel %vm787, %v755, %v819
        %v852 = vsel %vm788, %v756, %v820
        %v853 = vsel %vm789, %v757, %v821
        %v854 = vsel %vm790, %v758, %v822
        %v855 = vsel %vm791, %v759, %v823
        %v856 = vsel %vm792, %v760, %v824
        %v857 = vsel %vm793, %v761, %v825
        %v858 = vsel %vm794, %v762, %v826
        %v859 = vsel %vm795, %v763, %v827
        %v860 = vsel %vm796, %v764, %v828
        %v861 = vsel %vm797, %v765, %v829
        %v862 = vsel %vm798, %v766, %v830
        %v863 = vsel %vm799, %v767, %v831
        %v864 = vsel %vm800, %v768, %v832
        %v865 = vsel %vm801, %v769, %v833
        %v866 = vsel %vm802, %v770, %v834
        %v867 = vsel %vm803, %v771, %v835
        %v868 = vsel %vm804, %v772, %v836
        %v869 = vsel %vm805, %v773, %v837
        %v870 = vsel %vm806, %v774, %v838
        %v871 = vsel %vm807, %v775, %v839
        %v872 = vsel %vm808, %v776, %v840
        %v873 = vsel %vm809, %v777, %v841
        %v874 = vsel %vm810, %v778, %v842
        %v875 = vsel %vm811, %v779, %v843
        %v876 = vsel %vm812, %v780, %v844
        %v877 = vsel %vm813, %v781, %v845
        %v878 = vsel %vm814, %v782, %v846
        %v879 = vsel %vm815, %v783, %v847
        %v880 = vsel %vm816, %v784, %v848
        %v881 = vsel %vm817, %v785, %v849
        %v882 = vsel %vm818, %v786, %v850
        %883 = vst [vmem:[%s257] sm:$0xff] %v851
        %884 = vst [vmem:[%s257 + $0x8] sm:$0xff] %v852
        %885 = vst [vmem:[%s257 + $0x10] sm:$0xff] %v853
        %886 = vst [vmem:[%s257 + $0x18] sm:$0xff] %v854
        %887 = vst [vmem:[%s257 + $0x20] sm:$0xff] %v855
        %888 = vst [vmem:[%s257 + $0x28] sm:$0xff] %v856
        %889 = vst [vmem:[%s257 + $0x30] sm:$0xff] %v857
        %890 = vst [vmem:[%s257 + $0x38] sm:$0xff] %v858
        %891 = vst [vmem:[%s257 + $0x40] sm:$0xff] %v859
        %892 = vst [vmem:[%s257 + $0x48] sm:$0xff] %v860
        %893 = vst [vmem:[%s257 + $0x50] sm:$0xff] %v861
        %894 = vst [vmem:[%s257 + $0x58] sm:$0xff] %v862
        %895 = vst [vmem:[%s257 + $0x60] sm:$0xff] %v863
        %896 = vst [vmem:[%s257 + $0x68] sm:$0xff] %v864
        %897 = vst [vmem:[%s257 + $0x70] sm:$0xff] %v865
        %898 = vst [vmem:[%s257 + $0x78] sm:$0xff] %v866
        %899 = vst [vmem:[%s257 + $0x80] sm:$0xff] %v867
        %900 = vst [vmem:[%s257 + $0x88] sm:$0xff] %v868
        %901 = vst [vmem:[%s257 + $0x90] sm:$0xff] %v869
        %902 = vst [vmem:[%s257 + $0x98] sm:$0xff] %v870
        %903 = vst [vmem:[%s257 + $0xa0] sm:$0xff] %v871
        %904 = vst [vmem:[%s257 + $0xa8] sm:$0xff] %v872
        %905 = vst [vmem:[%s257 + $0xb0] sm:$0xff] %v873
        %906 = vst [vmem:[%s257 + $0xb8] sm:$0xff] %v874
        %907 = vst [vmem:[%s257 + $0xc0] sm:$0xff] %v875
        %908 = vst [vmem:[%s257 + $0xc8] sm:$0xff] %v876
        %909 = vst [vmem:[%s257 + $0xd0] sm:$0xff] %v877
        %910 = vst [vmem:[%s257 + $0xd8] sm:$0xff] %v878
        %911 = vst [vmem:[%s257 + $0xe0] sm:$0xff] %v879
        %912 = vst [vmem:[%s257 + $0xe8] sm:$0xff] %v880
        %913 = vst [vmem:[%s257 + $0xf0] sm:$0xff] %v881
        %914 = vst [vmem:[%s257 + $0xf8] sm:$0xff] %v882
      $region40: #{discriminator_forward.8} parent=31 // pred_fallthru
        _
      %s915 = smul.u32 32, %s19
      %p916 = scmp.lt.s32.totalorder %s915, 63
      %s917 = scalar_select %p916, %s915, 63
      %p918 = scmp.lt.s32.totalorder %s20, 0
      %s919 = scalar_select %p918, %s20, 0
      %s920 = sadd.s32 %s919, %s917
      %s921 = smul.addr %s920, 8
      %s922 = scalar_lea.vmem %s3, %s921
      // Predicated region
      $region41: #{discriminator_forward.8} parent=31 // pred_check
        %p923 = pneg %p135
      $region42: #{discriminator_forward.8} parent=31 // pred_check_branch
        %925 = sbr.rel (%p923) target = $region44
      $region43: #{discriminator_forward.8} parent=31 // pred_region
        %s926 = smul.u32 32, %s19
      $region44: #{discriminator_forward.8} parent=31 // pred_fallthru
        _
    $region32: #{discriminator_forward.8} parent=5 // pred_fallthru
      _
    %p927 = scmp.le.s32.totalorder 2, %s9
    // Predicated region
    $region45: #{discriminator_forward.8} parent=5 // pred_check
      %p928 = pneg %p927
    $region46: #{discriminator_forward.8} parent=5 // pred_check_branch
      %930 = sbr.rel (%p928) target = $region48
    $region47: #{discriminator_forward.8} parent=5 // pred_region
      %s931 = ssub.s32 %s9, 2
      // Predicated region
      $region49: #{discriminator_forward.8} parent=47 // pred_check
        %p932 = pneg %p141
      $region50: #{discriminator_forward.8} parent=47 // pred_check_branch
        %934 = sbr.rel (%p932) target = $region52
      $region51: #{discriminator_forward.8} parent=47 // pred_region
        %s935 = smul.u32 32, %s22
        %p936 = scmp.lt.s32.totalorder %s935, 63
        %s937 = scalar_select %p936, %s935, 63
        %p938 = scmp.lt.s32.totalorder %s23, 0
        %s939 = scalar_select %p938, %s23, 0
        %s940 = sadd.s32 %s939, %s937
        %s941 = smul.addr %s940, 8
        %s942 = scalar_lea.vmem %s3, %s941
      $region52: #{discriminator_forward.8} parent=47 // pred_fallthru
        _
    $region48: #{discriminator_forward.8} parent=5 // pred_fallthru
      _
  $region6: #{discriminator_forward.8} parent=0 // loop_footer
    %s13 = sadd.s32 1, %s9
  $region7: #{discriminator_forward.8} parent=0 // loop_footer_branch
    %8 = sbr.rel target = $region3
  $region8: #{discriminator_forward.8} parent=0 // loop_exit
    _

// kernel: discriminator_forward.9
$region0: #{discriminator_forward.9}
  #allocation0 [shape = 'u32[]', space=smem, size = 0x4, offset = 0x4, fixed_abs, tag = 'smem constant byte address 0x4 - core index']
  #allocation1 [shape = 'u32[144,128]{1,0:T(1,128)}', space=vmem, size = 0x12000, scoped, tag = 'internal scratch']
  #allocation2 [shape = 'f32[128,128]{1,0:T(8,128)}', space=vmem, size = 0x10000, scoped, tag = 'scratch operand']
  %s0 = inlined_call_operand.vmem [shape: bf16[128,1024], index: 0, kind: input, shape index: {}]
  %s1 = inlined_call_operand.vmem [shape: bf16[1024,128], index: 1, kind: input, shape index: {}]
  %s2 = inlined_call_operand.vmem [shape: f32[1,128], index: 2, kind: input, shape index: {}]
  %s3 = inlined_call_operand.vmem [shape: f32[128,128], index: 3, kind: output, shape index: {}]
  %s4 = sld [smem:[#allocation0]]
  $region76: #{discriminator_forward.9} parent=0
    _
  %s6 = ssub.s32 1, %s4
  %s7 = scalar_select 0, %s6, %s4
  $region1: #{discriminator_forward.9} parent=0
    #allocation3 [shape = 'u8[262144]{0}', space=vmem, size = 0x40000, scoped, tag = 'input window, operand 0']
    loop: start=0, step=1, limit=4
    $region2: #{discriminator_forward.9} parent=1 // loop_pre_header
      _
    $region3: #{discriminator_forward.9} parent=1 // loop_header
      %s9 = sphi 0, %s13
      %p10 = scmp.ge.s32.totalorder %s9, 4
      %s16 = sphi 0, %s35
      %s17 = sphi 0, %s31
      %s18 = sphi 0, %s27
      %s19 = sphi 0, %s16
      %s20 = sphi 0, %s17
      %s21 = sphi 0, %s18
      %s22 = sphi 0, %s19
      %s23 = sphi 0, %s20
      %s24 = sphi 0, %s21
      %s40 = sphi 0, %s42
      %s43 = sphi 0, %s40
      %s44 = sphi 0, %s43
      %s60 = sphi 0, %s44
      %s68 = sphi 0, %s70
      %s71 = sphi 0, %s68
      %s72 = sphi 0, %s71
      %s88 = sphi 0, %s72
      %s94 = sphi 0, %s96
      %s97 = sphi 0, %s94
      %s98 = sphi 0, %s97
      %s114 = sphi 0, %s98
      %s122 = sphi 0, %s124
      %s125 = sphi 0, %s122
      %s126 = sphi 0, %s125
      %s142 = sphi 0, %s126
    $region4: #{discriminator_forward.9} parent=1 // loop_header_branch
      %12 = sbr.rel (%p10) target = $region8
    $region5: #{discriminator_forward.9} parent=1 // loop_body
      %s14 = ssub.s32 %s9, 1
      %s15 = ssub.s32 %s9, 2
      %s25 = sadd.s32 1, %s18
      %p26 = scmp.ge.s32.totalorder %s25, 2
      %s27 = scalar_select %p26, 0, %s25
      %s28 = sadd.s32 1, %s17
      %s29 = scalar_select %p26, %s28, %s17
      %p30 = scmp.ge.s32.totalorder %s29, 1
      %s31 = scalar_select %p30, 0, %s29
      %s32 = sadd.s32 1, %s16
      %s33 = scalar_select %p30, %s32, %s16
      %p34 = scmp.ge.s32.totalorder %s33, 1
      %s35 = scalar_select %p34, 0, %s33
      %s36 = ssub.s32 %s16, %s35
      %s37 = ssub.s32 %s18, %s27
      %s38 = sor.u32 %s36, %s37
      %p39 = scmp.eq.s32.totalorder %s38, 0
      %s41 = sadd.s32 %s40, 1
      %s42 = scalar_select %p39, %s40, %s41
      %p45 = pneg %p39
      %p46 = scmp.eq.s32.totalorder %s9, 1
      %p47 = por %p45, %p46
      %p48 = scmp.ne.s32.totalorder %s40, %s43
      %p49 = scmp.eq.s32.totalorder %s9, 0
      %p50 = por %p48, %p49
      %p51 = scmp.ne.s32.totalorder %s40, %s43
      %p52 = scmp.eq.s32.totalorder %s14, 1
      %p53 = por %p51, %p52
      %p54 = scmp.ne.s32.totalorder %s43, %s44
      %p55 = scmp.eq.s32.totalorder %s14, 0
      %p56 = por %p54, %p55
      %p57 = scmp.ne.s32.totalorder %s43, %s44
      %p58 = scmp.eq.s32.totalorder %s15, 1
      %p59 = por %p57, %p58
      %p61 = scmp.ne.s32.totalorder %s44, %s60
      %p62 = scmp.eq.s32.totalorder %s15, 0
      %p63 = por %p61, %p62
      %s64 = ssub.s32 %s18, %s27
      %s65 = ssub.s32 %s17, %s31
      %s66 = sor.u32 %s64, %s65
      %p67 = scmp.eq.s32.totalorder %s66, 0
      %s69 = sadd.s32 %s68, 1
      %s70 = scalar_select %p67, %s68, %s69
      %p73 = pneg %p67
      %p74 = scmp.eq.s32.totalorder %s9, 1
      %p75 = por %p73, %p74
      %p76 = scmp.ne.s32.totalorder %s68, %s71
      %p77 = scmp.eq.s32.totalorder %s9, 0
      %p78 = por %p76, %p77
      %p79 = scmp.ne.s32.totalorder %s68, %s71
      %p80 = scmp.eq.s32.totalorder %s14, 1
      %p81 = por %p79, %p80
      %p82 = scmp.ne.s32.totalorder %s71, %s72
      %p83 = scmp.eq.s32.totalorder %s14, 0
      %p84 = por %p82, %p83
      %p85 = scmp.ne.s32.totalorder %s71, %s72
      %p86 = scmp.eq.s32.totalorder %s15, 1
      %p87 = por %p85, %p86
      %p89 = scmp.ne.s32.totalorder %s72, %s88
      %p90 = scmp.eq.s32.totalorder %s15, 0
      %p91 = por %p89, %p90
      %s92 = ssub.s32 %s17, %s31
      %p93 = scmp.eq.s32.totalorder %s92, 0
      %s95 = sadd.s32 %s94, 1
      %s96 = scalar_select %p93, %s94, %s95
      %p99 = pneg %p93
      %p100 = scmp.eq.s32.totalorder %s9, 1
      %p101 = por %p99, %p100
      %p102 = scmp.ne.s32.totalorder %s94, %s97
      %p103 = scmp.eq.s32.totalorder %s9, 0
      %p104 = por %p102, %p103
      %p105 = scmp.ne.s32.totalorder %s94, %s97
      %p106 = scmp.eq.s32.totalorder %s14, 1
      %p107 = por %p105, %p106
      %p108 = scmp.ne.s32.totalorder %s97, %s98
      %p109 = scmp.eq.s32.totalorder %s14, 0
      %p110 = por %p108, %p109
      %p111 = scmp.ne.s32.totalorder %s97, %s98
      %p112 = scmp.eq.s32.totalorder %s15, 1
      %p113 = por %p111, %p112
      %p115 = scmp.ne.s32.totalorder %s98, %s114
      %p116 = scmp.eq.s32.totalorder %s15, 0
      %p117 = por %p115, %p116
      %s118 = ssub.s32 %s16, %s35
      %s119 = ssub.s32 %s17, %s31
      %s120 = sor.u32 %s118, %s119
      %p121 = scmp.eq.s32.totalorder %s120, 0
      %s123 = sadd.s32 %s122, 1
      %s124 = scalar_select %p121, %s122, %s123
      %p127 = pneg %p121
      %p128 = scmp.eq.s32.totalorder %s9, 1
      %p129 = por %p127, %p128
      %p130 = scmp.ne.s32.totalorder %s122, %s125
      %p131 = scmp.eq.s32.totalorder %s9, 0
      %p132 = por %p130, %p131
      %p133 = scmp.ne.s32.totalorder %s122, %s125
      %p134 = scmp.eq.s32.totalorder %s14, 1
      %p135 = por %p133, %p134
      %p136 = scmp.ne.s32.totalorder %s125, %s126
      %p137 = scmp.eq.s32.totalorder %s14, 0
      %p138 = por %p136, %p137
      %p139 = scmp.ne.s32.totalorder %s125, %s126
      %p140 = scmp.eq.s32.totalorder %s15, 1
      %p141 = por %p139, %p140
      %p143 = scmp.ne.s32.totalorder %s126, %s142
      %p144 = scmp.eq.s32.totalorder %s15, 0
      %p145 = por %p143, %p144
      %p146 = scmp.le.s32.totalorder 1, %s9
      %p147 = scmp.lt.s32.totalorder %s9, 3
      %p148 = pnand %p146, %p147
      %p149 = pneg %p148
      // Predicated region
      $region9: #{discriminator_forward.9} parent=5 // pred_check
        _
      $region10: #{discriminator_forward.9} parent=5 // pred_check_branch
        %151 = sbr.rel (%p148) target = $region12
      $region11: #{discriminator_forward.9} parent=5 // pred_region
        %s152 = ssub.s32 %s9, 1
        // Predicated region
        $region13: #{discriminator_forward.9} parent=11 // pred_check
          %p153 = pneg %p110
        $region14: #{discriminator_forward.9} parent=11 // pred_check_branch
          %155 = sbr.rel (%p153) target = $region16
        $region15: #{discriminator_forward.9} parent=11 // pred_region
          %p156 = scmp.lt.s32.totalorder %s20, 0
          %s157 = scalar_select %p156, %s20, 0
          %s158 = scalar_lea.vmem %s2, %s157
        $region16: #{discriminator_forward.9} parent=11 // pred_fallthru
          _
      $region12: #{discriminator_forward.9} parent=5 // pred_fallthru
        _
      %p159 = scmp.lt.s32.totalorder %s9, 2
      // Predicated region
      $region17: #{discriminator_forward.9} parent=5 // pred_check
        %p160 = pneg %p159
      $region18: #{discriminator_forward.9} parent=5 // pred_check_branch
        %162 = sbr.rel (%p160) target = $region20
      $region19: #{discriminator_forward.9} parent=5 // pred_region
        // Predicated region
        $region21: #{discriminator_forward.9} parent=19 // pred_check
          %p163 = pneg %p50
        $region22: #{discriminator_forward.9} parent=19 // pred_check_branch
          %165 = sbr.rel (%p163) target = $region24
        $region23: #{discriminator_forward.9} parent=19 // pred_region
          %s166 = sand.u32 %s40, 1
          %s167 = sand.u32 %s40, 1
          %s168 = smul.addr %s167, 256
          %s169 = scalar_lea.vmem [#allocation3], %s168
          %s170 = smul.u32 16, %s16
          %s171 = smul.u32 4, %s18
          %s172 = smul.addr %s170, 8
          %s173 = sadd.s32 %s171, %s172
          %s174 = smul.addr %s173, 4
          %s175 = scalar_lea.vmem %s0, %s174
          // Predicated region
          $region25: #{discriminator_forward.9} parent=23 // pred_check
            _
          $region26: #{discriminator_forward.9} parent=23 // pred_check_branch
            %177 = sbr.rel (0) target = $region28
          $region27: #{discriminator_forward.9} parent=23 // pred_region
            // Predicated region
            $region29: #{discriminator_forward.9} parent=27 // pred_check
              _
            $region30: #{discriminator_forward.9} parent=27 // pred_check_branch
              %179 = sbr.rel (0) target = $region32
            $region31: #{discriminator_forward.9} parent=27 // pred_region
              loop: start=0, step=1, limit=1
              $region33: #{discriminator_forward.9} parent=31 // loop_pre_header
                _
              $region34: #{discriminator_forward.9} parent=31 // loop_header
                %s181 = sphi 0, %s185
                %p182 = scmp.ge.s32.totalorder %s181, 1
                %s186 = sphi %s175, %s175
                %s187 = sphi %s169, %s169
              $region35: #{discriminator_forward.9} parent=31 // loop_header_branch
                %184 = sbr.rel (%p182) target = $region39
              $region36: #{discriminator_forward.9} parent=31 // loop_body
                %v188 = vld [vmem:[%s186] sm:$0xff]
                %189 = vst [vmem:[%s187] sm:$0xff] %v188
                %v190 = vld [vmem:[%s186 + $0x8] sm:$0xff]
                %191 = vst [vmem:[%s187 + $0x8] sm:$0xff] %v190
                %v192 = vld [vmem:[%s186 + $0x20] sm:$0xff]
                %193 = vst [vmem:[%s187 + $0x10] sm:$0xff] %v192
                %v194 = vld [vmem:[%s186 + $0x28] sm:$0xff]
                %195 = vst [vmem:[%s187 + $0x18] sm:$0xff] %v194
                %v196 = vld [vmem:[%s186 + $0x40] sm:$0xff]
                %197 = vst [vmem:[%s187 + $0x20] sm:$0xff] %v196
                %v198 = vld [vmem:[%s186 + $0x48] sm:$0xff]
                %199 = vst [vmem:[%s187 + $0x28] sm:$0xff] %v198
                %v200 = vld [vmem:[%s186 + $0x60] sm:$0xff]
                %201 = vst [vmem:[%s187 + $0x30] sm:$0xff] %v200
                %v202 = vld [vmem:[%s186 + $0x68] sm:$0xff]
                %203 = vst [vmem:[%s187 + $0x38] sm:$0xff] %v202
                %v204 = vld [vmem:[%s186 + $0x80] sm:$0xff]
                %205 = vst [vmem:[%s187 + $0x40] sm:$0xff] %v204
                %v206 = vld [vmem:[%s186 + $0x88] sm:$0xff]
                %207 = vst [vmem:[%s187 + $0x48] sm:$0xff] %v206
                %v208 = vld [vmem:[%s186 + $0xa0] sm:$0xff]
                %209 = vst [vmem:[%s187 + $0x50] sm:$0xff] %v208
                %v210 = vld [vmem:[%s186 + $0xa8] sm:$0xff]
                %211 = vst [vmem:[%s187 + $0x58] sm:$0xff] %v210
                %v212 = vld [vmem:[%s186 + $0xc0] sm:$0xff]
                %213 = vst [vmem:[%s187 + $0x60] sm:$0xff] %v212
                %v214 = vld [vmem:[%s186 + $0xc8] sm:$0xff]
                %215 = vst [vmem:[%s187 + $0x68] sm:$0xff] %v214
                %v216 = vld [vmem:[%s186 + $0xe0] sm:$0xff]
                %217 = vst [vmem:[%s187 + $0x70] sm:$0xff] %v216
                %v218 = vld [vmem:[%s186 + $0xe8] sm:$0xff]
                %219 = vst [vmem:[%s187 + $0x78] sm:$0xff] %v218
                %v220 = vld [vmem:[%s186 + $0x100] sm:$0xff]
                %221 = vst [vmem:[%s187 + $0x80] sm:$0xff] %v220
                %v222 = vld [vmem:[%s186 + $0x108] sm:$0xff]
                %223 = vst [vmem:[%s187 + $0x88] sm:$0xff] %v222
                %v224 = vld [vmem:[%s186 + $0x120] sm:$0xff]
                %225 = vst [vmem:[%s187 + $0x90] sm:$0xff] %v224
                %v226 = vld [vmem:[%s186 + $0x128] sm:$0xff]
                %227 = vst [vmem:[%s187 + $0x98] sm:$0xff] %v226
                %v228 = vld [vmem:[%s186 + $0x140] sm:$0xff]
                %229 = vst [vmem:[%s187 + $0xa0] sm:$0xff] %v228
                %v230 = vld [vmem:[%s186 + $0x148] sm:$0xff]
                %231 = vst [vmem:[%s187 + $0xa8] sm:$0xff] %v230
                %v232 = vld [vmem:[%s186 + $0x160] sm:$0xff]
                %233 = vst [vmem:[%s187 + $0xb0] sm:$0xff] %v232
                %v234 = vld [vmem:[%s186 + $0x168] sm:$0xff]
                %235 = vst [vmem:[%s187 + $0xb8] sm:$0xff] %v234
                %v236 = vld [vmem:[%s186 + $0x180] sm:$0xff]
                %237 = vst [vmem:[%s187 + $0xc0] sm:$0xff] %v236
                %v238 = vld [vmem:[%s186 + $0x188] sm:$0xff]
                %239 = vst [vmem:[%s187 + $0xc8] sm:$0xff] %v238
                %v240 = vld [vmem:[%s186 + $0x1a0] sm:$0xff]
                %241 = vst [vmem:[%s187 + $0xd0] sm:$0xff] %v240
                %v242 = vld [vmem:[%s186 + $0x1a8] sm:$0xff]
                %243 = vst [vmem:[%s187 + $0xd8] sm:$0xff] %v242
                %v244 = vld [vmem:[%s186 + $0x1c0] sm:$0xff]
                %245 = vst [vmem:[%s187 + $0xe0] sm:$0xff] %v244
                %v246 = vld [vmem:[%s186 + $0x1c8] sm:$0xff]
                %247 = vst [vmem:[%s187 + $0xe8] sm:$0xff] %v246
                %v248 = vld [vmem:[%s186 + $0x1e0] sm:$0xff]
                %249 = vst [vmem:[%s187 + $0xf0] sm:$0xff] %v248
                %v250 = vld [vmem:[%s186 + $0x1e8] sm:$0xff]
                %251 = vst [vmem:[%s187 + $0xf8] sm:$0xff] %v250
              $region37: #{discriminator_forward.9} parent=31 // loop_footer
                %s185 = sadd.s32 1, %s181
              $region38: #{discriminator_forward.9} parent=31 // loop_footer_branch
                %180 = sbr.rel target = $region34
              $region39: #{discriminator_forward.9} parent=31 // loop_exit
                _
            $region32: #{discriminator_forward.9} parent=27 // pred_fallthru
              _
            // Predicated region
            $region40: #{discriminator_forward.9} parent=27 // pred_check
              _
            $region41: #{discriminator_forward.9} parent=27 // pred_check_branch
              %253 = sbr.rel target = $region43
            $region42: #{discriminator_forward.9} parent=27 // pred_region
              _
            $region43: #{discriminator_forward.9} parent=27 // pred_fallthru
              _
          $region28: #{discriminator_forward.9} parent=23 // pred_fallthru
            _
          %254 = vnop
        $region24: #{discriminator_forward.9} parent=19 // pred_fallthru
          _
        // Predicated region
        $region44: #{discriminator_forward.9} parent=19 // pred_check
          %p255 = pneg %p78
        $region45: #{discriminator_forward.9} parent=19 // pred_check_branch
          %257 = sbr.rel (%p255) target = $region47
        $region46: #{discriminator_forward.9} parent=19 // pred_region
          %s258 = smul.u32 64, %s18
          %p259 = scmp.lt.s32.totalorder %s258, 127
          %s260 = scalar_select %p259, %s258, 127
          %p261 = scmp.lt.s32.totalorder %s17, 0
          %s262 = scalar_select %p261, %s17, 0
          %s263 = sadd.s32 %s262, %s260
          %s264 = smul.addr %s263, 4
          %s265 = scalar_lea.vmem %s1, %s264
          %s266 = smul.u32 64, %s18
        $region47: #{discriminator_forward.9} parent=19 // pred_fallthru
          _
      $region20: #{discriminator_forward.9} parent=5 // pred_fallthru
        _
      %p267 = scmp.le.s32.totalorder 1, %s9
      %p268 = scmp.lt.s32.totalorder %s9, 3
      %p269 = pnand %p267, %p268
      %p270 = pneg %p269
      // Predicated region
      $region48: #{discriminator_forward.9} parent=5 // pred_check
        _
      $region49: #{discriminator_forward.9} parent=5 // pred_check_branch
        %272 = sbr.rel (%p269) target = $region51
      $region50: #{discriminator_forward.9} parent=5 // pred_region
        %s273 = ssub.s32 %s9, 1
        %s274 = sand.u32 %s43, 1
        %s275 = sand.u32 %s43, 1
        %s276 = smul.addr %s275, 256
        %s277 = scalar_lea.vmem [#allocation3], %s276
        // Predicated region
        $region52: #{discriminator_forward.9} parent=50 // pred_check
          %p278 = pneg %p56
        $region53: #{discriminator_forward.9} parent=50 // pred_check_branch
          %280 = sbr.rel (%p278) target = $region55
        $region54: #{discriminator_forward.9} parent=50 // pred_region
          _
        $region55: #{discriminator_forward.9} parent=50 // pred_fallthru
          _
        %s281 = sand.u32 %s43, 1
        %s282 = sand.u32 %s43, 1
        %s283 = smul.addr %s282, 256
        %s284 = scalar_lea.vmem [#allocation3], %s283
        %p285 = pneg %p56
        %p286 = pneg %p53
        %s287 = smul.u32 64, %s21
        %p288 = scmp.lt.s32.totalorder %s287, 127
        %s289 = scalar_select %p288, %s287, 127
        %p290 = scmp.lt.s32.totalorder %s20, 0
        %s291 = scalar_select %p290, %s20, 0
        %s292 = sadd.s32 %s291, %s289
        %s293 = smul.addr %s292, 4
        %s294 = scalar_lea.vmem %s1, %s293
        %p295 = pneg %p84
        %p296 = pneg %p81
        %p297 = scmp.lt.s32.totalorder %s20, 0
        %s298 = scalar_select %p297, %s20, 0
        %s299 = scalar_lea.vmem %s2, %s298
        %p300 = pneg %p110
        %p301 = pneg %p107
        %p302 = pneg %p138
        %p303 = pneg %p135
        %s304 = smul.u32 16, %s19
        %p305 = scmp.lt.s32.totalorder %s304, 15
        %s306 = scalar_select %p305, %s304, 15
        %p307 = scmp.lt.s32.totalorder %s20, 0
        %s308 = scalar_select %p307, %s20, 0
        %s309 = sadd.s32 %s308, %s306
        %s310 = smul.addr %s309, 8
        %s311 = scalar_lea.vmem %s3, %s310
        %s312 = smul.u32 16, %s19
        %s313 = smul.u32 4, %s21
        %s314 = smul.u32 64, %s21
        %p315 = scmp.lt.s32.totalorder %s314, 127
        %s316 = scalar_select %p315, %s314, 127
        %p317 = scmp.lt.s32.totalorder %s20, 0
        %s318 = scalar_select %p317, %s20, 0
        %s319 = sadd.s32 %s318, %s316
        %s320 = smul.addr %s319, 4
        %s321 = scalar_lea.vmem %s1, %s320
        %s322 = smul.u32 64, %s21
        %p323 = scmp.lt.s32.totalorder %s20, 0
        %s324 = scalar_select %p323, %s20, 0
        %s325 = scalar_lea.vmem %s2, %s324
        %s326 = smul.u32 16, %s19
        %p327 = scmp.lt.s32.totalorder %s326, 15
        %s328 = scalar_select %p327, %s326, 15
        %p329 = scmp.lt.s32.totalorder %s20, 0
        %s330 = scalar_select %p329, %s20, 0
        %s331 = sadd.s32 %s330, %s328
        %s332 = smul.addr %s331, 8
        %s333 = scalar_lea.vmem %s3, %s332
        %s334 = smul.u32 16, %s19
        %p336 = scmp.eq.s32.totalorder %s21, 0
        // Predicated region
        $region56: #{discriminator_forward.9} parent=50 // pred_check
          %p337 = pneg %p336
        $region57: #{discriminator_forward.9} parent=50 // pred_check_branch
          %339 = sbr.rel (%p337) target = $region59
        $region58: #{discriminator_forward.9} parent=50 // pred_region
          %v340 = vld [vmem:[%s325] sm:$0x1]
          %v342 = vlaneseq
          %v343 = vshrl.u32 %v342, 7
          %v344 = vsub.s32 0, %v343
          %v345 = vrot.slane %v340, %v344
          %347 = vst [vmem:[#allocation2] sm:$0xff] %v345
          %348 = vst [vmem:[#allocation2 + $0x8] sm:$0xff] %v345
          %349 = vst [vmem:[#allocation2 + $0x10] sm:$0xff] %v345
          %350 = vst [vmem:[#allocation2 + $0x18] sm:$0xff] %v345
          %351 = vst [vmem:[#allocation2 + $0x20] sm:$0xff] %v345
          %352 = vst [vmem:[#allocation2 + $0x28] sm:$0xff] %v345
          %353 = vst [vmem:[#allocation2 + $0x30] sm:$0xff] %v345
          %354 = vst [vmem:[#allocation2 + $0x38] sm:$0xff] %v345
          %355 = vst [vmem:[#allocation2 + $0x40] sm:$0xff] %v345
          %356 = vst [vmem:[#allocation2 + $0x48] sm:$0xff] %v345
          %357 = vst [vmem:[#allocation2 + $0x50] sm:$0xff] %v345
          %358 = vst [vmem:[#allocation2 + $0x58] sm:$0xff] %v345
          %359 = vst [vmem:[#allocation2 + $0x60] sm:$0xff] %v345
          %360 = vst [vmem:[#allocation2 + $0x68] sm:$0xff] %v345
          %361 = vst [vmem:[#allocation2 + $0x70] sm:$0xff] %v345
          %362 = vst [vmem:[#allocation2 + $0x78] sm:$0xff] %v345
        $region59: #{discriminator_forward.9} parent=50 // pred_fallthru
          _
        %v363 = vld [vmem:[#allocation2] sm:$0xff]
        %v364 = vld [vmem:[#allocation2 + $0x8] sm:$0xff]
        %v365 = vld [vmem:[#allocation2 + $0x10] sm:$0xff]
        %v366 = vld [vmem:[#allocation2 + $0x18] sm:$0xff]
        %v367 = vld [vmem:[#allocation2 + $0x20] sm:$0xff]
        %v368 = vld [vmem:[#allocation2 + $0x28] sm:$0xff]
        %v369 = vld [vmem:[#allocation2 + $0x30] sm:$0xff]
        %v370 = vld [vmem:[#allocation2 + $0x38] sm:$0xff]
        %v371 = vld [vmem:[#allocation2 + $0x40] sm:$0xff]
        %v372 = vld [vmem:[#allocation2 + $0x48] sm:$0xff]
        %v373 = vld [vmem:[#allocation2 + $0x50] sm:$0xff]
        %v374 = vld [vmem:[#allocation2 + $0x58] sm:$0xff]
        %v375 = vld [vmem:[#allocation2 + $0x60] sm:$0xff]
        %v376 = vld [vmem:[#allocation2 + $0x68] sm:$0xff]
        %v377 = vld [vmem:[#allocation2 + $0x70] sm:$0xff]
        %v378 = vld [vmem:[#allocation2 + $0x78] sm:$0xff]
        %v379 = vld [vmem:[%s277] sm:$0xff]
        %v380 = vld [vmem:[%s277 + $0x8] sm:$0xff]
        %v381 = vld [vmem:[%s277 + $0x10] sm:$0xff]
        %v382 = vld [vmem:[%s277 + $0x18] sm:$0xff]
        %v383 = vld [vmem:[%s277 + $0x20] sm:$0xff]
        %v384 = vld [vmem:[%s277 + $0x28] sm:$0xff]
        %v385 = vld [vmem:[%s277 + $0x30] sm:$0xff]
        %v386 = vld [vmem:[%s277 + $0x38] sm:$0xff]
        %v387 = vld [vmem:[%s277 + $0x40] sm:$0xff]
        %v388 = vld [vmem:[%s277 + $0x48] sm:$0xff]
        %v389 = vld [vmem:[%s277 + $0x50] sm:$0xff]
        %v390 = vld [vmem:[%s277 + $0x58] sm:$0xff]
        %v391 = vld [vmem:[%s277 + $0x60] sm:$0xff]
        %v392 = vld [vmem:[%s277 + $0x68] sm:$0xff]
        %v393 = vld [vmem:[%s277 + $0x70] sm:$0xff]
        %v394 = vld [vmem:[%s277 + $0x78] sm:$0xff]
        %v395 = vld [vmem:[%s277 + $0x80] sm:$0xff]
        %v396 = vld [vmem:[%s277 + $0x88] sm:$0xff]
        %v397 = vld [vmem:[%s277 + $0x90] sm:$0xff]
        %v398 = vld [vmem:[%s277 + $0x98] sm:$0xff]
        %v399 = vld [vmem:[%s277 + $0xa0] sm:$0xff]
        %v400 = vld [vmem:[%s277 + $0xa8] sm:$0xff]
        %v401 = vld [vmem:[%s277 + $0xb0] sm:$0xff]
        %v402 = vld [vmem:[%s277 + $0xb8] sm:$0xff]
        %v403 = vld [vmem:[%s277 + $0xc0] sm:$0xff]
        %v404 = vld [vmem:[%s277 + $0xc8] sm:$0xff]
        %v405 = vld [vmem:[%s277 + $0xd0] sm:$0xff]
        %v406 = vld [vmem:[%s277 + $0xd8] sm:$0xff]
        %v407 = vld [vmem:[%s277 + $0xe0] sm:$0xff]
        %v408 = vld [vmem:[%s277 + $0xe8] sm:$0xff]
        %v409 = vld [vmem:[%s277 + $0xf0] sm:$0xff]
        %v410 = vld [vmem:[%s277 + $0xf8] sm:$0xff]
        %v411 = vld [vmem:[%s321] sm:$0xf]
        %v412 = vld [vmem:[%s321 + $0x4] sm:$0xf]
        %v413 = vld [vmem:[%s321 + $0x8] sm:$0xf]
        %v414 = vld [vmem:[%s321 + $0xc] sm:$0xf]
        %v415 = vld [vmem:[%s321 + $0x10] sm:$0xf]
        %v416 = vld [vmem:[%s321 + $0x14] sm:$0xf]
        %v417 = vld [vmem:[%s321 + $0x18] sm:$0xf]
        %v418 = vld [vmem:[%s321 + $0x1c] sm:$0xf]
        %v419 = vld [vmem:[%s321 + $0x20] sm:$0xf]
        %v420 = vld [vmem:[%s321 + $0x24] sm:$0xf]
        %v421 = vld [vmem:[%s321 + $0x28] sm:$0xf]
        %v422 = vld [vmem:[%s321 + $0x2c] sm:$0xf]
        %v423 = vld [vmem:[%s321 + $0x30] sm:$0xf]
        %v424 = vld [vmem:[%s321 + $0x34] sm:$0xf]
        %v425 = vld [vmem:[%s321 + $0x38] sm:$0xf]
        %v426 = vld [vmem:[%s321 + $0x3c] sm:$0xf]
        %v427 = vld [vmem:[%s321 + $0x40] sm:$0xf]
        %v428 = vld [vmem:[%s321 + $0x44] sm:$0xf]
        %v429 = vld [vmem:[%s321 + $0x48] sm:$0xf]
        %v430 = vld [vmem:[%s321 + $0x4c] sm:$0xf]
        %v431 = vld [vmem:[%s321 + $0x50] sm:$0xf]
        %v432 = vld [vmem:[%s321 + $0x54] sm:$0xf]
        %v433 = vld [vmem:[%s321 + $0x58] sm:$0xf]
        %v434 = vld [vmem:[%s321 + $0x5c] sm:$0xf]
        %v435 = vld [vmem:[%s321 + $0x60] sm:$0xf]
        %v436 = vld [vmem:[%s321 + $0x64] sm:$0xf]
        %v437 = vld [vmem:[%s321 + $0x68] sm:$0xf]
        %v438 = vld [vmem:[%s321 + $0x6c] sm:$0xf]
        %v439 = vld [vmem:[%s321 + $0x70] sm:$0xf]
        %v440 = vld [vmem:[%s321 + $0x74] sm:$0xf]
        %v441 = vld [vmem:[%s321 + $0x78] sm:$0xf]
        %v442 = vld [vmem:[%s321 + $0x7c] sm:$0xf]
        %v443 = vld [vmem:[%s321 + $0x80] sm:$0xf]
        %v444 = vld [vmem:[%s321 + $0x84] sm:$0xf]
        %v445 = vld [vmem:[%s321 + $0x88] sm:$0xf]
        %v446 = vld [vmem:[%s321 + $0x8c] sm:$0xf]
        %v447 = vld [vmem:[%s321 + $0x90] sm:$0xf]
        %v448 = vld [vmem:[%s321 + $0x94] sm:$0xf]
        %v449 = vld [vmem:[%s321 + $0x98] sm:$0xf]
        %v450 = vld [vmem:[%s321 + $0x9c] sm:$0xf]
        %v451 = vld [vmem:[%s321 + $0xa0] sm:$0xf]
        %v452 = vld [vmem:[%s321 + $0xa4] sm:$0xf]
        %v453 = vld [vmem:[%s321 + $0xa8] sm:$0xf]
        %v454 = vld [vmem:[%s321 + $0xac] sm:$0xf]
        %v455 = vld [vmem:[%s321 + $0xb0] sm:$0xf]
        %v456 = vld [vmem:[%s321 + $0xb4] sm:$0xf]
        %v457 = vld [vmem:[%s321 + $0xb8] sm:$0xf]
        %v458 = vld [vmem:[%s321 + $0xbc] sm:$0xf]
        %v459 = vld [vmem:[%s321 + $0xc0] sm:$0xf]
        %v460 = vld [vmem:[%s321 + $0xc4] sm:$0xf]
        %v461 = vld [vmem:[%s321 + $0xc8] sm:$0xf]
        %v462 = vld [vmem:[%s321 + $0xcc] sm:$0xf]
        %v463 = vld [vmem:[%s321 + $0xd0] sm:$0xf]
        %v464 = vld [vmem:[%s321 + $0xd4] sm:$0xf]
        %v465 = vld [vmem:[%s321 + $0xd8] sm:$0xf]
        %v466 = vld [vmem:[%s321 + $0xdc] sm:$0xf]
        %v467 = vld [vmem:[%s321 + $0xe0] sm:$0xf]
        %v468 = vld [vmem:[%s321 + $0xe4] sm:$0xf]
        %v469 = vld [vmem:[%s321 + $0xe8] sm:$0xf]
        %v470 = vld [vmem:[%s321 + $0xec] sm:$0xf]
        %v471 = vld [vmem:[%s321 + $0xf0] sm:$0xf]
        %v472 = vld [vmem:[%s321 + $0xf4] sm:$0xf]
        %v473 = vld [vmem:[%s321 + $0xf8] sm:$0xf]
        %v474 = vld [vmem:[%s321 + $0xfc] sm:$0xf]
        %v507 = vunpack.c.l.b16 %v379
        %v508 = vunpack.c.h.b16 %v379
        %v509 = vunpack.c.l.b16 %v380
        %v510 = vunpack.c.h.b16 %v380
        %v511 = vunpack.c.l.b16 %v381
        %v512 = vunpack.c.h.b16 %v381
        %v513 = vunpack.c.l.b16 %v382
        %v514 = vunpack.c.h.b16 %v382
        %v515 = vunpack.c.l.b16 %v383
        %v516 = vunpack.c.h.b16 %v383
        %v517 = vunpack.c.l.b16 %v384
        %v518 = vunpack.c.h.b16 %v384
        %v519 = vunpack.c.l.b16 %v385
        %v520 = vunpack.c.h.b16 %v385
        %v521 = vunpack.c.l.b16 %v386
        %v522 = vunpack.c.h.b16 %v386
        %v523 = vunpack.c.l.b16 %v387
        %v524 = vunpack.c.h.b16 %v387
        %v525 = vunpack.c.l.b16 %v388
        %v526 = vunpack.c.h.b16 %v388
        %v527 = vunpack.c.l.b16 %v389
        %v528 = vunpack.c.h.b16 %v389
        %v529 = vunpack.c.l.b16 %v390
        %v530 = vunpack.c.h.b16 %v390
        %v531 = vunpack.c.l.b16 %v391
        %v532 = vunpack.c.h.b16 %v391
        %v533 = vunpack.c.l.b16 %v392
        %v534 = vunpack.c.h.b16 %v392
        %v535 = vunpack.c.l.b16 %v393
        %v536 = vunpack.c.h.b16 %v393
        %v537 = vunpack.c.l.b16 %v394
        %v538 = vunpack.c.h.b16 %v394
        %v539 = vunpack.c.l.b16 %v395
        %v540 = vunpack.c.h.b16 %v395
        %v541 = vunpack.c.l.b16 %v396
        %v542 = vunpack.c.h.b16 %v396
        %v543 = vunpack.c.l.b16 %v397
        %v544 = vunpack.c.h.b16 %v397
        %v545 = vunpack.c.l.b16 %v398
        %v546 = vunpack.c.h.b16 %v398
        %v547 = vunpack.c.l.b16 %v399
        %v548 = vunpack.c.h.b16 %v399
        %v549 = vunpack.c.l.b16 %v400
        %v550 = vunpack.c.h.b16 %v400
        %v551 = vunpack.c.l.b16 %v401
        %v552 = vunpack.c.h.b16 %v401
        %v553 = vunpack.c.l.b16 %v402
        %v554 = vunpack.c.h.b16 %v402
        %v555 = vunpack.c.l.b16 %v403
        %v556 = vunpack.c.h.b16 %v403
        %v557 = vunpack.c.l.b16 %v404
        %v558 = vunpack.c.h.b16 %v404
        %v559 = vunpack.c.l.b16 %v405
        %v560 = vunpack.c.h.b16 %v405
        %v561 = vunpack.c.l.b16 %v406
        %v562 = vunpack.c.h.b16 %v406
        %v563 = vunpack.c.l.b16 %v407
        %v564 = vunpack.c.h.b16 %v407
        %v565 = vunpack.c.l.b16 %v408
        %v566 = vunpack.c.h.b16 %v408
        %v567 = vunpack.c.l.b16 %v409
        %v568 = vunpack.c.h.b16 %v409
        %v569 = vunpack.c.l.b16 %v410
        %v570 = vunpack.c.h.b16 %v410
        %v571 = vpack.c.b16 %v511, %v507
        %v572 = vpack.c.b16 %v512, %v508
        %v573 = vpack.c.b16 %v513, %v509
        %v574 = vpack.c.b16 %v514, %v510
        %v575 = vpack.c.b16 %v519, %v515
        %v576 = vpack.c.b16 %v520, %v516
        %v577 = vpack.c.b16 %v521, %v517
        %v578 = vpack.c.b16 %v522, %v518
        %v579 = vpack.c.b16 %v527, %v523
        %v580 = vpack.c.b16 %v528, %v524
        %v581 = vpack.c.b16 %v529, %v525
        %v582 = vpack.c.b16 %v530, %v526
        %v583 = vpack.c.b16 %v535, %v531
        %v584 = vpack.c.b16 %v536, %v532
        %v585 = vpack.c.b16 %v537, %v533
        %v586 = vpack.c.b16 %v538, %v534
        %v587 = vpack.c.b16 %v543, %v539
        %v588 = vpack.c.b16 %v544, %v540
        %v589 = vpack.c.b16 %v545, %v541
        %v590 = vpack.c.b16 %v546, %v542
        %v591 = vpack.c.b16 %v551, %v547
        %v592 = vpack.c.b16 %v552, %v548
        %v593 = vpack.c.b16 %v553, %v549
        %v594 = vpack.c.b16 %v554, %v550
        %v595 = vpack.c.b16 %v559, %v555
        %v596 = vpack.c.b16 %v560, %v556
        %v597 = vpack.c.b16 %v561, %v557
        %v598 = vpack.c.b16 %v562, %v558
        %v599 = vpack.c.b16 %v567, %v563
        %v600 = vpack.c.b16 %v568, %v564
        %v601 = vpack.c.b16 %v569, %v565
        %v602 = vpack.c.b16 %v570, %v566
        %v699 = vunpack.c.l.b16 %v411
        %v700 = vunpack.c.l.b16 %v412
        %v701 = vunpack.c.l.b16 %v413
        %v702 = vunpack.c.l.b16 %v414
        %v703 = vunpack.c.l.b16 %v415
        %v704 = vunpack.c.l.b16 %v416
        %v705 = vunpack.c.l.b16 %v417
        %v706 = vunpack.c.l.b16 %v418
        %v707 = vunpack.c.l.b16 %v419
        %v708 = vunpack.c.l.b16 %v420
        %v709 = vunpack.c.l.b16 %v421
        %v710 = vunpack.c.l.b16 %v422
        %v711 = vunpack.c.l.b16 %v423
        %v712 = vunpack.c.l.b16 %v424
        %v713 = vunpack.c.l.b16 %v425
        %v714 = vunpack.c.l.b16 %v426
        %v715 = vunpack.c.l.b16 %v427
        %v716 = vunpack.c.l.b16 %v428
        %v717 = vunpack.c.l.b16 %v429
        %v718 = vunpack.c.l.b16 %v430
        %v719 = vunpack.c.l.b16 %v431
        %v720 = vunpack.c.l.b16 %v432
        %v721 = vunpack.c.l.b16 %v433
        %v722 = vunpack.c.l.b16 %v434
        %v723 = vunpack.c.l.b16 %v435
        %v724 = vunpack.c.l.b16 %v436
        %v725 = vunpack.c.l.b16 %v437
        %v726 = vunpack.c.l.b16 %v438
        %v727 = vunpack.c.l.b16 %v439
        %v728 = vunpack.c.l.b16 %v440
        %v729 = vunpack.c.l.b16 %v441
        %v730 = vunpack.c.l.b16 %v442
        %v731 = vunpack.c.l.b16 %v443
        %v732 = vunpack.c.l.b16 %v444
        %v733 = vunpack.c.l.b16 %v445
        %v734 = vunpack.c.l.b16 %v446
        %v735 = vunpack.c.l.b16 %v447
        %v736 = vunpack.c.l.b16 %v448
        %v737 = vunpack.c.l.b16 %v449
        %v738 = vunpack.c.l.b16 %v450
        %v739 = vunpack.c.l.b16 %v451
        %v740 = vunpack.c.l.b16 %v452
        %v741 = vunpack.c.l.b16 %v453
        %v742 = vunpack.c.l.b16 %v454
        %v743 = vunpack.c.l.b16 %v455
        %v744 = vunpack.c.l.b16 %v456
        %v745 = vunpack.c.l.b16 %v457
        %v746 = vunpack.c.l.b16 %v458
        %v747 = vunpack.c.l.b16 %v459
        %v748 = vunpack.c.l.b16 %v460
        %v749 = vunpack.c.l.b16 %v461
        %v750 = vunpack.c.l.b16 %v462
        %v751 = vunpack.c.l.b16 %v463
        %v752 = vunpack.c.l.b16 %v464
        %v753 = vunpack.c.l.b16 %v465
        %v754 = vunpack.c.l.b16 %v466
        %v755 = vunpack.c.l.b16 %v467
        %v756 = vunpack.c.l.b16 %v468
        %v757 = vunpack.c.l.b16 %v469
        %v758 = vunpack.c.l.b16 %v470
        %v759 = vunpack.c.l.b16 %v471
        %v760 = vunpack.c.l.b16 %v472
        %v761 = vunpack.c.l.b16 %v473
        %v762 = vunpack.c.l.b16 %v474
        %v763 = vpack.c.b16 %v700, %v699
        %v764 = vpack.c.b16 %v702, %v701
        %v765 = vpack.c.b16 %v704, %v703
        %v766 = vpack.c.b16 %v706, %v705
        %v767 = vpack.c.b16 %v708, %v707
        %v768 = vpack.c.b16 %v710, %v709
        %v769 = vpack.c.b16 %v712, %v711
        %v770 = vpack.c.b16 %v714, %v713
        %v771 = vpack.c.b16 %v716, %v715
        %v772 = vpack.c.b16 %v718, %v717
        %v773 = vpack.c.b16 %v720, %v719
        %v774 = vpack.c.b16 %v722, %v721
        %v775 = vpack.c.b16 %v724, %v723
        %v776 = vpack.c.b16 %v726, %v725
        %v777 = vpack.c.b16 %v728, %v727
        %v778 = vpack.c.b16 %v730, %v729
        %v779 = vpack.c.b16 %v732, %v731
        %v780 = vpack.c.b16 %v734, %v733
        %v781 = vpack.c.b16 %v736, %v735
        %v782 = vpack.c.b16 %v738, %v737
        %v783 = vpack.c.b16 %v740, %v739
        %v784 = vpack.c.b16 %v742, %v741
        %v785 = vpack.c.b16 %v744, %v743
        %v786 = vpack.c.b16 %v746, %v745
        %v787 = vpack.c.b16 %v748, %v747
        %v788 = vpack.c.b16 %v750, %v749
        %v789 = vpack.c.b16 %v752, %v751
        %v790 = vpack.c.b16 %v754, %v753
        %v791 = vpack.c.b16 %v756, %v755
        %v792 = vpack.c.b16 %v758, %v757
        %v793 = vpack.c.b16 %v760, %v759
        %v794 = vpack.c.b16 %v762, %v761
        %827 = vmatprep.subr.bf16.mxu0 0
        %828 = vmatpush1.bf16.msra.mxu0 %v770
        %829 = vmatprep.subr.bf16.mxu0 0
        %830 = vmatpush1.bf16.msra.mxu0 %v769
        %831 = vmatprep.subr.bf16.mxu0 0
        %832 = vmatpush1.bf16.msra.mxu0 %v768
        %833 = vmatprep.subr.bf16.mxu0 0
        %834 = vmatpush1.bf16.msra.mxu0 %v767
        %835 = vmatprep.subr.bf16.mxu0 0
        %836 = vmatpush1.bf16.msra.mxu0 %v766
        %837 = vmatprep.subr.bf16.mxu0 0
        %838 = vmatpush1.bf16.msra.mxu0 %v765
        %839 = vmatprep.subr.bf16.mxu0 0
        %840 = vmatpush1.bf16.msra.mxu0 %v764
        %841 = vmatprep.subr.bf16.mxu0 0
        %842 = vmatpush1.bf16.msra.mxu0 %v763
        %843 = vmatprep.subr.bf16.mxu0 0
        %844 = vmatpush2.bf16.msra.mxu0 %v778
        %845 = vmatprep.subr.bf16.mxu0 0
        %846 = vmatpush2.bf16.msra.mxu0 %v777
        %847 = vmatprep.subr.bf16.mxu0 0
        %848 = vmatpush2.bf16.msra.mxu0 %v776
        %849 = vmatprep.subr.bf16.mxu0 0
        %850 = vmatpush2.bf16.msra.mxu0 %v775
        %851 = vmatprep.subr.bf16.mxu0 0
        %852 = vmatpush2.bf16.msra.mxu0 %v774
        %853 = vmatprep.subr.bf16.mxu0 0
        %854 = vmatpush2.bf16.msra.mxu0 %v773
        %855 = vmatprep.subr.bf16.mxu0 0
        %856 = vmatpush2.bf16.msra.mxu0 %v772
        %857 = vmatprep.subr.bf16.mxu0 0
        %858 = vmatpush2.bf16.msra.mxu0 %v771
        %859 = vmatprep.mubr.bf16.mxu0 %v572
        %860 = vmatmul.mubr.bf16.gmra.mxu0 %v571
        %v861 = vpop.f32.mrf.mxu0
        %v862 = vadd.f32 0.0, %v861
        %v863 = vpop.f32.mrf.mxu0
        %v864 = vpop.f32.mrf.mxu0
        %v865 = vadd.f32 0.0, %v864
        %v866 = vpop.f32.mrf.mxu0
        %867 = vmatprep.mubr.bf16.mxu0 %v576
        %868 = vmatmul.mubr.bf16.gmra.mxu0 %v575
        %v869 = vpop.f32.mrf.mxu0
        %v870 = vadd.f32 0.0, %v869
        %v871 = vpop.f32.mrf.mxu0
        %v872 = vpop.f32.mrf.mxu0
        %v873 = vadd.f32 0.0, %v872
        %v874 = vpop.f32.mrf.mxu0
        %875 = vmatprep.mubr.bf16.mxu0 %v580
        %876 = vmatmul.mubr.bf16.gmra.mxu0 %v579
        %v877 = vpop.f32.mrf.mxu0
        %v878 = vadd.f32 0.0, %v877
        %v879 = vpop.f32.mrf.mxu0
        %v880 = vpop.f32.mrf.mxu0
        %v881 = vadd.f32 0.0, %v880
        %v882 = vpop.f32.mrf.mxu0
        %883 = vmatprep.mubr.bf16.mxu0 %v584
        %884 = vmatmul.mubr.bf16.gmra.mxu0 %v583
        %v885 = vpop.f32.mrf.mxu0
        %v886 = vadd.f32 0.0, %v885
        %v887 = vpop.f32.mrf.mxu0
        %v888 = vpop.f32.mrf.mxu0
        %v889 = vadd.f32 0.0, %v888
        %v890 = vpop.f32.mrf.mxu0
        %891 = vmatprep.mubr.bf16.mxu0 %v588
        %892 = vmatmul.mubr.bf16.gmra.mxu0 %v587
        %v893 = vpop.f32.mrf.mxu0
        %v894 = vadd.f32 0.0, %v893
        %v895 = vpop.f32.mrf.mxu0
        %v896 = vpop.f32.mrf.mxu0
        %v897 = vadd.f32 0.0, %v896
        %v898 = vpop.f32.mrf.mxu0
        %899 = vmatprep.mubr.bf16.mxu0 %v592
        %900 = vmatmul.mubr.bf16.gmra.mxu0 %v591
        %v901 = vpop.f32.mrf.mxu0
        %v902 = vadd.f32 0.0, %v901
        %v903 = vpop.f32.mrf.mxu0
        %v904 = vpop.f32.mrf.mxu0
        %v905 = vadd.f32 0.0, %v904
        %v906 = vpop.f32.mrf.mxu0
        %907 = vmatprep.mubr.bf16.mxu0 %v596
        %908 = vmatmul.mubr.bf16.gmra.mxu0 %v595
        %v909 = vpop.f32.mrf.mxu0
        %v910 = vadd.f32 0.0, %v909
        %v911 = vpop.f32.mrf.mxu0
        %v912 = vpop.f32.mrf.mxu0
        %v913 = vadd.f32 0.0, %v912
        %v914 = vpop.f32.mrf.mxu0
        %915 = vmatprep.mubr.bf16.mxu0 %v600
        %916 = vmatmul.mubr.bf16.gmra.mxu0 %v599
        %v917 = vpop.f32.mrf.mxu0
        %v918 = vadd.f32 0.0, %v917
        %v919 = vpop.f32.mrf.mxu0
        %v920 = vpop.f32.mrf.mxu0
        %v921 = vadd.f32 0.0, %v920
        %v922 = vpop.f32.mrf.mxu0
        %923 = vdwg.mxu0
        %924 = vmatprep.subr.bf16.mxu0 0
        %925 = vmatpush1.bf16.msra.mxu0 %v786
        %926 = vmatprep.subr.bf16.mxu0 0
        %927 = vmatpush1.bf16.msra.mxu0 %v785
        %928 = vmatprep.subr.bf16.mxu0 0
        %929 = vmatpush1.bf16.msra.mxu0 %v784
        %930 = vmatprep.subr.bf16.mxu0 0
        %931 = vmatpush1.bf16.msra.mxu0 %v783
        %932 = vmatprep.subr.bf16.mxu0 0
        %933 = vmatpush1.bf16.msra.mxu0 %v782
        %934 = vmatprep.subr.bf16.mxu0 0
        %935 = vmatpush1.bf16.msra.mxu0 %v781
        %936 = vmatprep.subr.bf16.mxu0 0
        %937 = vmatpush1.bf16.msra.mxu0 %v780
        %938 = vmatprep.subr.bf16.mxu0 0
        %939 = vmatpush1.bf16.msra.mxu0 %v779
        %940 = vmatprep.subr.bf16.mxu0 0
        %941 = vmatpush2.bf16.msra.mxu0 %v794
        %942 = vmatprep.subr.bf16.mxu0 0
        %943 = vmatpush2.bf16.msra.mxu0 %v793
        %944 = vmatprep.subr.bf16.mxu0 0
        %945 = vmatpush2.bf16.msra.mxu0 %v792
        %946 = vmatprep.subr.bf16.mxu0 0
        %947 = vmatpush2.bf16.msra.mxu0 %v791
        %948 = vmatprep.subr.bf16.mxu0 0
        %949 = vmatpush2.bf16.msra.mxu0 %v790
        %950 = vmatprep.subr.bf16.mxu0 0
        %951 = vmatpush2.bf16.msra.mxu0 %v789
        %952 = vmatprep.subr.bf16.mxu0 0
        %953 = vmatpush2.bf16.msra.mxu0 %v788
        %954 = vmatprep.subr.bf16.mxu0 0
        %955 = vmatpush2.bf16.msra.mxu0 %v787
        %956 = vmatprep.mubr.bf16.mxu0 %v574
        %957 = vmatmul.mubr.bf16.gmra.mxu0 %v573
        %v958 = vpop.f32.mrf.mxu0
        %v959 = vadd.f32 %v862, %v958
        %v960 = vpop.f32.mrf.mxu0
        %v961 = vpop.f32.mrf.mxu0
        %v962 = vadd.f32 %v865, %v961
        %v963 = vpop.f32.mrf.mxu0
        %964 = vmatprep.mubr.bf16.mxu0 %v578
        %965 = vmatmul.mubr.bf16.gmra.mxu0 %v577
        %v966 = vpop.f32.mrf.mxu0
        %v967 = vadd.f32 %v870, %v966
        %v968 = vpop.f32.mrf.mxu0
        %v969 = vpop.f32.mrf.mxu0
        %v970 = vadd.f32 %v873, %v969
        %v971 = vpop.f32.mrf.mxu0
        %972 = vmatprep.mubr.bf16.mxu0 %v582
        %973 = vmatmul.mubr.bf16.gmra.mxu0 %v581
        %v974 = vpop.f32.mrf.mxu0
        %v975 = vadd.f32 %v878, %v974
        %v976 = vpop.f32.mrf.mxu0
        %v977 = vpop.f32.mrf.mxu0
        %v978 = vadd.f32 %v881, %v977
        %v979 = vpop.f32.mrf.mxu0
        %980 = vmatprep.mubr.bf16.mxu0 %v586
        %981 = vmatmul.mubr.bf16.gmra.mxu0 %v585
        %v982 = vpop.f32.mrf.mxu0
        %v983 = vadd.f32 %v886, %v982
        %v984 = vpop.f32.mrf.mxu0
        %v985 = vpop.f32.mrf.mxu0
        %v986 = vadd.f32 %v889, %v985
        %v987 = vpop.f32.mrf.mxu0
        %988 = vmatprep.mubr.bf16.mxu0 %v590
        %989 = vmatmul.mubr.bf16.gmra.mxu0 %v589
        %v990 = vpop.f32.mrf.mxu0
        %v991 = vadd.f32 %v894, %v990
        %v992 = vpop.f32.mrf.mxu0
        %v993 = vpop.f32.mrf.mxu0
        %v994 = vadd.f32 %v897, %v993
        %v995 = vpop.f32.mrf.mxu0
        %996 = vmatprep.mubr.bf16.mxu0 %v594
        %997 = vmatmul.mubr.bf16.gmra.mxu0 %v593
        %v998 = vpop.f32.mrf.mxu0
        %v999 = vadd.f32 %v902, %v998
        %v1000 = vpop.f32.mrf.mxu0
        %v1001 = vpop.f32.mrf.mxu0
        %v1002 = vadd.f32 %v905, %v1001
        %v1003 = vpop.f32.mrf.mxu0
        %1004 = vmatprep.mubr.bf16.mxu0 %v598
        %1005 = vmatmul.mubr.bf16.gmra.mxu0 %v597
        %v1006 = vpop.f32.mrf.mxu0
        %v1007 = vadd.f32 %v910, %v1006
        %v1008 = vpop.f32.mrf.mxu0
        %v1009 = vpop.f32.mrf.mxu0
        %v1010 = vadd.f32 %v913, %v1009
        %v1011 = vpop.f32.mrf.mxu0
        %1012 = vmatprep.mubr.bf16.mxu0 %v602
        %1013 = vmatmul.mubr.bf16.gmra.mxu0 %v601
        %v1014 = vpop.f32.mrf.mxu0
        %v1015 = vadd.f32 %v918, %v1014
        %v1016 = vpop.f32.mrf.mxu0
        %v1017 = vpop.f32.mrf.mxu0
        %v1018 = vadd.f32 %v921, %v1017
        %v1019 = vpop.f32.mrf.mxu0
        %1020 = vdwg.mxu0
        %v1021 = vadd.f32 %v363, %v959
        %v1022 = vadd.f32 %v364, %v962
        %v1023 = vadd.f32 %v365, %v967
        %v1024 = vadd.f32 %v366, %v970
        %v1025 = vadd.f32 %v367, %v975
        %v1026 = vadd.f32 %v368, %v978
        %v1027 = vadd.f32 %v369, %v983
        %v1028 = vadd.f32 %v370, %v986
        %v1029 = vadd.f32 %v371, %v991
        %v1030 = vadd.f32 %v372, %v994
        %v1031 = vadd.f32 %v373, %v999
        %v1032 = vadd.f32 %v374, %v1002
        %v1033 = vadd.f32 %v375, %v1007
        %v1034 = vadd.f32 %v376, %v1010
        %v1035 = vadd.f32 %v377, %v1015
        %v1036 = vadd.f32 %v378, %v1018
        %1037 = vst [vmem:[#allocation2] sm:$0xff] %v1021
        %1038 = vst [vmem:[#allocation2 + $0x8] sm:$0xff] %v1022
        %1039 = vst [vmem:[#allocation2 + $0x10] sm:$0xff] %v1023
        %1040 = vst [vmem:[#allocation2 + $0x18] sm:$0xff] %v1024
        %1041 = vst [vmem:[#allocation2 + $0x20] sm:$0xff] %v1025
        %1042 = vst [vmem:[#allocation2 + $0x28] sm:$0xff] %v1026
        %1043 = vst [vmem:[#allocation2 + $0x30] sm:$0xff] %v1027
        %1044 = vst [vmem:[#allocation2 + $0x38] sm:$0xff] %v1028
        %1045 = vst [vmem:[#allocation2 + $0x40] sm:$0xff] %v1029
        %1046 = vst [vmem:[#allocation2 + $0x48] sm:$0xff] %v1030
        %1047 = vst [vmem:[#allocation2 + $0x50] sm:$0xff] %v1031
        %1048 = vst [vmem:[#allocation2 + $0x58] sm:$0xff] %v1032
        %1049 = vst [vmem:[#allocation2 + $0x60] sm:$0xff] %v1033
        %1050 = vst [vmem:[#allocation2 + $0x68] sm:$0xff] %v1034
        %1051 = vst [vmem:[#allocation2 + $0x70] sm:$0xff] %v1035
        %1052 = vst [vmem:[#allocation2 + $0x78] sm:$0xff] %v1036
        %p1053 = scmp.eq.s32.totalorder %s21, 1
        // Predicated region
        $region60: #{discriminator_forward.9} parent=50 // pred_check
          %p1054 = pneg %p1053
        $region61: #{discriminator_forward.9} parent=50 // pred_check_branch
          %1056 = sbr.rel (%p1054) target = $region63
        $region62: #{discriminator_forward.9} parent=50 // pred_region
          %v1057 = vld [vmem:[#allocation2] sm:$0xff]
          %v1058 = vld [vmem:[#allocation2 + $0x8] sm:$0xff]
          %v1059 = vld [vmem:[#allocation2 + $0x10] sm:$0xff]
          %v1060 = vld [vmem:[#allocation2 + $0x18] sm:$0xff]
          %v1061 = vld [vmem:[#allocation2 + $0x20] sm:$0xff]
          %v1062 = vld [vmem:[#allocation2 + $0x28] sm:$0xff]
          %v1063 = vld [vmem:[#allocation2 + $0x30] sm:$0xff]
          %v1064 = vld [vmem:[#allocation2 + $0x38] sm:$0xff]
          %v1065 = vld [vmem:[#allocation2 + $0x40] sm:$0xff]
          %v1066 = vld [vmem:[#allocation2 + $0x48] sm:$0xff]
          %v1067 = vld [vmem:[#allocation2 + $0x50] sm:$0xff]
          %v1068 = vld [vmem:[#allocation2 + $0x58] sm:$0xff]
          %v1069 = vld [vmem:[#allocation2 + $0x60] sm:$0xff]
          %v1070 = vld [vmem:[#allocation2 + $0x68] sm:$0xff]
          %v1071 = vld [vmem:[#allocation2 + $0x70] sm:$0xff]
          %v1072 = vld [vmem:[#allocation2 + $0x78] sm:$0xff]
          %1073 = vst [vmem:[%s333] sm:$0xff] %v1057
          %1074 = vst [vmem:[%s333 + $0x8] sm:$0xff] %v1058
          %1075 = vst [vmem:[%s333 + $0x10] sm:$0xff] %v1059
          %1076 = vst [vmem:[%s333 + $0x18] sm:$0xff] %v1060
          %1077 = vst [vmem:[%s333 + $0x20] sm:$0xff] %v1061
          %1078 = vst [vmem:[%s333 + $0x28] sm:$0xff] %v1062
          %1079 = vst [vmem:[%s333 + $0x30] sm:$0xff] %v1063
          %1080 = vst [vmem:[%s333 + $0x38] sm:$0xff] %v1064
          %1081 = vst [vmem:[%s333 + $0x40] sm:$0xff] %v1065
          %1082 = vst [vmem:[%s333 + $0x48] sm:$0xff] %v1066
          %1083 = vst [vmem:[%s333 + $0x50] sm:$0xff] %v1067
          %1084 = vst [vmem:[%s333 + $0x58] sm:$0xff] %v1068
          %1085 = vst [vmem:[%s333 + $0x60] sm:$0xff] %v1069
          %1086 = vst [vmem:[%s333 + $0x68] sm:$0xff] %v1070
          %1087 = vst [vmem:[%s333 + $0x70] sm:$0xff] %v1071
          %1088 = vst [vmem:[%s333 + $0x78] sm:$0xff] %v1072
        $region63: #{discriminator_forward.9} parent=50 // pred_fallthru
          _
        %s1089 = smul.u32 16, %s19
        %p1090 = scmp.lt.s32.totalorder %s1089, 15
        %s1091 = scalar_select %p1090, %s1089, 15
        %p1092 = scmp.lt.s32.totalorder %s20, 0
        %s1093 = scalar_select %p1092, %s20, 0
        %s1094 = sadd.s32 %s1093, %s1091
        %s1095 = smul.addr %s1094, 8
        %s1096 = scalar_lea.vmem %s3, %s1095
        // Predicated region
        $region64: #{discriminator_forward.9} parent=50 // pred_check
          %p1097 = pneg %p135
        $region65: #{discriminator_forward.9} parent=50 // pred_check_branch
          %1099 = sbr.rel (%p1097) target = $region67
        $region66: #{discriminator_forward.9} parent=50 // pred_region
          %s1100 = smul.u32 16, %s19
        $region67: #{discriminator_forward.9} parent=50 // pred_fallthru
          _
        // Predicated region
        $region68: #{discriminator_forward.9} parent=50 // pred_check
          %p1101 = pneg %p135
        $region69: #{discriminator_forward.9} parent=50 // pred_check_branch
          %1103 = sbr.rel (%p1101) target = $region71
        $region70: #{discriminator_forward.9} parent=50 // pred_region
          %s1104 = smul.u32 16, %s19
          %p1105 = scmp.lt.s32.totalorder %s1104, 15
          %s1106 = scalar_select %p1105, %s1104, 15
          %p1107 = scmp.lt.s32.totalorder %s20, 0
          %s1108 = scalar_select %p1107, %s20, 0
          %s1109 = sadd.s32 %s1108, %s1106
          %s1110 = smul.addr %s1109, 8
          %s1111 = scalar_lea.vmem %s3, %s1110
        $region71: #{discriminator_forward.9} parent=50 // pred_fallthru
          _
      $region51: #{discriminator_forward.9} parent=5 // pred_fallthru
        _
      %p1112 = scmp.le.s32.totalorder 2, %s9
      // Predicated region
      $region72: #{discriminator_forward.9} parent=5 // pred_check
        %p1113 = pneg %p1112
      $region73: #{discriminator_forward.9} parent=5 // pred_check_branch
        %1115 = sbr.rel (%p1113) target = $region75
      $region74: #{discriminator_forward.9} parent=5 // pred_region
        %s1116 = ssub.s32 %s9, 2
      $region75: #{discriminator_forward.9} parent=5 // pred_fallthru
        _
    $region6: #{discriminator_forward.9} parent=1 // loop_footer
      %s13 = sadd.s32 1, %s9
    $region7: #{discriminator_forward.9} parent=1 // loop_footer_branch
      %8 = sbr.rel target = $region3
    $region8: #{discriminator_forward.9} parent=1 // loop_exit
      _

// kernel: discriminator_forward.10
$region0: #{discriminator_forward.10}
  #allocation0 [shape = 'u32[]', space=smem, size = 0x4, offset = 0x4, fixed_abs, tag = 'smem constant byte address 0x4 - core index']
  #allocation1 [shape = 'u32[144,128]{1,0:T(1,128)}', space=vmem, size = 0x12000, scoped, tag = 'internal scratch']
  %s0 = inlined_call_operand.vmem [shape: f32[2,64,128], index: 0, kind: input, shape index: {}]
  %s1 = inlined_call_operand.vmem [shape: f32[2,64,128], index: 1, kind: output, shape index: {}]
  %s2 = sld [smem:[#allocation0]]
  $region37: #{discriminator_forward.10} parent=0
    _
  %s4 = ssub.s32 1, %s2
  %s5 = scalar_select 0, %s4, %s2
  loop: start=0, step=1, limit=4
  $region2: #{discriminator_forward.10} parent=0 // loop_pre_header
    _
  $region3: #{discriminator_forward.10} parent=0 // loop_header
    %s7 = sphi 0, %s11
    %p8 = scmp.ge.s32.totalorder %s7, 4
    %s14 = sphi 0, %s26
    %s15 = sphi 0, %s22
    %s16 = sphi 0, %s14
    %s17 = sphi 0, %s15
    %s18 = sphi 0, %s16
    %s19 = sphi 0, %s17
    %s31 = sphi 0, %s33
    %s34 = sphi 0, %s31
    %s35 = sphi 0, %s34
    %s51 = sphi 0, %s35
    %s59 = sphi 0, %s61
    %s62 = sphi 0, %s59
    %s63 = sphi 0, %s62
    %s79 = sphi 0, %s63
  $region4: #{discriminator_forward.10} parent=0 // loop_header_branch
    %10 = sbr.rel (%p8) target = $region8
  $region5: #{discriminator_forward.10} parent=0 // loop_body
    %s12 = ssub.s32 %s7, 1
    %s13 = ssub.s32 %s7, 2
    %s20 = sadd.s32 1, %s15
    %p21 = scmp.ge.s32.totalorder %s20, 1
    %s22 = scalar_select %p21, 0, %s20
    %s23 = sadd.s32 1, %s14
    %s24 = scalar_select %p21, %s23, %s14
    %p25 = scmp.ge.s32.totalorder %s24, 2
    %s26 = scalar_select %p25, 0, %s24
    %s27 = ssub.s32 %s14, %s26
    %s28 = ssub.s32 %s15, %s22
    %s29 = sor.u32 %s27, %s28
    %p30 = scmp.eq.s32.totalorder %s29, 0
    %s32 = sadd.s32 %s31, 1
    %s33 = scalar_select %p30, %s31, %s32
    %p36 = pneg %p30
    %p37 = scmp.eq.s32.totalorder %s7, 1
    %p38 = por %p36, %p37
    %p39 = scmp.ne.s32.totalorder %s31, %s34
    %p40 = scmp.eq.s32.totalorder %s7, 0
    %p41 = por %p39, %p40
    %p42 = scmp.ne.s32.totalorder %s31, %s34
    %p43 = scmp.eq.s32.totalorder %s12, 1
    %p44 = por %p42, %p43
    %p45 = scmp.ne.s32.totalorder %s34, %s35
    %p46 = scmp.eq.s32.totalorder %s12, 0
    %p47 = por %p45, %p46
    %p48 = scmp.ne.s32.totalorder %s34, %s35
    %p49 = scmp.eq.s32.totalorder %s13, 1
    %p50 = por %p48, %p49
    %p52 = scmp.ne.s32.totalorder %s35, %s51
    %p53 = scmp.eq.s32.totalorder %s13, 0
    %p54 = por %p52, %p53
    %s55 = ssub.s32 %s14, %s26
    %s56 = ssub.s32 %s15, %s22
    %s57 = sor.u32 %s55, %s56
    %p58 = scmp.eq.s32.totalorder %s57, 0
    %s60 = sadd.s32 %s59, 1
    %s61 = scalar_select %p58, %s59, %s60
    %p64 = pneg %p58
    %p65 = scmp.eq.s32.totalorder %s7, 1
    %p66 = por %p64, %p65
    %p67 = scmp.ne.s32.totalorder %s59, %s62
    %p68 = scmp.eq.s32.totalorder %s7, 0
    %p69 = por %p67, %p68
    %p70 = scmp.ne.s32.totalorder %s59, %s62
    %p71 = scmp.eq.s32.totalorder %s12, 1
    %p72 = por %p70, %p71
    %p73 = scmp.ne.s32.totalorder %s62, %s63
    %p74 = scmp.eq.s32.totalorder %s12, 0
    %p75 = por %p73, %p74
    %p76 = scmp.ne.s32.totalorder %s62, %s63
    %p77 = scmp.eq.s32.totalorder %s13, 1
    %p78 = por %p76, %p77
    %p80 = scmp.ne.s32.totalorder %s63, %s79
    %p81 = scmp.eq.s32.totalorder %s13, 0
    %p82 = por %p80, %p81
    %p83 = scmp.le.s32.totalorder 1, %s7
    %p84 = scmp.lt.s32.totalorder %s7, 3
    %p85 = pnand %p83, %p84
    %p86 = pneg %p85
    // Predicated region
    $region9: #{discriminator_forward.10} parent=5 // pred_check
      _
    $region10: #{discriminator_forward.10} parent=5 // pred_check_branch
      %88 = sbr.rel (%p85) target = $region12
    $region11: #{discriminator_forward.10} parent=5 // pred_region
      %s89 = ssub.s32 %s7, 1
    $region12: #{discriminator_forward.10} parent=5 // pred_fallthru
      _
    %p90 = scmp.lt.s32.totalorder %s7, 2
    // Predicated region
    $region13: #{discriminator_forward.10} parent=5 // pred_check
      %p91 = pneg %p90
    $region14: #{discriminator_forward.10} parent=5 // pred_check_branch
      %93 = sbr.rel (%p91) target = $region16
    $region15: #{discriminator_forward.10} parent=5 // pred_region
      // Predicated region
      $region17: #{discriminator_forward.10} parent=15 // pred_check
        %p94 = pneg %p41
      $region18: #{discriminator_forward.10} parent=15 // pred_check_branch
        %96 = sbr.rel (%p94) target = $region20
      $region19: #{discriminator_forward.10} parent=15 // pred_region
        %p97 = scmp.lt.s32.totalorder %s14, 1
        %s98 = scalar_select %p97, %s14, 1
        %p99 = scmp.lt.s32.totalorder %s15, 0
        %s100 = scalar_select %p99, %s15, 0
        %s101 = smul.addr %s98, 8
        %s102 = sadd.s32 %s100, %s101
        %s103 = smul.addr %s102, 8
        %s104 = scalar_lea.vmem %s0, %s103
      $region20: #{discriminator_forward.10} parent=15 // pred_fallthru
        _
    $region16: #{discriminator_forward.10} parent=5 // pred_fallthru
      _
    %p105 = scmp.le.s32.totalorder 1, %s7
    %p106 = scmp.lt.s32.totalorder %s7, 3
    %p107 = pnand %p105, %p106
    %p108 = pneg %p107
    // Predicated region
    $region21: #{discriminator_forward.10} parent=5 // pred_check
      _
    $region22: #{discriminator_forward.10} parent=5 // pred_check_branch
      %110 = sbr.rel (%p107) target = $region24
    $region23: #{discriminator_forward.10} parent=5 // pred_region
      %s111 = ssub.s32 %s7, 1
      %p112 = scmp.lt.s32.totalorder %s16, 1
      %s113 = scalar_select %p112, %s16, 1
      %p114 = scmp.lt.s32.totalorder %s17, 0
      %s115 = scalar_select %p114, %s17, 0
      %s116 = smul.addr %s113, 8
      %s117 = sadd.s32 %s115, %s116
      %s118 = smul.addr %s117, 8
      %s119 = scalar_lea.vmem %s0, %s118
      %p120 = pneg %p47
      %p121 = pneg %p44
      %p122 = pneg %p75
      %p123 = pneg %p72
      %p124 = scmp.lt.s32.totalorder %s16, 1
      %s125 = scalar_select %p124, %s16, 1
      %p126 = scmp.lt.s32.totalorder %s17, 0
      %s127 = scalar_select %p126, %s17, 0
      %s128 = smul.addr %s125, 8
      %s129 = sadd.s32 %s127, %s128
      %s130 = smul.addr %s129, 8
      %s131 = scalar_lea.vmem %s1, %s130
      %p132 = scmp.lt.s32.totalorder %s16, 1
      %s133 = scalar_select %p132, %s16, 1
      %p134 = scmp.lt.s32.totalorder %s17, 0
      %s135 = scalar_select %p134, %s17, 0
      %s136 = smul.addr %s133, 8
      %s137 = sadd.s32 %s135, %s136
      %s138 = smul.addr %s137, 8
      %s139 = scalar_lea.vmem %s0, %s138
      %p140 = scmp.lt.s32.totalorder %s16, 1
      %s141 = scalar_select %p140, %s16, 1
      %p142 = scmp.lt.s32.totalorder %s17, 0
      %s143 = scalar_select %p142, %s17, 0
      %s144 = smul.addr %s141, 8
      %s145 = sadd.s32 %s143, %s144
      %s146 = smul.addr %s145, 8
      %s147 = scalar_lea.vmem %s1, %s146
      %v148 = vld [vmem:[%s139] sm:$0xff]
      %v149 = vld [vmem:[%s139 + $0x8] sm:$0xff]
      %v150 = vld [vmem:[%s139 + $0x10] sm:$0xff]
      %v151 = vld [vmem:[%s139 + $0x18] sm:$0xff]
      %v152 = vld [vmem:[%s139 + $0x20] sm:$0xff]
      %v153 = vld [vmem:[%s139 + $0x28] sm:$0xff]
      %v154 = vld [vmem:[%s139 + $0x30] sm:$0xff]
      %v155 = vld [vmem:[%s139 + $0x38] sm:$0xff]
      %v156 = vadd.f32 %v148, %v149
      %v157 = vadd.f32 %v156, %v150
      %v158 = vadd.f32 %v157, %v151
      %v159 = vadd.f32 %v158, %v152
      %v160 = vadd.f32 %v159, %v153
      %v161 = vadd.f32 %v160, %v154
      %v162 = vadd.f32 %v161, %v155
      %v163 = vrot.slane %v162, 4
      %v164 = vadd.f32 %v162, %v163
      %v165 = vrot.slane %v164, 2
      %v166 = vadd.f32 %v164, %v165
      %v167 = vrot.slane %v166, 1
      %v168 = vadd.f32 %v166, %v167
      %v169 = vrcp.pop 64.0
      %v170 = vmul.f32 %v168, %v169
      %v171 = vmul.f32 %v148, %v148
      %v172 = vmul.f32 %v149, %v149
      %v173 = vmul.f32 %v150, %v150
      %v174 = vmul.f32 %v151, %v151
      %v175 = vmul.f32 %v152, %v152
      %v176 = vmul.f32 %v153, %v153
      %v177 = vmul.f32 %v154, %v154
      %v178 = vmul.f32 %v155, %v155
      %v179 = vadd.f32 %v171, %v172
      %v180 = vadd.f32 %v179, %v173
      %v181 = vadd.f32 %v180, %v174
      %v182 = vadd.f32 %v181, %v175
      %v183 = vadd.f32 %v182, %v176
      %v184 = vadd.f32 %v183, %v177
      %v185 = vadd.f32 %v184, %v178
      %v186 = vrot.slane %v185, 4
      %v187 = vadd.f32 %v185, %v186
      %v188 = vrot.slane %v187, 2
      %v189 = vadd.f32 %v187, %v188
      %v190 = vrot.slane %v189, 1
      %v191 = vadd.f32 %v189, %v190
      %v192 = vmul.f32 %v191, %v169
      %v193 = vmul.f32 %v170, %v170
      %v194 = vsub.f32 %v192, %v193
      %v195 = vmax.f32 %v194, 0.0
      %v196 = vsub.f32 %v148, %v170
      %v197 = vsub.f32 %v149, %v170
      %v198 = vsub.f32 %v150, %v170
      %v199 = vsub.f32 %v151, %v170
      %v200 = vsub.f32 %v152, %v170
      %v201 = vsub.f32 %v153, %v170
      %v202 = vsub.f32 %v154, %v170
      %v203 = vsub.f32 %v155, %v170
      %v204 = vadd.f32 %v195, 1e-05
      %v205 = vrsqrt.pop %v204
      %v206 = vmul.f32 %v196, %v205
      %v207 = vmul.f32 %v197, %v205
      %v208 = vmul.f32 %v198, %v205
      %v209 = vmul.f32 %v199, %v205
      %v210 = vmul.f32 %v200, %v205
      %v211 = vmul.f32 %v201, %v205
      %v212 = vmul.f32 %v202, %v205
      %v213 = vmul.f32 %v203, %v205
      %vm214 = vcmp.ge.f32.partialorder %v206, 0.0
      %vm215 = vcmp.ge.f32.partialorder %v207, 0.0
      %vm216 = vcmp.ge.f32.partialorder %v208, 0.0
      %vm217 = vcmp.ge.f32.partialorder %v209, 0.0
      %vm218 = vcmp.ge.f32.partialorder %v210, 0.0
      %vm219 = vcmp.ge.f32.partialorder %v211, 0.0
      %vm220 = vcmp.ge.f32.partialorder %v212, 0.0
      %vm221 = vcmp.ge.f32.partialorder %v213, 0.0
      %v222 = vmul.f32 %v206, 0.2
      %v223 = vmul.f32 %v207, 0.2
      %v224 = vmul.f32 %v208, 0.2
      %v225 = vmul.f32 %v209, 0.2
      %v226 = vmul.f32 %v210, 0.2
      %v227 = vmul.f32 %v211, 0.2
      %v228 = vmul.f32 %v212, 0.2
      %v229 = vmul.f32 %v213, 0.2
      %v230 = vsel %vm214, %v206, %v222
      %v231 = vsel %vm215, %v207, %v223
      %v232 = vsel %vm216, %v208, %v224
      %v233 = vsel %vm217, %v209, %v225
      %v234 = vsel %vm218, %v210, %v226
      %v235 = vsel %vm219, %v211, %v227
      %v236 = vsel %vm220, %v212, %v228
      %v237 = vsel %vm221, %v213, %v229
      %238 = vst [vmem:[%s147] sm:$0xff] %v230
      %239 = vst [vmem:[%s147 + $0x8] sm:$0xff] %v231
      %240 = vst [vmem:[%s147 + $0x10] sm:$0xff] %v232
      %241 = vst [vmem:[%s147 + $0x18] sm:$0xff] %v233
      %242 = vst [vmem:[%s147 + $0x20] sm:$0xff] %v234
      %243 = vst [vmem:[%s147 + $0x28] sm:$0xff] %v235
      %244 = vst [vmem:[%s147 + $0x30] sm:$0xff] %v236
      %245 = vst [vmem:[%s147 + $0x38] sm:$0xff] %v237
      %p246 = scmp.lt.s32.totalorder %s16, 1
      %s247 = scalar_select %p246, %s16, 1
      %p248 = scmp.lt.s32.totalorder %s17, 0
      %s249 = scalar_select %p248, %s17, 0
      %s250 = smul.addr %s247, 8
      %s251 = sadd.s32 %s249, %s250
      %s252 = smul.addr %s251, 8
      %s253 = scalar_lea.vmem %s1, %s252
      // Predicated region
      $region25: #{discriminator_forward.10} parent=23 // pred_check
        %p254 = pneg %p72
      $region26: #{discriminator_forward.10} parent=23 // pred_check_branch
        %256 = sbr.rel (%p254) target = $region28
      $region27: #{discriminator_forward.10} parent=23 // pred_region
        _
      $region28: #{discriminator_forward.10} parent=23 // pred_fallthru
        _
    $region24: #{discriminator_forward.10} parent=5 // pred_fallthru
      _
    %p257 = scmp.le.s32.totalorder 2, %s7
    // Predicated region
    $region29: #{discriminator_forward.10} parent=5 // pred_check
      %p258 = pneg %p257
    $region30: #{discriminator_forward.10} parent=5 // pred_check_branch
      %260 = sbr.rel (%p258) target = $region32
    $region31: #{discriminator_forward.10} parent=5 // pred_region
      %s261 = ssub.s32 %s7, 2
      // Predicated region
      $region33: #{discriminator_forward.10} parent=31 // pred_check
        %p262 = pneg %p78
      $region34: #{discriminator_forward.10} parent=31 // pred_check_branch
        %264 = sbr.rel (%p262) target = $region36
      $region35: #{discriminator_forward.10} parent=31 // pred_region
        %p265 = scmp.lt.s32.totalorder %s18, 1
        %s266 = scalar_select %p265, %s18, 1
        %p267 = scmp.lt.s32.totalorder %s19, 0
        %s268 = scalar_select %p267, %s19, 0
        %s269 = smul.addr %s266, 8
        %s270 = sadd.s32 %s268, %s269
        %s271 = smul.addr %s270, 8
        %s272 = scalar_lea.vmem %s1, %s271
      $region36: #{discriminator_forward.10} parent=31 // pred_fallthru
        _
    $region32: #{discriminator_forward.10} parent=5 // pred_fallthru
      _
  $region6: #{discriminator_forward.10} parent=0 // loop_footer
    %s11 = sadd.s32 1, %s7
  $region7: #{discriminator_forward.10} parent=0 // loop_footer_branch
    %6 = sbr.rel target = $region3
  $region8: #{discriminator_forward.10} parent=0 // loop_exit
    _

// kernel: discriminator_forward.12
$region0: #{discriminator_forward.12}
  #allocation0 [shape = 'u32[]', space=smem, size = 0x4, offset = 0x4, fixed_abs, tag = 'smem constant byte address 0x4 - core index']
  #allocation1 [shape = 'u32[144,128]{1,0:T(1,128)}', space=vmem, size = 0x12000, scoped, tag = 'internal scratch']
  %s0 = inlined_call_operand.vmem [shape: f32[2,16,256], index: 0, kind: input, shape index: {}]
  %s1 = inlined_call_operand.vmem [shape: f32[2,16,256], index: 1, kind: output, shape index: {}]
  %s2 = sld [smem:[#allocation0]]
  $region109: #{discriminator_forward.12} parent=0
    _
  %s4 = ssub.s32 1, %s2
  %s5 = scalar_select 0, %s4, %s2
  $region1: #{discriminator_forward.12} parent=0
    #allocation2 [shape = 'u8[16384]{0}', space=vmem, size = 0x4000, scoped, tag = 'input window, operand 0']
    #allocation3 [shape = 'u8[16384]{0}', space=vmem, size = 0x4000, scoped, tag = 'output window, operand 0']
    loop: start=0, step=1, limit=6
    $region2: #{discriminator_forward.12} parent=1 // loop_pre_header
      _
    $region3: #{discriminator_forward.12} parent=1 // loop_header
      %s7 = sphi 0, %s11
      %p8 = scmp.ge.s32.totalorder %s7, 6
      %s14 = sphi 0, %s26
      %s15 = sphi 0, %s22
      %s16 = sphi 0, %s14
      %s17 = sphi 0, %s15
      %s18 = sphi 0, %s16
      %s19 = sphi 0, %s17
      %s31 = sphi 0, %s33
      %s34 = sphi 0, %s31
      %s35 = sphi 0, %s34
      %s51 = sphi 0, %s35
      %s59 = sphi 0, %s61
      %s62 = sphi 0, %s59
      %s63 = sphi 0, %s62
      %s79 = sphi 0, %s63
    $region4: #{discriminator_forward.12} parent=1 // loop_header_branch
      %10 = sbr.rel (%p8) target = $region8
    $region5: #{discriminator_forward.12} parent=1 // loop_body
      %s12 = ssub.s32 %s7, 1
      %s13 = ssub.s32 %s7, 2
      %s20 = sadd.s32 1, %s15
      %p21 = scmp.ge.s32.totalorder %s20, 2
      %s22 = scalar_select %p21, 0, %s20
      %s23 = sadd.s32 1, %s14
      %s24 = scalar_select %p21, %s23, %s14
      %p25 = scmp.ge.s32.totalorder %s24, 2
      %s26 = scalar_select %p25, 0, %s24
      %s27 = ssub.s32 %s14, %s26
      %s28 = ssub.s32 %s15, %s22
      %s29 = sor.u32 %s27, %s28
      %p30 = scmp.eq.s32.totalorder %s29, 0
      %s32 = sadd.s32 %s31, 1
      %s33 = scalar_select %p30, %s31, %s32
      %p36 = pneg %p30
      %p37 = scmp.eq.s32.totalorder %s7, 3
      %p38 = por %p36, %p37
      %p39 = scmp.ne.s32.totalorder %s31, %s34
      %p40 = scmp.eq.s32.totalorder %s7, 0
      %p41 = por %p39, %p40
      %p42 = scmp.ne.s32.totalorder %s31, %s34
      %p43 = scmp.eq.s32.totalorder %s12, 3
      %p44 = por %p42, %p43
      %p45 = scmp.ne.s32.totalorder %s34, %s35
      %p46 = scmp.eq.s32.totalorder %s12, 0
      %p47 = por %p45, %p46
      %p48 = scmp.ne.s32.totalorder %s34, %s35
      %p49 = scmp.eq.s32.totalorder %s13, 3
      %p50 = por %p48, %p49
      %p52 = scmp.ne.s32.totalorder %s35, %s51
      %p53 = scmp.eq.s32.totalorder %s13, 0
      %p54 = por %p52, %p53
      %s55 = ssub.s32 %s14, %s26
      %s56 = ssub.s32 %s15, %s22
      %s57 = sor.u32 %s55, %s56
      %p58 = scmp.eq.s32.totalorder %s57, 0
      %s60 = sadd.s32 %s59, 1
      %s61 = scalar_select %p58, %s59, %s60
      %p64 = pneg %p58
      %p65 = scmp.eq.s32.totalorder %s7, 3
      %p66 = por %p64, %p65
      %p67 = scmp.ne.s32.totalorder %s59, %s62
      %p68 = scmp.eq.s32.totalorder %s7, 0
      %p69 = por %p67, %p68
      %p70 = scmp.ne.s32.totalorder %s59, %s62
      %p71 = scmp.eq.s32.totalorder %s12, 3
      %p72 = por %p70, %p71
      %p73 = scmp.ne.s32.totalorder %s62, %s63
      %p74 = scmp.eq.s32.totalorder %s12, 0
      %p75 = por %p73, %p74
      %p76 = scmp.ne.s32.totalorder %s62, %s63
      %p77 = scmp.eq.s32.totalorder %s13, 3
      %p78 = por %p76, %p77
      %p80 = scmp.ne.s32.totalorder %s63, %s79
      %p81 = scmp.eq.s32.totalorder %s13, 0
      %p82 = por %p80, %p81
      %p83 = scmp.le.s32.totalorder 1, %s7
      %p84 = scmp.lt.s32.totalorder %s7, 5
      %p85 = pnand %p83, %p84
      %p86 = pneg %p85
      // Predicated region
      $region9: #{discriminator_forward.12} parent=5 // pred_check
        _
      $region10: #{discriminator_forward.12} parent=5 // pred_check_branch
        %88 = sbr.rel (%p85) target = $region12
      $region11: #{discriminator_forward.12} parent=5 // pred_region
        %s89 = ssub.s32 %s7, 1
      $region12: #{discriminator_forward.12} parent=5 // pred_fallthru
        _
      %p90 = scmp.lt.s32.totalorder %s7, 4
      // Predicated region
      $region13: #{discriminator_forward.12} parent=5 // pred_check
        %p91 = pneg %p90
      $region14: #{discriminator_forward.12} parent=5 // pred_check_branch
        %93 = sbr.rel (%p91) target = $region16
      $region15: #{discriminator_forward.12} parent=5 // pred_region
        // Predicated region
        $region17: #{discriminator_forward.12} parent=15 // pred_check
          %p94 = pneg %p41
        $region18: #{discriminator_forward.12} parent=15 // pred_check_branch
          %96 = sbr.rel (%p94) target = $region20
        $region19: #{discriminator_forward.12} parent=15 // pred_region
          %s97 = sand.u32 %s31, 1
          %s98 = sand.u32 %s31, 1
          %s99 = smul.addr %s98, 16
          %s100 = scalar_lea.vmem [#allocation2], %s99
          %s101 = smul.addr %s14, 4
          %s102 = sadd.s32 %s15, %s101
          %s103 = smul.addr %s102, 8
          %s104 = scalar_lea.vmem %s0, %s103
          // Predicated region
          $region21: #{discriminator_forward.12} parent=19 // pred_check
            _
          $region22: #{discriminator_forward.12} parent=19 // pred_check_branch
            %106 = sbr.rel (0) target = $region24
          $region23: #{discriminator_forward.12} parent=19 // pred_region
            // Predicated region
            $region25: #{discriminator_forward.12} parent=23 // pred_check
              _
            $region26: #{discriminator_forward.12} parent=23 // pred_check_branch
              %108 = sbr.rel (0) target = $region28
            $region27: #{discriminator_forward.12} parent=23 // pred_region
              // Predicated region
              $region40: #{discriminator_forward.12} parent=27 // pred_check
                _
              $region41: #{discriminator_forward.12} parent=27 // pred_check_branch
                %126 = sbr.rel (0) target = $region43
              $region42: #{discriminator_forward.12} parent=27 // pred_region
                loop: start=0, step=1, limit=1
                $region44: #{discriminator_forward.12} parent=42 // loop_pre_header
                  _
                $region45: #{discriminator_forward.12} parent=42 // loop_header
                  %s128 = sphi 0, %s132
                  %p129 = scmp.ge.s32.totalorder %s128, 1
                  %s133 = sphi %s104, %s104
                  %s134 = sphi %s100, %s100
                $region46: #{discriminator_forward.12} parent=42 // loop_header_branch
                  %131 = sbr.rel (%p129) target = $region50
                $region47: #{discriminator_forward.12} parent=42 // loop_body
                  %v135 = vld [vmem:[%s133] sm:$0xff]
                  %136 = vst [vmem:[%s134] sm:$0xff] %v135
                  %v137 = vld [vmem:[%s133 + $0x10] sm:$0xff]
                  %138 = vst [vmem:[%s134 + $0x8] sm:$0xff] %v137
                $region48: #{discriminator_forward.12} parent=42 // loop_footer
                  %s132 = sadd.s32 1, %s128
                $region49: #{discriminator_forward.12} parent=42 // loop_footer_branch
                  %127 = sbr.rel target = $region45
                $region50: #{discriminator_forward.12} parent=42 // loop_exit
                  _
              $region43: #{discriminator_forward.12} parent=27 // pred_fallthru
                _
              // Predicated region
              $region51: #{discriminator_forward.12} parent=27 // pred_check
                _
              $region52: #{discriminator_forward.12} parent=27 // pred_check_branch
                %140 = sbr.rel target = $region54
              $region53: #{discriminator_forward.12} parent=27 // pred_region
                _
              $region54: #{discriminator_forward.12} parent=27 // pred_fallthru
                _
            $region28: #{discriminator_forward.12} parent=23 // pred_fallthru
              _
            // Predicated region
            $region29: #{discriminator_forward.12} parent=23 // pred_check
              _
            $region30: #{discriminator_forward.12} parent=23 // pred_check_branch
              %110 = sbr.rel target = $region32
            $region31: #{discriminator_forward.12} parent=23 // pred_region
              %s112 = ssub.s32 256, 1
              loop: start=0, step=1, limit=1
              $region33: #{discriminator_forward.12} parent=31 // loop_pre_header
                _
              $region34: #{discriminator_forward.12} parent=31 // loop_header
                %s114 = sphi 0, %s118
                %p115 = scmp.ge.s32.totalorder %s114, 1
                %s119 = sphi %s104, %s104
                %s120 = sphi %s100, %s100
              $region35: #{discriminator_forward.12} parent=31 // loop_header_branch
                %117 = sbr.rel (%p115) target = $region39
              $region36: #{discriminator_forward.12} parent=31 // loop_body
                %v121 = vld [vmem:[%s119] sm:%s112]
                %122 = vst [vmem:[%s120] sm:%s112] %v121
                %v123 = vld [vmem:[%s119 + $0x10] sm:%s112]
                %124 = vst [vmem:[%s120 + $0x8] sm:%s112] %v123
              $region37: #{discriminator_forward.12} parent=31 // loop_footer
                %s118 = sadd.s32 1, %s114
              $region38: #{discriminator_forward.12} parent=31 // loop_footer_branch
                %113 = sbr.rel target = $region34
              $region39: #{discriminator_forward.12} parent=31 // loop_exit
                _
            $region32: #{discriminator_forward.12} parent=23 // pred_fallthru
              _
          $region24: #{discriminator_forward.12} parent=19 // pred_fallthru
            _
          %141 = vnop
        $region20: #{discriminator_forward.12} parent=15 // pred_fallthru
          _
      $region16: #{discriminator_forward.12} parent=5 // pred_fallthru
        _
      %p142 = scmp.le.s32.totalorder 1, %s7
      %p143 = scmp.lt.s32.totalorder %s7, 5
      %p144 = pnand %p142, %p143
      %p145 = pneg %p144
      // Predicated region
      $region55: #{discriminator_forward.12} parent=5 // pred_check
        _
      $region56: #{discriminator_forward.12} parent=5 // pred_check_branch
        %147 = sbr.rel (%p144) target = $region58
      $region57: #{discriminator_forward.12} parent=5 // pred_region
        %s148 = ssub.s32 %s7, 1
        %s149 = sand.u32 %s34, 1
        %s150 = sand.u32 %s34, 1
        %s151 = smul.addr %s150, 16
        %s152 = scalar_lea.vmem [#allocation2], %s151
        // Predicated region
        $region59: #{discriminator_forward.12} parent=57 // pred_check
          %p153 = pneg %p47
        $region60: #{discriminator_forward.12} parent=57 // pred_check_branch
          %155 = sbr.rel (%p153) target = $region62
        $region61: #{discriminator_forward.12} parent=57 // pred_region
          _
        $region62: #{discriminator_forward.12} parent=57 // pred_fallthru
          _
        %s156 = sand.u32 %s34, 1
        %s157 = sand.u32 %s34, 1
        %s158 = smul.addr %s157, 16
        %s159 = scalar_lea.vmem [#allocation2], %s158
        %p160 = pneg %p47
        %p161 = pneg %p44
        %p162 = pneg %p75
        %p163 = pneg %p72
        %s164 = sand.u32 %s62, 1
        %s165 = sand.u32 %s62, 1
        %s166 = smul.addr %s165, 16
        %s167 = scalar_lea.vmem [#allocation3], %s166
        %v168 = vld [vmem:[%s152] sm:$0xff]
        %v169 = vld [vmem:[%s152 + $0x8] sm:$0xff]
        %v170 = vadd.f32 %v168, %v169
        %v171 = vrot.slane %v170, 4
        %v172 = vadd.f32 %v170, %v171
        %v173 = vrot.slane %v172, 2
        %v174 = vadd.f32 %v172, %v173
        %v175 = vrot.slane %v174, 1
        %v176 = vadd.f32 %v174, %v175
        %v177 = vrcp.pop 16.0
        %v178 = vmul.f32 %v176, %v177
        %v179 = vmul.f32 %v168, %v168
        %v180 = vmul.f32 %v169, %v169
        %v181 = vadd.f32 %v179, %v180
        %v182 = vrot.slane %v181, 4
        %v183 = vadd.f32 %v181, %v182
        %v184 = vrot.slane %v183, 2
        %v185 = vadd.f32 %v183, %v184
        %v186 = vrot.slane %v185, 1
        %v187 = vadd.f32 %v185, %v186
        %v188 = vmul.f32 %v187, %v177
        %v189 = vmul.f32 %v178, %v178
        %v190 = vsub.f32 %v188, %v189
        %v191 = vmax.f32 %v190, 0.0
        %v192 = vsub.f32 %v168, %v178
        %v193 = vsub.f32 %v169, %v178
        %v194 = vadd.f32 %v191, 1e-05
        %v195 = vrsqrt.pop %v194
        %v196 = vmul.f32 %v192, %v195
        %v197 = vmul.f32 %v193, %v195
        %vm198 = vcmp.ge.f32.partialorder %v196, 0.0
        %vm199 = vcmp.ge.f32.partialorder %v197, 0.0
        %v200 = vmul.f32 %v196, 0.2
        %v201 = vmul.f32 %v197, 0.2
        %v202 = vsel %vm198, %v196, %v200
        %v203 = vsel %vm199, %v197, %v201
        %204 = vst [vmem:[%s167] sm:$0xff] %v202
        %205 = vst [vmem:[%s167 + $0x8] sm:$0xff] %v203
        %s206 = sand.u32 %s62, 1
        %s207 = sand.u32 %s62, 1
        %s208 = smul.addr %s207, 16
        %s209 = scalar_lea.vmem [#allocation3], %s208
        // Predicated region
        $region63: #{discriminator_forward.12} parent=57 // pred_check
          %p210 = pneg %p72
        $region64: #{discriminator_forward.12} parent=57 // pred_check_branch
          %212 = sbr.rel (%p210) target = $region66
        $region65: #{discriminator_forward.12} parent=57 // pred_region
          %s213 = smul.addr %s16, 4
          %s214 = sadd.s32 %s17, %s213
          %s215 = smul.addr %s214, 8
          %s216 = scalar_lea.vmem %s1, %s215
          // Predicated region
          $region67: #{discriminator_forward.12} parent=65 // pred_check
            _
          $region68: #{discriminator_forward.12} parent=65 // pred_check_branch
            %218 = sbr.rel (0) target = $region70
          $region69: #{discriminator_forward.12} parent=65 // pred_region
            // Predicated region
            $region71: #{discriminator_forward.12} parent=69 // pred_check
              _
            $region72: #{discriminator_forward.12} parent=69 // pred_check_branch
              %220 = sbr.rel (0) target = $region74
            $region73: #{discriminator_forward.12} parent=69 // pred_region
              // Predicated region
              $region86: #{discriminator_forward.12} parent=73 // pred_check
                _
              $region87: #{discriminator_forward.12} parent=73 // pred_check_branch
                %238 = sbr.rel (0) target = $region89
              $region88: #{discriminator_forward.12} parent=73 // pred_region
                loop: start=0, step=1, limit=1
                $region90: #{discriminator_forward.12} parent=88 // loop_pre_header
                  _
                $region91: #{discriminator_forward.12} parent=88 // loop_header
                  %s240 = sphi 0, %s244
                  %p241 = scmp.ge.s32.totalorder %s240, 1
                  %s245 = sphi %s209, %s209
                  %s246 = sphi %s216, %s216
                $region92: #{discriminator_forward.12} parent=88 // loop_header_branch
                  %243 = sbr.rel (%p241) target = $region96
                $region93: #{discriminator_forward.12} parent=88 // loop_body
                  %v247 = vld [vmem:[%s245] sm:$0xff]
                  %248 = vst [vmem:[%s246] sm:$0xff] %v247
                  %v249 = vld [vmem:[%s245 + $0x8] sm:$0xff]
                  %250 = vst [vmem:[%s246 + $0x10] sm:$0xff] %v249
                $region94: #{discriminator_forward.12} parent=88 // loop_footer
                  %s244 = sadd.s32 1, %s240
                $region95: #{discriminator_forward.12} parent=88 // loop_footer_branch
                  %239 = sbr.rel target = $region91
                $region96: #{discriminator_forward.12} parent=88 // loop_exit
                  _
              $region89: #{discriminator_forward.12} parent=73 // pred_fallthru
                _
              // Predicated region
              $region97: #{discriminator_forward.12} parent=73 // pred_check
                _
              $region98: #{discriminator_forward.12} parent=73 // pred_check_branch
                %252 = sbr.rel target = $region100
              $region99: #{discriminator_forward.12} parent=73 // pred_region
                _
              $region100: #{discriminator_forward.12} parent=73 // pred_fallthru
                _
            $region74: #{discriminator_forward.12} parent=69 // pred_fallthru
              _
            // Predicated region
            $region75: #{discriminator_forward.12} parent=69 // pred_check
              _
            $region76: #{discriminator_forward.12} parent=69 // pred_check_branch
              %222 = sbr.rel target = $region78
            $region77: #{discriminator_forward.12} parent=69 // pred_region
              %s224 = ssub.s32 256, 1
              loop: start=0, step=1, limit=1
              $region79: #{discriminator_forward.12} parent=77 // loop_pre_header
                _
              $region80: #{discriminator_forward.12} parent=77 // loop_header
                %s226 = sphi 0, %s230
                %p227 = scmp.ge.s32.totalorder %s226, 1
                %s231 = sphi %s209, %s209
                %s232 = sphi %s216, %s216
              $region81: #{discriminator_forward.12} parent=77 // loop_header_branch
                %229 = sbr.rel (%p227) target = $region85
              $region82: #{discriminator_forward.12} parent=77 // loop_body
                %v233 = vld [vmem:[%s231] sm:%s224]
                %234 = vst [vmem:[%s232] sm:%s224] %v233
                %v235 = vld [vmem:[%s231 + $0x8] sm:%s224]
                %236 = vst [vmem:[%s232 + $0x10] sm:%s224] %v235
              $region83: #{discriminator_forward.12} parent=77 // loop_footer
                %s230 = sadd.s32 1, %s226
              $region84: #{discriminator_forward.12} parent=77 // loop_footer_branch
                %225 = sbr.rel target = $region80
              $region85: #{discriminator_forward.12} parent=77 // loop_exit
                _
            $region78: #{discriminator_forward.12} parent=69 // pred_fallthru
              _
          $region70: #{discriminator_forward.12} parent=65 // pred_fallthru
            _
          %253 = vnop
        $region66: #{discriminator_forward.12} parent=57 // pred_fallthru
          _
      $region58: #{discriminator_forward.12} parent=5 // pred_fallthru
        _
      %p254 = scmp.le.s32.totalorder 2, %s7
      // Predicated region
      $region101: #{discriminator_forward.12} parent=5 // pred_check
        %p255 = pneg %p254
      $region102: #{discriminator_forward.12} parent=5 // pred_check_branch
        %257 = sbr.rel (%p255) target = $region104
      $region103: #{discriminator_forward.12} parent=5 // pred_region
        %s258 = ssub.s32 %s7, 2
        // Predicated region
        $region105: #{discriminator_forward.12} parent=103 // pred_check
          %p259 = pneg %p78
        $region106: #{discriminator_forward.12} parent=103 // pred_check_branch
          %261 = sbr.rel (%p259) target = $region108
        $region107: #{discriminator_forward.12} parent=103 // pred_region
          %s262 = sand.u32 %s63, 1
          %s263 = sand.u32 %s63, 1
          %s264 = smul.addr %s263, 16
          %s265 = scalar_lea.vmem [#allocation3], %s264
        $region108: #{discriminator_forward.12} parent=103 // pred_fallthru
          _
      $region104: #{discriminator_forward.12} parent=5 // pred_fallthru
        _
    $region6: #{discriminator_forward.12} parent=1 // loop_footer
      %s11 = sadd.s32 1, %s7
    $region7: #{discriminator_forward.12} parent=1 // loop_footer_branch
      %6 = sbr.rel target = $region3
    $region8: #{discriminator_forward.12} parent=1 // loop_exit
      _

// kernel: discriminator_forward.11
$region0: #{discriminator_forward.11}
  #allocation0 [shape = 'u32[]', space=smem, size = 0x4, offset = 0x4, fixed_abs, tag = 'smem constant byte address 0x4 - core index']
  #allocation1 [shape = 'u32[144,128]{1,0:T(1,128)}', space=vmem, size = 0x12000, scoped, tag = 'internal scratch']
  #allocation2 [shape = 'f32[128,128]{1,0:T(8,128)}', space=vmem, size = 0x10000, scoped, tag = 'scratch operand']
  %s0 = inlined_call_operand.vmem [shape: bf16[128,2048], index: 0, kind: input, shape index: {}]
  %s1 = inlined_call_operand.vmem [shape: bf16[2048,256], index: 1, kind: input, shape index: {}]
  %s2 = inlined_call_operand.vmem [shape: f32[1,256], index: 2, kind: input, shape index: {}]
  %s3 = inlined_call_operand.vmem [shape: f32[128,256], index: 3, kind: output, shape index: {}]
  %s4 = sld [smem:[#allocation0]]
  $region151: #{discriminator_forward.11} parent=0
    _
  %s6 = ssub.s32 1, %s4
  %s7 = scalar_select 0, %s6, %s4
  $region1: #{discriminator_forward.11} parent=0
    #allocation3 [shape = 'u8[262144]{0}', space=vmem, size = 0x40000, scoped, tag = 'input window, operand 0']
    #allocation4 [shape = 'u8[262144]{0}', space=vmem, size = 0x40000, scoped, tag = 'input window, operand 1']
    #allocation5 [shape = 'u8[131072]{0}', space=vmem, size = 0x20000, scoped, tag = 'output window, operand 0']
    loop: start=0, step=1, limit=10
    $region2: #{discriminator_forward.11} parent=1 // loop_pre_header
      _
    $region3: #{discriminator_forward.11} parent=1 // loop_header
      %s9 = sphi 0, %s13
      %p10 = scmp.ge.s32.totalorder %s9, 10
      %s16 = sphi 0, %s35
      %s17 = sphi 0, %s31
      %s18 = sphi 0, %s27
      %s19 = sphi 0, %s16
      %s20 = sphi 0, %s17
      %s21 = sphi 0, %s18
      %s22 = sphi 0, %s19
      %s23 = sphi 0, %s20
      %s24 = sphi 0, %s21
      %s40 = sphi 0, %s42
      %s43 = sphi 0, %s40
      %s44 = sphi 0, %s43
      %s60 = sphi 0, %s44
      %s68 = sphi 0, %s70
      %s71 = sphi 0, %s68
      %s72 = sphi 0, %s71
      %s88 = sphi 0, %s72
      %s94 = sphi 0, %s96
      %s97 = sphi 0, %s94
      %s98 = sphi 0, %s97
      %s114 = sphi 0, %s98
      %s122 = sphi 0, %s124
      %s125 = sphi 0, %s122
      %s126 = sphi 0, %s125
      %s142 = sphi 0, %s126
    $region4: #{discriminator_forward.11} parent=1 // loop_header_branch
      %12 = sbr.rel (%p10) target = $region8
    $region5: #{discriminator_forward.11} parent=1 // loop_body
      %s14 = ssub.s32 %s9, 1
      %s15 = ssub.s32 %s9, 2
      %s25 = sadd.s32 1, %s18
      %p26 = scmp.ge.s32.totalorder %s25, 4
      %s27 = scalar_select %p26, 0, %s25
      %s28 = sadd.s32 1, %s17
      %s29 = scalar_select %p26, %s28, %s17
      %p30 = scmp.ge.s32.totalorder %s29, 2
      %s31 = scalar_select %p30, 0, %s29
      %s32 = sadd.s32 1, %s16
      %s33 = scalar_select %p30, %s32, %s16
      %p34 = scmp.ge.s32.totalorder %s33, 1
      %s35 = scalar_select %p34, 0, %s33
      %s36 = ssub.s32 %s16, %s35
      %s37 = ssub.s32 %s18, %s27
      %s38 = sor.u32 %s36, %s37
      %p39 = scmp.eq.s32.totalorder %s38, 0
      %s41 = sadd.s32 %s40, 1
      %s42 = scalar_select %p39, %s40, %s41
      %p45 = pneg %p39
      %p46 = scmp.eq.s32.totalorder %s9, 7
      %p47 = por %p45, %p46
      %p48 = scmp.ne.s32.totalorder %s40, %s43
      %p49 = scmp.eq.s32.totalorder %s9, 0
      %p50 = por %p48, %p49
      %p51 = scmp.ne.s32.totalorder %s40, %s43
      %p52 = scmp.eq.s32.totalorder %s14, 7
      %p53 = por %p51, %p52
      %p54 = scmp.ne.s32.totalorder %s43, %s44
      %p55 = scmp.eq.s32.totalorder %s14, 0
      %p56 = por %p54, %p55
      %p57 = scmp.ne.s32.totalorder %s43, %s44
      %p58 = scmp.eq.s32.totalorder %s15, 7
      %p59 = por %p57, %p58
      %p61 = scmp.ne.s32.totalorder %s44, %s60
      %p62 = scmp.eq.s32.totalorder %s15, 0
      %p63 = por %p61, %p62
      %s64 = ssub.s32 %s18, %s27
      %s65 = ssub.s32 %s17, %s31
      %s66 = sor.u32 %s64, %s65
      %p67 = scmp.eq.s32.totalorder %s66, 0
      %s69 = sadd.s32 %s68, 1
      %s70 = scalar_select %p67, %s68, %s69
      %p73 = pneg %p67
      %p74 = scmp.eq.s32.totalorder %s9, 7
      %p75 = por %p73, %p74
      %p76 = scmp.ne.s32.totalorder %s68, %s71
      %p77 = scmp.eq.s32.totalorder %s9, 0
      %p78 = por %p76, %p77
      %p79 = scmp.ne.s32.totalorder %s68, %s71
      %p80 = scmp.eq.s32.totalorder %s14, 7
      %p81 = por %p79, %p80
      %p82 = scmp.ne.s32.totalorder %s71, %s72
      %p83 = scmp.eq.s32.totalorder %s14, 0
      %p84 = por %p82, %p83
      %p85 = scmp.ne.s32.totalorder %s71, %s72
      %p86 = scmp.eq.s32.totalorder %s15, 7
      %p87 = por %p85, %p86
      %p89 = scmp.ne.s32.totalorder %s72, %s88
      %p90 = scmp.eq.s32.totalorder %s15, 0
      %p91 = por %p89, %p90
      %s92 = ssub.s32 %s17, %s31
      %p93 = scmp.eq.s32.totalorder %s92, 0
      %s95 = sadd.s32 %s94, 1
      %s96 = scalar_select %p93, %s94, %s95
      %p99 = pneg %p93
      %p100 = scmp.eq.s32.totalorder %s9, 7
      %p101 = por %p99, %p100
      %p102 = scmp.ne.s32.totalorder %s94, %s97
      %p103 = scmp.eq.s32.totalorder %s9, 0
      %p104 = por %p102, %p103
      %p105 = scmp.ne.s32.totalorder %s94, %s97
      %p106 = scmp.eq.s32.totalorder %s14, 7
      %p107 = por %p105, %p106
      %p108 = scmp.ne.s32.totalorder %s97, %s98
      %p109 = scmp.eq.s32.totalorder %s14, 0
      %p110 = por %p108, %p109
      %p111 = scmp.ne.s32.totalorder %s97, %s98
      %p112 = scmp.eq.s32.totalorder %s15, 7
      %p113 = por %p111, %p112
      %p115 = scmp.ne.s32.totalorder %s98, %s114
      %p116 = scmp.eq.s32.totalorder %s15, 0
      %p117 = por %p115, %p116
      %s118 = ssub.s32 %s16, %s35
      %s119 = ssub.s32 %s17, %s31
      %s120 = sor.u32 %s118, %s119
      %p121 = scmp.eq.s32.totalorder %s120, 0
      %s123 = sadd.s32 %s122, 1
      %s124 = scalar_select %p121, %s122, %s123
      %p127 = pneg %p121
      %p128 = scmp.eq.s32.totalorder %s9, 7
      %p129 = por %p127, %p128
      %p130 = scmp.ne.s32.totalorder %s122, %s125
      %p131 = scmp.eq.s32.totalorder %s9, 0
      %p132 = por %p130, %p131
      %p133 = scmp.ne.s32.totalorder %s122, %s125
      %p134 = scmp.eq.s32.totalorder %s14, 7
      %p135 = por %p133, %p134
      %p136 = scmp.ne.s32.totalorder %s125, %s126
      %p137 = scmp.eq.s32.totalorder %s14, 0
      %p138 = por %p136, %p137
      %p139 = scmp.ne.s32.totalorder %s125, %s126
      %p140 = scmp.eq.s32.totalorder %s15, 7
      %p141 = por %p139, %p140
      %p143 = scmp.ne.s32.totalorder %s126, %s142
      %p144 = scmp.eq.s32.totalorder %s15, 0
      %p145 = por %p143, %p144
      %p146 = scmp.le.s32.totalorder 1, %s9
      %p147 = scmp.lt.s32.totalorder %s9, 9
      %p148 = pnand %p146, %p147
      %p149 = pneg %p148
      // Predicated region
      $region9: #{discriminator_forward.11} parent=5 // pred_check
        _
      $region10: #{discriminator_forward.11} parent=5 // pred_check_branch
        %151 = sbr.rel (%p148) target = $region12
      $region11: #{discriminator_forward.11} parent=5 // pred_region
        %s152 = ssub.s32 %s9, 1
      $region12: #{discriminator_forward.11} parent=5 // pred_fallthru
        _
      %p153 = scmp.lt.s32.totalorder %s9, 8
      // Predicated region
      $region13: #{discriminator_forward.11} parent=5 // pred_check
        %p154 = pneg %p153
      $region14: #{discriminator_forward.11} parent=5 // pred_check_branch
        %156 = sbr.rel (%p154) target = $region16
      $region15: #{discriminator_forward.11} parent=5 // pred_region
        // Predicated region
        $region17: #{discriminator_forward.11} parent=15 // pred_check
          %p157 = pneg %p50
        $region18: #{discriminator_forward.11} parent=15 // pred_check_branch
          %159 = sbr.rel (%p157) target = $region20
        $region19: #{discriminator_forward.11} parent=15 // pred_region
          %s160 = sand.u32 %s40, 1
          %s161 = sand.u32 %s40, 1
          %s162 = smul.addr %s161, 256
          %s163 = scalar_lea.vmem [#allocation3], %s162
          %s164 = smul.u32 16, %s16
          %s165 = smul.u32 4, %s18
          %s166 = smul.addr %s164, 16
          %s167 = sadd.s32 %s165, %s166
          %s168 = smul.addr %s167, 4
          %s169 = scalar_lea.vmem %s0, %s168
          // Predicated region
          $region21: #{discriminator_forward.11} parent=19 // pred_check
            _
          $region22: #{discriminator_forward.11} parent=19 // pred_check_branch
            %171 = sbr.rel (0) target = $region24
          $region23: #{discriminator_forward.11} parent=19 // pred_region
            // Predicated region
            $region25: #{discriminator_forward.11} parent=23 // pred_check
              _
            $region26: #{discriminator_forward.11} parent=23 // pred_check_branch
              %173 = sbr.rel (0) target = $region28
            $region27: #{discriminator_forward.11} parent=23 // pred_region
              loop: start=0, step=1, limit=1
              $region29: #{discriminator_forward.11} parent=27 // loop_pre_header
                _
              $region30: #{discriminator_forward.11} parent=27 // loop_header
                %s175 = sphi 0, %s179
                %p176 = scmp.ge.s32.totalorder %s175, 1
                %s180 = sphi %s169, %s169
                %s181 = sphi %s163, %s163
              $region31: #{discriminator_forward.11} parent=27 // loop_header_branch
                %178 = sbr.rel (%p176) target = $region35
              $region32: #{discriminator_forward.11} parent=27 // loop_body
                %v182 = vld [vmem:[%s180] sm:$0xff]
                %183 = vst [vmem:[%s181] sm:$0xff] %v182
                %v184 = vld [vmem:[%s180 + $0x8] sm:$0xff]
                %185 = vst [vmem:[%s181 + $0x8] sm:$0xff] %v184
                %v186 = vld [vmem:[%s180 + $0x40] sm:$0xff]
                %187 = vst [vmem:[%s181 + $0x10] sm:$0xff] %v186
                %v188 = vld [vmem:[%s180 + $0x48] sm:$0xff]
                %189 = vst [vmem:[%s181 + $0x18] sm:$0xff] %v188
                %v190 = vld [vmem:[%s180 + $0x80] sm:$0xff]
                %191 = vst [vmem:[%s181 + $0x20] sm:$0xff] %v190
                %v192 = vld [vmem:[%s180 + $0x88] sm:$0xff]
                %193 = vst [vmem:[%s181 + $0x28] sm:$0xff] %v192
                %v194 = vld [vmem:[%s180 + $0xc0] sm:$0xff]
                %195 = vst [vmem:[%s181 + $0x30] sm:$0xff] %v194
                %v196 = vld [vmem:[%s180 + $0xc8] sm:$0xff]
                %197 = vst [vmem:[%s181 + $0x38] sm:$0xff] %v196
                %v198 = vld [vmem:[%s180 + $0x100] sm:$0xff]
                %199 = vst [vmem:[%s181 + $0x40] sm:$0xff] %v198
                %v200 = vld [vmem:[%s180 + $0x108] sm:$0xff]
                %201 = vst [vmem:[%s181 + $0x48] sm:$0xff] %v200
                %v202 = vld [vmem:[%s180 + $0x140] sm:$0xff]
                %203 = vst [vmem:[%s181 + $0x50] sm:$0xff] %v202
                %v204 = vld [vmem:[%s180 + $0x148] sm:$0xff]
                %205 = vst [vmem:[%s181 + $0x58] sm:$0xff] %v204
                %v206 = vld [vmem:[%s180 + $0x180] sm:$0xff]
                %207 = vst [vmem:[%s181 + $0x60] sm:$0xff] %v206
                %v208 = vld [vmem:[%s180 + $0x188] sm:$0xff]
                %209 = vst [vmem:[%s181 + $0x68] sm:$0xff] %v208
                %v210 = vld [vmem:[%s180 + $0x1c0] sm:$0xff]
                %211 = vst [vmem:[%s181 + $0x70] sm:$0xff] %v210
                %v212 = vld [vmem:[%s180 + $0x1c8] sm:$0xff]
                %213 = vst [vmem:[%s181 + $0x78] sm:$0xff] %v212
                %v214 = vld [vmem:[%s180 + $0x200] sm:$0xff]
                %215 = vst [vmem:[%s181 + $0x80] sm:$0xff] %v214
                %v216 = vld [vmem:[%s180 + $0x208] sm:$0xff]
                %217 = vst [vmem:[%s181 + $0x88] sm:$0xff] %v216
                %v218 = vld [vmem:[%s180 + $0x240] sm:$0xff]
                %219 = vst [vmem:[%s181 + $0x90] sm:$0xff] %v218
                %v220 = vld [vmem:[%s180 + $0x248] sm:$0xff]
                %221 = vst [vmem:[%s181 + $0x98] sm:$0xff] %v220
                %v222 = vld [vmem:[%s180 + $0x280] sm:$0xff]
                %223 = vst [vmem:[%s181 + $0xa0] sm:$0xff] %v222
                %v224 = vld [vmem:[%s180 + $0x288] sm:$0xff]
                %225 = vst [vmem:[%s181 + $0xa8] sm:$0xff] %v224
                %v226 = vld [vmem:[%s180 + $0x2c0] sm:$0xff]
                %227 = vst [vmem:[%s181 + $0xb0] sm:$0xff] %v226
                %v228 = vld [vmem:[%s180 + $0x2c8] sm:$0xff]
                %229 = vst [vmem:[%s181 + $0xb8] sm:$0xff] %v228
                %v230 = vld [vmem:[%s180 + $0x300] sm:$0xff]
                %231 = vst [vmem:[%s181 + $0xc0] sm:$0xff] %v230
                %v232 = vld [vmem:[%s180 + $0x308] sm:$0xff]
                %233 = vst [vmem:[%s181 + $0xc8] sm:$0xff] %v232
                %v234 = vld [vmem:[%s180 + $0x340] sm:$0xff]
                %235 = vst [vmem:[%s181 + $0xd0] sm:$0xff] %v234
                %v236 = vld [vmem:[%s180 + $0x348] sm:$0xff]
                %237 = vst [vmem:[%s181 + $0xd8] sm:$0xff] %v236
                %v238 = vld [vmem:[%s180 + $0x380] sm:$0xff]
                %239 = vst [vmem:[%s181 + $0xe0] sm:$0xff] %v238
                %v240 = vld [vmem:[%s180 + $0x388] sm:$0xff]
                %241 = vst [vmem:[%s181 + $0xe8] sm:$0xff] %v240
                %v242 = vld [vmem:[%s180 + $0x3c0] sm:$0xff]
                %243 = vst [vmem:[%s181 + $0xf0] sm:$0xff] %v242
                %v244 = vld [vmem:[%s180 + $0x3c8] sm:$0xff]
                %245 = vst [vmem:[%s181 + $0xf8] sm:$0xff] %v244
              $region33: #{discriminator_forward.11} parent=27 // loop_footer
                %s179 = sadd.s32 1, %s175
              $region34: #{discriminator_forward.11} parent=27 // loop_footer_branch
                %174 = sbr.rel target = $region30
              $region35: #{discriminator_forward.11} parent=27 // loop_exit
                _
            $region28: #{discriminator_forward.11} parent=23 // pred_fallthru
              _
            // Predicated region
            $region36: #{discriminator_forward.11} parent=23 // pred_check
              _
            $region37: #{discriminator_forward.11} parent=23 // pred_check_branch
              %247 = sbr.rel target = $region39
            $region38: #{discriminator_forward.11} parent=23 // pred_region
              _
            $region39: #{discriminator_forward.11} parent=23 // pred_fallthru
              _
          $region24: #{discriminator_forward.11} parent=19 // pred_fallthru
            _
          %248 = vnop
        $region20: #{discriminator_forward.11} parent=15 // pred_fallthru
          _
        // Predicated region
        $region40: #{discriminator_forward.11} parent=15 // pred_check
          %p249 = pneg %p78
        $region41: #{discriminator_forward.11} parent=15 // pred_check_branch
          %251 = sbr.rel (%p249) target = $region43
        $region42: #{discriminator_forward.11} parent=15 // pred_region
          %s252 = sand.u32 %s68, 1
          %s253 = sand.u32 %s68, 1
          %s254 = smul.addr %s253, 256
          %s255 = scalar_lea.vmem [#allocation4], %s254
          %s256 = smul.u32 64, %s18
          %s257 = smul.addr %s256, 2
          %s258 = sadd.s32 %s17, %s257
          %s259 = smul.addr %s258, 4
          %s260 = scalar_lea.vmem %s1, %s259
          // Predicated region
          $region44: #{discriminator_forward.11} parent=42 // pred_check
            _
          $region45: #{discriminator_forward.11} parent=42 // pred_check_branch
            %262 = sbr.rel (0) target = $region47
          $region46: #{discriminator_forward.11} parent=42 // pred_region
            // Predicated region
            $region48: #{discriminator_forward.11} parent=46 // pred_check
              _
            $region49: #{discriminator_forward.11} parent=46 // pred_check_branch
              %264 = sbr.rel target = $region51
            $region50: #{discriminator_forward.11} parent=46 // pred_region
              // Predicated region
              $region63: #{discriminator_forward.11} parent=50 // pred_check
                _
              $region64: #{discriminator_forward.11} parent=50 // pred_check_branch
                %406 = sbr.rel (0) target = $region66
              $region65: #{discriminator_forward.11} parent=50 // pred_region
                loop: start=0, step=1, limit=1
                $region67: #{discriminator_forward.11} parent=65 // loop_pre_header
                  _
                $region68: #{discriminator_forward.11} parent=65 // loop_header
                  %s408 = sphi 0, %s412
                  %p409 = scmp.ge.s32.totalorder %s408, 1
                  %s413 = sphi %s260, %s260
                  %s414 = sphi %s255, %s255
                $region69: #{discriminator_forward.11} parent=65 // loop_header_branch
                  %411 = sbr.rel (%p409) target = $region73
                $region70: #{discriminator_forward.11} parent=65 // loop_body
                  _
                $region71: #{discriminator_forward.11} parent=65 // loop_footer
                  %s412 = sadd.s32 1, %s408
                $region72: #{discriminator_forward.11} parent=65 // loop_footer_branch
                  %407 = sbr.rel target = $region68
                $region73: #{discriminator_forward.11} parent=65 // loop_exit
                  _
                %s416 = ssub.s32 16, 1
                loop: start=0, step=1, limit=1
                $region74: #{discriminator_forward.11} parent=65 // loop_pre_header
                  _
                $region75: #{discriminator_forward.11} parent=65 // loop_header
                  %s418 = sphi 0, %s422
                  %p419 = scmp.ge.s32.totalorder %s418, 1
                  %s423 = sphi %s260, %s260
                  %s424 = sphi %s255, %s255
                $region76: #{discriminator_forward.11} parent=65 // loop_header_branch
                  %421 = sbr.rel (%p419) target = $region80
                $region77: #{discriminator_forward.11} parent=65 // loop_body
                  %v425 = vld [vmem:[%s423] sm:%s416]
                  %426 = vst [vmem:[%s424] sm:%s416] %v425
                  %v427 = vld [vmem:[%s423 + $0x8] sm:%s416]
                  %428 = vst [vmem:[%s424 + $0x4] sm:%s416] %v427
                  %v429 = vld [vmem:[%s423 + $0x10] sm:%s416]
                  %430 = vst [vmem:[%s424 + $0x8] sm:%s416] %v429
                  %v431 = vld [vmem:[%s423 + $0x18] sm:%s416]
                  %432 = vst [vmem:[%s424 + $0xc] sm:%s416] %v431
                  %v433 = vld [vmem:[%s423 + $0x20] sm:%s416]
                  %434 = vst [vmem:[%s424 + $0x10] sm:%s416] %v433
                  %v435 = vld [vmem:[%s423 + $0x28] sm:%s416]
                  %436 = vst [vmem:[%s424 + $0x14] sm:%s416] %v435
                  %v437 = vld [vmem:[%s423 + $0x30] sm:%s416]
                  %438 = vst [vmem:[%s424 + $0x18] sm:%s416] %v437
                  %v439 = vld [vmem:[%s423 + $0x38] sm:%s416]
                  %440 = vst [vmem:[%s424 + $0x1c] sm:%s416] %v439
                  %v441 = vld [vmem:[%s423 + $0x40] sm:%s416]
                  %442 = vst [vmem:[%s424 + $0x20] sm:%s416] %v441
                  %v443 = vld [vmem:[%s423 + $0x48] sm:%s416]
                  %444 = vst [vmem:[%s424 + $0x24] sm:%s416] %v443
                  %v445 = vld [vmem:[%s423 + $0x50] sm:%s416]
                  %446 = vst [vmem:[%s424 + $0x28] sm:%s416] %v445
                  %v447 = vld [vmem:[%s423 + $0x58] sm:%s416]
                  %448 = vst [vmem:[%s424 + $0x2c] sm:%s416] %v447
                  %v449 = vld [vmem:[%s423 + $0x60] sm:%s416]
                  %450 = vst [vmem:[%s424 + $0x30] sm:%s416] %v449
                  %v451 = vld [vmem:[%s423 + $0x68] sm:%s416]
                  %452 = vst [vmem:[%s424 + $0x34] sm:%s416] %v451
                  %v453 = vld [vmem:[%s423 + $0x70] sm:%s416]
                  %454 = vst [vmem:[%s424 + $0x38] sm:%s416] %v453
                  %v455 = vld [vmem:[%s423 + $0x78] sm:%s416]
                  %456 = vst [vmem:[%s424 + $0x3c] sm:%s416] %v455
                  %v457 = vld [vmem:[%s423 + $0x80] sm:%s416]
                  %458 = vst [vmem:[%s424 + $0x40] sm:%s416] %v457
                  %v459 = vld [vmem:[%s423 + $0x88] sm:%s416]
                  %460 = vst [vmem:[%s424 + $0x44] sm:%s416] %v459
                  %v461 = vld [vmem:[%s423 + $0x90] sm:%s416]
                  %462 = vst [vmem:[%s424 + $0x48] sm:%s416] %v461
                  %v463 = vld [vmem:[%s423 + $0x98] sm:%s416]
                  %464 = vst [vmem:[%s424 + $0x4c] sm:%s416] %v463
                  %v465 = vld [vmem:[%s423 + $0xa0] sm:%s416]
                  %466 = vst [vmem:[%s424 + $0x50] sm:%s416] %v465
                  %v467 = vld [vmem:[%s423 + $0xa8] sm:%s416]
                  %468 = vst [vmem:[%s424 + $0x54] sm:%s416] %v467
                  %v469 = vld [vmem:[%s423 + $0xb0] sm:%s416]
                  %470 = vst [vmem:[%s424 + $0x58] sm:%s416] %v469
                  %v471 = vld [vmem:[%s423 + $0xb8] sm:%s416]
                  %472 = vst [vmem:[%s424 + $0x5c] sm:%s416] %v471
                  %v473 = vld [vmem:[%s423 + $0xc0] sm:%s416]
                  %474 = vst [vmem:[%s424 + $0x60] sm:%s416] %v473
                  %v475 = vld [vmem:[%s423 + $0xc8] sm:%s416]
                  %476 = vst [vmem:[%s424 + $0x64] sm:%s416] %v475
                  %v477 = vld [vmem:[%s423 + $0xd0] sm:%s416]
                  %478 = vst [vmem:[%s424 + $0x68] sm:%s416] %v477
                  %v479 = vld [vmem:[%s423 + $0xd8] sm:%s416]
                  %480 = vst [vmem:[%s424 + $0x6c] sm:%s416] %v479
                  %v481 = vld [vmem:[%s423 + $0xe0] sm:%s416]
                  %482 = vst [vmem:[%s424 + $0x70] sm:%s416] %v481
                  %v483 = vld [vmem:[%s423 + $0xe8] sm:%s416]
                  %484 = vst [vmem:[%s424 + $0x74] sm:%s416] %v483
                  %v485 = vld [vmem:[%s423 + $0xf0] sm:%s416]
                  %486 = vst [vmem:[%s424 + $0x78] sm:%s416] %v485
                  %v487 = vld [vmem:[%s423 + $0xf8] sm:%s416]
                  %488 = vst [vmem:[%s424 + $0x7c] sm:%s416] %v487
                  %v489 = vld [vmem:[%s423 + $0x100] sm:%s416]
                  %490 = vst [vmem:[%s424 + $0x80] sm:%s416] %v489
                  %v491 = vld [vmem:[%s423 + $0x108] sm:%s416]
                  %492 = vst [vmem:[%s424 + $0x84] sm:%s416] %v491
                  %v493 = vld [vmem:[%s423 + $0x110] sm:%s416]
                  %494 = vst [vmem:[%s424 + $0x88] sm:%s416] %v493
                  %v495 = vld [vmem:[%s423 + $0x118] sm:%s416]
                  %496 = vst [vmem:[%s424 + $0x8c] sm:%s416] %v495
                  %v497 = vld [vmem:[%s423 + $0x120] sm:%s416]
                  %498 = vst [vmem:[%s424 + $0x90] sm:%s416] %v497
                  %v499 = vld [vmem:[%s423 + $0x128] sm:%s416]
                  %500 = vst [vmem:[%s424 + $0x94] sm:%s416] %v499
                  %v501 = vld [vmem:[%s423 + $0x130] sm:%s416]
                  %502 = vst [vmem:[%s424 + $0x98] sm:%s416] %v501
                  %v503 = vld [vmem:[%s423 + $0x138] sm:%s416]
                  %504 = vst [vmem:[%s424 + $0x9c] sm:%s416] %v503
                  %v505 = vld [vmem:[%s423 + $0x140] sm:%s416]
                  %506 = vst [vmem:[%s424 + $0xa0] sm:%s416] %v505
                  %v507 = vld [vmem:[%s423 + $0x148] sm:%s416]
                  %508 = vst [vmem:[%s424 + $0xa4] sm:%s416] %v507
                  %v509 = vld [vmem:[%s423 + $0x150] sm:%s416]
                  %510 = vst [vmem:[%s424 + $0xa8] sm:%s416] %v509
                  %v511 = vld [vmem:[%s423 + $0x158] sm:%s416]
                  %512 = vst [vmem:[%s424 + $0xac] sm:%s416] %v511
                  %v513 = vld [vmem:[%s423 + $0x160] sm:%s416]
                  %514 = vst [vmem:[%s424 + $0xb0] sm:%s416] %v513
                  %v515 = vld [vmem:[%s423 + $0x168] sm:%s416]
                  %516 = vst [vmem:[%s424 + $0xb4] sm:%s416] %v515
                  %v517 = vld [vmem:[%s423 + $0x170] sm:%s416]
                  %518 = vst [vmem:[%s424 + $0xb8] sm:%s416] %v517
                  %v519 = vld [vmem:[%s423 + $0x178] sm:%s416]
                  %520 = vst [vmem:[%s424 + $0xbc] sm:%s416] %v519
                  %v521 = vld [vmem:[%s423 + $0x180] sm:%s416]
                  %522 = vst [vmem:[%s424 + $0xc0] sm:%s416] %v521
                  %v523 = vld [vmem:[%s423 + $0x188] sm:%s416]
                  %524 = vst [vmem:[%s424 + $0xc4] sm:%s416] %v523
                  %v525 = vld [vmem:[%s423 + $0x190] sm:%s416]
                  %526 = vst [vmem:[%s424 + $0xc8] sm:%s416] %v525
                  %v527 = vld [vmem:[%s423 + $0x198] sm:%s416]
                  %528 = vst [vmem:[%s424 + $0xcc] sm:%s416] %v527
                  %v529 = vld [vmem:[%s423 + $0x1a0] sm:%s416]
                  %530 = vst [vmem:[%s424 + $0xd0] sm:%s416] %v529
                  %v531 = vld [vmem:[%s423 + $0x1a8] sm:%s416]
                  %532 = vst [vmem:[%s424 + $0xd4] sm:%s416] %v531
                  %v533 = vld [vmem:[%s423 + $0x1b0] sm:%s416]
                  %534 = vst [vmem:[%s424 + $0xd8] sm:%s416] %v533
                  %v535 = vld [vmem:[%s423 + $0x1b8] sm:%s416]
                  %536 = vst [vmem:[%s424 + $0xdc] sm:%s416] %v535
                  %v537 = vld [vmem:[%s423 + $0x1c0] sm:%s416]
                  %538 = vst [vmem:[%s424 + $0xe0] sm:%s416] %v537
                  %v539 = vld [vmem:[%s423 + $0x1c8] sm:%s416]
                  %540 = vst [vmem:[%s424 + $0xe4] sm:%s416] %v539
                  %v541 = vld [vmem:[%s423 + $0x1d0] sm:%s416]
                  %542 = vst [vmem:[%s424 + $0xe8] sm:%s416] %v541
                  %v543 = vld [vmem:[%s423 + $0x1d8] sm:%s416]
                  %544 = vst [vmem:[%s424 + $0xec] sm:%s416] %v543
                  %v545 = vld [vmem:[%s423 + $0x1e0] sm:%s416]
                  %546 = vst [vmem:[%s424 + $0xf0] sm:%s416] %v545
                  %v547 = vld [vmem:[%s423 + $0x1e8] sm:%s416]
                  %548 = vst [vmem:[%s424 + $0xf4] sm:%s416] %v547
                  %v549 = vld [vmem:[%s423 + $0x1f0] sm:%s416]
                  %550 = vst [vmem:[%s424 + $0xf8] sm:%s416] %v549
                  %v551 = vld [vmem:[%s423 + $0x1f8] sm:%s416]
                  %552 = vst [vmem:[%s424 + $0xfc] sm:%s416] %v551
                $region78: #{discriminator_forward.11} parent=65 // loop_footer
                  %s422 = sadd.s32 1, %s418
                $region79: #{discriminator_forward.11} parent=65 // loop_footer_branch
                  %417 = sbr.rel target = $region75
                $region80: #{discriminator_forward.11} parent=65 // loop_exit
                  _
              $region66: #{discriminator_forward.11} parent=50 // pred_fallthru
                _
            $region51: #{discriminator_forward.11} parent=46 // pred_fallthru
              _
            // Predicated region
            $region52: #{discriminator_forward.11} parent=46 // pred_check
              _
            $region53: #{discriminator_forward.11} parent=46 // pred_check_branch
              %266 = sbr.rel (0) target = $region55
            $region54: #{discriminator_forward.11} parent=46 // pred_region
              %s268 = ssub.s32 16, 1
              loop: start=0, step=1, limit=1
              $region56: #{discriminator_forward.11} parent=54 // loop_pre_header
                _
              $region57: #{discriminator_forward.11} parent=54 // loop_header
                %s270 = sphi 0, %s274
                %p271 = scmp.ge.s32.totalorder %s270, 1
                %s275 = sphi %s260, %s260
                %s276 = sphi %s255, %s255
              $region58: #{discriminator_forward.11} parent=54 // loop_header_branch
                %273 = sbr.rel (%p271) target = $region62
              $region59: #{discriminator_forward.11} parent=54 // loop_body
                %v277 = vld [vmem:[%s275] sm:%s268]
                %278 = vst [vmem:[%s276] sm:%s268] %v277
                %v279 = vld [vmem:[%s275 + $0x8] sm:%s268]
                %280 = vst [vmem:[%s276 + $0x4] sm:%s268] %v279
                %v281 = vld [vmem:[%s275 + $0x10] sm:%s268]
                %282 = vst [vmem:[%s276 + $0x8] sm:%s268] %v281
                %v283 = vld [vmem:[%s275 + $0x18] sm:%s268]
                %284 = vst [vmem:[%s276 + $0xc] sm:%s268] %v283
                %v285 = vld [vmem:[%s275 + $0x20] sm:%s268]
                %286 = vst [vmem:[%s276 + $0x10] sm:%s268] %v285
                %v287 = vld [vmem:[%s275 + $0x28] sm:%s268]
                %288 = vst [vmem:[%s276 + $0x14] sm:%s268] %v287
                %v289 = vld [vmem:[%s275 + $0x30] sm:%s268]
                %290 = vst [vmem:[%s276 + $0x18] sm:%s268] %v289
                %v291 = vld [vmem:[%s275 + $0x38] sm:%s268]
                %292 = vst [vmem:[%s276 + $0x1c] sm:%s268] %v291
                %v293 = vld [vmem:[%s275 + $0x40] sm:%s268]
                %294 = vst [vmem:[%s276 + $0x20] sm:%s268] %v293
                %v295 = vld [vmem:[%s275 + $0x48] sm:%s268]
                %296 = vst [vmem:[%s276 + $0x24] sm:%s268] %v295
                %v297 = vld [vmem:[%s275 + $0x50] sm:%s268]
                %298 = vst [vmem:[%s276 + $0x28] sm:%s268] %v297
                %v299 = vld [vmem:[%s275 + $0x58] sm:%s268]
                %300 = vst [vmem:[%s276 + $0x2c] sm:%s268] %v299
                %v301 = vld [vmem:[%s275 + $0x60] sm:%s268]
                %302 = vst [vmem:[%s276 + $0x30] sm:%s268] %v301
                %v303 = vld [vmem:[%s275 + $0x68] sm:%s268]
                %304 = vst [vmem:[%s276 + $0x34] sm:%s268] %v303
                %v305 = vld [vmem:[%s275 + $0x70] sm:%s268]
                %306 = vst [vmem:[%s276 + $0x38] sm:%s268] %v305
                %v307 = vld [vmem:[%s275 + $0x78] sm:%s268]
                %308 = vst [vmem:[%s276 + $0x3c] sm:%s268] %v307
                %v309 = vld [vmem:[%s275 + $0x80] sm:%s268]
                %310 = vst [vmem:[%s276 + $0x40] sm:%s268] %v309
                %v311 = vld [vmem:[%s275 + $0x88] sm:%s268]
                %312 = vst [vmem:[%s276 + $0x44] sm:%s268] %v311
                %v313 = vld [vmem:[%s275 + $0x90] sm:%s268]
                %314 = vst [vmem:[%s276 + $0x48] sm:%s268] %v313
                %v315 = vld [vmem:[%s275 + $0x98] sm:%s268]
                %316 = vst [vmem:[%s276 + $0x4c] sm:%s268] %v315
                %v317 = vld [vmem:[%s275 + $0xa0] sm:%s268]
                %318 = vst [vmem:[%s276 + $0x50] sm:%s268] %v317
                %v319 = vld [vmem:[%s275 + $0xa8] sm:%s268]
                %320 = vst [vmem:[%s276 + $0x54] sm:%s268] %v319
                %v321 = vld [vmem:[%s275 + $0xb0] sm:%s268]
                %322 = vst [vmem:[%s276 + $0x58] sm:%s268] %v321
                %v323 = vld [vmem:[%s275 + $0xb8] sm:%s268]
                %324 = vst [vmem:[%s276 + $0x5c] sm:%s268] %v323
                %v325 = vld [vmem:[%s275 + $0xc0] sm:%s268]
                %326 = vst [vmem:[%s276 + $0x60] sm:%s268] %v325
                %v327 = vld [vmem:[%s275 + $0xc8] sm:%s268]
                %328 = vst [vmem:[%s276 + $0x64] sm:%s268] %v327
                %v329 = vld [vmem:[%s275 + $0xd0] sm:%s268]
                %330 = vst [vmem:[%s276 + $0x68] sm:%s268] %v329
                %v331 = vld [vmem:[%s275 + $0xd8] sm:%s268]
                %332 = vst [vmem:[%s276 + $0x6c] sm:%s268] %v331
                %v333 = vld [vmem:[%s275 + $0xe0] sm:%s268]
                %334 = vst [vmem:[%s276 + $0x70] sm:%s268] %v333
                %v335 = vld [vmem:[%s275 + $0xe8] sm:%s268]
                %336 = vst [vmem:[%s276 + $0x74] sm:%s268] %v335
                %v337 = vld [vmem:[%s275 + $0xf0] sm:%s268]
                %338 = vst [vmem:[%s276 + $0x78] sm:%s268] %v337
                %v339 = vld [vmem:[%s275 + $0xf8] sm:%s268]
                %340 = vst [vmem:[%s276 + $0x7c] sm:%s268] %v339
                %v341 = vld [vmem:[%s275 + $0x100] sm:%s268]
                %342 = vst [vmem:[%s276 + $0x80] sm:%s268] %v341
                %v343 = vld [vmem:[%s275 + $0x108] sm:%s268]
                %344 = vst [vmem:[%s276 + $0x84] sm:%s268] %v343
                %v345 = vld [vmem:[%s275 + $0x110] sm:%s268]
                %346 = vst [vmem:[%s276 + $0x88] sm:%s268] %v345
                %v347 = vld [vmem:[%s275 + $0x118] sm:%s268]
                %348 = vst [vmem:[%s276 + $0x8c] sm:%s268] %v347
                %v349 = vld [vmem:[%s275 + $0x120] sm:%s268]
                %350 = vst [vmem:[%s276 + $0x90] sm:%s268] %v349
                %v351 = vld [vmem:[%s275 + $0x128] sm:%s268]
                %352 = vst [vmem:[%s276 + $0x94] sm:%s268] %v351
                %v353 = vld [vmem:[%s275 + $0x130] sm:%s268]
                %354 = vst [vmem:[%s276 + $0x98] sm:%s268] %v353
                %v355 = vld [vmem:[%s275 + $0x138] sm:%s268]
                %356 = vst [vmem:[%s276 + $0x9c] sm:%s268] %v355
                %v357 = vld [vmem:[%s275 + $0x140] sm:%s268]
                %358 = vst [vmem:[%s276 + $0xa0] sm:%s268] %v357
                %v359 = vld [vmem:[%s275 + $0x148] sm:%s268]
                %360 = vst [vmem:[%s276 + $0xa4] sm:%s268] %v359
                %v361 = vld [vmem:[%s275 + $0x150] sm:%s268]
                %362 = vst [vmem:[%s276 + $0xa8] sm:%s268] %v361
                %v363 = vld [vmem:[%s275 + $0x158] sm:%s268]
                %364 = vst [vmem:[%s276 + $0xac] sm:%s268] %v363
                %v365 = vld [vmem:[%s275 + $0x160] sm:%s268]
                %366 = vst [vmem:[%s276 + $0xb0] sm:%s268] %v365
                %v367 = vld [vmem:[%s275 + $0x168] sm:%s268]
                %368 = vst [vmem:[%s276 + $0xb4] sm:%s268] %v367
                %v369 = vld [vmem:[%s275 + $0x170] sm:%s268]
                %370 = vst [vmem:[%s276 + $0xb8] sm:%s268] %v369
                %v371 = vld [vmem:[%s275 + $0x178] sm:%s268]
                %372 = vst [vmem:[%s276 + $0xbc] sm:%s268] %v371
                %v373 = vld [vmem:[%s275 + $0x180] sm:%s268]
                %374 = vst [vmem:[%s276 + $0xc0] sm:%s268] %v373
                %v375 = vld [vmem:[%s275 + $0x188] sm:%s268]
                %376 = vst [vmem:[%s276 + $0xc4] sm:%s268] %v375
                %v377 = vld [vmem:[%s275 + $0x190] sm:%s268]
                %378 = vst [vmem:[%s276 + $0xc8] sm:%s268] %v377
                %v379 = vld [vmem:[%s275 + $0x198] sm:%s268]
                %380 = vst [vmem:[%s276 + $0xcc] sm:%s268] %v379
                %v381 = vld [vmem:[%s275 + $0x1a0] sm:%s268]
                %382 = vst [vmem:[%s276 + $0xd0] sm:%s268] %v381
                %v383 = vld [vmem:[%s275 + $0x1a8] sm:%s268]
                %384 = vst [vmem:[%s276 + $0xd4] sm:%s268] %v383
                %v385 = vld [vmem:[%s275 + $0x1b0] sm:%s268]
                %386 = vst [vmem:[%s276 + $0xd8] sm:%s268] %v385
                %v387 = vld [vmem:[%s275 + $0x1b8] sm:%s268]
                %388 = vst [vmem:[%s276 + $0xdc] sm:%s268] %v387
                %v389 = vld [vmem:[%s275 + $0x1c0] sm:%s268]
                %390 = vst [vmem:[%s276 + $0xe0] sm:%s268] %v389
                %v391 = vld [vmem:[%s275 + $0x1c8] sm:%s268]
                %392 = vst [vmem:[%s276 + $0xe4] sm:%s268] %v391
                %v393 = vld [vmem:[%s275 + $0x1d0] sm:%s268]
                %394 = vst [vmem:[%s276 + $0xe8] sm:%s268] %v393
                %v395 = vld [vmem:[%s275 + $0x1d8] sm:%s268]
                %396 = vst [vmem:[%s276 + $0xec] sm:%s268] %v395
                %v397 = vld [vmem:[%s275 + $0x1e0] sm:%s268]
                %398 = vst [vmem:[%s276 + $0xf0] sm:%s268] %v397
                %v399 = vld [vmem:[%s275 + $0x1e8] sm:%s268]
                %400 = vst [vmem:[%s276 + $0xf4] sm:%s268] %v399
                %v401 = vld [vmem:[%s275 + $0x1f0] sm:%s268]
                %402 = vst [vmem:[%s276 + $0xf8] sm:%s268] %v401
                %v403 = vld [vmem:[%s275 + $0x1f8] sm:%s268]
                %404 = vst [vmem:[%s276 + $0xfc] sm:%s268] %v403
              $region60: #{discriminator_forward.11} parent=54 // loop_footer
                %s274 = sadd.s32 1, %s270
              $region61: #{discriminator_forward.11} parent=54 // loop_footer_branch
                %269 = sbr.rel target = $region57
              $region62: #{discriminator_forward.11} parent=54 // loop_exit
                _
            $region55: #{discriminator_forward.11} parent=46 // pred_fallthru
              _
          $region47: #{discriminator_forward.11} parent=42 // pred_fallthru
            _
          %553 = vnop
        $region43: #{discriminator_forward.11} parent=15 // pred_fallthru
          _
        // Predicated region
        $region81: #{discriminator_forward.11} parent=15 // pred_check
          %p554 = pneg %p104
        $region82: #{discriminator_forward.11} parent=15 // pred_check_branch
          %556 = sbr.rel (%p554) target = $region84
        $region83: #{discriminator_forward.11} parent=15 // pred_region
          %p557 = scmp.lt.s32.totalorder %s17, 1
          %s558 = scalar_select %p557, %s17, 1
          %s559 = scalar_lea.vmem %s2, %s558
        $region84: #{discriminator_forward.11} parent=15 // pred_fallthru
          _
      $region16: #{discriminator_forward.11} parent=5 // pred_fallthru
        _
      %p560 = scmp.le.s32.totalorder 1, %s9
      %p561 = scmp.lt.s32.totalorder %s9, 9
      %p562 = pnand %p560, %p561
      %p563 = pneg %p562
      // Predicated region
      $region85: #{discriminator_forward.11} parent=5 // pred_check
        _
      $region86: #{discriminator_forward.11} parent=5 // pred_check_branch
        %565 = sbr.rel (%p562) target = $region88
      $region87: #{discriminator_forward.11} parent=5 // pred_region
        %s566 = ssub.s32 %s9, 1
        %s567 = sand.u32 %s43, 1
        %s568 = sand.u32 %s43, 1
        %s569 = smul.addr %s568, 256
        %s570 = scalar_lea.vmem [#allocation3], %s569
        // Predicated region
        $region89: #{discriminator_forward.11} parent=87 // pred_check
          %p571 = pneg %p56
        $region90: #{discriminator_forward.11} parent=87 // pred_check_branch
          %573 = sbr.rel (%p571) target = $region92
        $region91: #{discriminator_forward.11} parent=87 // pred_region
          _
        $region92: #{discriminator_forward.11} parent=87 // pred_fallthru
          _
        %s574 = sand.u32 %s71, 1
        %s575 = sand.u32 %s71, 1
        %s576 = smul.addr %s575, 256
        %s577 = scalar_lea.vmem [#allocation4], %s576
        // Predicated region
        $region93: #{discriminator_forward.11} parent=87 // pred_check
          %p578 = pneg %p84
        $region94: #{discriminator_forward.11} parent=87 // pred_check_branch
          %580 = sbr.rel (%p578) target = $region96
        $region95: #{discriminator_forward.11} parent=87 // pred_region
          _
        $region96: #{discriminator_forward.11} parent=87 // pred_fallthru
          _
        %s581 = sand.u32 %s43, 1
        %s582 = sand.u32 %s43, 1
        %s583 = smul.addr %s582, 256
        %s584 = scalar_lea.vmem [#allocation3], %s583
        %p585 = pneg %p56
        %p586 = pneg %p53
        %s587 = sand.u32 %s71, 1
        %s588 = sand.u32 %s71, 1
        %s589 = smul.addr %s588, 256
        %s590 = scalar_lea.vmem [#allocation4], %s589
        %p591 = pneg %p84
        %p592 = pneg %p81
        %p593 = scmp.lt.s32.totalorder %s20, 1
        %s594 = scalar_select %p593, %s20, 1
        %s595 = scalar_lea.vmem %s2, %s594
        %p596 = pneg %p110
        %p597 = pneg %p107
        %p598 = pneg %p138
        %p599 = pneg %p135
        %s600 = sand.u32 %s125, 1
        %s601 = sand.u32 %s125, 1
        %s602 = smul.addr %s601, 128
        %s603 = scalar_lea.vmem [#allocation5], %s602
        %s604 = smul.u32 16, %s19
        %s605 = smul.u32 4, %s21
        %s606 = smul.u32 64, %s21
        %p607 = scmp.lt.s32.totalorder %s20, 1
        %s608 = scalar_select %p607, %s20, 1
        %s609 = scalar_lea.vmem %s2, %s608
        %s610 = smul.u32 16, %s19
        %p612 = scmp.eq.s32.totalorder %s21, 0
        // Predicated region
        $region97: #{discriminator_forward.11} parent=87 // pred_check
          %p613 = pneg %p612
        $region98: #{discriminator_forward.11} parent=87 // pred_check_branch
          %615 = sbr.rel (%p613) target = $region100
        $region99: #{discriminator_forward.11} parent=87 // pred_region
          %v616 = vld [vmem:[%s609] sm:$0x1]
          %v618 = vlaneseq
          %v619 = vshrl.u32 %v618, 7
          %v620 = vsub.s32 0, %v619
          %v621 = vrot.slane %v616, %v620
          %623 = vst [vmem:[#allocation2] sm:$0xff] %v621
          %624 = vst [vmem:[#allocation2 + $0x8] sm:$0xff] %v621
          %625 = vst [vmem:[#allocation2 + $0x10] sm:$0xff] %v621
          %626 = vst [vmem:[#allocation2 + $0x18] sm:$0xff] %v621
          %627 = vst [vmem:[#allocation2 + $0x20] sm:$0xff] %v621
          %628 = vst [vmem:[#allocation2 + $0x28] sm:$0xff] %v621
          %629 = vst [vmem:[#allocation2 + $0x30] sm:$0xff] %v621
          %630 = vst [vmem:[#allocation2 + $0x38] sm:$0xff] %v621
          %631 = vst [vmem:[#allocation2 + $0x40] sm:$0xff] %v621
          %632 = vst [vmem:[#allocation2 + $0x48] sm:$0xff] %v621
          %633 = vst [vmem:[#allocation2 + $0x50] sm:$0xff] %v621
          %634 = vst [vmem:[#allocation2 + $0x58] sm:$0xff] %v621
          %635 = vst [vmem:[#allocation2 + $0x60] sm:$0xff] %v621
          %636 = vst [vmem:[#allocation2 + $0x68] sm:$0xff] %v621
          %637 = vst [vmem:[#allocation2 + $0x70] sm:$0xff] %v621
          %638 = vst [vmem:[#allocation2 + $0x78] sm:$0xff] %v621
        $region100: #{discriminator_forward.11} parent=87 // pred_fallthru
          _
        %v639 = vld [vmem:[#allocation2] sm:$0xff]
        %v640 = vld [vmem:[#allocation2 + $0x8] sm:$0xff]
        %v641 = vld [vmem:[#allocation2 + $0x10] sm:$0xff]
        %v642 = vld [vmem:[#allocation2 + $0x18] sm:$0xff]
        %v643 = vld [vmem:[#allocation2 + $0x20] sm:$0xff]
        %v644 = vld [vmem:[#allocation2 + $0x28] sm:$0xff]
        %v645 = vld [vmem:[#allocation2 + $0x30] sm:$0xff]
        %v646 = vld [vmem:[#allocation2 + $0x38] sm:$0xff]
        %v647 = vld [vmem:[#allocation2 + $0x40] sm:$0xff]
        %v648 = vld [vmem:[#allocation2 + $0x48] sm:$0xff]
        %v649 = vld [vmem:[#allocation2 + $0x50] sm:$0xff]
        %v650 = vld [vmem:[#allocation2 + $0x58] sm:$0xff]
        %v651 = vld [vmem:[#allocation2 + $0x60] sm:$0xff]
        %v652 = vld [vmem:[#allocation2 + $0x68] sm:$0xff]
        %v653 = vld [vmem:[#allocation2 + $0x70] sm:$0xff]
        %v654 = vld [vmem:[#allocation2 + $0x78] sm:$0xff]
        %v655 = vld [vmem:[%s570] sm:$0xff]
        %v656 = vld [vmem:[%s570 + $0x8] sm:$0xff]
        %v657 = vld [vmem:[%s570 + $0x10] sm:$0xff]
        %v658 = vld [vmem:[%s570 + $0x18] sm:$0xff]
        %v659 = vld [vmem:[%s570 + $0x20] sm:$0xff]
        %v660 = vld [vmem:[%s570 + $0x28] sm:$0xff]
        %v661 = vld [vmem:[%s570 + $0x30] sm:$0xff]
        %v662 = vld [vmem:[%s570 + $0x38] sm:$0xff]
        %v663 = vld [vmem:[%s570 + $0x40] sm:$0xff]
        %v664 = vld [vmem:[%s570 + $0x48] sm:$0xff]
        %v665 = vld [vmem:[%s570 + $0x50] sm:$0xff]
        %v666 = vld [vmem:[%s570 + $0x58] sm:$0xff]
        %v667 = vld [vmem:[%s570 + $0x60] sm:$0xff]
        %v668 = vld [vmem:[%s570 + $0x68] sm:$0xff]
        %v669 = vld [vmem:[%s570 + $0x70] sm:$0xff]
        %v670 = vld [vmem:[%s570 + $0x78] sm:$0xff]
        %v671 = vld [vmem:[%s570 + $0x80] sm:$0xff]
        %v672 = vld [vmem:[%s570 + $0x88] sm:$0xff]
        %v673 = vld [vmem:[%s570 + $0x90] sm:$0xff]
        %v674 = vld [vmem:[%s570 + $0x98] sm:$0xff]
        %v675 = vld [vmem:[%s570 + $0xa0] sm:$0xff]
        %v676 = vld [vmem:[%s570 + $0xa8] sm:$0xff]
        %v677 = vld [vmem:[%s570 + $0xb0] sm:$0xff]
        %v678 = vld [vmem:[%s570 + $0xb8] sm:$0xff]
        %v679 = vld [vmem:[%s570 + $0xc0] sm:$0xff]
        %v680 = vld [vmem:[%s570 + $0xc8] sm:$0xff]
        %v681 = vld [vmem:[%s570 + $0xd0] sm:$0xff]
        %v682 = vld [vmem:[%s570 + $0xd8] sm:$0xff]
        %v683 = vld [vmem:[%s570 + $0xe0] sm:$0xff]
        %v684 = vld [vmem:[%s570 + $0xe8] sm:$0xff]
        %v685 = vld [vmem:[%s570 + $0xf0] sm:$0xff]
        %v686 = vld [vmem:[%s570 + $0xf8] sm:$0xff]
        %v687 = vld [vmem:[%s577] sm:$0xf]
        %v688 = vld [vmem:[%s577 + $0x4] sm:$0xf]
        %v689 = vld [vmem:[%s577 + $0x8] sm:$0xf]
        %v690 = vld [vmem:[%s577 + $0xc] sm:$0xf]
        %v691 = vld [vmem:[%s577 + $0x10] sm:$0xf]
        %v692 = vld [vmem:[%s577 + $0x14] sm:$0xf]
        %v693 = vld [vmem:[%s577 + $0x18] sm:$0xf]
        %v694 = vld [vmem:[%s577 + $0x1c] sm:$0xf]
        %v695 = vld [vmem:[%s577 + $0x20] sm:$0xf]
        %v696 = vld [vmem:[%s577 + $0x24] sm:$0xf]
        %v697 = vld [vmem:[%s577 + $0x28] sm:$0xf]
        %v698 = vld [vmem:[%s577 + $0x2c] sm:$0xf]
        %v699 = vld [vmem:[%s577 + $0x30] sm:$0xf]
        %v700 = vld [vmem:[%s577 + $0x34] sm:$0xf]
        %v701 = vld [vmem:[%s577 + $0x38] sm:$0xf]
        %v702 = vld [vmem:[%s577 + $0x3c] sm:$0xf]
        %v703 = vld [vmem:[%s577 + $0x40] sm:$0xf]
        %v704 = vld [vmem:[%s577 + $0x44] sm:$0xf]
        %v705 = vld [vmem:[%s577 + $0x48] sm:$0xf]
        %v706 = vld [vmem:[%s577 + $0x4c] sm:$0xf]
        %v707 = vld [vmem:[%s577 + $0x50] sm:$0xf]
        %v708 = vld [vmem:[%s577 + $0x54] sm:$0xf]
        %v709 = vld [vmem:[%s577 + $0x58] sm:$0xf]
        %v710 = vld [vmem:[%s577 + $0x5c] sm:$0xf]
        %v711 = vld [vmem:[%s577 + $0x60] sm:$0xf]
        %v712 = vld [vmem:[%s577 + $0x64] sm:$0xf]
        %v713 = vld [vmem:[%s577 + $0x68] sm:$0xf]
        %v714 = vld [vmem:[%s577 + $0x6c] sm:$0xf]
        %v715 = vld [vmem:[%s577 + $0x70] sm:$0xf]
        %v716 = vld [vmem:[%s577 + $0x74] sm:$0xf]
        %v717 = vld [vmem:[%s577 + $0x78] sm:$0xf]
        %v718 = vld [vmem:[%s577 + $0x7c] sm:$0xf]
        %v719 = vld [vmem:[%s577 + $0x80] sm:$0xf]
        %v720 = vld [vmem:[%s577 + $0x84] sm:$0xf]
        %v721 = vld [vmem:[%s577 + $0x88] sm:$0xf]
        %v722 = vld [vmem:[%s577 + $0x8c] sm:$0xf]
        %v723 = vld [vmem:[%s577 + $0x90] sm:$0xf]
        %v724 = vld [vmem:[%s577 + $0x94] sm:$0xf]
        %v725 = vld [vmem:[%s577 + $0x98] sm:$0xf]
        %v726 = vld [vmem:[%s577 + $0x9c] sm:$0xf]
        %v727 = vld [vmem:[%s577 + $0xa0] sm:$0xf]
        %v728 = vld [vmem:[%s577 + $0xa4] sm:$0xf]
        %v729 = vld [vmem:[%s577 + $0xa8] sm:$0xf]
        %v730 = vld [vmem:[%s577 + $0xac] sm:$0xf]
        %v731 = vld [vmem:[%s577 + $0xb0] sm:$0xf]
        %v732 = vld [vmem:[%s577 + $0xb4] sm:$0xf]
        %v733 = vld [vmem:[%s577 + $0xb8] sm:$0xf]
        %v734 = vld [vmem:[%s577 + $0xbc] sm:$0xf]
        %v735 = vld [vmem:[%s577 + $0xc0] sm:$0xf]
        %v736 = vld [vmem:[%s577 + $0xc4] sm:$0xf]
        %v737 = vld [vmem:[%s577 + $0xc8] sm:$0xf]
        %v738 = vld [vmem:[%s577 + $0xcc] sm:$0xf]
        %v739 = vld [vmem:[%s577 + $0xd0] sm:$0xf]
        %v740 = vld [vmem:[%s577 + $0xd4] sm:$0xf]
        %v741 = vld [vmem:[%s577 + $0xd8] sm:$0xf]
        %v742 = vld [vmem:[%s577 + $0xdc] sm:$0xf]
        %v743 = vld [vmem:[%s577 + $0xe0] sm:$0xf]
        %v744 = vld [vmem:[%s577 + $0xe4] sm:$0xf]
        %v745 = vld [vmem:[%s577 + $0xe8] sm:$0xf]
        %v746 = vld [vmem:[%s577 + $0xec] sm:$0xf]
        %v747 = vld [vmem:[%s577 + $0xf0] sm:$0xf]
        %v748 = vld [vmem:[%s577 + $0xf4] sm:$0xf]
        %v749 = vld [vmem:[%s577 + $0xf8] sm:$0xf]
        %v750 = vld [vmem:[%s577 + $0xfc] sm:$0xf]
        %v783 = vunpack.c.l.b16 %v655
        %v784 = vunpack.c.h.b16 %v655
        %v785 = vunpack.c.l.b16 %v656
        %v786 = vunpack.c.h.b16 %v656
        %v787 = vunpack.c.l.b16 %v657
        %v788 = vunpack.c.h.b16 %v657
        %v789 = vunpack.c.l.b16 %v658
        %v790 = vunpack.c.h.b16 %v658
        %v791 = vunpack.c.l.b16 %v659
        %v792 = vunpack.c.h.b16 %v659
        %v793 = vunpack.c.l.b16 %v660
        %v794 = vunpack.c.h.b16 %v660
        %v795 = vunpack.c.l.b16 %v661
        %v796 = vunpack.c.h.b16 %v661
        %v797 = vunpack.c.l.b16 %v662
        %v798 = vunpack.c.h.b16 %v662
        %v799 = vunpack.c.l.b16 %v663
        %v800 = vunpack.c.h.b16 %v663
        %v801 = vunpack.c.l.b16 %v664
        %v802 = vunpack.c.h.b16 %v664
        %v803 = vunpack.c.l.b16 %v665
        %v804 = vunpack.c.h.b16 %v665
        %v805 = vunpack.c.l.b16 %v666
        %v806 = vunpack.c.h.b16 %v666
        %v807 = vunpack.c.l.b16 %v667
        %v808 = vunpack.c.h.b16 %v667
        %v809 = vunpack.c.l.b16 %v668
        %v810 = vunpack.c.h.b16 %v668
        %v811 = vunpack.c.l.b16 %v669
        %v812 = vunpack.c.h.b16 %v669
        %v813 = vunpack.c.l.b16 %v670
        %v814 = vunpack.c.h.b16 %v670
        %v815 = vunpack.c.l.b16 %v671
        %v816 = vunpack.c.h.b16 %v671
        %v817 = vunpack.c.l.b16 %v672
        %v818 = vunpack.c.h.b16 %v672
        %v819 = vunpack.c.l.b16 %v673
        %v820 = vunpack.c.h.b16 %v673
        %v821 = vunpack.c.l.b16 %v674
        %v822 = vunpack.c.h.b16 %v674
        %v823 = vunpack.c.l.b16 %v675
        %v824 = vunpack.c.h.b16 %v675
        %v825 = vunpack.c.l.b16 %v676
        %v826 = vunpack.c.h.b16 %v676
        %v827 = vunpack.c.l.b16 %v677
        %v828 = vunpack.c.h.b16 %v677
        %v829 = vunpack.c.l.b16 %v678
        %v830 = vunpack.c.h.b16 %v678
        %v831 = vunpack.c.l.b16 %v679
        %v832 = vunpack.c.h.b16 %v679
        %v833 = vunpack.c.l.b16 %v680
        %v834 = vunpack.c.h.b16 %v680
        %v835 = vunpack.c.l.b16 %v681
        %v836 = vunpack.c.h.b16 %v681
        %v837 = vunpack.c.l.b16 %v682
        %v838 = vunpack.c.h.b16 %v682
        %v839 = vunpack.c.l.b16 %v683
        %v840 = vunpack.c.h.b16 %v683
        %v841 = vunpack.c.l.b16 %v684
        %v842 = vunpack.c.h.b16 %v684
        %v843 = vunpack.c.l.b16 %v685
        %v844 = vunpack.c.h.b16 %v685
        %v845 = vunpack.c.l.b16 %v686
        %v846 = vunpack.c.h.b16 %v686
        %v847 = vpack.c.b16 %v787, %v783
        %v848 = vpack.c.b16 %v788, %v784
        %v849 = vpack.c.b16 %v789, %v785
        %v850 = vpack.c.b16 %v790, %v786
        %v851 = vpack.c.b16 %v795, %v791
        %v852 = vpack.c.b16 %v796, %v792
        %v853 = vpack.c.b16 %v797, %v793
        %v854 = vpack.c.b16 %v798, %v794
        %v855 = vpack.c.b16 %v803, %v799
        %v856 = vpack.c.b16 %v804, %v800
        %v857 = vpack.c.b16 %v805, %v801
        %v858 = vpack.c.b16 %v806, %v802
        %v859 = vpack.c.b16 %v811, %v807
        %v860 = vpack.c.b16 %v812, %v808
        %v861 = vpack.c.b16 %v813, %v809
        %v862 = vpack.c.b16 %v814, %v810
        %v863 = vpack.c.b16 %v819, %v815
        %v864 = vpack.c.b16 %v820, %v816
        %v865 = vpack.c.b16 %v821, %v817
        %v866 = vpack.c.b16 %v822, %v818
        %v867 = vpack.c.b16 %v827, %v823
        %v868 = vpack.c.b16 %v828, %v824
        %v869 = vpack.c.b16 %v829, %v825
        %v870 = vpack.c.b16 %v830, %v826
        %v871 = vpack.c.b16 %v835, %v831
        %v872 = vpack.c.b16 %v836, %v832
        %v873 = vpack.c.b16 %v837, %v833
        %v874 = vpack.c.b16 %v838, %v834
        %v875 = vpack.c.b16 %v843, %v839
        %v876 = vpack.c.b16 %v844, %v840
        %v877 = vpack.c.b16 %v845, %v841
        %v878 = vpack.c.b16 %v846, %v842
        %v975 = vunpack.c.l.b16 %v687
        %v976 = vunpack.c.l.b16 %v688
        %v977 = vunpack.c.l.b16 %v689
        %v978 = vunpack.c.l.b16 %v690
        %v979 = vunpack.c.l.b16 %v691
        %v980 = vunpack.c.l.b16 %v692
        %v981 = vunpack.c.l.b16 %v693
        %v982 = vunpack.c.l.b16 %v694
        %v983 = vunpack.c.l.b16 %v695
        %v984 = vunpack.c.l.b16 %v696
        %v985 = vunpack.c.l.b16 %v697
        %v986 = vunpack.c.l.b16 %v698
        %v987 = vunpack.c.l.b16 %v699
        %v988 = vunpack.c.l.b16 %v700
        %v989 = vunpack.c.l.b16 %v701
        %v990 = vunpack.c.l.b16 %v702
        %v991 = vunpack.c.l.b16 %v703
        %v992 = vunpack.c.l.b16 %v704
        %v993 = vunpack.c.l.b16 %v705
        %v994 = vunpack.c.l.b16 %v706
        %v995 = vunpack.c.l.b16 %v707
        %v996 = vunpack.c.l.b16 %v708
        %v997 = vunpack.c.l.b16 %v709
        %v998 = vunpack.c.l.b16 %v710
        %v999 = vunpack.c.l.b16 %v711
        %v1000 = vunpack.c.l.b16 %v712
        %v1001 = vunpack.c.l.b16 %v713
        %v1002 = vunpack.c.l.b16 %v714
        %v1003 = vunpack.c.l.b16 %v715
        %v1004 = vunpack.c.l.b16 %v716
        %v1005 = vunpack.c.l.b16 %v717
        %v1006 = vunpack.c.l.b16 %v718
        %v1007 = vunpack.c.l.b16 %v719
        %v1008 = vunpack.c.l.b16 %v720
        %v1009 = vunpack.c.l.b16 %v721
        %v1010 = vunpack.c.l.b16 %v722
        %v1011 = vunpack.c.l.b16 %v723
        %v1012 = vunpack.c.l.b16 %v724
        %v1013 = vunpack.c.l.b16 %v725
        %v1014 = vunpack.c.l.b16 %v726
        %v1015 = vunpack.c.l.b16 %v727
        %v1016 = vunpack.c.l.b16 %v728
        %v1017 = vunpack.c.l.b16 %v729
        %v1018 = vunpack.c.l.b16 %v730
        %v1019 = vunpack.c.l.b16 %v731
        %v1020 = vunpack.c.l.b16 %v732
        %v1021 = vunpack.c.l.b16 %v733
        %v1022 = vunpack.c.l.b16 %v734
        %v1023 = vunpack.c.l.b16 %v735
        %v1024 = vunpack.c.l.b16 %v736
        %v1025 = vunpack.c.l.b16 %v737
        %v1026 = vunpack.c.l.b16 %v738
        %v1027 = vunpack.c.l.b16 %v739
        %v1028 = vunpack.c.l.b16 %v740
        %v1029 = vunpack.c.l.b16 %v741
        %v1030 = vunpack.c.l.b16 %v742
        %v1031 = vunpack.c.l.b16 %v743
        %v1032 = vunpack.c.l.b16 %v744
        %v1033 = vunpack.c.l.b16 %v745
        %v1034 = vunpack.c.l.b16 %v746
        %v1035 = vunpack.c.l.b16 %v747
        %v1036 = vunpack.c.l.b16 %v748
        %v1037 = vunpack.c.l.b16 %v749
        %v1038 = vunpack.c.l.b16 %v750
        %v1039 = vpack.c.b16 %v976, %v975
        %v1040 = vpack.c.b16 %v978, %v977
        %v1041 = vpack.c.b16 %v980, %v979
        %v1042 = vpack.c.b16 %v982, %v981
        %v1043 = vpack.c.b16 %v984, %v983
        %v1044 = vpack.c.b16 %v986, %v985
        %v1045 = vpack.c.b16 %v988, %v987
        %v1046 = vpack.c.b16 %v990, %v989
        %v1047 = vpack.c.b16 %v992, %v991
        %v1048 = vpack.c.b16 %v994, %v993
        %v1049 = vpack.c.b16 %v996, %v995
        %v1050 = vpack.c.b16 %v998, %v997
        %v1051 = vpack.c.b16 %v1000, %v999
        %v1052 = vpack.c.b16 %v1002, %v1001
        %v1053 = vpack.c.b16 %v1004, %v1003
        %v1054 = vpack.c.b16 %v1006, %v1005
        %v1055 = vpack.c.b16 %v1008, %v1007
        %v1056 = vpack.c.b16 %v1010, %v1009
        %v1057 = vpack.c.b16 %v1012, %v1011
        %v1058 = vpack.c.b16 %v1014, %v1013
        %v1059 = vpack.c.b16 %v1016, %v1015
        %v1060 = vpack.c.b16 %v1018, %v1017
        %v1061 = vpack.c.b16 %v1020, %v1019
        %v1062 = vpack.c.b16 %v1022, %v1021
        %v1063 = vpack.c.b16 %v1024, %v1023
        %v1064 = vpack.c.b16 %v1026, %v1025
        %v1065 = vpack.c.b16 %v1028, %v1027
        %v1066 = vpack.c.b16 %v1030, %v1029
        %v1067 = vpack.c.b16 %v1032, %v1031
        %v1068 = vpack.c.b16 %v1034, %v1033
        %v1069 = vpack.c.b16 %v1036, %v1035
        %v1070 = vpack.c.b16 %v1038, %v1037
        %1103 = vmatprep.subr.bf16.mxu0 0
        %1104 = vmatpush1.bf16.msra.mxu0 %v1046
        %1105 = vmatprep.subr.bf16.mxu0 0
        %1106 = vmatpush1.bf16.msra.mxu0 %v1045
        %1107 = vmatprep.subr.bf16.mxu0 0
        %1108 = vmatpush1.bf16.msra.mxu0 %v1044
        %1109 = vmatprep.subr.bf16.mxu0 0
        %1110 = vmatpush1.bf16.msra.mxu0 %v1043
        %1111 = vmatprep.subr.bf16.mxu0 0
        %1112 = vmatpush1.bf16.msra.mxu0 %v1042
        %1113 = vmatprep.subr.bf16.mxu0 0
        %1114 = vmatpush1.bf16.msra.mxu0 %v1041
        %1115 = vmatprep.subr.bf16.mxu0 0
        %1116 = vmatpush1.bf16.msra.mxu0 %v1040
        %1117 = vmatprep.subr.bf16.mxu0 0
        %1118 = vmatpush1.bf16.msra.mxu0 %v1039
        %1119 = vmatprep.subr.bf16.mxu0 0
        %1120 = vmatpush2.bf16.msra.mxu0 %v1054
        %1121 = vmatprep.subr.bf16.mxu0 0
        %1122 = vmatpush2.bf16.msra.mxu0 %v1053
        %1123 = vmatprep.subr.bf16.mxu0 0
        %1124 = vmatpush2.bf16.msra.mxu0 %v1052
        %1125 = vmatprep.subr.bf16.mxu0 0
        %1126 = vmatpush2.bf16.msra.mxu0 %v1051
        %1127 = vmatprep.subr.bf16.mxu0 0
        %1128 = vmatpush2.bf16.msra.mxu0 %v1050
        %1129 = vmatprep.subr.bf16.mxu0 0
        %1130 = vmatpush2.bf16.msra.mxu0 %v1049
        %1131 = vmatprep.subr.bf16.mxu0 0
        %1132 = vmatpush2.bf16.msra.mxu0 %v1048
        %1133 = vmatprep.subr.bf16.mxu0 0
        %1134 = vmatpush2.bf16.msra.mxu0 %v1047
        %1135 = vmatprep.mubr.bf16.mxu0 %v848
        %1136 = vmatmul.mubr.bf16.gmra.mxu0 %v847
        %v1137 = vpop.f32.mrf.mxu0
        %v1138 = vadd.f32 0.0, %v1137
        %v1139 = vpop.f32.mrf.mxu0
        %v1140 = vpop.f32.mrf.mxu0
        %v1141 = vadd.f32 0.0, %v1140
        %v1142 = vpop.f32.mrf.mxu0
        %1143 = vmatprep.mubr.bf16.mxu0 %v852
        %1144 = vmatmul.mubr.bf16.gmra.mxu0 %v851
        %v1145 = vpop.f32.mrf.mxu0
        %v1146 = vadd.f32 0.0, %v1145
        %v1147 = vpop.f32.mrf.mxu0
        %v1148 = vpop.f32.mrf.mxu0
        %v1149 = vadd.f32 0.0, %v1148
        %v1150 = vpop.f32.mrf.mxu0
        %1151 = vmatprep.mubr.bf16.mxu0 %v856
        %1152 = vmatmul.mubr.bf16.gmra.mxu0 %v855
        %v1153 = vpop.f32.mrf.mxu0
        %v1154 = vadd.f32 0.0, %v1153
        %v1155 = vpop.f32.mrf.mxu0
        %v1156 = vpop.f32.mrf.mxu0
        %v1157 = vadd.f32 0.0, %v1156
        %v1158 = vpop.f32.mrf.mxu0
        %1159 = vmatprep.mubr.bf16.mxu0 %v860
        %1160 = vmatmul.mubr.bf16.gmra.mxu0 %v859
        %v1161 = vpop.f32.mrf.mxu0
        %v1162 = vadd.f32 0.0, %v1161
        %v1163 = vpop.f32.mrf.mxu0
        %v1164 = vpop.f32.mrf.mxu0
        %v1165 = vadd.f32 0.0, %v1164
        %v1166 = vpop.f32.mrf.mxu0
        %1167 = vmatprep.mubr.bf16.mxu0 %v864
        %1168 = vmatmul.mubr.bf16.gmra.mxu0 %v863
        %v1169 = vpop.f32.mrf.mxu0
        %v1170 = vadd.f32 0.0, %v1169
        %v1171 = vpop.f32.mrf.mxu0
        %v1172 = vpop.f32.mrf.mxu0
        %v1173 = vadd.f32 0.0, %v1172
        %v1174 = vpop.f32.mrf.mxu0
        %1175 = vmatprep.mubr.bf16.mxu0 %v868
        %1176 = vmatmul.mubr.bf16.gmra.mxu0 %v867
        %v1177 = vpop.f32.mrf.mxu0
        %v1178 = vadd.f32 0.0, %v1177
        %v1179 = vpop.f32.mrf.mxu0
        %v1180 = vpop.f32.mrf.mxu0
        %v1181 = vadd.f32 0.0, %v1180
        %v1182 = vpop.f32.mrf.mxu0
        %1183 = vmatprep.mubr.bf16.mxu0 %v872
        %1184 = vmatmul.mubr.bf16.gmra.mxu0 %v871
        %v1185 = vpop.f32.mrf.mxu0
        %v1186 = vadd.f32 0.0, %v1185
        %v1187 = vpop.f32.mrf.mxu0
        %v1188 = vpop.f32.mrf.mxu0
        %v1189 = vadd.f32 0.0, %v1188
        %v1190 = vpop.f32.mrf.mxu0
        %1191 = vmatprep.mubr.bf16.mxu0 %v876
        %1192 = vmatmul.mubr.bf16.gmra.mxu0 %v875
        %v1193 = vpop.f32.mrf.mxu0
        %v1194 = vadd.f32 0.0, %v1193
        %v1195 = vpop.f32.mrf.mxu0
        %v1196 = vpop.f32.mrf.mxu0
        %v1197 = vadd.f32 0.0, %v1196
        %v1198 = vpop.f32.mrf.mxu0
        %1199 = vdwg.mxu0
        %1200 = vmatprep.subr.bf16.mxu0 0
        %1201 = vmatpush1.bf16.msra.mxu0 %v1062
        %1202 = vmatprep.subr.bf16.mxu0 0
        %1203 = vmatpush1.bf16.msra.mxu0 %v1061
        %1204 = vmatprep.subr.bf16.mxu0 0
        %1205 = vmatpush1.bf16.msra.mxu0 %v1060
        %1206 = vmatprep.subr.bf16.mxu0 0
        %1207 = vmatpush1.bf16.msra.mxu0 %v1059
        %1208 = vmatprep.subr.bf16.mxu0 0
        %1209 = vmatpush1.bf16.msra.mxu0 %v1058
        %1210 = vmatprep.subr.bf16.mxu0 0
        %1211 = vmatpush1.bf16.msra.mxu0 %v1057
        %1212 = vmatprep.subr.bf16.mxu0 0
        %1213 = vmatpush1.bf16.msra.mxu0 %v1056
        %1214 = vmatprep.subr.bf16.mxu0 0
        %1215 = vmatpush1.bf16.msra.mxu0 %v1055
        %1216 = vmatprep.subr.bf16.mxu0 0
        %1217 = vmatpush2.bf16.msra.mxu0 %v1070
        %1218 = vmatprep.subr.bf16.mxu0 0
        %1219 = vmatpush2.bf16.msra.mxu0 %v1069
        %1220 = vmatprep.subr.bf16.mxu0 0
        %1221 = vmatpush2.bf16.msra.mxu0 %v1068
        %1222 = vmatprep.subr.bf16.mxu0 0
        %1223 = vmatpush2.bf16.msra.mxu0 %v1067
        %1224 = vmatprep.subr.bf16.mxu0 0
        %1225 = vmatpush2.bf16.msra.mxu0 %v1066
        %1226 = vmatprep.subr.bf16.mxu0 0
        %1227 = vmatpush2.bf16.msra.mxu0 %v1065
        %1228 = vmatprep.subr.bf16.mxu0 0
        %1229 = vmatpush2.bf16.msra.mxu0 %v1064
        %1230 = vmatprep.subr.bf16.mxu0 0
        %1231 = vmatpush2.bf16.msra.mxu0 %v1063
        %1232 = vmatprep.mubr.bf16.mxu0 %v850
        %1233 = vmatmul.mubr.bf16.gmra.mxu0 %v849
        %v1234 = vpop.f32.mrf.mxu0
        %v1235 = vadd.f32 %v1138, %v1234
        %v1236 = vpop.f32.mrf.mxu0
        %v1237 = vpop.f32.mrf.mxu0
        %v1238 = vadd.f32 %v1141, %v1237
        %v1239 = vpop.f32.mrf.mxu0
        %1240 = vmatprep.mubr.bf16.mxu0 %v854
        %1241 = vmatmul.mubr.bf16.gmra.mxu0 %v853
        %v1242 = vpop.f32.mrf.mxu0
        %v1243 = vadd.f32 %v1146, %v1242
        %v1244 = vpop.f32.mrf.mxu0
        %v1245 = vpop.f32.mrf.mxu0
        %v1246 = vadd.f32 %v1149, %v1245
        %v1247 = vpop.f32.mrf.mxu0
        %1248 = vmatprep.mubr.bf16.mxu0 %v858
        %1249 = vmatmul.mubr.bf16.gmra.mxu0 %v857
        %v1250 = vpop.f32.mrf.mxu0
        %v1251 = vadd.f32 %v1154, %v1250
        %v1252 = vpop.f32.mrf.mxu0
        %v1253 = vpop.f32.mrf.mxu0
        %v1254 = vadd.f32 %v1157, %v1253
        %v1255 = vpop.f32.mrf.mxu0
        %1256 = vmatprep.mubr.bf16.mxu0 %v862
        %1257 = vmatmul.mubr.bf16.gmra.mxu0 %v861
        %v1258 = vpop.f32.mrf.mxu0
        %v1259 = vadd.f32 %v1162, %v1258
        %v1260 = vpop.f32.mrf.mxu0
        %v1261 = vpop.f32.mrf.mxu0
        %v1262 = vadd.f32 %v1165, %v1261
        %v1263 = vpop.f32.mrf.mxu0
        %1264 = vmatprep.mubr.bf16.mxu0 %v866
        %1265 = vmatmul.mubr.bf16.gmra.mxu0 %v865
        %v1266 = vpop.f32.mrf.mxu0
        %v1267 = vadd.f32 %v1170, %v1266
        %v1268 = vpop.f32.mrf.mxu0
        %v1269 = vpop.f32.mrf.mxu0
        %v1270 = vadd.f32 %v1173, %v1269
        %v1271 = vpop.f32.mrf.mxu0
        %1272 = vmatprep.mubr.bf16.mxu0 %v870
        %1273 = vmatmul.mubr.bf16.gmra.mxu0 %v869
        %v1274 = vpop.f32.mrf.mxu0
        %v1275 = vadd.f32 %v1178, %v1274
        %v1276 = vpop.f32.mrf.mxu0
        %v1277 = vpop.f32.mrf.mxu0
        %v1278 = vadd.f32 %v1181, %v1277
        %v1279 = vpop.f32.mrf.mxu0
        %1280 = vmatprep.mubr.bf16.mxu0 %v874
        %1281 = vmatmul.mubr.bf16.gmra.mxu0 %v873
        %v1282 = vpop.f32.mrf.mxu0
        %v1283 = vadd.f32 %v1186, %v1282
        %v1284 = vpop.f32.mrf.mxu0
        %v1285 = vpop.f32.mrf.mxu0
        %v1286 = vadd.f32 %v1189, %v1285
        %v1287 = vpop.f32.mrf.mxu0
        %1288 = vmatprep.mubr.bf16.mxu0 %v878
        %1289 = vmatmul.mubr.bf16.gmra.mxu0 %v877
        %v1290 = vpop.f32.mrf.mxu0
        %v1291 = vadd.f32 %v1194, %v1290
        %v1292 = vpop.f32.mrf.mxu0
        %v1293 = vpop.f32.mrf.mxu0
        %v1294 = vadd.f32 %v1197, %v1293
        %v1295 = vpop.f32.mrf.mxu0
        %1296 = vdwg.mxu0
        %v1297 = vadd.f32 %v639, %v1235
        %v1298 = vadd.f32 %v640, %v1238
        %v1299 = vadd.f32 %v641, %v1243
        %v1300 = vadd.f32 %v642, %v1246
        %v1301 = vadd.f32 %v643, %v1251
        %v1302 = vadd.f32 %v644, %v1254
        %v1303 = vadd.f32 %v645, %v1259
        %v1304 = vadd.f32 %v646, %v1262
        %v1305 = vadd.f32 %v647, %v1267
        %v1306 = vadd.f32 %v648, %v1270
        %v1307 = vadd.f32 %v649, %v1275
        %v1308 = vadd.f32 %v650, %v1278
        %v1309 = vadd.f32 %v651, %v1283
        %v1310 = vadd.f32 %v652, %v1286
        %v1311 = vadd.f32 %v653, %v1291
        %v1312 = vadd.f32 %v654, %v1294
        %1313 = vst [vmem:[#allocation2] sm:$0xff] %v1297
        %1314 = vst [vmem:[#allocation2 + $0x8] sm:$0xff] %v1298
        %1315 = vst [vmem:[#allocation2 + $0x10] sm:$0xff] %v1299
        %1316 = vst [vmem:[#allocation2 + $0x18] sm:$0xff] %v1300
        %1317 = vst [vmem:[#allocation2 + $0x20] sm:$0xff] %v1301
        %1318 = vst [vmem:[#allocation2 + $0x28] sm:$0xff] %v1302
        %1319 = vst [vmem:[#allocation2 + $0x30] sm:$0xff] %v1303
        %1320 = vst [vmem:[#allocation2 + $0x38] sm:$0xff] %v1304
        %1321 = vst [vmem:[#allocation2 + $0x40] sm:$0xff] %v1305
        %1322 = vst [vmem:[#allocation2 + $0x48] sm:$0xff] %v1306
        %1323 = vst [vmem:[#allocation2 + $0x50] sm:$0xff] %v1307
        %1324 = vst [vmem:[#allocation2 + $0x58] sm:$0xff] %v1308
        %1325 = vst [vmem:[#allocation2 + $0x60] sm:$0xff] %v1309
        %1326 = vst [vmem:[#allocation2 + $0x68] sm:$0xff] %v1310
        %1327 = vst [vmem:[#allocation2 + $0x70] sm:$0xff] %v1311
        %1328 = vst [vmem:[#allocation2 + $0x78] sm:$0xff] %v1312
        %p1329 = scmp.eq.s32.totalorder %s21, 3
        // Predicated region
        $region101: #{discriminator_forward.11} parent=87 // pred_check
          %p1330 = pneg %p1329
        $region102: #{discriminator_forward.11} parent=87 // pred_check_branch
          %1332 = sbr.rel (%p1330) target = $region104
        $region103: #{discriminator_forward.11} parent=87 // pred_region
          %v1333 = vld [vmem:[#allocation2] sm:$0xff]
          %v1334 = vld [vmem:[#allocation2 + $0x8] sm:$0xff]
          %v1335 = vld [vmem:[#allocation2 + $0x10] sm:$0xff]
          %v1336 = vld [vmem:[#allocation2 + $0x18] sm:$0xff]
          %v1337 = vld [vmem:[#allocation2 + $0x20] sm:$0xff]
          %v1338 = vld [vmem:[#allocation2 + $0x28] sm:$0xff]
          %v1339 = vld [vmem:[#allocation2 + $0x30] sm:$0xff]
          %v1340 = vld [vmem:[#allocation2 + $0x38] sm:$0xff]
          %v1341 = vld [vmem:[#allocation2 + $0x40] sm:$0xff]
          %v1342 = vld [vmem:[#allocation2 + $0x48] sm:$0xff]
          %v1343 = vld [vmem:[#allocation2 + $0x50] sm:$0xff]
          %v1344 = vld [vmem:[#allocation2 + $0x58] sm:$0xff]
          %v1345 = vld [vmem:[#allocation2 + $0x60] sm:$0xff]
          %v1346 = vld [vmem:[#allocation2 + $0x68] sm:$0xff]
          %v1347 = vld [vmem:[#allocation2 + $0x70] sm:$0xff]
          %v1348 = vld [vmem:[#allocation2 + $0x78] sm:$0xff]
          %1349 = vst [vmem:[%s603] sm:$0xff] %v1333
          %1350 = vst [vmem:[%s603 + $0x8] sm:$0xff] %v1334
          %1351 = vst [vmem:[%s603 + $0x10] sm:$0xff] %v1335
          %1352 = vst [vmem:[%s603 + $0x18] sm:$0xff] %v1336
          %1353 = vst [vmem:[%s603 + $0x20] sm:$0xff] %v1337
          %1354 = vst [vmem:[%s603 + $0x28] sm:$0xff] %v1338
          %1355 = vst [vmem:[%s603 + $0x30] sm:$0xff] %v1339
          %1356 = vst [vmem:[%s603 + $0x38] sm:$0xff] %v1340
          %1357 = vst [vmem:[%s603 + $0x40] sm:$0xff] %v1341
          %1358 = vst [vmem:[%s603 + $0x48] sm:$0xff] %v1342
          %1359 = vst [vmem:[%s603 + $0x50] sm:$0xff] %v1343
          %1360 = vst [vmem:[%s603 + $0x58] sm:$0xff] %v1344
          %1361 = vst [vmem:[%s603 + $0x60] sm:$0xff] %v1345
          %1362 = vst [vmem:[%s603 + $0x68] sm:$0xff] %v1346
          %1363 = vst [vmem:[%s603 + $0x70] sm:$0xff] %v1347
          %1364 = vst [vmem:[%s603 + $0x78] sm:$0xff] %v1348
        $region104: #{discriminator_forward.11} parent=87 // pred_fallthru
          _
        %s1365 = sand.u32 %s125, 1
        %s1366 = sand.u32 %s125, 1
        %s1367 = smul.addr %s1366, 128
        %s1368 = scalar_lea.vmem [#allocation5], %s1367
        // Predicated region
        $region105: #{discriminator_forward.11} parent=87 // pred_check
          %p1369 = pneg %p135
        $region106: #{discriminator_forward.11} parent=87 // pred_check_branch
          %1371 = sbr.rel (%p1369) target = $region108
        $region107: #{discriminator_forward.11} parent=87 // pred_region
          %s1372 = smul.u32 16, %s19
          %s1373 = smul.addr %s1372, 2
          %s1374 = sadd.s32 %s20, %s1373
          %s1375 = smul.addr %s1374, 8
          %s1376 = scalar_lea.vmem %s3, %s1375
          // Predicated region
          $region109: #{discriminator_forward.11} parent=107 // pred_check
            _
          $region110: #{discriminator_forward.11} parent=107 // pred_check_branch
            %1378 = sbr.rel (0) target = $region112
          $region111: #{discriminator_forward.11} parent=107 // pred_region
            // Predicated region
            $region113: #{discriminator_forward.11} parent=111 // pred_check
              _
            $region114: #{discriminator_forward.11} parent=111 // pred_check_branch
              %1380 = sbr.rel (0) target = $region116
            $region115: #{discriminator_forward.11} parent=111 // pred_region
              // Predicated region
              $region128: #{discriminator_forward.11} parent=115 // pred_check
                _
              $region129: #{discriminator_forward.11} parent=115 // pred_check_branch
                %1426 = sbr.rel (0) target = $region131
              $region130: #{discriminator_forward.11} parent=115 // pred_region
                loop: start=0, step=1, limit=1
                $region132: #{discriminator_forward.11} parent=130 // loop_pre_header
                  _
                $region133: #{discriminator_forward.11} parent=130 // loop_header
                  %s1428 = sphi 0, %s1432
                  %p1429 = scmp.ge.s32.totalorder %s1428, 1
                  %s1433 = sphi %s1368, %s1368
                  %s1434 = sphi %s1376, %s1376
                $region134: #{discriminator_forward.11} parent=130 // loop_header_branch
                  %1431 = sbr.rel (%p1429) target = $region138
                $region135: #{discriminator_forward.11} parent=130 // loop_body
                  %v1435 = vld [vmem:[%s1433] sm:$0xff]
                  %1436 = vst [vmem:[%s1434] sm:$0xff] %v1435
                  %v1437 = vld [vmem:[%s1433 + $0x8] sm:$0xff]
                  %1438 = vst [vmem:[%s1434 + $0x10] sm:$0xff] %v1437
                  %v1439 = vld [vmem:[%s1433 + $0x10] sm:$0xff]
                  %1440 = vst [vmem:[%s1434 + $0x20] sm:$0xff] %v1439
                  %v1441 = vld [vmem:[%s1433 + $0x18] sm:$0xff]
                  %1442 = vst [vmem:[%s1434 + $0x30] sm:$0xff] %v1441
                  %v1443 = vld [vmem:[%s1433 + $0x20] sm:$0xff]
                  %1444 = vst [vmem:[%s1434 + $0x40] sm:$0xff] %v1443
                  %v1445 = vld [vmem:[%s1433 + $0x28] sm:$0xff]
                  %1446 = vst [vmem:[%s1434 + $0x50] sm:$0xff] %v1445
                  %v1447 = vld [vmem:[%s1433 + $0x30] sm:$0xff]
                  %1448 = vst [vmem:[%s1434 + $0x60] sm:$0xff] %v1447
                  %v1449 = vld [vmem:[%s1433 + $0x38] sm:$0xff]
                  %1450 = vst [vmem:[%s1434 + $0x70] sm:$0xff] %v1449
                  %v1451 = vld [vmem:[%s1433 + $0x40] sm:$0xff]
                  %1452 = vst [vmem:[%s1434 + $0x80] sm:$0xff] %v1451
                  %v1453 = vld [vmem:[%s1433 + $0x48] sm:$0xff]
                  %1454 = vst [vmem:[%s1434 + $0x90] sm:$0xff] %v1453
                  %v1455 = vld [vmem:[%s1433 + $0x50] sm:$0xff]
                  %1456 = vst [vmem:[%s1434 + $0xa0] sm:$0xff] %v1455
                  %v1457 = vld [vmem:[%s1433 + $0x58] sm:$0xff]
                  %1458 = vst [vmem:[%s1434 + $0xb0] sm:$0xff] %v1457
                  %v1459 = vld [vmem:[%s1433 + $0x60] sm:$0xff]
                  %1460 = vst [vmem:[%s1434 + $0xc0] sm:$0xff] %v1459
                  %v1461 = vld [vmem:[%s1433 + $0x68] sm:$0xff]
                  %1462 = vst [vmem:[%s1434 + $0xd0] sm:$0xff] %v1461
                  %v1463 = vld [vmem:[%s1433 + $0x70] sm:$0xff]
                  %1464 = vst [vmem:[%s1434 + $0xe0] sm:$0xff] %v1463
                  %v1465 = vld [vmem:[%s1433 + $0x78] sm:$0xff]
                  %1466 = vst [vmem:[%s1434 + $0xf0] sm:$0xff] %v1465
                $region136: #{discriminator_forward.11} parent=130 // loop_footer
                  %s1432 = sadd.s32 1, %s1428
                $region137: #{discriminator_forward.11} parent=130 // loop_footer_branch
                  %1427 = sbr.rel target = $region133
                $region138: #{discriminator_forward.11} parent=130 // loop_exit
                  _
              $region131: #{discriminator_forward.11} parent=115 // pred_fallthru
                _
              // Predicated region
              $region139: #{discriminator_forward.11} parent=115 // pred_check
                _
              $region140: #{discriminator_forward.11} parent=115 // pred_check_branch
                %1468 = sbr.rel target = $region142
              $region141: #{discriminator_forward.11} parent=115 // pred_region
                _
              $region142: #{discriminator_forward.11} parent=115 // pred_fallthru
                _
            $region116: #{discriminator_forward.11} parent=111 // pred_fallthru
              _
            // Predicated region
            $region117: #{discriminator_forward.11} parent=111 // pred_check
              _
            $region118: #{discriminator_forward.11} parent=111 // pred_check_branch
              %1382 = sbr.rel target = $region120
            $region119: #{discriminator_forward.11} parent=111 // pred_region
              %s1384 = ssub.s32 256, 1
              loop: start=0, step=1, limit=1
              $region121: #{discriminator_forward.11} parent=119 // loop_pre_header
                _
              $region122: #{discriminator_forward.11} parent=119 // loop_header
                %s1386 = sphi 0, %s1390
                %p1387 = scmp.ge.s32.totalorder %s1386, 1
                %s1391 = sphi %s1368, %s1368
                %s1392 = sphi %s1376, %s1376
              $region123: #{discriminator_forward.11} parent=119 // loop_header_branch
                %1389 = sbr.rel (%p1387) target = $region127
              $region124: #{discriminator_forward.11} parent=119 // loop_body
                %v1393 = vld [vmem:[%s1391] sm:%s1384]
                %1394 = vst [vmem:[%s1392] sm:%s1384] %v1393
                %v1395 = vld [vmem:[%s1391 + $0x8] sm:%s1384]
                %1396 = vst [vmem:[%s1392 + $0x10] sm:%s1384] %v1395
                %v1397 = vld [vmem:[%s1391 + $0x10] sm:%s1384]
                %1398 = vst [vmem:[%s1392 + $0x20] sm:%s1384] %v1397
                %v1399 = vld [vmem:[%s1391 + $0x18] sm:%s1384]
                %1400 = vst [vmem:[%s1392 + $0x30] sm:%s1384] %v1399
                %v1401 = vld [vmem:[%s1391 + $0x20] sm:%s1384]
                %1402 = vst [vmem:[%s1392 + $0x40] sm:%s1384] %v1401
                %v1403 = vld [vmem:[%s1391 + $0x28] sm:%s1384]
                %1404 = vst [vmem:[%s1392 + $0x50] sm:%s1384] %v1403
                %v1405 = vld [vmem:[%s1391 + $0x30] sm:%s1384]
                %1406 = vst [vmem:[%s1392 + $0x60] sm:%s1384] %v1405
                %v1407 = vld [vmem:[%s1391 + $0x38] sm:%s1384]
                %1408 = vst [vmem:[%s1392 + $0x70] sm:%s1384] %v1407
                %v1409 = vld [vmem:[%s1391 + $0x40] sm:%s1384]
                %1410 = vst [vmem:[%s1392 + $0x80] sm:%s1384] %v1409
                %v1411 = vld [vmem:[%s1391 + $0x48] sm:%s1384]
                %1412 = vst [vmem:[%s1392 + $0x90] sm:%s1384] %v1411
                %v1413 = vld [vmem:[%s1391 + $0x50] sm:%s1384]
                %1414 = vst [vmem:[%s1392 + $0xa0] sm:%s1384] %v1413
                %v1415 = vld [vmem:[%s1391 + $0x58] sm:%s1384]
                %1416 = vst [vmem:[%s1392 + $0xb0] sm:%s1384] %v1415
                %v1417 = vld [vmem:[%s1391 + $0x60] sm:%s1384]
                %1418 = vst [vmem:[%s1392 + $0xc0] sm:%s1384] %v1417
                %v1419 = vld [vmem:[%s1391 + $0x68] sm:%s1384]
                %1420 = vst [vmem:[%s1392 + $0xd0] sm:%s1384] %v1419
                %v1421 = vld [vmem:[%s1391 + $0x70] sm:%s1384]
                %1422 = vst [vmem:[%s1392 + $0xe0] sm:%s1384] %v1421
                %v1423 = vld [vmem:[%s1391 + $0x78] sm:%s1384]
                %1424 = vst [vmem:[%s1392 + $0xf0] sm:%s1384] %v1423
              $region125: #{discriminator_forward.11} parent=119 // loop_footer
                %s1390 = sadd.s32 1, %s1386
              $region126: #{discriminator_forward.11} parent=119 // loop_footer_branch
                %1385 = sbr.rel target = $region122
              $region127: #{discriminator_forward.11} parent=119 // loop_exit
                _
            $region120: #{discriminator_forward.11} parent=111 // pred_fallthru
              _
          $region112: #{discriminator_forward.11} parent=107 // pred_fallthru
            _
          %1469 = vnop
        $region108: #{discriminator_forward.11} parent=87 // pred_fallthru
          _
      $region88: #{discriminator_forward.11} parent=5 // pred_fallthru
        _
      %p1470 = scmp.le.s32.totalorder 2, %s9
      // Predicated region
      $region143: #{discriminator_forward.11} parent=5 // pred_check
        %p1471 = pneg %p1470
      $region144: #{discriminator_forward.11} parent=5 // pred_check_branch
        %1473 = sbr.rel (%p1471) target = $region146
      $region145: #{discriminator_forward.11} parent=5 // pred_region
        %s1474 = ssub.s32 %s9, 2
        // Predicated region
        $region147: #{discriminator_forward.11} parent=145 // pred_check
          %p1475 = pneg %p141
        $region148: #{discriminator_forward.11} parent=145 // pred_check_branch
          %1477 = sbr.rel (%p1475) target = $region150
        $region149: #{discriminator_forward.11} parent=145 // pred_region
          %s1478 = sand.u32 %s126, 1
          %s1479 = sand.u32 %s126, 1
          %s1480 = smul.addr %s1479, 128
          %s1481 = scalar_lea.vmem [#allocation5], %s1480
        $region150: #{discriminator_forward.11} parent=145 // pred_fallthru
          _
      $region146: #{discriminator_forward.11} parent=5 // pred_fallthru
        _
    $region6: #{discriminator_forward.11} parent=1 // loop_footer
      %s13 = sadd.s32 1, %s9
    $region7: #{discriminator_forward.11} parent=1 // loop_footer_branch
      %8 = sbr.rel target = $region3
    $region8: #{discriminator_forward.11} parent=1 // loop_exit
      _

// kernel: discriminator_forward.13
$region0: #{discriminator_forward.13}
  #allocation0 [shape = 'u32[]', space=smem, size = 0x4, offset = 0x4, fixed_abs, tag = 'smem constant byte address 0x4 - core index']
  #allocation1 [shape = 'u32[144,128]{1,0:T(1,128)}', space=vmem, size = 0x12000, scoped, tag = 'internal scratch']
  #allocation2 [shape = 'f32[128,128]{1,0:T(8,128)}', space=vmem, size = 0x10000, scoped, tag = 'scratch operand']
  %s0 = inlined_call_operand.vmem [shape: bf16[128,4096], index: 0, kind: input, shape index: {}]
  %s1 = inlined_call_operand.vmem [shape: bf16[4096,512], index: 1, kind: input, shape index: {}]
  %s2 = inlined_call_operand.vmem [shape: f32[1,512], index: 2, kind: input, shape index: {}]
  %s3 = inlined_call_operand.vmem [shape: f32[128,512], index: 3, kind: output, shape index: {}]
  %s4 = sld [smem:[#allocation0]]
  $region151: #{discriminator_forward.13} parent=0
    _
  %s6 = ssub.s32 1, %s4
  %s7 = scalar_select 0, %s6, %s4
  $region1: #{discriminator_forward.13} parent=0
    #allocation3 [shape = 'u8[262144]{0}', space=vmem, size = 0x40000, scoped, tag = 'input window, operand 0']
    #allocation4 [shape = 'u8[262144]{0}', space=vmem, size = 0x40000, scoped, tag = 'input window, operand 1']
    #allocation5 [shape = 'u8[131072]{0}', space=vmem, size = 0x20000, scoped, tag = 'output window, operand 0']
    loop: start=0, step=1, limit=34
    $region2: #{discriminator_forward.13} parent=1 // loop_pre_header
      _
    $region3: #{discriminator_forward.13} parent=1 // loop_header
      %s9 = sphi 0, %s13
      %p10 = scmp.ge.s32.totalorder %s9, 34
      %s16 = sphi 0, %s35
      %s17 = sphi 0, %s31
      %s18 = sphi 0, %s27
      %s19 = sphi 0, %s16
      %s20 = sphi 0, %s17
      %s21 = sphi 0, %s18
      %s22 = sphi 0, %s19
      %s23 = sphi 0, %s20
      %s24 = sphi 0, %s21
      %s40 = sphi 0, %s42
      %s43 = sphi 0, %s40
      %s44 = sphi 0, %s43
      %s60 = sphi 0, %s44
      %s68 = sphi 0, %s70
      %s71 = sphi 0, %s68
      %s72 = sphi 0, %s71
      %s88 = sphi 0, %s72
      %s94 = sphi 0, %s96
      %s97 = sphi 0, %s94
      %s98 = sphi 0, %s97
      %s114 = sphi 0, %s98
      %s122 = sphi 0, %s124
      %s125 = sphi 0, %s122
      %s126 = sphi 0, %s125
      %s142 = sphi 0, %s126
    $region4: #{discriminator_forward.13} parent=1 // loop_header_branch
      %12 = sbr.rel (%p10) target = $region8
    $region5: #{discriminator_forward.13} parent=1 // loop_body
      %s14 = ssub.s32 %s9, 1
      %s15 = ssub.s32 %s9, 2
      %s25 = sadd.s32 1, %s18
      %p26 = scmp.ge.s32.totalorder %s25, 8
      %s27 = scalar_select %p26, 0, %s25
      %s28 = sadd.s32 1, %s17
      %s29 = scalar_select %p26, %s28, %s17
      %p30 = scmp.ge.s32.totalorder %s29, 4
      %s31 = scalar_select %p30, 0, %s29
      %s32 = sadd.s32 1, %s16
      %s33 = scalar_select %p30, %s32, %s16
      %p34 = scmp.ge.s32.totalorder %s33, 1
      %s35 = scalar_select %p34, 0, %s33
      %s36 = ssub.s32 %s16, %s35
      %s37 = ssub.s32 %s18, %s27
      %s38 = sor.u32 %s36, %s37
      %p39 = scmp.eq.s32.totalorder %s38, 0
      %s41 = sadd.s32 %s40, 1
      %s42 = scalar_select %p39, %s40, %s41
      %p45 = pneg %p39
      %p46 = scmp.eq.s32.totalorder %s9, 31
      %p47 = por %p45, %p46
      %p48 = scmp.ne.s32.totalorder %s40, %s43
      %p49 = scmp.eq.s32.totalorder %s9, 0
      %p50 = por %p48, %p49
      %p51 = scmp.ne.s32.totalorder %s40, %s43
      %p52 = scmp.eq.s32.totalorder %s14, 31
      %p53 = por %p51, %p52
      %p54 = scmp.ne.s32.totalorder %s43, %s44
      %p55 = scmp.eq.s32.totalorder %s14, 0
      %p56 = por %p54, %p55
      %p57 = scmp.ne.s32.totalorder %s43, %s44
      %p58 = scmp.eq.s32.totalorder %s15, 31
      %p59 = por %p57, %p58
      %p61 = scmp.ne.s32.totalorder %s44, %s60
      %p62 = scmp.eq.s32.totalorder %s15, 0
      %p63 = por %p61, %p62
      %s64 = ssub.s32 %s18, %s27
      %s65 = ssub.s32 %s17, %s31
      %s66 = sor.u32 %s64, %s65
      %p67 = scmp.eq.s32.totalorder %s66, 0
      %s69 = sadd.s32 %s68, 1
      %s70 = scalar_select %p67, %s68, %s69
      %p73 = pneg %p67
      %p74 = scmp.eq.s32.totalorder %s9, 31
      %p75 = por %p73, %p74
      %p76 = scmp.ne.s32.totalorder %s68, %s71
      %p77 = scmp.eq.s32.totalorder %s9, 0
      %p78 = por %p76, %p77
      %p79 = scmp.ne.s32.totalorder %s68, %s71
      %p80 = scmp.eq.s32.totalorder %s14, 31
      %p81 = por %p79, %p80
      %p82 = scmp.ne.s32.totalorder %s71, %s72
      %p83 = scmp.eq.s32.totalorder %s14, 0
      %p84 = por %p82, %p83
      %p85 = scmp.ne.s32.totalorder %s71, %s72
      %p86 = scmp.eq.s32.totalorder %s15, 31
      %p87 = por %p85, %p86
      %p89 = scmp.ne.s32.totalorder %s72, %s88
      %p90 = scmp.eq.s32.totalorder %s15, 0
      %p91 = por %p89, %p90
      %s92 = ssub.s32 %s17, %s31
      %p93 = scmp.eq.s32.totalorder %s92, 0
      %s95 = sadd.s32 %s94, 1
      %s96 = scalar_select %p93, %s94, %s95
      %p99 = pneg %p93
      %p100 = scmp.eq.s32.totalorder %s9, 31
      %p101 = por %p99, %p100
      %p102 = scmp.ne.s32.totalorder %s94, %s97
      %p103 = scmp.eq.s32.totalorder %s9, 0
      %p104 = por %p102, %p103
      %p105 = scmp.ne.s32.totalorder %s94, %s97
      %p106 = scmp.eq.s32.totalorder %s14, 31
      %p107 = por %p105, %p106
      %p108 = scmp.ne.s32.totalorder %s97, %s98
      %p109 = scmp.eq.s32.totalorder %s14, 0
      %p110 = por %p108, %p109
      %p111 = scmp.ne.s32.totalorder %s97, %s98
      %p112 = scmp.eq.s32.totalorder %s15, 31
      %p113 = por %p111, %p112
      %p115 = scmp.ne.s32.totalorder %s98, %s114
      %p116 = scmp.eq.s32.totalorder %s15, 0
      %p117 = por %p115, %p116
      %s118 = ssub.s32 %s16, %s35
      %s119 = ssub.s32 %s17, %s31
      %s120 = sor.u32 %s118, %s119
      %p121 = scmp.eq.s32.totalorder %s120, 0
      %s123 = sadd.s32 %s122, 1
      %s124 = scalar_select %p121, %s122, %s123
      %p127 = pneg %p121
      %p128 = scmp.eq.s32.totalorder %s9, 31
      %p129 = por %p127, %p128
      %p130 = scmp.ne.s32.totalorder %s122, %s125
      %p131 = scmp.eq.s32.totalorder %s9, 0
      %p132 = por %p130, %p131
      %p133 = scmp.ne.s32.totalorder %s122, %s125
      %p134 = scmp.eq.s32.totalorder %s14, 31
      %p135 = por %p133, %p134
      %p136 = scmp.ne.s32.totalorder %s125, %s126
      %p137 = scmp.eq.s32.totalorder %s14, 0
      %p138 = por %p136, %p137
      %p139 = scmp.ne.s32.totalorder %s125, %s126
      %p140 = scmp.eq.s32.totalorder %s15, 31
      %p141 = por %p139, %p140
      %p143 = scmp.ne.s32.totalorder %s126, %s142
      %p144 = scmp.eq.s32.totalorder %s15, 0
      %p145 = por %p143, %p144
      %p146 = scmp.le.s32.totalorder 1, %s9
      %p147 = scmp.lt.s32.totalorder %s9, 33
      %p148 = pnand %p146, %p147
      %p149 = pneg %p148
      // Predicated region
      $region9: #{discriminator_forward.13} parent=5 // pred_check
        _
      $region10: #{discriminator_forward.13} parent=5 // pred_check_branch
        %151 = sbr.rel (%p148) target = $region12
      $region11: #{discriminator_forward.13} parent=5 // pred_region
        %s152 = ssub.s32 %s9, 1
      $region12: #{discriminator_forward.13} parent=5 // pred_fallthru
        _
      %p153 = scmp.lt.s32.totalorder %s9, 32
      // Predicated region
      $region13: #{discriminator_forward.13} parent=5 // pred_check
        %p154 = pneg %p153
      $region14: #{discriminator_forward.13} parent=5 // pred_check_branch
        %156 = sbr.rel (%p154) target = $region16
      $region15: #{discriminator_forward.13} parent=5 // pred_region
        // Predicated region
        $region17: #{discriminator_forward.13} parent=15 // pred_check
          %p157 = pneg %p50
        $region18: #{discriminator_forward.13} parent=15 // pred_check_branch
          %159 = sbr.rel (%p157) target = $region20
        $region19: #{discriminator_forward.13} parent=15 // pred_region
          %s160 = sand.u32 %s40, 1
          %s161 = sand.u32 %s40, 1
          %s162 = smul.addr %s161, 256
          %s163 = scalar_lea.vmem [#allocation3], %s162
          %s164 = smul.u32 16, %s16
          %s165 = smul.u32 4, %s18
          %s166 = smul.addr %s164, 32
          %s167 = sadd.s32 %s165, %s166
          %s168 = smul.addr %s167, 4
          %s169 = scalar_lea.vmem %s0, %s168
          // Predicated region
          $region21: #{discriminator_forward.13} parent=19 // pred_check
            _
          $region22: #{discriminator_forward.13} parent=19 // pred_check_branch
            %171 = sbr.rel (0) target = $region24
          $region23: #{discriminator_forward.13} parent=19 // pred_region
            // Predicated region
            $region25: #{discriminator_forward.13} parent=23 // pred_check
              _
            $region26: #{discriminator_forward.13} parent=23 // pred_check_branch
              %173 = sbr.rel (0) target = $region28
            $region27: #{discriminator_forward.13} parent=23 // pred_region
              loop: start=0, step=1, limit=1
              $region29: #{discriminator_forward.13} parent=27 // loop_pre_header
                _
              $region30: #{discriminator_forward.13} parent=27 // loop_header
                %s175 = sphi 0, %s179
                %p176 = scmp.ge.s32.totalorder %s175, 1
                %s180 = sphi %s169, %s169
                %s181 = sphi %s163, %s163
              $region31: #{discriminator_forward.13} parent=27 // loop_header_branch
                %178 = sbr.rel (%p176) target = $region35
              $region32: #{discriminator_forward.13} parent=27 // loop_body
                %v182 = vld [vmem:[%s180] sm:$0xff]
                %183 = vst [vmem:[%s181] sm:$0xff] %v182
                %v184 = vld [vmem:[%s180 + $0x8] sm:$0xff]
                %185 = vst [vmem:[%s181 + $0x8] sm:$0xff] %v184
                %v186 = vld [vmem:[%s180 + $0x80] sm:$0xff]
                %187 = vst [vmem:[%s181 + $0x10] sm:$0xff] %v186
                %v188 = vld [vmem:[%s180 + $0x88] sm:$0xff]
                %189 = vst [vmem:[%s181 + $0x18] sm:$0xff] %v188
                %v190 = vld [vmem:[%s180 + $0x100] sm:$0xff]
                %191 = vst [vmem:[%s181 + $0x20] sm:$0xff] %v190
                %v192 = vld [vmem:[%s180 + $0x108] sm:$0xff]
                %193 = vst [vmem:[%s181 + $0x28] sm:$0xff] %v192
                %v194 = vld [vmem:[%s180 + $0x180] sm:$0xff]
                %195 = vst [vmem:[%s181 + $0x30] sm:$0xff] %v194
                %v196 = vld [vmem:[%s180 + $0x188] sm:$0xff]
                %197 = vst [vmem:[%s181 + $0x38] sm:$0xff] %v196
                %v198 = vld [vmem:[%s180 + $0x200] sm:$0xff]
                %199 = vst [vmem:[%s181 + $0x40] sm:$0xff] %v198
                %v200 = vld [vmem:[%s180 + $0x208] sm:$0xff]
                %201 = vst [vmem:[%s181 + $0x48] sm:$0xff] %v200
                %v202 = vld [vmem:[%s180 + $0x280] sm:$0xff]
                %203 = vst [vmem:[%s181 + $0x50] sm:$0xff] %v202
                %v204 = vld [vmem:[%s180 + $0x288] sm:$0xff]
                %205 = vst [vmem:[%s181 + $0x58] sm:$0xff] %v204
                %v206 = vld [vmem:[%s180 + $0x300] sm:$0xff]
                %207 = vst [vmem:[%s181 + $0x60] sm:$0xff] %v206
                %v208 = vld [vmem:[%s180 + $0x308] sm:$0xff]
                %209 = vst [vmem:[%s181 + $0x68] sm:$0xff] %v208
                %v210 = vld [vmem:[%s180 + $0x380] sm:$0xff]
                %211 = vst [vmem:[%s181 + $0x70] sm:$0xff] %v210
                %v212 = vld [vmem:[%s180 + $0x388] sm:$0xff]
                %213 = vst [vmem:[%s181 + $0x78] sm:$0xff] %v212
                %v214 = vld [vmem:[%s180 + $0x400] sm:$0xff]
                %215 = vst [vmem:[%s181 + $0x80] sm:$0xff] %v214
                %v216 = vld [vmem:[%s180 + $0x408] sm:$0xff]
                %217 = vst [vmem:[%s181 + $0x88] sm:$0xff] %v216
                %v218 = vld [vmem:[%s180 + $0x480] sm:$0xff]
                %219 = vst [vmem:[%s181 + $0x90] sm:$0xff] %v218
                %v220 = vld [vmem:[%s180 + $0x488] sm:$0xff]
                %221 = vst [vmem:[%s181 + $0x98] sm:$0xff] %v220
                %v222 = vld [vmem:[%s180 + $0x500] sm:$0xff]
                %223 = vst [vmem:[%s181 + $0xa0] sm:$0xff] %v222
                %v224 = vld [vmem:[%s180 + $0x508] sm:$0xff]
                %225 = vst [vmem:[%s181 + $0xa8] sm:$0xff] %v224
                %v226 = vld [vmem:[%s180 + $0x580] sm:$0xff]
                %227 = vst [vmem:[%s181 + $0xb0] sm:$0xff] %v226
                %v228 = vld [vmem:[%s180 + $0x588] sm:$0xff]
                %229 = vst [vmem:[%s181 + $0xb8] sm:$0xff] %v228
                %v230 = vld [vmem:[%s180 + $0x600] sm:$0xff]
                %231 = vst [vmem:[%s181 + $0xc0] sm:$0xff] %v230
                %v232 = vld [vmem:[%s180 + $0x608] sm:$0xff]
                %233 = vst [vmem:[%s181 + $0xc8] sm:$0xff] %v232
                %v234 = vld [vmem:[%s180 + $0x680] sm:$0xff]
                %235 = vst [vmem:[%s181 + $0xd0] sm:$0xff] %v234
                %v236 = vld [vmem:[%s180 + $0x688] sm:$0xff]
                %237 = vst [vmem:[%s181 + $0xd8] sm:$0xff] %v236
                %v238 = vld [vmem:[%s180 + $0x700] sm:$0xff]
                %239 = vst [vmem:[%s181 + $0xe0] sm:$0xff] %v238
                %v240 = vld [vmem:[%s180 + $0x708] sm:$0xff]
                %241 = vst [vmem:[%s181 + $0xe8] sm:$0xff] %v240
                %v242 = vld [vmem:[%s180 + $0x780] sm:$0xff]
                %243 = vst [vmem:[%s181 + $0xf0] sm:$0xff] %v242
                %v244 = vld [vmem:[%s180 + $0x788] sm:$0xff]
                %245 = vst [vmem:[%s181 + $0xf8] sm:$0xff] %v244
              $region33: #{discriminator_forward.13} parent=27 // loop_footer
                %s179 = sadd.s32 1, %s175
              $region34: #{discriminator_forward.13} parent=27 // loop_footer_branch
                %174 = sbr.rel target = $region30
              $region35: #{discriminator_forward.13} parent=27 // loop_exit
                _
            $region28: #{discriminator_forward.13} parent=23 // pred_fallthru
              _
            // Predicated region
            $region36: #{discriminator_forward.13} parent=23 // pred_check
              _
            $region37: #{discriminator_forward.13} parent=23 // pred_check_branch
              %247 = sbr.rel target = $region39
            $region38: #{discriminator_forward.13} parent=23 // pred_region
              _
            $region39: #{discriminator_forward.13} parent=23 // pred_fallthru
              _
          $region24: #{discriminator_forward.13} parent=19 // pred_fallthru
            _
          %248 = vnop
        $region20: #{discriminator_forward.13} parent=15 // pred_fallthru
          _
        // Predicated region
        $region40: #{discriminator_forward.13} parent=15 // pred_check
          %p249 = pneg %p78
        $region41: #{discriminator_forward.13} parent=15 // pred_check_branch
          %251 = sbr.rel (%p249) target = $region43
        $region42: #{discriminator_forward.13} parent=15 // pred_region
          %s252 = sand.u32 %s68, 1
          %s253 = sand.u32 %s68, 1
          %s254 = smul.addr %s253, 256
          %s255 = scalar_lea.vmem [#allocation4], %s254
          %s256 = smul.u32 64, %s18
          %s257 = smul.addr %s256, 4
          %s258 = sadd.s32 %s17, %s257
          %s259 = smul.addr %s258, 4
          %s260 = scalar_lea.vmem %s1, %s259
          // Predicated region
          $region44: #{discriminator_forward.13} parent=42 // pred_check
            _
          $region45: #{discriminator_forward.13} parent=42 // pred_check_branch
            %262 = sbr.rel (0) target = $region47
          $region46: #{discriminator_forward.13} parent=42 // pred_region
            // Predicated region
            $region48: #{discriminator_forward.13} parent=46 // pred_check
              _
            $region49: #{discriminator_forward.13} parent=46 // pred_check_branch
              %264 = sbr.rel target = $region51
            $region50: #{discriminator_forward.13} parent=46 // pred_region
              // Predicated region
              $region63: #{discriminator_forward.13} parent=50 // pred_check
                _
              $region64: #{discriminator_forward.13} parent=50 // pred_check_branch
                %406 = sbr.rel (0) target = $region66
              $region65: #{discriminator_forward.13} parent=50 // pred_region
                loop: start=0, step=1, limit=1
                $region67: #{discriminator_forward.13} parent=65 // loop_pre_header
                  _
                $region68: #{discriminator_forward.13} parent=65 // loop_header
                  %s408 = sphi 0, %s412
                  %p409 = scmp.ge.s32.totalorder %s408, 1
                  %s413 = sphi %s260, %s260
                  %s414 = sphi %s255, %s255
                $region69: #{discriminator_forward.13} parent=65 // loop_header_branch
                  %411 = sbr.rel (%p409) target = $region73
                $region70: #{discriminator_forward.13} parent=65 // loop_body
                  _
                $region71: #{discriminator_forward.13} parent=65 // loop_footer
                  %s412 = sadd.s32 1, %s408
                $region72: #{discriminator_forward.13} parent=65 // loop_footer_branch
                  %407 = sbr.rel target = $region68
                $region73: #{discriminator_forward.13} parent=65 // loop_exit
                  _
                %s416 = ssub.s32 16, 1
                loop: start=0, step=1, limit=1
                $region74: #{discriminator_forward.13} parent=65 // loop_pre_header
                  _
                $region75: #{discriminator_forward.13} parent=65 // loop_header
                  %s418 = sphi 0, %s422
                  %p419 = scmp.ge.s32.totalorder %s418, 1
                  %s423 = sphi %s260, %s260
                  %s424 = sphi %s255, %s255
                $region76: #{discriminator_forward.13} parent=65 // loop_header_branch
                  %421 = sbr.rel (%p419) target = $region80
                $region77: #{discriminator_forward.13} parent=65 // loop_body
                  %v425 = vld [vmem:[%s423] sm:%s416]
                  %426 = vst [vmem:[%s424] sm:%s416] %v425
                  %v427 = vld [vmem:[%s423 + $0x10] sm:%s416]
                  %428 = vst [vmem:[%s424 + $0x4] sm:%s416] %v427
                  %v429 = vld [vmem:[%s423 + $0x20] sm:%s416]
                  %430 = vst [vmem:[%s424 + $0x8] sm:%s416] %v429
                  %v431 = vld [vmem:[%s423 + $0x30] sm:%s416]
                  %432 = vst [vmem:[%s424 + $0xc] sm:%s416] %v431
                  %v433 = vld [vmem:[%s423 + $0x40] sm:%s416]
                  %434 = vst [vmem:[%s424 + $0x10] sm:%s416] %v433
                  %v435 = vld [vmem:[%s423 + $0x50] sm:%s416]
                  %436 = vst [vmem:[%s424 + $0x14] sm:%s416] %v435
                  %v437 = vld [vmem:[%s423 + $0x60] sm:%s416]
                  %438 = vst [vmem:[%s424 + $0x18] sm:%s416] %v437
                  %v439 = vld [vmem:[%s423 + $0x70] sm:%s416]
                  %440 = vst [vmem:[%s424 + $0x1c] sm:%s416] %v439
                  %v441 = vld [vmem:[%s423 + $0x80] sm:%s416]
                  %442 = vst [vmem:[%s424 + $0x20] sm:%s416] %v441
                  %v443 = vld [vmem:[%s423 + $0x90] sm:%s416]
                  %444 = vst [vmem:[%s424 + $0x24] sm:%s416] %v443
                  %v445 = vld [vmem:[%s423 + $0xa0] sm:%s416]
                  %446 = vst [vmem:[%s424 + $0x28] sm:%s416] %v445
                  %v447 = vld [vmem:[%s423 + $0xb0] sm:%s416]
                  %448 = vst [vmem:[%s424 + $0x2c] sm:%s416] %v447
                  %v449 = vld [vmem:[%s423 + $0xc0] sm:%s416]
                  %450 = vst [vmem:[%s424 + $0x30] sm:%s416] %v449
                  %v451 = vld [vmem:[%s423 + $0xd0] sm:%s416]
                  %452 = vst [vmem:[%s424 + $0x34] sm:%s416] %v451
                  %v453 = vld [vmem:[%s423 + $0xe0] sm:%s416]
                  %454 = vst [vmem:[%s424 + $0x38] sm:%s416] %v453
                  %v455 = vld [vmem:[%s423 + $0xf0] sm:%s416]
                  %456 = vst [vmem:[%s424 + $0x3c] sm:%s416] %v455
                  %v457 = vld [vmem:[%s423 + $0x100] sm:%s416]
                  %458 = vst [vmem:[%s424 + $0x40] sm:%s416] %v457
                  %v459 = vld [vmem:[%s423 + $0x110] sm:%s416]
                  %460 = vst [vmem:[%s424 + $0x44] sm:%s416] %v459
                  %v461 = vld [vmem:[%s423 + $0x120] sm:%s416]
                  %462 = vst [vmem:[%s424 + $0x48] sm:%s416] %v461
                  %v463 = vld [vmem:[%s423 + $0x130] sm:%s416]
                  %464 = vst [vmem:[%s424 + $0x4c] sm:%s416] %v463
                  %v465 = vld [vmem:[%s423 + $0x140] sm:%s416]
                  %466 = vst [vmem:[%s424 + $0x50] sm:%s416] %v465
                  %v467 = vld [vmem:[%s423 + $0x150] sm:%s416]
                  %468 = vst [vmem:[%s424 + $0x54] sm:%s416] %v467
                  %v469 = vld [vmem:[%s423 + $0x160] sm:%s416]
                  %470 = vst [vmem:[%s424 + $0x58] sm:%s416] %v469
                  %v471 = vld [vmem:[%s423 + $0x170] sm:%s416]
                  %472 = vst [vmem:[%s424 + $0x5c] sm:%s416] %v471
                  %v473 = vld [vmem:[%s423 + $0x180] sm:%s416]
                  %474 = vst [vmem:[%s424 + $0x60] sm:%s416] %v473
                  %v475 = vld [vmem:[%s423 + $0x190] sm:%s416]
                  %476 = vst [vmem:[%s424 + $0x64] sm:%s416] %v475
                  %v477 = vld [vmem:[%s423 + $0x1a0] sm:%s416]
                  %478 = vst [vmem:[%s424 + $0x68] sm:%s416] %v477
                  %v479 = vld [vmem:[%s423 + $0x1b0] sm:%s416]
                  %480 = vst [vmem:[%s424 + $0x6c] sm:%s416] %v479
                  %v481 = vld [vmem:[%s423 + $0x1c0] sm:%s416]
                  %482 = vst [vmem:[%s424 + $0x70] sm:%s416] %v481
                  %v483 = vld [vmem:[%s423 + $0x1d0] sm:%s416]
                  %484 = vst [vmem:[%s424 + $0x74] sm:%s416] %v483
                  %v485 = vld [vmem:[%s423 + $0x1e0] sm:%s416]
                  %486 = vst [vmem:[%s424 + $0x78] sm:%s416] %v485
                  %v487 = vld [vmem:[%s423 + $0x1f0] sm:%s416]
                  %488 = vst [vmem:[%s424 + $0x7c] sm:%s416] %v487
                  %v489 = vld [vmem:[%s423 + $0x200] sm:%s416]
                  %490 = vst [vmem:[%s424 + $0x80] sm:%s416] %v489
                  %v491 = vld [vmem:[%s423 + $0x210] sm:%s416]
                  %492 = vst [vmem:[%s424 + $0x84] sm:%s416] %v491
                  %v493 = vld [vmem:[%s423 + $0x220] sm:%s416]
                  %494 = vst [vmem:[%s424 + $0x88] sm:%s416] %v493
                  %v495 = vld [vmem:[%s423 + $0x230] sm:%s416]
                  %496 = vst [vmem:[%s424 + $0x8c] sm:%s416] %v495
                  %v497 = vld [vmem:[%s423 + $0x240] sm:%s416]
                  %498 = vst [vmem:[%s424 + $0x90] sm:%s416] %v497
                  %v499 = vld [vmem:[%s423 + $0x250] sm:%s416]
                  %500 = vst [vmem:[%s424 + $0x94] sm:%s416] %v499
                  %v501 = vld [vmem:[%s423 + $0x260] sm:%s416]
                  %502 = vst [vmem:[%s424 + $0x98] sm:%s416] %v501
                  %v503 = vld [vmem:[%s423 + $0x270] sm:%s416]
                  %504 = vst [vmem:[%s424 + $0x9c] sm:%s416] %v503
                  %v505 = vld [vmem:[%s423 + $0x280] sm:%s416]
                  %506 = vst [vmem:[%s424 + $0xa0] sm:%s416] %v505
                  %v507 = vld [vmem:[%s423 + $0x290] sm:%s416]
                  %508 = vst [vmem:[%s424 + $0xa4] sm:%s416] %v507
                  %v509 = vld [vmem:[%s423 + $0x2a0] sm:%s416]
                  %510 = vst [vmem:[%s424 + $0xa8] sm:%s416] %v509
                  %v511 = vld [vmem:[%s423 + $0x2b0] sm:%s416]
                  %512 = vst [vmem:[%s424 + $0xac] sm:%s416] %v511
                  %v513 = vld [vmem:[%s423 + $0x2c0] sm:%s416]
                  %514 = vst [vmem:[%s424 + $0xb0] sm:%s416] %v513
                  %v515 = vld [vmem:[%s423 + $0x2d0] sm:%s416]
                  %516 = vst [vmem:[%s424 + $0xb4] sm:%s416] %v515
                  %v517 = vld [vmem:[%s423 + $0x2e0] sm:%s416]
                  %518 = vst [vmem:[%s424 + $0xb8] sm:%s416] %v517
                  %v519 = vld [vmem:[%s423 + $0x2f0] sm:%s416]
                  %520 = vst [vmem:[%s424 + $0xbc] sm:%s416] %v519
                  %v521 = vld [vmem:[%s423 + $0x300] sm:%s416]
                  %522 = vst [vmem:[%s424 + $0xc0] sm:%s416] %v521
                  %v523 = vld [vmem:[%s423 + $0x310] sm:%s416]
                  %524 = vst [vmem:[%s424 + $0xc4] sm:%s416] %v523
                  %v525 = vld [vmem:[%s423 + $0x320] sm:%s416]
                  %526 = vst [vmem:[%s424 + $0xc8] sm:%s416] %v525
                  %v527 = vld [vmem:[%s423 + $0x330] sm:%s416]
                  %528 = vst [vmem:[%s424 + $0xcc] sm:%s416] %v527
                  %v529 = vld [vmem:[%s423 + $0x340] sm:%s416]
                  %530 = vst [vmem:[%s424 + $0xd0] sm:%s416] %v529
                  %v531 = vld [vmem:[%s423 + $0x350] sm:%s416]
                  %532 = vst [vmem:[%s424 + $0xd4] sm:%s416] %v531
                  %v533 = vld [vmem:[%s423 + $0x360] sm:%s416]
                  %534 = vst [vmem:[%s424 + $0xd8] sm:%s416] %v533
                  %v535 = vld [vmem:[%s423 + $0x370] sm:%s416]
                  %536 = vst [vmem:[%s424 + $0xdc] sm:%s416] %v535
                  %v537 = vld [vmem:[%s423 + $0x380] sm:%s416]
                  %538 = vst [vmem:[%s424 + $0xe0] sm:%s416] %v537
                  %v539 = vld [vmem:[%s423 + $0x390] sm:%s416]
                  %540 = vst [vmem:[%s424 + $0xe4] sm:%s416] %v539
                  %v541 = vld [vmem:[%s423 + $0x3a0] sm:%s416]
                  %542 = vst [vmem:[%s424 + $0xe8] sm:%s416] %v541
                  %v543 = vld [vmem:[%s423 + $0x3b0] sm:%s416]
                  %544 = vst [vmem:[%s424 + $0xec] sm:%s416] %v543
                  %v545 = vld [vmem:[%s423 + $0x3c0] sm:%s416]
                  %546 = vst [vmem:[%s424 + $0xf0] sm:%s416] %v545
                  %v547 = vld [vmem:[%s423 + $0x3d0] sm:%s416]
                  %548 = vst [vmem:[%s424 + $0xf4] sm:%s416] %v547
                  %v549 = vld [vmem:[%s423 + $0x3e0] sm:%s416]
                  %550 = vst [vmem:[%s424 + $0xf8] sm:%s416] %v549
                  %v551 = vld [vmem:[%s423 + $0x3f0] sm:%s416]
                  %552 = vst [vmem:[%s424 + $0xfc] sm:%s416] %v551
                $region78: #{discriminator_forward.13} parent=65 // loop_footer
                  %s422 = sadd.s32 1, %s418
                $region79: #{discriminator_forward.13} parent=65 // loop_footer_branch
                  %417 = sbr.rel target = $region75
                $region80: #{discriminator_forward.13} parent=65 // loop_exit
                  _
              $region66: #{discriminator_forward.13} parent=50 // pred_fallthru
                _
            $region51: #{discriminator_forward.13} parent=46 // pred_fallthru
              _
            // Predicated region
            $region52: #{discriminator_forward.13} parent=46 // pred_check
              _
            $region53: #{discriminator_forward.13} parent=46 // pred_check_branch
              %266 = sbr.rel (0) target = $region55
            $region54: #{discriminator_forward.13} parent=46 // pred_region
              %s268 = ssub.s32 16, 1
              loop: start=0, step=1, limit=1
              $region56: #{discriminator_forward.13} parent=54 // loop_pre_header
                _
              $region57: #{discriminator_forward.13} parent=54 // loop_header
                %s270 = sphi 0, %s274
                %p271 = scmp.ge.s32.totalorder %s270, 1
                %s275 = sphi %s260, %s260
                %s276 = sphi %s255, %s255
              $region58: #{discriminator_forward.13} parent=54 // loop_header_branch
                %273 = sbr.rel (%p271) target = $region62
              $region59: #{discriminator_forward.13} parent=54 // loop_body
                %v277 = vld [vmem:[%s275] sm:%s268]
                %278 = vst [vmem:[%s276] sm:%s268] %v277
                %v279 = vld [vmem:[%s275 + $0x10] sm:%s268]
                %280 = vst [vmem:[%s276 + $0x4] sm:%s268] %v279
                %v281 = vld [vmem:[%s275 + $0x20] sm:%s268]
                %282 = vst [vmem:[%s276 + $0x8] sm:%s268] %v281
                %v283 = vld [vmem:[%s275 + $0x30] sm:%s268]
                %284 = vst [vmem:[%s276 + $0xc] sm:%s268] %v283
                %v285 = vld [vmem:[%s275 + $0x40] sm:%s268]
                %286 = vst [vmem:[%s276 + $0x10] sm:%s268] %v285
                %v287 = vld [vmem:[%s275 + $0x50] sm:%s268]
                %288 = vst [vmem:[%s276 + $0x14] sm:%s268] %v287
                %v289 = vld [vmem:[%s275 + $0x60] sm:%s268]
                %290 = vst [vmem:[%s276 + $0x18] sm:%s268] %v289
                %v291 = vld [vmem:[%s275 + $0x70] sm:%s268]
                %292 = vst [vmem:[%s276 + $0x1c] sm:%s268] %v291
                %v293 = vld [vmem:[%s275 + $0x80] sm:%s268]
                %294 = vst [vmem:[%s276 + $0x20] sm:%s268] %v293
                %v295 = vld [vmem:[%s275 + $0x90] sm:%s268]
                %296 = vst [vmem:[%s276 + $0x24] sm:%s268] %v295
                %v297 = vld [vmem:[%s275 + $0xa0] sm:%s268]
                %298 = vst [vmem:[%s276 + $0x28] sm:%s268] %v297
                %v299 = vld [vmem:[%s275 + $0xb0] sm:%s268]
                %300 = vst [vmem:[%s276 + $0x2c] sm:%s268] %v299
                %v301 = vld [vmem:[%s275 + $0xc0] sm:%s268]
                %302 = vst [vmem:[%s276 + $0x30] sm:%s268] %v301
                %v303 = vld [vmem:[%s275 + $0xd0] sm:%s268]
                %304 = vst [vmem:[%s276 + $0x34] sm:%s268] %v303
                %v305 = vld [vmem:[%s275 + $0xe0] sm:%s268]
                %306 = vst [vmem:[%s276 + $0x38] sm:%s268] %v305
                %v307 = vld [vmem:[%s275 + $0xf0] sm:%s268]
                %308 = vst [vmem:[%s276 + $0x3c] sm:%s268] %v307
                %v309 = vld [vmem:[%s275 + $0x100] sm:%s268]
                %310 = vst [vmem:[%s276 + $0x40] sm:%s268] %v309
                %v311 = vld [vmem:[%s275 + $0x110] sm:%s268]
                %312 = vst [vmem:[%s276 + $0x44] sm:%s268] %v311
                %v313 = vld [vmem:[%s275 + $0x120] sm:%s268]
                %314 = vst [vmem:[%s276 + $0x48] sm:%s268] %v313
                %v315 = vld [vmem:[%s275 + $0x130] sm:%s268]
                %316 = vst [vmem:[%s276 + $0x4c] sm:%s268] %v315
                %v317 = vld [vmem:[%s275 + $0x140] sm:%s268]
                %318 = vst [vmem:[%s276 + $0x50] sm:%s268] %v317
                %v319 = vld [vmem:[%s275 + $0x150] sm:%s268]
                %320 = vst [vmem:[%s276 + $0x54] sm:%s268] %v319
                %v321 = vld [vmem:[%s275 + $0x160] sm:%s268]
                %322 = vst [vmem:[%s276 + $0x58] sm:%s268] %v321
                %v323 = vld [vmem:[%s275 + $0x170] sm:%s268]
                %324 = vst [vmem:[%s276 + $0x5c] sm:%s268] %v323
                %v325 = vld [vmem:[%s275 + $0x180] sm:%s268]
                %326 = vst [vmem:[%s276 + $0x60] sm:%s268] %v325
                %v327 = vld [vmem:[%s275 + $0x190] sm:%s268]
                %328 = vst [vmem:[%s276 + $0x64] sm:%s268] %v327
                %v329 = vld [vmem:[%s275 + $0x1a0] sm:%s268]
                %330 = vst [vmem:[%s276 + $0x68] sm:%s268] %v329
                %v331 = vld [vmem:[%s275 + $0x1b0] sm:%s268]
                %332 = vst [vmem:[%s276 + $0x6c] sm:%s268] %v331
                %v333 = vld [vmem:[%s275 + $0x1c0] sm:%s268]
                %334 = vst [vmem:[%s276 + $0x70] sm:%s268] %v333
                %v335 = vld [vmem:[%s275 + $0x1d0] sm:%s268]
                %336 = vst [vmem:[%s276 + $0x74] sm:%s268] %v335
                %v337 = vld [vmem:[%s275 + $0x1e0] sm:%s268]
                %338 = vst [vmem:[%s276 + $0x78] sm:%s268] %v337
                %v339 = vld [vmem:[%s275 + $0x1f0] sm:%s268]
                %340 = vst [vmem:[%s276 + $0x7c] sm:%s268] %v339
                %v341 = vld [vmem:[%s275 + $0x200] sm:%s268]
                %342 = vst [vmem:[%s276 + $0x80] sm:%s268] %v341
                %v343 = vld [vmem:[%s275 + $0x210] sm:%s268]
                %344 = vst [vmem:[%s276 + $0x84] sm:%s268] %v343
                %v345 = vld [vmem:[%s275 + $0x220] sm:%s268]
                %346 = vst [vmem:[%s276 + $0x88] sm:%s268] %v345
                %v347 = vld [vmem:[%s275 + $0x230] sm:%s268]
                %348 = vst [vmem:[%s276 + $0x8c] sm:%s268] %v347
                %v349 = vld [vmem:[%s275 + $0x240] sm:%s268]
                %350 = vst [vmem:[%s276 + $0x90] sm:%s268] %v349
                %v351 = vld [vmem:[%s275 + $0x250] sm:%s268]
                %352 = vst [vmem:[%s276 + $0x94] sm:%s268] %v351
                %v353 = vld [vmem:[%s275 + $0x260] sm:%s268]
                %354 = vst [vmem:[%s276 + $0x98] sm:%s268] %v353
                %v355 = vld [vmem:[%s275 + $0x270] sm:%s268]
                %356 = vst [vmem:[%s276 + $0x9c] sm:%s268] %v355
                %v357 = vld [vmem:[%s275 + $0x280] sm:%s268]
                %358 = vst [vmem:[%s276 + $0xa0] sm:%s268] %v357
                %v359 = vld [vmem:[%s275 + $0x290] sm:%s268]
                %360 = vst [vmem:[%s276 + $0xa4] sm:%s268] %v359
                %v361 = vld [vmem:[%s275 + $0x2a0] sm:%s268]
                %362 = vst [vmem:[%s276 + $0xa8] sm:%s268] %v361
                %v363 = vld [vmem:[%s275 + $0x2b0] sm:%s268]
                %364 = vst [vmem:[%s276 + $0xac] sm:%s268] %v363
                %v365 = vld [vmem:[%s275 + $0x2c0] sm:%s268]
                %366 = vst [vmem:[%s276 + $0xb0] sm:%s268] %v365
                %v367 = vld [vmem:[%s275 + $0x2d0] sm:%s268]
                %368 = vst [vmem:[%s276 + $0xb4] sm:%s268] %v367
                %v369 = vld [vmem:[%s275 + $0x2e0] sm:%s268]
                %370 = vst [vmem:[%s276 + $0xb8] sm:%s268] %v369
                %v371 = vld [vmem:[%s275 + $0x2f0] sm:%s268]
                %372 = vst [vmem:[%s276 + $0xbc] sm:%s268] %v371
                %v373 = vld [vmem:[%s275 + $0x300] sm:%s268]
                %374 = vst [vmem:[%s276 + $0xc0] sm:%s268] %v373
                %v375 = vld [vmem:[%s275 + $0x310] sm:%s268]
                %376 = vst [vmem:[%s276 + $0xc4] sm:%s268] %v375
                %v377 = vld [vmem:[%s275 + $0x320] sm:%s268]
                %378 = vst [vmem:[%s276 + $0xc8] sm:%s268] %v377
                %v379 = vld [vmem:[%s275 + $0x330] sm:%s268]
                %380 = vst [vmem:[%s276 + $0xcc] sm:%s268] %v379
                %v381 = vld [vmem:[%s275 + $0x340] sm:%s268]
                %382 = vst [vmem:[%s276 + $0xd0] sm:%s268] %v381
                %v383 = vld [vmem:[%s275 + $0x350] sm:%s268]
                %384 = vst [vmem:[%s276 + $0xd4] sm:%s268] %v383
                %v385 = vld [vmem:[%s275 + $0x360] sm:%s268]
                %386 = vst [vmem:[%s276 + $0xd8] sm:%s268] %v385
                %v387 = vld [vmem:[%s275 + $0x370] sm:%s268]
                %388 = vst [vmem:[%s276 + $0xdc] sm:%s268] %v387
                %v389 = vld [vmem:[%s275 + $0x380] sm:%s268]
                %390 = vst [vmem:[%s276 + $0xe0] sm:%s268] %v389
                %v391 = vld [vmem:[%s275 + $0x390] sm:%s268]
                %392 = vst [vmem:[%s276 + $0xe4] sm:%s268] %v391
                %v393 = vld [vmem:[%s275 + $0x3a0] sm:%s268]
                %394 = vst [vmem:[%s276 + $0xe8] sm:%s268] %v393
                %v395 = vld [vmem:[%s275 + $0x3b0] sm:%s268]
                %396 = vst [vmem:[%s276 + $0xec] sm:%s268] %v395
                %v397 = vld [vmem:[%s275 + $0x3c0] sm:%s268]
                %398 = vst [vmem:[%s276 + $0xf0] sm:%s268] %v397
                %v399 = vld [vmem:[%s275 + $0x3d0] sm:%s268]
                %400 = vst [vmem:[%s276 + $0xf4] sm:%s268] %v399
                %v401 = vld [vmem:[%s275 + $0x3e0] sm:%s268]
                %402 = vst [vmem:[%s276 + $0xf8] sm:%s268] %v401
                %v403 = vld [vmem:[%s275 + $0x3f0] sm:%s268]
                %404 = vst [vmem:[%s276 + $0xfc] sm:%s268] %v403
              $region60: #{discriminator_forward.13} parent=54 // loop_footer
                %s274 = sadd.s32 1, %s270
              $region61: #{discriminator_forward.13} parent=54 // loop_footer_branch
                %269 = sbr.rel target = $region57
              $region62: #{discriminator_forward.13} parent=54 // loop_exit
                _
            $region55: #{discriminator_forward.13} parent=46 // pred_fallthru
              _
          $region47: #{discriminator_forward.13} parent=42 // pred_fallthru
            _
          %553 = vnop
        $region43: #{discriminator_forward.13} parent=15 // pred_fallthru
          _
        // Predicated region
        $region81: #{discriminator_forward.13} parent=15 // pred_check
          %p554 = pneg %p104
        $region82: #{discriminator_forward.13} parent=15 // pred_check_branch
          %556 = sbr.rel (%p554) target = $region84
        $region83: #{discriminator_forward.13} parent=15 // pred_region
          %p557 = scmp.lt.s32.totalorder %s17, 3
          %s558 = scalar_select %p557, %s17, 3
          %s559 = scalar_lea.vmem %s2, %s558
        $region84: #{discriminator_forward.13} parent=15 // pred_fallthru
          _
      $region16: #{discriminator_forward.13} parent=5 // pred_fallthru
        _
      %p560 = scmp.le.s32.totalorder 1, %s9
      %p561 = scmp.lt.s32.totalorder %s9, 33
      %p562 = pnand %p560, %p561
      %p563 = pneg %p562
      // Predicated region
      $region85: #{discriminator_forward.13} parent=5 // pred_check
        _
      $region86: #{discriminator_forward.13} parent=5 // pred_check_branch
        %565 = sbr.rel (%p562) target = $region88
      $region87: #{discriminator_forward.13} parent=5 // pred_region
        %s566 = ssub.s32 %s9, 1
        %s567 = sand.u32 %s43, 1
        %s568 = sand.u32 %s43, 1
        %s569 = smul.addr %s568, 256
        %s570 = scalar_lea.vmem [#allocation3], %s569
        // Predicated region
        $region89: #{discriminator_forward.13} parent=87 // pred_check
          %p571 = pneg %p56
        $region90: #{discriminator_forward.13} parent=87 // pred_check_branch
          %573 = sbr.rel (%p571) target = $region92
        $region91: #{discriminator_forward.13} parent=87 // pred_region
          _
        $region92: #{discriminator_forward.13} parent=87 // pred_fallthru
          _
        %s574 = sand.u32 %s71, 1
        %s575 = sand.u32 %s71, 1
        %s576 = smul.addr %s575, 256
        %s577 = scalar_lea.vmem [#allocation4], %s576
        // Predicated region
        $region93: #{discriminator_forward.13} parent=87 // pred_check
          %p578 = pneg %p84
        $region94: #{discriminator_forward.13} parent=87 // pred_check_branch
          %580 = sbr.rel (%p578) target = $region96
        $region95: #{discriminator_forward.13} parent=87 // pred_region
          _
        $region96: #{discriminator_forward.13} parent=87 // pred_fallthru
          _
        %s581 = sand.u32 %s43, 1
        %s582 = sand.u32 %s43, 1
        %s583 = smul.addr %s582, 256
        %s584 = scalar_lea.vmem [#allocation3], %s583
        %p585 = pneg %p56
        %p586 = pneg %p53
        %s587 = sand.u32 %s71, 1
        %s588 = sand.u32 %s71, 1
        %s589 = smul.addr %s588, 256
        %s590 = scalar_lea.vmem [#allocation4], %s589
        %p591 = pneg %p84
        %p592 = pneg %p81
        %p593 = scmp.lt.s32.totalorder %s20, 3
        %s594 = scalar_select %p593, %s20, 3
        %s595 = scalar_lea.vmem %s2, %s594
        %p596 = pneg %p110
        %p597 = pneg %p107
        %p598 = pneg %p138
        %p599 = pneg %p135
        %s600 = sand.u32 %s125, 1
        %s601 = sand.u32 %s125, 1
        %s602 = smul.addr %s601, 128
        %s603 = scalar_lea.vmem [#allocation5], %s602
        %s604 = smul.u32 16, %s19
        %s605 = smul.u32 4, %s21
        %s606 = smul.u32 64, %s21
        %p607 = scmp.lt.s32.totalorder %s20, 3
        %s608 = scalar_select %p607, %s20, 3
        %s609 = scalar_lea.vmem %s2, %s608
        %s610 = smul.u32 16, %s19
        %p612 = scmp.eq.s32.totalorder %s21, 0
        // Predicated region
        $region97: #{discriminator_forward.13} parent=87 // pred_check
          %p613 = pneg %p612
        $region98: #{discriminator_forward.13} parent=87 // pred_check_branch
          %615 = sbr.rel (%p613) target = $region100
        $region99: #{discriminator_forward.13} parent=87 // pred_region
          %v616 = vld [vmem:[%s609] sm:$0x1]
          %v618 = vlaneseq
          %v619 = vshrl.u32 %v618, 7
          %v620 = vsub.s32 0, %v619
          %v621 = vrot.slane %v616, %v620
          %623 = vst [vmem:[#allocation2] sm:$0xff] %v621
          %624 = vst [vmem:[#allocation2 + $0x8] sm:$0xff] %v621
          %625 = vst [vmem:[#allocation2 + $0x10] sm:$0xff] %v621
          %626 = vst [vmem:[#allocation2 + $0x18] sm:$0xff] %v621
          %627 = vst [vmem:[#allocation2 + $0x20] sm:$0xff] %v621
          %628 = vst [vmem:[#allocation2 + $0x28] sm:$0xff] %v621
          %629 = vst [vmem:[#allocation2 + $0x30] sm:$0xff] %v621
          %630 = vst [vmem:[#allocation2 + $0x38] sm:$0xff] %v621
          %631 = vst [vmem:[#allocation2 + $0x40] sm:$0xff] %v621
          %632 = vst [vmem:[#allocation2 + $0x48] sm:$0xff] %v621
          %633 = vst [vmem:[#allocation2 + $0x50] sm:$0xff] %v621
          %634 = vst [vmem:[#allocation2 + $0x58] sm:$0xff] %v621
          %635 = vst [vmem:[#allocation2 + $0x60] sm:$0xff] %v621
          %636 = vst [vmem:[#allocation2 + $0x68] sm:$0xff] %v621
          %637 = vst [vmem:[#allocation2 + $0x70] sm:$0xff] %v621
          %638 = vst [vmem:[#allocation2 + $0x78] sm:$0xff] %v621
        $region100: #{discriminator_forward.13} parent=87 // pred_fallthru
          _
        %v639 = vld [vmem:[#allocation2] sm:$0xff]
        %v640 = vld [vmem:[#allocation2 + $0x8] sm:$0xff]
        %v641 = vld [vmem:[#allocation2 + $0x10] sm:$0xff]
        %v642 = vld [vmem:[#allocation2 + $0x18] sm:$0xff]
        %v643 = vld [vmem:[#allocation2 + $0x20] sm:$0xff]
        %v644 = vld [vmem:[#allocation2 + $0x28] sm:$0xff]
        %v645 = vld [vmem:[#allocation2 + $0x30] sm:$0xff]
        %v646 = vld [vmem:[#allocation2 + $0x38] sm:$0xff]
        %v647 = vld [vmem:[#allocation2 + $0x40] sm:$0xff]
        %v648 = vld [vmem:[#allocation2 + $0x48] sm:$0xff]
        %v649 = vld [vmem:[#allocation2 + $0x50] sm:$0xff]
        %v650 = vld [vmem:[#allocation2 + $0x58] sm:$0xff]
        %v651 = vld [vmem:[#allocation2 + $0x60] sm:$0xff]
        %v652 = vld [vmem:[#allocation2 + $0x68] sm:$0xff]
        %v653 = vld [vmem:[#allocation2 + $0x70] sm:$0xff]
        %v654 = vld [vmem:[#allocation2 + $0x78] sm:$0xff]
        %v655 = vld [vmem:[%s570] sm:$0xff]
        %v656 = vld [vmem:[%s570 + $0x8] sm:$0xff]
        %v657 = vld [vmem:[%s570 + $0x10] sm:$0xff]
        %v658 = vld [vmem:[%s570 + $0x18] sm:$0xff]
        %v659 = vld [vmem:[%s570 + $0x20] sm:$0xff]
        %v660 = vld [vmem:[%s570 + $0x28] sm:$0xff]
        %v661 = vld [vmem:[%s570 + $0x30] sm:$0xff]
        %v662 = vld [vmem:[%s570 + $0x38] sm:$0xff]
        %v663 = vld [vmem:[%s570 + $0x40] sm:$0xff]
        %v664 = vld [vmem:[%s570 + $0x48] sm:$0xff]
        %v665 = vld [vmem:[%s570 + $0x50] sm:$0xff]
        %v666 = vld [vmem:[%s570 + $0x58] sm:$0xff]
        %v667 = vld [vmem:[%s570 + $0x60] sm:$0xff]
        %v668 = vld [vmem:[%s570 + $0x68] sm:$0xff]
        %v669 = vld [vmem:[%s570 + $0x70] sm:$0xff]
        %v670 = vld [vmem:[%s570 + $0x78] sm:$0xff]
        %v671 = vld [vmem:[%s570 + $0x80] sm:$0xff]
        %v672 = vld [vmem:[%s570 + $0x88] sm:$0xff]
        %v673 = vld [vmem:[%s570 + $0x90] sm:$0xff]
        %v674 = vld [vmem:[%s570 + $0x98] sm:$0xff]
        %v675 = vld [vmem:[%s570 + $0xa0] sm:$0xff]
        %v676 = vld [vmem:[%s570 + $0xa8] sm:$0xff]
        %v677 = vld [vmem:[%s570 + $0xb0] sm:$0xff]
        %v678 = vld [vmem:[%s570 + $0xb8] sm:$0xff]
        %v679 = vld [vmem:[%s570 + $0xc0] sm:$0xff]
        %v680 = vld [vmem:[%s570 + $0xc8] sm:$0xff]
        %v681 = vld [vmem:[%s570 + $0xd0] sm:$0xff]
        %v682 = vld [vmem:[%s570 + $0xd8] sm:$0xff]
        %v683 = vld [vmem:[%s570 + $0xe0] sm:$0xff]
        %v684 = vld [vmem:[%s570 + $0xe8] sm:$0xff]
        %v685 = vld [vmem:[%s570 + $0xf0] sm:$0xff]
        %v686 = vld [vmem:[%s570 + $0xf8] sm:$0xff]
        %v687 = vld [vmem:[%s577] sm:$0xf]
        %v688 = vld [vmem:[%s577 + $0x4] sm:$0xf]
        %v689 = vld [vmem:[%s577 + $0x8] sm:$0xf]
        %v690 = vld [vmem:[%s577 + $0xc] sm:$0xf]
        %v691 = vld [vmem:[%s577 + $0x10] sm:$0xf]
        %v692 = vld [vmem:[%s577 + $0x14] sm:$0xf]
        %v693 = vld [vmem:[%s577 + $0x18] sm:$0xf]
        %v694 = vld [vmem:[%s577 + $0x1c] sm:$0xf]
        %v695 = vld [vmem:[%s577 + $0x20] sm:$0xf]
        %v696 = vld [vmem:[%s577 + $0x24] sm:$0xf]
        %v697 = vld [vmem:[%s577 + $0x28] sm:$0xf]
        %v698 = vld [vmem:[%s577 + $0x2c] sm:$0xf]
        %v699 = vld [vmem:[%s577 + $0x30] sm:$0xf]
        %v700 = vld [vmem:[%s577 + $0x34] sm:$0xf]
        %v701 = vld [vmem:[%s577 + $0x38] sm:$0xf]
        %v702 = vld [vmem:[%s577 + $0x3c] sm:$0xf]
        %v703 = vld [vmem:[%s577 + $0x40] sm:$0xf]
        %v704 = vld [vmem:[%s577 + $0x44] sm:$0xf]
        %v705 = vld [vmem:[%s577 + $0x48] sm:$0xf]
        %v706 = vld [vmem:[%s577 + $0x4c] sm:$0xf]
        %v707 = vld [vmem:[%s577 + $0x50] sm:$0xf]
        %v708 = vld [vmem:[%s577 + $0x54] sm:$0xf]
        %v709 = vld [vmem:[%s577 + $0x58] sm:$0xf]
        %v710 = vld [vmem:[%s577 + $0x5c] sm:$0xf]
        %v711 = vld [vmem:[%s577 + $0x60] sm:$0xf]
        %v712 = vld [vmem:[%s577 + $0x64] sm:$0xf]
        %v713 = vld [vmem:[%s577 + $0x68] sm:$0xf]
        %v714 = vld [vmem:[%s577 + $0x6c] sm:$0xf]
        %v715 = vld [vmem:[%s577 + $0x70] sm:$0xf]
        %v716 = vld [vmem:[%s577 + $0x74] sm:$0xf]
        %v717 = vld [vmem:[%s577 + $0x78] sm:$0xf]
        %v718 = vld [vmem:[%s577 + $0x7c] sm:$0xf]
        %v719 = vld [vmem:[%s577 + $0x80] sm:$0xf]
        %v720 = vld [vmem:[%s577 + $0x84] sm:$0xf]
        %v721 = vld [vmem:[%s577 + $0x88] sm:$0xf]
        %v722 = vld [vmem:[%s577 + $0x8c] sm:$0xf]
        %v723 = vld [vmem:[%s577 + $0x90] sm:$0xf]
        %v724 = vld [vmem:[%s577 + $0x94] sm:$0xf]
        %v725 = vld [vmem:[%s577 + $0x98] sm:$0xf]
        %v726 = vld [vmem:[%s577 + $0x9c] sm:$0xf]
        %v727 = vld [vmem:[%s577 + $0xa0] sm:$0xf]
        %v728 = vld [vmem:[%s577 + $0xa4] sm:$0xf]
        %v729 = vld [vmem:[%s577 + $0xa8] sm:$0xf]
        %v730 = vld [vmem:[%s577 + $0xac] sm:$0xf]
        %v731 = vld [vmem:[%s577 + $0xb0] sm:$0xf]
        %v732 = vld [vmem:[%s577 + $0xb4] sm:$0xf]
        %v733 = vld [vmem:[%s577 + $0xb8] sm:$0xf]
        %v734 = vld [vmem:[%s577 + $0xbc] sm:$0xf]
        %v735 = vld [vmem:[%s577 + $0xc0] sm:$0xf]
        %v736 = vld [vmem:[%s577 + $0xc4] sm:$0xf]
        %v737 = vld [vmem:[%s577 + $0xc8] sm:$0xf]
        %v738 = vld [vmem:[%s577 + $0xcc] sm:$0xf]
        %v739 = vld [vmem:[%s577 + $0xd0] sm:$0xf]
        %v740 = vld [vmem:[%s577 + $0xd4] sm:$0xf]
        %v741 = vld [vmem:[%s577 + $0xd8] sm:$0xf]
        %v742 = vld [vmem:[%s577 + $0xdc] sm:$0xf]
        %v743 = vld [vmem:[%s577 + $0xe0] sm:$0xf]
        %v744 = vld [vmem:[%s577 + $0xe4] sm:$0xf]
        %v745 = vld [vmem:[%s577 + $0xe8] sm:$0xf]
        %v746 = vld [vmem:[%s577 + $0xec] sm:$0xf]
        %v747 = vld [vmem:[%s577 + $0xf0] sm:$0xf]
        %v748 = vld [vmem:[%s577 + $0xf4] sm:$0xf]
        %v749 = vld [vmem:[%s577 + $0xf8] sm:$0xf]
        %v750 = vld [vmem:[%s577 + $0xfc] sm:$0xf]
        %v783 = vunpack.c.l.b16 %v655
        %v784 = vunpack.c.h.b16 %v655
        %v785 = vunpack.c.l.b16 %v656
        %v786 = vunpack.c.h.b16 %v656
        %v787 = vunpack.c.l.b16 %v657
        %v788 = vunpack.c.h.b16 %v657
        %v789 = vunpack.c.l.b16 %v658
        %v790 = vunpack.c.h.b16 %v658
        %v791 = vunpack.c.l.b16 %v659
        %v792 = vunpack.c.h.b16 %v659
        %v793 = vunpack.c.l.b16 %v660
        %v794 = vunpack.c.h.b16 %v660
        %v795 = vunpack.c.l.b16 %v661
        %v796 = vunpack.c.h.b16 %v661
        %v797 = vunpack.c.l.b16 %v662
        %v798 = vunpack.c.h.b16 %v662
        %v799 = vunpack.c.l.b16 %v663
        %v800 = vunpack.c.h.b16 %v663
        %v801 = vunpack.c.l.b16 %v664
        %v802 = vunpack.c.h.b16 %v664
        %v803 = vunpack.c.l.b16 %v665
        %v804 = vunpack.c.h.b16 %v665
        %v805 = vunpack.c.l.b16 %v666
        %v806 = vunpack.c.h.b16 %v666
        %v807 = vunpack.c.l.b16 %v667
        %v808 = vunpack.c.h.b16 %v667
        %v809 = vunpack.c.l.b16 %v668
        %v810 = vunpack.c.h.b16 %v668
        %v811 = vunpack.c.l.b16 %v669
        %v812 = vunpack.c.h.b16 %v669
        %v813 = vunpack.c.l.b16 %v670
        %v814 = vunpack.c.h.b16 %v670
        %v815 = vunpack.c.l.b16 %v671
        %v816 = vunpack.c.h.b16 %v671
        %v817 = vunpack.c.l.b16 %v672
        %v818 = vunpack.c.h.b16 %v672
        %v819 = vunpack.c.l.b16 %v673
        %v820 = vunpack.c.h.b16 %v673
        %v821 = vunpack.c.l.b16 %v674
        %v822 = vunpack.c.h.b16 %v674
        %v823 = vunpack.c.l.b16 %v675
        %v824 = vunpack.c.h.b16 %v675
        %v825 = vunpack.c.l.b16 %v676
        %v826 = vunpack.c.h.b16 %v676
        %v827 = vunpack.c.l.b16 %v677
        %v828 = vunpack.c.h.b16 %v677
        %v829 = vunpack.c.l.b16 %v678
        %v830 = vunpack.c.h.b16 %v678
        %v831 = vunpack.c.l.b16 %v679
        %v832 = vunpack.c.h.b16 %v679
        %v833 = vunpack.c.l.b16 %v680
        %v834 = vunpack.c.h.b16 %v680
        %v835 = vunpack.c.l.b16 %v681
        %v836 = vunpack.c.h.b16 %v681
        %v837 = vunpack.c.l.b16 %v682
        %v838 = vunpack.c.h.b16 %v682
        %v839 = vunpack.c.l.b16 %v683
        %v840 = vunpack.c.h.b16 %v683
        %v841 = vunpack.c.l.b16 %v684
        %v842 = vunpack.c.h.b16 %v684
        %v843 = vunpack.c.l.b16 %v685
        %v844 = vunpack.c.h.b16 %v685
        %v845 = vunpack.c.l.b16 %v686
        %v846 = vunpack.c.h.b16 %v686
        %v847 = vpack.c.b16 %v787, %v783
        %v848 = vpack.c.b16 %v788, %v784
        %v849 = vpack.c.b16 %v789, %v785
        %v850 = vpack.c.b16 %v790, %v786
        %v851 = vpack.c.b16 %v795, %v791
        %v852 = vpack.c.b16 %v796, %v792
        %v853 = vpack.c.b16 %v797, %v793
        %v854 = vpack.c.b16 %v798, %v794
        %v855 = vpack.c.b16 %v803, %v799
        %v856 = vpack.c.b16 %v804, %v800
        %v857 = vpack.c.b16 %v805, %v801
        %v858 = vpack.c.b16 %v806, %v802
        %v859 = vpack.c.b16 %v811, %v807
        %v860 = vpack.c.b16 %v812, %v808
        %v861 = vpack.c.b16 %v813, %v809
        %v862 = vpack.c.b16 %v814, %v810
        %v863 = vpack.c.b16 %v819, %v815
        %v864 = vpack.c.b16 %v820, %v816
        %v865 = vpack.c.b16 %v821, %v817
        %v866 = vpack.c.b16 %v822, %v818
        %v867 = vpack.c.b16 %v827, %v823
        %v868 = vpack.c.b16 %v828, %v824
        %v869 = vpack.c.b16 %v829, %v825
        %v870 = vpack.c.b16 %v830, %v826
        %v871 = vpack.c.b16 %v835, %v831
        %v872 = vpack.c.b16 %v836, %v832
        %v873 = vpack.c.b16 %v837, %v833
        %v874 = vpack.c.b16 %v838, %v834
        %v875 = vpack.c.b16 %v843, %v839
        %v876 = vpack.c.b16 %v844, %v840
        %v877 = vpack.c.b16 %v845, %v841
        %v878 = vpack.c.b16 %v846, %v842
        %v975 = vunpack.c.l.b16 %v687
        %v976 = vunpack.c.l.b16 %v688
        %v977 = vunpack.c.l.b16 %v689
        %v978 = vunpack.c.l.b16 %v690
        %v979 = vunpack.c.l.b16 %v691
        %v980 = vunpack.c.l.b16 %v692
        %v981 = vunpack.c.l.b16 %v693
        %v982 = vunpack.c.l.b16 %v694
        %v983 = vunpack.c.l.b16 %v695
        %v984 = vunpack.c.l.b16 %v696
        %v985 = vunpack.c.l.b16 %v697
        %v986 = vunpack.c.l.b16 %v698
        %v987 = vunpack.c.l.b16 %v699
        %v988 = vunpack.c.l.b16 %v700
        %v989 = vunpack.c.l.b16 %v701
        %v990 = vunpack.c.l.b16 %v702
        %v991 = vunpack.c.l.b16 %v703
        %v992 = vunpack.c.l.b16 %v704
        %v993 = vunpack.c.l.b16 %v705
        %v994 = vunpack.c.l.b16 %v706
        %v995 = vunpack.c.l.b16 %v707
        %v996 = vunpack.c.l.b16 %v708
        %v997 = vunpack.c.l.b16 %v709
        %v998 = vunpack.c.l.b16 %v710
        %v999 = vunpack.c.l.b16 %v711
        %v1000 = vunpack.c.l.b16 %v712
        %v1001 = vunpack.c.l.b16 %v713
        %v1002 = vunpack.c.l.b16 %v714
        %v1003 = vunpack.c.l.b16 %v715
        %v1004 = vunpack.c.l.b16 %v716
        %v1005 = vunpack.c.l.b16 %v717
        %v1006 = vunpack.c.l.b16 %v718
        %v1007 = vunpack.c.l.b16 %v719
        %v1008 = vunpack.c.l.b16 %v720
        %v1009 = vunpack.c.l.b16 %v721
        %v1010 = vunpack.c.l.b16 %v722
        %v1011 = vunpack.c.l.b16 %v723
        %v1012 = vunpack.c.l.b16 %v724
        %v1013 = vunpack.c.l.b16 %v725
        %v1014 = vunpack.c.l.b16 %v726
        %v1015 = vunpack.c.l.b16 %v727
        %v1016 = vunpack.c.l.b16 %v728
        %v1017 = vunpack.c.l.b16 %v729
        %v1018 = vunpack.c.l.b16 %v730
        %v1019 = vunpack.c.l.b16 %v731
        %v1020 = vunpack.c.l.b16 %v732
        %v1021 = vunpack.c.l.b16 %v733
        %v1022 = vunpack.c.l.b16 %v734
        %v1023 = vunpack.c.l.b16 %v735
        %v1024 = vunpack.c.l.b16 %v736
        %v1025 = vunpack.c.l.b16 %v737
        %v1026 = vunpack.c.l.b16 %v738
        %v1027 = vunpack.c.l.b16 %v739
        %v1028 = vunpack.c.l.b16 %v740
        %v1029 = vunpack.c.l.b16 %v741
        %v1030 = vunpack.c.l.b16 %v742
        %v1031 = vunpack.c.l.b16 %v743
        %v1032 = vunpack.c.l.b16 %v744
        %v1033 = vunpack.c.l.b16 %v745
        %v1034 = vunpack.c.l.b16 %v746
        %v1035 = vunpack.c.l.b16 %v747
        %v1036 = vunpack.c.l.b16 %v748
        %v1037 = vunpack.c.l.b16 %v749
        %v1038 = vunpack.c.l.b16 %v750
        %v1039 = vpack.c.b16 %v976, %v975
        %v1040 = vpack.c.b16 %v978, %v977
        %v1041 = vpack.c.b16 %v980, %v979
        %v1042 = vpack.c.b16 %v982, %v981
        %v1043 = vpack.c.b16 %v984, %v983
        %v1044 = vpack.c.b16 %v986, %v985
        %v1045 = vpack.c.b16 %v988, %v987
        %v1046 = vpack.c.b16 %v990, %v989
        %v1047 = vpack.c.b16 %v992, %v991
        %v1048 = vpack.c.b16 %v994, %v993
        %v1049 = vpack.c.b16 %v996, %v995
        %v1050 = vpack.c.b16 %v998, %v997
        %v1051 = vpack.c.b16 %v1000, %v999
        %v1052 = vpack.c.b16 %v1002, %v1001
        %v1053 = vpack.c.b16 %v1004, %v1003
        %v1054 = vpack.c.b16 %v1006, %v1005
        %v1055 = vpack.c.b16 %v1008, %v1007
        %v1056 = vpack.c.b16 %v1010, %v1009
        %v1057 = vpack.c.b16 %v1012, %v1011
        %v1058 = vpack.c.b16 %v1014, %v1013
        %v1059 = vpack.c.b16 %v1016, %v1015
        %v1060 = vpack.c.b16 %v1018, %v1017
        %v1061 = vpack.c.b16 %v1020, %v1019
        %v1062 = vpack.c.b16 %v1022, %v1021
        %v1063 = vpack.c.b16 %v1024, %v1023
        %v1064 = vpack.c.b16 %v1026, %v1025
        %v1065 = vpack.c.b16 %v1028, %v1027
        %v1066 = vpack.c.b16 %v1030, %v1029
        %v1067 = vpack.c.b16 %v1032, %v1031
        %v1068 = vpack.c.b16 %v1034, %v1033
        %v1069 = vpack.c.b16 %v1036, %v1035
        %v1070 = vpack.c.b16 %v1038, %v1037
        %1103 = vmatprep.subr.bf16.mxu0 0
        %1104 = vmatpush1.bf16.msra.mxu0 %v1046
        %1105 = vmatprep.subr.bf16.mxu0 0
        %1106 = vmatpush1.bf16.msra.mxu0 %v1045
        %1107 = vmatprep.subr.bf16.mxu0 0
        %1108 = vmatpush1.bf16.msra.mxu0 %v1044
        %1109 = vmatprep.subr.bf16.mxu0 0
        %1110 = vmatpush1.bf16.msra.mxu0 %v1043
        %1111 = vmatprep.subr.bf16.mxu0 0
        %1112 = vmatpush1.bf16.msra.mxu0 %v1042
        %1113 = vmatprep.subr.bf16.mxu0 0
        %1114 = vmatpush1.bf16.msra.mxu0 %v1041
        %1115 = vmatprep.subr.bf16.mxu0 0
        %1116 = vmatpush1.bf16.msra.mxu0 %v1040
        %1117 = vmatprep.subr.bf16.mxu0 0
        %1118 = vmatpush1.bf16.msra.mxu0 %v1039
        %1119 = vmatprep.subr.bf16.mxu0 0
        %1120 = vmatpush2.bf16.msra.mxu0 %v1054
        %1121 = vmatprep.subr.bf16.mxu0 0
        %1122 = vmatpush2.bf16.msra.mxu0 %v1053
        %1123 = vmatprep.subr.bf16.mxu0 0
        %1124 = vmatpush2.bf16.msra.mxu0 %v1052
        %1125 = vmatprep.subr.bf16.mxu0 0
        %1126 = vmatpush2.bf16.msra.mxu0 %v1051
        %1127 = vmatprep.subr.bf16.mxu0 0
        %1128 = vmatpush2.bf16.msra.mxu0 %v1050
        %1129 = vmatprep.subr.bf16.mxu0 0
        %1130 = vmatpush2.bf16.msra.mxu0 %v1049
        %1131 = vmatprep.subr.bf16.mxu0 0
        %1132 = vmatpush2.bf16.msra.mxu0 %v1048
        %1133 = vmatprep.subr.bf16.mxu0 0
        %1134 = vmatpush2.bf16.msra.mxu0 %v1047
        %1135 = vmatprep.mubr.bf16.mxu0 %v848
        %1136 = vmatmul.mubr.bf16.gmra.mxu0 %v847
        %v1137 = vpop.f32.mrf.mxu0
        %v1138 = vadd.f32 0.0, %v1137
        %v1139 = vpop.f32.mrf.mxu0
        %v1140 = vpop.f32.mrf.mxu0
        %v1141 = vadd.f32 0.0, %v1140
        %v1142 = vpop.f32.mrf.mxu0
        %1143 = vmatprep.mubr.bf16.mxu0 %v852
        %1144 = vmatmul.mubr.bf16.gmra.mxu0 %v851
        %v1145 = vpop.f32.mrf.mxu0
        %v1146 = vadd.f32 0.0, %v1145
        %v1147 = vpop.f32.mrf.mxu0
        %v1148 = vpop.f32.mrf.mxu0
        %v1149 = vadd.f32 0.0, %v1148
        %v1150 = vpop.f32.mrf.mxu0
        %1151 = vmatprep.mubr.bf16.mxu0 %v856
        %1152 = vmatmul.mubr.bf16.gmra.mxu0 %v855
        %v1153 = vpop.f32.mrf.mxu0
        %v1154 = vadd.f32 0.0, %v1153
        %v1155 = vpop.f32.mrf.mxu0
        %v1156 = vpop.f32.mrf.mxu0
        %v1157 = vadd.f32 0.0, %v1156
        %v1158 = vpop.f32.mrf.mxu0
        %1159 = vmatprep.mubr.bf16.mxu0 %v860
        %1160 = vmatmul.mubr.bf16.gmra.mxu0 %v859
        %v1161 = vpop.f32.mrf.mxu0
        %v1162 = vadd.f32 0.0, %v1161
        %v1163 = vpop.f32.mrf.mxu0
        %v1164 = vpop.f32.mrf.mxu0
        %v1165 = vadd.f32 0.0, %v1164
        %v1166 = vpop.f32.mrf.mxu0
        %1167 = vmatprep.mubr.bf16.mxu0 %v864
        %1168 = vmatmul.mubr.bf16.gmra.mxu0 %v863
        %v1169 = vpop.f32.mrf.mxu0
        %v1170 = vadd.f32 0.0, %v1169
        %v1171 = vpop.f32.mrf.mxu0
        %v1172 = vpop.f32.mrf.mxu0
        %v1173 = vadd.f32 0.0, %v1172
        %v1174 = vpop.f32.mrf.mxu0
        %1175 = vmatprep.mubr.bf16.mxu0 %v868
        %1176 = vmatmul.mubr.bf16.gmra.mxu0 %v867
        %v1177 = vpop.f32.mrf.mxu0
        %v1178 = vadd.f32 0.0, %v1177
        %v1179 = vpop.f32.mrf.mxu0
        %v1180 = vpop.f32.mrf.mxu0
        %v1181 = vadd.f32 0.0, %v1180
        %v1182 = vpop.f32.mrf.mxu0
        %1183 = vmatprep.mubr.bf16.mxu0 %v872
        %1184 = vmatmul.mubr.bf16.gmra.mxu0 %v871
        %v1185 = vpop.f32.mrf.mxu0
        %v1186 = vadd.f32 0.0, %v1185
        %v1187 = vpop.f32.mrf.mxu0
        %v1188 = vpop.f32.mrf.mxu0
        %v1189 = vadd.f32 0.0, %v1188
        %v1190 = vpop.f32.mrf.mxu0
        %1191 = vmatprep.mubr.bf16.mxu0 %v876
        %1192 = vmatmul.mubr.bf16.gmra.mxu0 %v875
        %v1193 = vpop.f32.mrf.mxu0
        %v1194 = vadd.f32 0.0, %v1193
        %v1195 = vpop.f32.mrf.mxu0
        %v1196 = vpop.f32.mrf.mxu0
        %v1197 = vadd.f32 0.0, %v1196
        %v1198 = vpop.f32.mrf.mxu0
        %1199 = vdwg.mxu0
        %1200 = vmatprep.subr.bf16.mxu0 0
        %1201 = vmatpush1.bf16.msra.mxu0 %v1062
        %1202 = vmatprep.subr.bf16.mxu0 0
        %1203 = vmatpush1.bf16.msra.mxu0 %v1061
        %1204 = vmatprep.subr.bf16.mxu0 0
        %1205 = vmatpush1.bf16.msra.mxu0 %v1060
        %1206 = vmatprep.subr.bf16.mxu0 0
        %1207 = vmatpush1.bf16.msra.mxu0 %v1059
        %1208 = vmatprep.subr.bf16.mxu0 0
        %1209 = vmatpush1.bf16.msra.mxu0 %v1058
        %1210 = vmatprep.subr.bf16.mxu0 0
        %1211 = vmatpush1.bf16.msra.mxu0 %v1057
        %1212 = vmatprep.subr.bf16.mxu0 0
        %1213 = vmatpush1.bf16.msra.mxu0 %v1056
        %1214 = vmatprep.subr.bf16.mxu0 0
        %1215 = vmatpush1.bf16.msra.mxu0 %v1055
        %1216 = vmatprep.subr.bf16.mxu0 0
        %1217 = vmatpush2.bf16.msra.mxu0 %v1070
        %1218 = vmatprep.subr.bf16.mxu0 0
        %1219 = vmatpush2.bf16.msra.mxu0 %v1069
        %1220 = vmatprep.subr.bf16.mxu0 0
        %1221 = vmatpush2.bf16.msra.mxu0 %v1068
        %1222 = vmatprep.subr.bf16.mxu0 0
        %1223 = vmatpush2.bf16.msra.mxu0 %v1067
        %1224 = vmatprep.subr.bf16.mxu0 0
        %1225 = vmatpush2.bf16.msra.mxu0 %v1066
        %1226 = vmatprep.subr.bf16.mxu0 0
        %1227 = vmatpush2.bf16.msra.mxu0 %v1065
        %1228 = vmatprep.subr.bf16.mxu0 0
        %1229 = vmatpush2.bf16.msra.mxu0 %v1064
        %1230 = vmatprep.subr.bf16.mxu0 0
        %1231 = vmatpush2.bf16.msra.mxu0 %v1063
        %1232 = vmatprep.mubr.bf16.mxu0 %v850
        %1233 = vmatmul.mubr.bf16.gmra.mxu0 %v849
        %v1234 = vpop.f32.mrf.mxu0
        %v1235 = vadd.f32 %v1138, %v1234
        %v1236 = vpop.f32.mrf.mxu0
        %v1237 = vpop.f32.mrf.mxu0
        %v1238 = vadd.f32 %v1141, %v1237
        %v1239 = vpop.f32.mrf.mxu0
        %1240 = vmatprep.mubr.bf16.mxu0 %v854
        %1241 = vmatmul.mubr.bf16.gmra.mxu0 %v853
        %v1242 = vpop.f32.mrf.mxu0
        %v1243 = vadd.f32 %v1146, %v1242
        %v1244 = vpop.f32.mrf.mxu0
        %v1245 = vpop.f32.mrf.mxu0
        %v1246 = vadd.f32 %v1149, %v1245
        %v1247 = vpop.f32.mrf.mxu0
        %1248 = vmatprep.mubr.bf16.mxu0 %v858
        %1249 = vmatmul.mubr.bf16.gmra.mxu0 %v857
        %v1250 = vpop.f32.mrf.mxu0
        %v1251 = vadd.f32 %v1154, %v1250
        %v1252 = vpop.f32.mrf.mxu0
        %v1253 = vpop.f32.mrf.mxu0
        %v1254 = vadd.f32 %v1157, %v1253
        %v1255 = vpop.f32.mrf.mxu0
        %1256 = vmatprep.mubr.bf16.mxu0 %v862
        %1257 = vmatmul.mubr.bf16.gmra.mxu0 %v861
        %v1258 = vpop.f32.mrf.mxu0
        %v1259 = vadd.f32 %v1162, %v1258
        %v1260 = vpop.f32.mrf.mxu0
        %v1261 = vpop.f32.mrf.mxu0
        %v1262 = vadd.f32 %v1165, %v1261
        %v1263 = vpop.f32.mrf.mxu0
        %1264 = vmatprep.mubr.bf16.mxu0 %v866
        %1265 = vmatmul.mubr.bf16.gmra.mxu0 %v865
        %v1266 = vpop.f32.mrf.mxu0
        %v1267 = vadd.f32 %v1170, %v1266
        %v1268 = vpop.f32.mrf.mxu0
        %v1269 = vpop.f32.mrf.mxu0
        %v1270 = vadd.f32 %v1173, %v1269
        %v1271 = vpop.f32.mrf.mxu0
        %1272 = vmatprep.mubr.bf16.mxu0 %v870
        %1273 = vmatmul.mubr.bf16.gmra.mxu0 %v869
        %v1274 = vpop.f32.mrf.mxu0
        %v1275 = vadd.f32 %v1178, %v1274
        %v1276 = vpop.f32.mrf.mxu0
        %v1277 = vpop.f32.mrf.mxu0
        %v1278 = vadd.f32 %v1181, %v1277
        %v1279 = vpop.f32.mrf.mxu0
        %1280 = vmatprep.mubr.bf16.mxu0 %v874
        %1281 = vmatmul.mubr.bf16.gmra.mxu0 %v873
        %v1282 = vpop.f32.mrf.mxu0
        %v1283 = vadd.f32 %v1186, %v1282
        %v1284 = vpop.f32.mrf.mxu0
        %v1285 = vpop.f32.mrf.mxu0
        %v1286 = vadd.f32 %v1189, %v1285
        %v1287 = vpop.f32.mrf.mxu0
        %1288 = vmatprep.mubr.bf16.mxu0 %v878
        %1289 = vmatmul.mubr.bf16.gmra.mxu0 %v877
        %v1290 = vpop.f32.mrf.mxu0
        %v1291 = vadd.f32 %v1194, %v1290
        %v1292 = vpop.f32.mrf.mxu0
        %v1293 = vpop.f32.mrf.mxu0
        %v1294 = vadd.f32 %v1197, %v1293
        %v1295 = vpop.f32.mrf.mxu0
        %1296 = vdwg.mxu0
        %v1297 = vadd.f32 %v639, %v1235
        %v1298 = vadd.f32 %v640, %v1238
        %v1299 = vadd.f32 %v641, %v1243
        %v1300 = vadd.f32 %v642, %v1246
        %v1301 = vadd.f32 %v643, %v1251
        %v1302 = vadd.f32 %v644, %v1254
        %v1303 = vadd.f32 %v645, %v1259
        %v1304 = vadd.f32 %v646, %v1262
        %v1305 = vadd.f32 %v647, %v1267
        %v1306 = vadd.f32 %v648, %v1270
        %v1307 = vadd.f32 %v649, %v1275
        %v1308 = vadd.f32 %v650, %v1278
        %v1309 = vadd.f32 %v651, %v1283
        %v1310 = vadd.f32 %v652, %v1286
        %v1311 = vadd.f32 %v653, %v1291
        %v1312 = vadd.f32 %v654, %v1294
        %1313 = vst [vmem:[#allocation2] sm:$0xff] %v1297
        %1314 = vst [vmem:[#allocation2 + $0x8] sm:$0xff] %v1298
        %1315 = vst [vmem:[#allocation2 + $0x10] sm:$0xff] %v1299
        %1316 = vst [vmem:[#allocation2 + $0x18] sm:$0xff] %v1300
        %1317 = vst [vmem:[#allocation2 + $0x20] sm:$0xff] %v1301
        %1318 = vst [vmem:[#allocation2 + $0x28] sm:$0xff] %v1302
        %1319 = vst [vmem:[#allocation2 + $0x30] sm:$0xff] %v1303
        %1320 = vst [vmem:[#allocation2 + $0x38] sm:$0xff] %v1304
        %1321 = vst [vmem:[#allocation2 + $0x40] sm:$0xff] %v1305
        %1322 = vst [vmem:[#allocation2 + $0x48] sm:$0xff] %v1306
        %1323 = vst [vmem:[#allocation2 + $0x50] sm:$0xff] %v1307
        %1324 = vst [vmem:[#allocation2 + $0x58] sm:$0xff] %v1308
        %1325 = vst [vmem:[#allocation2 + $0x60] sm:$0xff] %v1309
        %1326 = vst [vmem:[#allocation2 + $0x68] sm:$0xff] %v1310
        %1327 = vst [vmem:[#allocation2 + $0x70] sm:$0xff] %v1311
        %1328 = vst [vmem:[#allocation2 + $0x78] sm:$0xff] %v1312
        %p1329 = scmp.eq.s32.totalorder %s21, 7
        // Predicated region
        $region101: #{discriminator_forward.13} parent=87 // pred_check
          %p1330 = pneg %p1329
        $region102: #{discriminator_forward.13} parent=87 // pred_check_branch
          %1332 = sbr.rel (%p1330) target = $region104
        $region103: #{discriminator_forward.13} parent=87 // pred_region
          %v1333 = vld [vmem:[#allocation2] sm:$0xff]
          %v1334 = vld [vmem:[#allocation2 + $0x8] sm:$0xff]
          %v1335 = vld [vmem:[#allocation2 + $0x10] sm:$0xff]
          %v1336 = vld [vmem:[#allocation2 + $0x18] sm:$0xff]
          %v1337 = vld [vmem:[#allocation2 + $0x20] sm:$0xff]
          %v1338 = vld [vmem:[#allocation2 + $0x28] sm:$0xff]
          %v1339 = vld [vmem:[#allocation2 + $0x30] sm:$0xff]
          %v1340 = vld [vmem:[#allocation2 + $0x38] sm:$0xff]
          %v1341 = vld [vmem:[#allocation2 + $0x40] sm:$0xff]
          %v1342 = vld [vmem:[#allocation2 + $0x48] sm:$0xff]
          %v1343 = vld [vmem:[#allocation2 + $0x50] sm:$0xff]
          %v1344 = vld [vmem:[#allocation2 + $0x58] sm:$0xff]
          %v1345 = vld [vmem:[#allocation2 + $0x60] sm:$0xff]
          %v1346 = vld [vmem:[#allocation2 + $0x68] sm:$0xff]
          %v1347 = vld [vmem:[#allocation2 + $0x70] sm:$0xff]
          %v1348 = vld [vmem:[#allocation2 + $0x78] sm:$0xff]
          %1349 = vst [vmem:[%s603] sm:$0xff] %v1333
          %1350 = vst [vmem:[%s603 + $0x8] sm:$0xff] %v1334
          %1351 = vst [vmem:[%s603 + $0x10] sm:$0xff] %v1335
          %1352 = vst [vmem:[%s603 + $0x18] sm:$0xff] %v1336
          %1353 = vst [vmem:[%s603 + $0x20] sm:$0xff] %v1337
          %1354 = vst [vmem:[%s603 + $0x28] sm:$0xff] %v1338
          %1355 = vst [vmem:[%s603 + $0x30] sm:$0xff] %v1339
          %1356 = vst [vmem:[%s603 + $0x38] sm:$0xff] %v1340
          %1357 = vst [vmem:[%s603 + $0x40] sm:$0xff] %v1341
          %1358 = vst [vmem:[%s603 + $0x48] sm:$0xff] %v1342
          %1359 = vst [vmem:[%s603 + $0x50] sm:$0xff] %v1343
          %1360 = vst [vmem:[%s603 + $0x58] sm:$0xff] %v1344
          %1361 = vst [vmem:[%s603 + $0x60] sm:$0xff] %v1345
          %1362 = vst [vmem:[%s603 + $0x68] sm:$0xff] %v1346
          %1363 = vst [vmem:[%s603 + $0x70] sm:$0xff] %v1347
          %1364 = vst [vmem:[%s603 + $0x78] sm:$0xff] %v1348
        $region104: #{discriminator_forward.13} parent=87 // pred_fallthru
          _
        %s1365 = sand.u32 %s125, 1
        %s1366 = sand.u32 %s125, 1
        %s1367 = smul.addr %s1366, 128
        %s1368 = scalar_lea.vmem [#allocation5], %s1367
        // Predicated region
        $region105: #{discriminator_forward.13} parent=87 // pred_check
          %p1369 = pneg %p135
        $region106: #{discriminator_forward.13} parent=87 // pred_check_branch
          %1371 = sbr.rel (%p1369) target = $region108
        $region107: #{discriminator_forward.13} parent=87 // pred_region
          %s1372 = smul.u32 16, %s19
          %s1373 = smul.addr %s1372, 4
          %s1374 = sadd.s32 %s20, %s1373
          %s1375 = smul.addr %s1374, 8
          %s1376 = scalar_lea.vmem %s3, %s1375
          // Predicated region
          $region109: #{discriminator_forward.13} parent=107 // pred_check
            _
          $region110: #{discriminator_forward.13} parent=107 // pred_check_branch
            %1378 = sbr.rel (0) target = $region112
          $region111: #{discriminator_forward.13} parent=107 // pred_region
            // Predicated region
            $region113: #{discriminator_forward.13} parent=111 // pred_check
              _
            $region114: #{discriminator_forward.13} parent=111 // pred_check_branch
              %1380 = sbr.rel (0) target = $region116
            $region115: #{discriminator_forward.13} parent=111 // pred_region
              // Predicated region
              $region128: #{discriminator_forward.13} parent=115 // pred_check
                _
              $region129: #{discriminator_forward.13} parent=115 // pred_check_branch
                %1426 = sbr.rel (0) target = $region131
              $region130: #{discriminator_forward.13} parent=115 // pred_region
                loop: start=0, step=1, limit=1
                $region132: #{discriminator_forward.13} parent=130 // loop_pre_header
                  _
                $region133: #{discriminator_forward.13} parent=130 // loop_header
                  %s1428 = sphi 0, %s1432
                  %p1429 = scmp.ge.s32.totalorder %s1428, 1
                  %s1433 = sphi %s1368, %s1368
                  %s1434 = sphi %s1376, %s1376
                $region134: #{discriminator_forward.13} parent=130 // loop_header_branch
                  %1431 = sbr.rel (%p1429) target = $region138
                $region135: #{discriminator_forward.13} parent=130 // loop_body
                  %v1435 = vld [vmem:[%s1433] sm:$0xff]
                  %1436 = vst [vmem:[%s1434] sm:$0xff] %v1435
                  %v1437 = vld [vmem:[%s1433 + $0x8] sm:$0xff]
                  %1438 = vst [vmem:[%s1434 + $0x20] sm:$0xff] %v1437
                  %v1439 = vld [vmem:[%s1433 + $0x10] sm:$0xff]
                  %1440 = vst [vmem:[%s1434 + $0x40] sm:$0xff] %v1439
                  %v1441 = vld [vmem:[%s1433 + $0x18] sm:$0xff]
                  %1442 = vst [vmem:[%s1434 + $0x60] sm:$0xff] %v1441
                  %v1443 = vld [vmem:[%s1433 + $0x20] sm:$0xff]
                  %1444 = vst [vmem:[%s1434 + $0x80] sm:$0xff] %v1443
                  %v1445 = vld [vmem:[%s1433 + $0x28] sm:$0xff]
                  %1446 = vst [vmem:[%s1434 + $0xa0] sm:$0xff] %v1445
                  %v1447 = vld [vmem:[%s1433 + $0x30] sm:$0xff]
                  %1448 = vst [vmem:[%s1434 + $0xc0] sm:$0xff] %v1447
                  %v1449 = vld [vmem:[%s1433 + $0x38] sm:$0xff]
                  %1450 = vst [vmem:[%s1434 + $0xe0] sm:$0xff] %v1449
                  %v1451 = vld [vmem:[%s1433 + $0x40] sm:$0xff]
                  %1452 = vst [vmem:[%s1434 + $0x100] sm:$0xff] %v1451
                  %v1453 = vld [vmem:[%s1433 + $0x48] sm:$0xff]
                  %1454 = vst [vmem:[%s1434 + $0x120] sm:$0xff] %v1453
                  %v1455 = vld [vmem:[%s1433 + $0x50] sm:$0xff]
                  %1456 = vst [vmem:[%s1434 + $0x140] sm:$0xff] %v1455
                  %v1457 = vld [vmem:[%s1433 + $0x58] sm:$0xff]
                  %1458 = vst [vmem:[%s1434 + $0x160] sm:$0xff] %v1457
                  %v1459 = vld [vmem:[%s1433 + $0x60] sm:$0xff]
                  %1460 = vst [vmem:[%s1434 + $0x180] sm:$0xff] %v1459
                  %v1461 = vld [vmem:[%s1433 + $0x68] sm:$0xff]
                  %1462 = vst [vmem:[%s1434 + $0x1a0] sm:$0xff] %v1461
                  %v1463 = vld [vmem:[%s1433 + $0x70] sm:$0xff]
                  %1464 = vst [vmem:[%s1434 + $0x1c0] sm:$0xff] %v1463
                  %v1465 = vld [vmem:[%s1433 + $0x78] sm:$0xff]
                  %1466 = vst [vmem:[%s1434 + $0x1e0] sm:$0xff] %v1465
                $region136: #{discriminator_forward.13} parent=130 // loop_footer
                  %s1432 = sadd.s32 1, %s1428
                $region137: #{discriminator_forward.13} parent=130 // loop_footer_branch
                  %1427 = sbr.rel target = $region133
                $region138: #{discriminator_forward.13} parent=130 // loop_exit
                  _
              $region131: #{discriminator_forward.13} parent=115 // pred_fallthru
                _
              // Predicated region
              $region139: #{discriminator_forward.13} parent=115 // pred_check
                _
              $region140: #{discriminator_forward.13} parent=115 // pred_check_branch
                %1468 = sbr.rel target = $region142
              $region141: #{discriminator_forward.13} parent=115 // pred_region
                _
              $region142: #{discriminator_forward.13} parent=115 // pred_fallthru
                _
            $region116: #{discriminator_forward.13} parent=111 // pred_fallthru
              _
            // Predicated region
            $region117: #{discriminator_forward.13} parent=111 // pred_check
              _
            $region118: #{discriminator_forward.13} parent=111 // pred_check_branch
              %1382 = sbr.rel target = $region120
            $region119: #{discriminator_forward.13} parent=111 // pred_region
              %s1384 = ssub.s32 256, 1
              loop: start=0, step=1, limit=1
              $region121: #{discriminator_forward.13} parent=119 // loop_pre_header
                _
              $region122: #{discriminator_forward.13} parent=119 // loop_header
                %s1386 = sphi 0, %s1390
                %p1387 = scmp.ge.s32.totalorder %s1386, 1
                %s1391 = sphi %s1368, %s1368
                %s1392 = sphi %s1376, %s1376
              $region123: #{discriminator_forward.13} parent=119 // loop_header_branch
                %1389 = sbr.rel (%p1387) target = $region127
              $region124: #{discriminator_forward.13} parent=119 // loop_body
                %v1393 = vld [vmem:[%s1391] sm:%s1384]
                %1394 = vst [vmem:[%s1392] sm:%s1384] %v1393
                %v1395 = vld [vmem:[%s1391 + $0x8] sm:%s1384]
                %1396 = vst [vmem:[%s1392 + $0x20] sm:%s1384] %v1395
                %v1397 = vld [vmem:[%s1391 + $0x10] sm:%s1384]
                %1398 = vst [vmem:[%s1392 + $0x40] sm:%s1384] %v1397
                %v1399 = vld [vmem:[%s1391 + $0x18] sm:%s1384]
                %1400 = vst [vmem:[%s1392 + $0x60] sm:%s1384] %v1399
                %v1401 = vld [vmem:[%s1391 + $0x20] sm:%s1384]
                %1402 = vst [vmem:[%s1392 + $0x80] sm:%s1384] %v1401
                %v1403 = vld [vmem:[%s1391 + $0x28] sm:%s1384]
                %1404 = vst [vmem:[%s1392 + $0xa0] sm:%s1384] %v1403
                %v1405 = vld [vmem:[%s1391 + $0x30] sm:%s1384]
                %1406 = vst [vmem:[%s1392 + $0xc0] sm:%s1384] %v1405
                %v1407 = vld [vmem:[%s1391 + $0x38] sm:%s1384]
                %1408 = vst [vmem:[%s1392 + $0xe0] sm:%s1384] %v1407
                %v1409 = vld [vmem:[%s1391 + $0x40] sm:%s1384]
                %1410 = vst [vmem:[%s1392 + $0x100] sm:%s1384] %v1409
                %v1411 = vld [vmem:[%s1391 + $0x48] sm:%s1384]
                %1412 = vst [vmem:[%s1392 + $0x120] sm:%s1384] %v1411
                %v1413 = vld [vmem:[%s1391 + $0x50] sm:%s1384]
                %1414 = vst [vmem:[%s1392 + $0x140] sm:%s1384] %v1413
                %v1415 = vld [vmem:[%s1391 + $0x58] sm:%s1384]
                %1416 = vst [vmem:[%s1392 + $0x160] sm:%s1384] %v1415
                %v1417 = vld [vmem:[%s1391 + $0x60] sm:%s1384]
                %1418 = vst [vmem:[%s1392 + $0x180] sm:%s1384] %v1417
                %v1419 = vld [vmem:[%s1391 + $0x68] sm:%s1384]
                %1420 = vst [vmem:[%s1392 + $0x1a0] sm:%s1384] %v1419
                %v1421 = vld [vmem:[%s1391 + $0x70] sm:%s1384]
                %1422 = vst [vmem:[%s1392 + $0x1c0] sm:%s1384] %v1421
                %v1423 = vld [vmem:[%s1391 + $0x78] sm:%s1384]
                %1424 = vst [vmem:[%s1392 + $0x1e0] sm:%s1384] %v1423
              $region125: #{discriminator_forward.13} parent=119 // loop_footer
                %s1390 = sadd.s32 1, %s1386
              $region126: #{discriminator_forward.13} parent=119 // loop_footer_branch
                %1385 = sbr.rel target = $region122
              $region127: #{discriminator_forward.13} parent=119 // loop_exit
                _
            $region120: #{discriminator_forward.13} parent=111 // pred_fallthru
              _
          $region112: #{discriminator_forward.13} parent=107 // pred_fallthru
            _
          %1469 = vnop
        $region108: #{discriminator_forward.13} parent=87 // pred_fallthru
          _
      $region88: #{discriminator_forward.13} parent=5 // pred_fallthru
        _
      %p1470 = scmp.le.s32.totalorder 2, %s9
      // Predicated region
      $region143: #{discriminator_forward.13} parent=5 // pred_check
        %p1471 = pneg %p1470
      $region144: #{discriminator_forward.13} parent=5 // pred_check_branch
        %1473 = sbr.rel (%p1471) target = $region146
      $region145: #{discriminator_forward.13} parent=5 // pred_region
        %s1474 = ssub.s32 %s9, 2
        // Predicated region
        $region147: #{discriminator_forward.13} parent=145 // pred_check
          %p1475 = pneg %p141
        $region148: #{discriminator_forward.13} parent=145 // pred_check_branch
          %1477 = sbr.rel (%p1475) target = $region150
        $region149: #{discriminator_forward.13} parent=145 // pred_region
          %s1478 = sand.u32 %s126, 1
          %s1479 = sand.u32 %s126, 1
          %s1480 = smul.addr %s1479, 128
          %s1481 = scalar_lea.vmem [#allocation5], %s1480
        $region150: #{discriminator_forward.13} parent=145 // pred_fallthru
          _
      $region146: #{discriminator_forward.13} parent=5 // pred_fallthru
        _
    $region6: #{discriminator_forward.13} parent=1 // loop_footer
      %s13 = sadd.s32 1, %s9
    $region7: #{discriminator_forward.13} parent=1 // loop_footer_branch
      %8 = sbr.rel target = $region3
    $region8: #{discriminator_forward.13} parent=1 // loop_exit
      _

// kernel: discriminator_forward.14
$region0: #{discriminator_forward.14}
  #allocation0 [shape = 'u32[]', space=smem, size = 0x4, offset = 0x4, fixed_abs, tag = 'smem constant byte address 0x4 - core index']
  #allocation1 [shape = 'u32[144,128]{1,0:T(1,128)}', space=vmem, size = 0x12000, scoped, tag = 'internal scratch']
  %s0 = inlined_call_operand.vmem [shape: f32[2,9,512], index: 0, kind: input, shape index: {}]
  %s1 = inlined_call_operand.vmem [shape: f32[2,9,512], index: 1, kind: output, shape index: {}]
  %s2 = sld [smem:[#allocation0]]
  $region109: #{discriminator_forward.14} parent=0
    _
  %s4 = ssub.s32 1, %s2
  %s5 = scalar_select 0, %s4, %s2
  $region1: #{discriminator_forward.14} parent=0
    #allocation2 [shape = 'u8[16384]{0}', space=vmem, size = 0x4000, scoped, tag = 'input window, operand 0']
    #allocation3 [shape = 'u8[16384]{0}', space=vmem, size = 0x4000, scoped, tag = 'output window, operand 0']
    loop: start=0, step=1, limit=10
    $region2: #{discriminator_forward.14} parent=1 // loop_pre_header
      _
    $region3: #{discriminator_forward.14} parent=1 // loop_header
      %s7 = sphi 0, %s11
      %p8 = scmp.ge.s32.totalorder %s7, 10
      %s14 = sphi 0, %s26
      %s15 = sphi 0, %s22
      %s16 = sphi 0, %s14
      %s17 = sphi 0, %s15
      %s18 = sphi 0, %s16
      %s19 = sphi 0, %s17
      %s31 = sphi 0, %s33
      %s34 = sphi 0, %s31
      %s35 = sphi 0, %s34
      %s51 = sphi 0, %s35
      %s59 = sphi 0, %s61
      %s62 = sphi 0, %s59
      %s63 = sphi 0, %s62
      %s79 = sphi 0, %s63
    $region4: #{discriminator_forward.14} parent=1 // loop_header_branch
      %10 = sbr.rel (%p8) target = $region8
    $region5: #{discriminator_forward.14} parent=1 // loop_body
      %s12 = ssub.s32 %s7, 1
      %s13 = ssub.s32 %s7, 2
      %s20 = sadd.s32 1, %s15
      %p21 = scmp.ge.s32.totalorder %s20, 4
      %s22 = scalar_select %p21, 0, %s20
      %s23 = sadd.s32 1, %s14
      %s24 = scalar_select %p21, %s23, %s14
      %p25 = scmp.ge.s32.totalorder %s24, 2
      %s26 = scalar_select %p25, 0, %s24
      %s27 = ssub.s32 %s14, %s26
      %s28 = ssub.s32 %s15, %s22
      %s29 = sor.u32 %s27, %s28
      %p30 = scmp.eq.s32.totalorder %s29, 0
      %s32 = sadd.s32 %s31, 1
      %s33 = scalar_select %p30, %s31, %s32
      %p36 = pneg %p30
      %p37 = scmp.eq.s32.totalorder %s7, 7
      %p38 = por %p36, %p37
      %p39 = scmp.ne.s32.totalorder %s31, %s34
      %p40 = scmp.eq.s32.totalorder %s7, 0
      %p41 = por %p39, %p40
      %p42 = scmp.ne.s32.totalorder %s31, %s34
      %p43 = scmp.eq.s32.totalorder %s12, 7
      %p44 = por %p42, %p43
      %p45 = scmp.ne.s32.totalorder %s34, %s35
      %p46 = scmp.eq.s32.totalorder %s12, 0
      %p47 = por %p45, %p46
      %p48 = scmp.ne.s32.totalorder %s34, %s35
      %p49 = scmp.eq.s32.totalorder %s13, 7
      %p50 = por %p48, %p49
      %p52 = scmp.ne.s32.totalorder %s35, %s51
      %p53 = scmp.eq.s32.totalorder %s13, 0
      %p54 = por %p52, %p53
      %s55 = ssub.s32 %s14, %s26
      %s56 = ssub.s32 %s15, %s22
      %s57 = sor.u32 %s55, %s56
      %p58 = scmp.eq.s32.totalorder %s57, 0
      %s60 = sadd.s32 %s59, 1
      %s61 = scalar_select %p58, %s59, %s60
      %p64 = pneg %p58
      %p65 = scmp.eq.s32.totalorder %s7, 7
      %p66 = por %p64, %p65
      %p67 = scmp.ne.s32.totalorder %s59, %s62
      %p68 = scmp.eq.s32.totalorder %s7, 0
      %p69 = por %p67, %p68
      %p70 = scmp.ne.s32.totalorder %s59, %s62
      %p71 = scmp.eq.s32.totalorder %s12, 7
      %p72 = por %p70, %p71
      %p73 = scmp.ne.s32.totalorder %s62, %s63
      %p74 = scmp.eq.s32.totalorder %s12, 0
      %p75 = por %p73, %p74
      %p76 = scmp.ne.s32.totalorder %s62, %s63
      %p77 = scmp.eq.s32.totalorder %s13, 7
      %p78 = por %p76, %p77
      %p80 = scmp.ne.s32.totalorder %s63, %s79
      %p81 = scmp.eq.s32.totalorder %s13, 0
      %p82 = por %p80, %p81
      %p83 = scmp.le.s32.totalorder 1, %s7
      %p84 = scmp.lt.s32.totalorder %s7, 9
      %p85 = pnand %p83, %p84
      %p86 = pneg %p85
      // Predicated region
      $region9: #{discriminator_forward.14} parent=5 // pred_check
        _
      $region10: #{discriminator_forward.14} parent=5 // pred_check_branch
        %88 = sbr.rel (%p85) target = $region12
      $region11: #{discriminator_forward.14} parent=5 // pred_region
        %s89 = ssub.s32 %s7, 1
      $region12: #{discriminator_forward.14} parent=5 // pred_fallthru
        _
      %p90 = scmp.lt.s32.totalorder %s7, 8
      // Predicated region
      $region13: #{discriminator_forward.14} parent=5 // pred_check
        %p91 = pneg %p90
      $region14: #{discriminator_forward.14} parent=5 // pred_check_branch
        %93 = sbr.rel (%p91) target = $region16
      $region15: #{discriminator_forward.14} parent=5 // pred_region
        // Predicated region
        $region17: #{discriminator_forward.14} parent=15 // pred_check
          %p94 = pneg %p41
        $region18: #{discriminator_forward.14} parent=15 // pred_check_branch
          %96 = sbr.rel (%p94) target = $region20
        $region19: #{discriminator_forward.14} parent=15 // pred_region
          %s97 = sand.u32 %s31, 1
          %s98 = sand.u32 %s31, 1
          %s99 = smul.addr %s98, 16
          %s100 = scalar_lea.vmem [#allocation2], %s99
          %s101 = smul.addr %s14, 8
          %s102 = sadd.s32 %s15, %s101
          %s103 = smul.addr %s102, 8
          %s104 = scalar_lea.vmem %s0, %s103
          // Predicated region
          $region21: #{discriminator_forward.14} parent=19 // pred_check
            _
          $region22: #{discriminator_forward.14} parent=19 // pred_check_branch
            %106 = sbr.rel (0) target = $region24
          $region23: #{discriminator_forward.14} parent=19 // pred_region
            // Predicated region
            $region25: #{discriminator_forward.14} parent=23 // pred_check
              _
            $region26: #{discriminator_forward.14} parent=23 // pred_check_branch
              %108 = sbr.rel (0) target = $region28
            $region27: #{discriminator_forward.14} parent=23 // pred_region
              // Predicated region
              $region40: #{discriminator_forward.14} parent=27 // pred_check
                _
              $region41: #{discriminator_forward.14} parent=27 // pred_check_branch
                %126 = sbr.rel (0) target = $region43
              $region42: #{discriminator_forward.14} parent=27 // pred_region
                loop: start=0, step=1, limit=1
                $region44: #{discriminator_forward.14} parent=42 // loop_pre_header
                  _
                $region45: #{discriminator_forward.14} parent=42 // loop_header
                  %s128 = sphi 0, %s132
                  %p129 = scmp.ge.s32.totalorder %s128, 1
                  %s133 = sphi %s104, %s104
                  %s134 = sphi %s100, %s100
                $region46: #{discriminator_forward.14} parent=42 // loop_header_branch
                  %131 = sbr.rel (%p129) target = $region50
                $region47: #{discriminator_forward.14} parent=42 // loop_body
                  %v135 = vld [vmem:[%s133] sm:$0xff]
                  %136 = vst [vmem:[%s134] sm:$0xff] %v135
                  %v137 = vld [vmem:[%s133 + $0x20] sm:$0xff]
                  %138 = vst [vmem:[%s134 + $0x8] sm:$0xff] %v137
                $region48: #{discriminator_forward.14} parent=42 // loop_footer
                  %s132 = sadd.s32 1, %s128
                $region49: #{discriminator_forward.14} parent=42 // loop_footer_branch
                  %127 = sbr.rel target = $region45
                $region50: #{discriminator_forward.14} parent=42 // loop_exit
                  _
              $region43: #{discriminator_forward.14} parent=27 // pred_fallthru
                _
              // Predicated region
              $region51: #{discriminator_forward.14} parent=27 // pred_check
                _
              $region52: #{discriminator_forward.14} parent=27 // pred_check_branch
                %140 = sbr.rel target = $region54
              $region53: #{discriminator_forward.14} parent=27 // pred_region
                _
              $region54: #{discriminator_forward.14} parent=27 // pred_fallthru
                _
            $region28: #{discriminator_forward.14} parent=23 // pred_fallthru
              _
            // Predicated region
            $region29: #{discriminator_forward.14} parent=23 // pred_check
              _
            $region30: #{discriminator_forward.14} parent=23 // pred_check_branch
              %110 = sbr.rel target = $region32
            $region31: #{discriminator_forward.14} parent=23 // pred_region
              %s112 = ssub.s32 256, 1
              loop: start=0, step=1, limit=1
              $region33: #{discriminator_forward.14} parent=31 // loop_pre_header
                _
              $region34: #{discriminator_forward.14} parent=31 // loop_header
                %s114 = sphi 0, %s118
                %p115 = scmp.ge.s32.totalorder %s114, 1
                %s119 = sphi %s104, %s104
                %s120 = sphi %s100, %s100
              $region35: #{discriminator_forward.14} parent=31 // loop_header_branch
                %117 = sbr.rel (%p115) target = $region39
              $region36: #{discriminator_forward.14} parent=31 // loop_body
                %v121 = vld [vmem:[%s119] sm:%s112]
                %122 = vst [vmem:[%s120] sm:%s112] %v121
                %v123 = vld [vmem:[%s119 + $0x20] sm:%s112]
                %124 = vst [vmem:[%s120 + $0x8] sm:%s112] %v123
              $region37: #{discriminator_forward.14} parent=31 // loop_footer
                %s118 = sadd.s32 1, %s114
              $region38: #{discriminator_forward.14} parent=31 // loop_footer_branch
                %113 = sbr.rel target = $region34
              $region39: #{discriminator_forward.14} parent=31 // loop_exit
                _
            $region32: #{discriminator_forward.14} parent=23 // pred_fallthru
              _
          $region24: #{discriminator_forward.14} parent=19 // pred_fallthru
            _
          %141 = vnop
        $region20: #{discriminator_forward.14} parent=15 // pred_fallthru
          _
      $region16: #{discriminator_forward.14} parent=5 // pred_fallthru
        _
      %p142 = scmp.le.s32.totalorder 1, %s7
      %p143 = scmp.lt.s32.totalorder %s7, 9
      %p144 = pnand %p142, %p143
      %p145 = pneg %p144
      // Predicated region
      $region55: #{discriminator_forward.14} parent=5 // pred_check
        _
      $region56: #{discriminator_forward.14} parent=5 // pred_check_branch
        %147 = sbr.rel (%p144) target = $region58
      $region57: #{discriminator_forward.14} parent=5 // pred_region
        %s148 = ssub.s32 %s7, 1
        %s149 = sand.u32 %s34, 1
        %s150 = sand.u32 %s34, 1
        %s151 = smul.addr %s150, 16
        %s152 = scalar_lea.vmem [#allocation2], %s151
        // Predicated region
        $region59: #{discriminator_forward.14} parent=57 // pred_check
          %p153 = pneg %p47
        $region60: #{discriminator_forward.14} parent=57 // pred_check_branch
          %155 = sbr.rel (%p153) target = $region62
        $region61: #{discriminator_forward.14} parent=57 // pred_region
          _
        $region62: #{discriminator_forward.14} parent=57 // pred_fallthru
          _
        %s156 = sand.u32 %s34, 1
        %s157 = sand.u32 %s34, 1
        %s158 = smul.addr %s157, 16
        %s159 = scalar_lea.vmem [#allocation2], %s158
        %p160 = pneg %p47
        %p161 = pneg %p44
        %p162 = pneg %p75
        %p163 = pneg %p72
        %s164 = sand.u32 %s62, 1
        %s165 = sand.u32 %s62, 1
        %s166 = smul.addr %s165, 16
        %s167 = scalar_lea.vmem [#allocation3], %s166
        %v168 = vld [vmem:[%s152] sm:$0xff]
        %v169 = vld [vmem:[%s152 + $0x8] sm:$0x1]
        %vm170 = vcmask 1040384
        %v171 = vsel %vm170, %v169, 0.0
        %v172 = vadd.f32 %v168, %v171
        %v173 = vrot.slane %v172, 4
        %v174 = vadd.f32 %v172, %v173
        %v175 = vrot.slane %v174, 2
        %v176 = vadd.f32 %v174, %v175
        %v177 = vrot.slane %v176, 1
        %v178 = vadd.f32 %v176, %v177
        %v179 = vrcp.pop 9.0
        %v180 = vmul.f32 %v178, %v179
        %v181 = vmul.f32 %v168, %v168
        %v182 = vmul.f32 %v169, %v169
        %v183 = vsel %vm170, %v182, 0.0
        %v184 = vadd.f32 %v181, %v183
        %v185 = vrot.slane %v184, 4
        %v186 = vadd.f32 %v184, %v185
        %v187 = vrot.slane %v186, 2
        %v188 = vadd.f32 %v186, %v187
        %v189 = vrot.slane %v188, 1
        %v190 = vadd.f32 %v188, %v189
        %v191 = vmul.f32 %v190, %v179
        %v192 = vmul.f32 %v180, %v180
        %v193 = vsub.f32 %v191, %v192
        %v194 = vmax.f32 %v193, 0.0
        %v195 = vsub.f32 %v168, %v180
        %v196 = vsub.f32 %v169, %v180
        %v197 = vadd.f32 %v194, 1e-05
        %v198 = vrsqrt.pop %v197
        %v199 = vmul.f32 %v195, %v198
        %v200 = vmul.f32 %v196, %v198
        %vm201 = vcmp.ge.f32.partialorder %v199, 0.0
        %vm202 = vcmp.ge.f32.partialorder %v200, 0.0
        %v203 = vmul.f32 %v199, 0.2
        %v204 = vmul.f32 %v200, 0.2
        %v205 = vsel %vm201, %v199, %v203
        %v206 = vsel %vm202, %v200, %v204
        %207 = vst [vmem:[%s167] sm:$0xff] %v205
        %208 = vst [vmem:[%s167 + $0x8] sm:$0x1] %v206
        %s209 = sand.u32 %s62, 1
        %s210 = sand.u32 %s62, 1
        %s211 = smul.addr %s210, 16
        %s212 = scalar_lea.vmem [#allocation3], %s211
        // Predicated region
        $region63: #{discriminator_forward.14} parent=57 // pred_check
          %p213 = pneg %p72
        $region64: #{discriminator_forward.14} parent=57 // pred_check_branch
          %215 = sbr.rel (%p213) target = $region66
        $region65: #{discriminator_forward.14} parent=57 // pred_region
          %s216 = smul.addr %s16, 8
          %s217 = sadd.s32 %s17, %s216
          %s218 = smul.addr %s217, 8
          %s219 = scalar_lea.vmem %s1, %s218
          // Predicated region
          $region67: #{discriminator_forward.14} parent=65 // pred_check
            _
          $region68: #{discriminator_forward.14} parent=65 // pred_check_branch
            %221 = sbr.rel (0) target = $region70
          $region69: #{discriminator_forward.14} parent=65 // pred_region
            // Predicated region
            $region71: #{discriminator_forward.14} parent=69 // pred_check
              _
            $region72: #{discriminator_forward.14} parent=69 // pred_check_branch
              %223 = sbr.rel (0) target = $region74
            $region73: #{discriminator_forward.14} parent=69 // pred_region
              // Predicated region
              $region86: #{discriminator_forward.14} parent=73 // pred_check
                _
              $region87: #{discriminator_forward.14} parent=73 // pred_check_branch
                %241 = sbr.rel (0) target = $region89
              $region88: #{discriminator_forward.14} parent=73 // pred_region
                loop: start=0, step=1, limit=1
                $region90: #{discriminator_forward.14} parent=88 // loop_pre_header
                  _
                $region91: #{discriminator_forward.14} parent=88 // loop_header
                  %s243 = sphi 0, %s247
                  %p244 = scmp.ge.s32.totalorder %s243, 1
                  %s248 = sphi %s212, %s212
                  %s249 = sphi %s219, %s219
                $region92: #{discriminator_forward.14} parent=88 // loop_header_branch
                  %246 = sbr.rel (%p244) target = $region96
                $region93: #{discriminator_forward.14} parent=88 // loop_body
                  %v250 = vld [vmem:[%s248] sm:$0xff]
                  %251 = vst [vmem:[%s249] sm:$0xff] %v250
                  %v252 = vld [vmem:[%s248 + $0x8] sm:$0xff]
                  %253 = vst [vmem:[%s249 + $0x20] sm:$0xff] %v252
                $region94: #{discriminator_forward.14} parent=88 // loop_footer
                  %s247 = sadd.s32 1, %s243
                $region95: #{discriminator_forward.14} parent=88 // loop_footer_branch
                  %242 = sbr.rel target = $region91
                $region96: #{discriminator_forward.14} parent=88 // loop_exit
                  _
              $region89: #{discriminator_forward.14} parent=73 // pred_fallthru
                _
              // Predicated region
              $region97: #{discriminator_forward.14} parent=73 // pred_check
                _
              $region98: #{discriminator_forward.14} parent=73 // pred_check_branch
                %255 = sbr.rel target = $region100
              $region99: #{discriminator_forward.14} parent=73 // pred_region
                _
              $region100: #{discriminator_forward.14} parent=73 // pred_fallthru
                _
            $region74: #{discriminator_forward.14} parent=69 // pred_fallthru
              _
            // Predicated region
            $region75: #{discriminator_forward.14} parent=69 // pred_check
              _
            $region76: #{discriminator_forward.14} parent=69 // pred_check_branch
              %225 = sbr.rel target = $region78
            $region77: #{discriminator_forward.14} parent=69 // pred_region
              %s227 = ssub.s32 256, 1
              loop: start=0, step=1, limit=1
              $region79: #{discriminator_forward.14} parent=77 // loop_pre_header
                _
              $region80: #{discriminator_forward.14} parent=77 // loop_header
                %s229 = sphi 0, %s233
                %p230 = scmp.ge.s32.totalorder %s229, 1
                %s234 = sphi %s212, %s212
                %s235 = sphi %s219, %s219
              $region81: #{discriminator_forward.14} parent=77 // loop_header_branch
                %232 = sbr.rel (%p230) target = $region85
              $region82: #{discriminator_forward.14} parent=77 // loop_body
                %v236 = vld [vmem:[%s234] sm:%s227]
                %237 = vst [vmem:[%s235] sm:%s227] %v236
                %v238 = vld [vmem:[%s234 + $0x8] sm:%s227]
                %239 = vst [vmem:[%s235 + $0x20] sm:%s227] %v238
              $region83: #{discriminator_forward.14} parent=77 // loop_footer
                %s233 = sadd.s32 1, %s229
              $region84: #{discriminator_forward.14} parent=77 // loop_footer_branch
                %228 = sbr.rel target = $region80
              $region85: #{discriminator_forward.14} parent=77 // loop_exit
                _
            $region78: #{discriminator_forward.14} parent=69 // pred_fallthru
              _
          $region70: #{discriminator_forward.14} parent=65 // pred_fallthru
            _
          %256 = vnop
        $region66: #{discriminator_forward.14} parent=57 // pred_fallthru
          _
      $region58: #{discriminator_forward.14} parent=5 // pred_fallthru
        _
      %p257 = scmp.le.s32.totalorder 2, %s7
      // Predicated region
      $region101: #{discriminator_forward.14} parent=5 // pred_check
        %p258 = pneg %p257
      $region102: #{discriminator_forward.14} parent=5 // pred_check_branch
        %260 = sbr.rel (%p258) target = $region104
      $region103: #{discriminator_forward.14} parent=5 // pred_region
        %s261 = ssub.s32 %s7, 2
        // Predicated region
        $region105: #{discriminator_forward.14} parent=103 // pred_check
          %p262 = pneg %p78
        $region106: #{discriminator_forward.14} parent=103 // pred_check_branch
          %264 = sbr.rel (%p262) target = $region108
        $region107: #{discriminator_forward.14} parent=103 // pred_region
          %s265 = sand.u32 %s63, 1
          %s266 = sand.u32 %s63, 1
          %s267 = smul.addr %s266, 16
          %s268 = scalar_lea.vmem [#allocation3], %s267
        $region108: #{discriminator_forward.14} parent=103 // pred_fallthru
          _
      $region104: #{discriminator_forward.14} parent=5 // pred_fallthru
        _
    $region6: #{discriminator_forward.14} parent=1 // loop_footer
      %s11 = sadd.s32 1, %s7
    $region7: #{discriminator_forward.14} parent=1 // loop_footer_branch
      %6 = sbr.rel target = $region3
    $region8: #{discriminator_forward.14} parent=1 // loop_exit
      _

// kernel: discriminator_forward.15
$region0: #{discriminator_forward.15}
  #allocation0 [shape = 'u32[]', space=smem, size = 0x4, offset = 0x4, fixed_abs, tag = 'smem constant byte address 0x4 - core index']
  #allocation1 [shape = 'u32[144,128]{1,0:T(1,128)}', space=vmem, size = 0x12000, scoped, tag = 'internal scratch']
  #allocation2 [shape = 'f32[1,1]{1,0:T(1,128)S(1)}', space=vmem, size = 0x200, scoped, tag = 'scoped memory for discriminator_forward.15']
  %s0 = inlined_call_operand.vmem [shape: bf16[2,4,8192], index: 0, kind: input, shape index: {}]
  %s1 = inlined_call_operand.vmem [shape: bf16[1,8192], index: 1, kind: input, shape index: {}]
  %s2 = inlined_call_operand.<no memory space> [shape: f32[1,1], index: 2, kind: input, shape index: {}]
  %s3 = inlined_call_operand.vmem [shape: f32[2,1], index: 3, kind: output, shape index: {}]
  %s4 = sld [smem:[#allocation0]]
  $region22: #{discriminator_forward.15} parent=0
    _
  %s6 = ssub.s32 1, %s4
  %s7 = scalar_select 0, %s6, %s4
  %v8 = vstv %s2
  %9 = vst [vmem:[#allocation2] sm:$0x1] %v8
  // Predicated region
  $region2: #{discriminator_forward.15} parent=0 // pred_check
    _
  $region3: #{discriminator_forward.15} parent=0 // pred_check_branch
    %11 = sbr.rel (0) target = $region5
  $region4: #{discriminator_forward.15} parent=0 // pred_region
    _
  $region5: #{discriminator_forward.15} parent=0 // pred_fallthru
    _
  // Predicated region
  $region6: #{discriminator_forward.15} parent=0 // pred_check
    _
  $region7: #{discriminator_forward.15} parent=0 // pred_check_branch
    %13 = sbr.rel (0) target = $region9
  $region8: #{discriminator_forward.15} parent=0 // pred_region
    _
  $region9: #{discriminator_forward.15} parent=0 // pred_fallthru
    _
  // Predicated region
  $region10: #{discriminator_forward.15} parent=0 // pred_check
    _
  $region11: #{discriminator_forward.15} parent=0 // pred_check_branch
    %15 = sbr.rel (0) target = $region13
  $region12: #{discriminator_forward.15} parent=0 // pred_region
    _
  $region13: #{discriminator_forward.15} parent=0 // pred_fallthru
    _
  %v16 = vld [vmem:[%s0] sm:$0xff]
  %v17 = vld [vmem:[%s0 + $0x8] sm:$0xff]
  %v18 = vld [vmem:[%s0 + $0x10] sm:$0xff]
  %v19 = vld [vmem:[%s0 + $0x18] sm:$0xff]
  %v20 = vld [vmem:[%s0 + $0x20] sm:$0xff]
  %v21 = vld [vmem:[%s0 + $0x28] sm:$0xff]
  %v22 = vld [vmem:[%s0 + $0x30] sm:$0xff]
  %v23 = vld [vmem:[%s0 + $0x38] sm:$0xff]
  %v24 = vld [vmem:[%s0 + $0x40] sm:$0xff]
  %v25 = vld [vmem:[%s0 + $0x48] sm:$0xff]
  %v26 = vld [vmem:[%s0 + $0x50] sm:$0xff]
  %v27 = vld [vmem:[%s0 + $0x58] sm:$0xff]
  %v28 = vld [vmem:[%s0 + $0x60] sm:$0xff]
  %v29 = vld [vmem:[%s0 + $0x68] sm:$0xff]
  %v30 = vld [vmem:[%s0 + $0x70] sm:$0xff]
  %v31 = vld [vmem:[%s0 + $0x78] sm:$0xff]
  %v32 = vld [vmem:[%s0 + $0x80] sm:$0xff]
  %v33 = vld [vmem:[%s0 + $0x88] sm:$0xff]
  %v34 = vld [vmem:[%s0 + $0x90] sm:$0xff]
  %v35 = vld [vmem:[%s0 + $0x98] sm:$0xff]
  %v36 = vld [vmem:[%s0 + $0xa0] sm:$0xff]
  %v37 = vld [vmem:[%s0 + $0xa8] sm:$0xff]
  %v38 = vld [vmem:[%s0 + $0xb0] sm:$0xff]
  %v39 = vld [vmem:[%s0 + $0xb8] sm:$0xff]
  %v40 = vld [vmem:[%s0 + $0xc0] sm:$0xff]
  %v41 = vld [vmem:[%s0 + $0xc8] sm:$0xff]
  %v42 = vld [vmem:[%s0 + $0xd0] sm:$0xff]
  %v43 = vld [vmem:[%s0 + $0xd8] sm:$0xff]
  %v44 = vld [vmem:[%s0 + $0xe0] sm:$0xff]
  %v45 = vld [vmem:[%s0 + $0xe8] sm:$0xff]
  %v46 = vld [vmem:[%s0 + $0xf0] sm:$0xff]
  %v47 = vld [vmem:[%s0 + $0xf8] sm:$0xff]
  %v48 = vunpack.c.l.bf16 %v16
  %v49 = vunpack.c.h.bf16 %v16
  %v50 = vunpack.c.l.bf16 %v17
  %v51 = vunpack.c.h.bf16 %v17
  %v52 = vunpack.c.l.bf16 %v18
  %v53 = vunpack.c.h.bf16 %v18
  %v54 = vunpack.c.l.bf16 %v19
  %v55 = vunpack.c.h.bf16 %v19
  %v56 = vunpack.c.l.bf16 %v20
  %v57 = vunpack.c.h.bf16 %v20
  %v58 = vunpack.c.l.bf16 %v21
  %v59 = vunpack.c.h.bf16 %v21
  %v60 = vunpack.c.l.bf16 %v22
  %v61 = vunpack.c.h.bf16 %v22
  %v62 = vunpack.c.l.bf16 %v23
  %v63 = vunpack.c.h.bf16 %v23
  %v64 = vunpack.c.l.bf16 %v24
  %v65 = vunpack.c.h.bf16 %v24
  %v66 = vunpack.c.l.bf16 %v25
  %v67 = vunpack.c.h.bf16 %v25
  %v68 = vunpack.c.l.bf16 %v26
  %v69 = vunpack.c.h.bf16 %v26
  %v70 = vunpack.c.l.bf16 %v27
  %v71 = vunpack.c.h.bf16 %v27
  %v72 = vunpack.c.l.bf16 %v28
  %v73 = vunpack.c.h.bf16 %v28
  %v74 = vunpack.c.l.bf16 %v29
  %v75 = vunpack.c.h.bf16 %v29
  %v76 = vunpack.c.l.bf16 %v30
  %v77 = vunpack.c.h.bf16 %v30
  %v78 = vunpack.c.l.bf16 %v31
  %v79 = vunpack.c.h.bf16 %v31
  %v80 = vunpack.c.l.bf16 %v32
  %v81 = vunpack.c.h.bf16 %v32
  %v82 = vunpack.c.l.bf16 %v33
  %v83 = vunpack.c.h.bf16 %v33
  %v84 = vunpack.c.l.bf16 %v34
  %v85 = vunpack.c.h.bf16 %v34
  %v86 = vunpack.c.l.bf16 %v35
  %v87 = vunpack.c.h.bf16 %v35
  %v88 = vunpack.c.l.bf16 %v36
  %v89 = vunpack.c.h.bf16 %v36
  %v90 = vunpack.c.l.bf16 %v37
  %v91 = vunpack.c.h.bf16 %v37
  %v92 = vunpack.c.l.bf16 %v38
  %v93 = vunpack.c.h.bf16 %v38
  %v94 = vunpack.c.l.bf16 %v39
  %v95 = vunpack.c.h.bf16 %v39
  %v96 = vunpack.c.l.bf16 %v40
  %v97 = vunpack.c.h.bf16 %v40
  %v98 = vunpack.c.l.bf16 %v41
  %v99 = vunpack.c.h.bf16 %v41
  %v100 = vunpack.c.l.bf16 %v42
  %v101 = vunpack.c.h.bf16 %v42
  %v102 = vunpack.c.l.bf16 %v43
  %v103 = vunpack.c.h.bf16 %v43
  %v104 = vunpack.c.l.bf16 %v44
  %v105 = vunpack.c.h.bf16 %v44
  %v106 = vunpack.c.l.bf16 %v45
  %v107 = vunpack.c.h.bf16 %v45
  %v108 = vunpack.c.l.bf16 %v46
  %v109 = vunpack.c.h.bf16 %v46
  %v110 = vunpack.c.l.bf16 %v47
  %v111 = vunpack.c.h.bf16 %v47
  %v112 = vld [vmem:[%s1] sm:$0xff]
  %v113 = vld [vmem:[%s1 + $0x8] sm:$0xff]
  %v114 = vld [vmem:[%s1 + $0x10] sm:$0xff]
  %v115 = vld [vmem:[%s1 + $0x18] sm:$0xff]
  %v116 = vld [vmem:[%s1 + $0x20] sm:$0xff]
  %v117 = vld [vmem:[%s1 + $0x28] sm:$0xff]
  %v118 = vld [vmem:[%s1 + $0x30] sm:$0xff]
  %v119 = vld [vmem:[%s1 + $0x38] sm:$0xff]
  %v120 = vunpack.c.l.bf16 %v112
  %v121 = vunpack.c.h.bf16 %v112
  %v122 = vunpack.c.l.bf16 %v113
  %v123 = vunpack.c.h.bf16 %v113
  %v124 = vunpack.c.l.bf16 %v114
  %v125 = vunpack.c.h.bf16 %v114
  %v126 = vunpack.c.l.bf16 %v115
  %v127 = vunpack.c.h.bf16 %v115
  %v128 = vunpack.c.l.bf16 %v116
  %v129 = vunpack.c.h.bf16 %v116
  %v130 = vunpack.c.l.bf16 %v117
  %v131 = vunpack.c.h.bf16 %v117
  %v132 = vunpack.c.l.bf16 %v118
  %v133 = vunpack.c.h.bf16 %v118
  %v134 = vunpack.c.l.bf16 %v119
  %v135 = vunpack.c.h.bf16 %v119
  %v152 = vlaneseq
  %v153 = vshrl.u32 %v152, 7
  %v154 = vsub.s32 0, %v153
  %v155 = vrot.slane %v120, %v154
  %v156 = vlaneseq
  %v157 = vshrl.u32 %v156, 7
  %v158 = vsub.s32 2, %v157
  %v159 = vrot.slane %v120, %v158
  %v160 = vlaneseq
  %v161 = vshrl.u32 %v160, 7
  %v162 = vsub.s32 4, %v161
  %v163 = vrot.slane %v120, %v162
  %v164 = vlaneseq
  %v165 = vshrl.u32 %v164, 7
  %v166 = vsub.s32 6, %v165
  %v167 = vrot.slane %v120, %v166
  %v168 = vlaneseq
  %v169 = vshrl.u32 %v168, 7
  %v170 = vsub.s32 0, %v169
  %v171 = vrot.slane %v121, %v170
  %v172 = vlaneseq
  %v173 = vshrl.u32 %v172, 7
  %v174 = vsub.s32 2, %v173
  %v175 = vrot.slane %v121, %v174
  %v176 = vlaneseq
  %v177 = vshrl.u32 %v176, 7
  %v178 = vsub.s32 4, %v177
  %v179 = vrot.slane %v121, %v178
  %v180 = vlaneseq
  %v181 = vshrl.u32 %v180, 7
  %v182 = vsub.s32 6, %v181
  %v183 = vrot.slane %v121, %v182
  %v184 = vlaneseq
  %v185 = vshrl.u32 %v184, 7
  %v186 = vsub.s32 0, %v185
  %v187 = vrot.slane %v122, %v186
  %v188 = vlaneseq
  %v189 = vshrl.u32 %v188, 7
  %v190 = vsub.s32 2, %v189
  %v191 = vrot.slane %v122, %v190
  %v192 = vlaneseq
  %v193 = vshrl.u32 %v192, 7
  %v194 = vsub.s32 4, %v193
  %v195 = vrot.slane %v122, %v194
  %v196 = vlaneseq
  %v197 = vshrl.u32 %v196, 7
  %v198 = vsub.s32 6, %v197
  %v199 = vrot.slane %v122, %v198
  %v200 = vlaneseq
  %v201 = vshrl.u32 %v200, 7
  %v202 = vsub.s32 0, %v201
  %v203 = vrot.slane %v123, %v202
  %v204 = vlaneseq
  %v205 = vshrl.u32 %v204, 7
  %v206 = vsub.s32 2, %v205
  %v207 = vrot.slane %v123, %v206
  %v208 = vlaneseq
  %v209 = vshrl.u32 %v208, 7
  %v210 = vsub.s32 4, %v209
  %v211 = vrot.slane %v123, %v210
  %v212 = vlaneseq
  %v213 = vshrl.u32 %v212, 7
  %v214 = vsub.s32 6, %v213
  %v215 = vrot.slane %v123, %v214
  %v216 = vlaneseq
  %v217 = vshrl.u32 %v216, 7
  %v218 = vsub.s32 0, %v217
  %v219 = vrot.slane %v124, %v218
  %v220 = vlaneseq
  %v221 = vshrl.u32 %v220, 7
  %v222 = vsub.s32 2, %v221
  %v223 = vrot.slane %v124, %v222
  %v224 = vlaneseq
  %v225 = vshrl.u32 %v224, 7
  %v226 = vsub.s32 4, %v225
  %v227 = vrot.slane %v124, %v226
  %v228 = vlaneseq
  %v229 = vshrl.u32 %v228, 7
  %v230 = vsub.s32 6, %v229
  %v231 = vrot.slane %v124, %v230
  %v232 = vlaneseq
  %v233 = vshrl.u32 %v232, 7
  %v234 = vsub.s32 0, %v233
  %v235 = vrot.slane %v125, %v234
  %v236 = vlaneseq
  %v237 = vshrl.u32 %v236, 7
  %v238 = vsub.s32 2, %v237
  %v239 = vrot.slane %v125, %v238
  %v240 = vlaneseq
  %v241 = vshrl.u32 %v240, 7
  %v242 = vsub.s32 4, %v241
  %v243 = vrot.slane %v125, %v242
  %v244 = vlaneseq
  %v245 = vshrl.u32 %v244, 7
  %v246 = vsub.s32 6, %v245
  %v247 = vrot.slane %v125, %v246
  %v248 = vlaneseq
  %v249 = vshrl.u32 %v248, 7
  %v250 = vsub.s32 0, %v249
  %v251 = vrot.slane %v126, %v250
  %v252 = vlaneseq
  %v253 = vshrl.u32 %v252, 7
  %v254 = vsub.s32 2, %v253
  %v255 = vrot.slane %v126, %v254
  %v256 = vlaneseq
  %v257 = vshrl.u32 %v256, 7
  %v258 = vsub.s32 4, %v257
  %v259 = vrot.slane %v126, %v258
  %v260 = vlaneseq
  %v261 = vshrl.u32 %v260, 7
  %v262 = vsub.s32 6, %v261
  %v263 = vrot.slane %v126, %v262
  %v264 = vlaneseq
  %v265 = vshrl.u32 %v264, 7
  %v266 = vsub.s32 0, %v265
  %v267 = vrot.slane %v127, %v266
  %v268 = vlaneseq
  %v269 = vshrl.u32 %v268, 7
  %v270 = vsub.s32 2, %v269
  %v271 = vrot.slane %v127, %v270
  %v272 = vlaneseq
  %v273 = vshrl.u32 %v272, 7
  %v274 = vsub.s32 4, %v273
  %v275 = vrot.slane %v127, %v274
  %v276 = vlaneseq
  %v277 = vshrl.u32 %v276, 7
  %v278 = vsub.s32 6, %v277
  %v279 = vrot.slane %v127, %v278
  %v280 = vlaneseq
  %v281 = vshrl.u32 %v280, 7
  %v282 = vsub.s32 0, %v281
  %v283 = vrot.slane %v128, %v282
  %v284 = vlaneseq
  %v285 = vshrl.u32 %v284, 7
  %v286 = vsub.s32 2, %v285
  %v287 = vrot.slane %v128, %v286
  %v288 = vlaneseq
  %v289 = vshrl.u32 %v288, 7
  %v290 = vsub.s32 4, %v289
  %v291 = vrot.slane %v128, %v290
  %v292 = vlaneseq
  %v293 = vshrl.u32 %v292, 7
  %v294 = vsub.s32 6, %v293
  %v295 = vrot.slane %v128, %v294
  %v296 = vlaneseq
  %v297 = vshrl.u32 %v296, 7
  %v298 = vsub.s32 0, %v297
  %v299 = vrot.slane %v129, %v298
  %v300 = vlaneseq
  %v301 = vshrl.u32 %v300, 7
  %v302 = vsub.s32 2, %v301
  %v303 = vrot.slane %v129, %v302
  %v304 = vlaneseq
  %v305 = vshrl.u32 %v304, 7
  %v306 = vsub.s32 4, %v305
  %v307 = vrot.slane %v129, %v306
  %v308 = vlaneseq
  %v309 = vshrl.u32 %v308, 7
  %v310 = vsub.s32 6, %v309
  %v311 = vrot.slane %v129, %v310
  %v312 = vlaneseq
  %v313 = vshrl.u32 %v312, 7
  %v314 = vsub.s32 0, %v313
  %v315 = vrot.slane %v130, %v314
  %v316 = vlaneseq
  %v317 = vshrl.u32 %v316, 7
  %v318 = vsub.s32 2, %v317
  %v319 = vrot.slane %v130, %v318
  %v320 = vlaneseq
  %v321 = vshrl.u32 %v320, 7
  %v322 = vsub.s32 4, %v321
  %v323 = vrot.slane %v130, %v322
  %v324 = vlaneseq
  %v325 = vshrl.u32 %v324, 7
  %v326 = vsub.s32 6, %v325
  %v327 = vrot.slane %v130, %v326
  %v328 = vlaneseq
  %v329 = vshrl.u32 %v328, 7
  %v330 = vsub.s32 0, %v329
  %v331 = vrot.slane %v131, %v330
  %v332 = vlaneseq
  %v333 = vshrl.u32 %v332, 7
  %v334 = vsub.s32 2, %v333
  %v335 = vrot.slane %v131, %v334
  %v336 = vlaneseq
  %v337 = vshrl.u32 %v336, 7
  %v338 = vsub.s32 4, %v337
  %v339 = vrot.slane %v131, %v338
  %v340 = vlaneseq
  %v341 = vshrl.u32 %v340, 7
  %v342 = vsub.s32 6, %v341
  %v343 = vrot.slane %v131, %v342
  %v344 = vlaneseq
  %v345 = vshrl.u32 %v344, 7
  %v346 = vsub.s32 0, %v345
  %v347 = vrot.slane %v132, %v346
  %v348 = vlaneseq
  %v349 = vshrl.u32 %v348, 7
  %v350 = vsub.s32 2, %v349
  %v351 = vrot.slane %v132, %v350
  %v352 = vlaneseq
  %v353 = vshrl.u32 %v352, 7
  %v354 = vsub.s32 4, %v353
  %v355 = vrot.slane %v132, %v354
  %v356 = vlaneseq
  %v357 = vshrl.u32 %v356, 7
  %v358 = vsub.s32 6, %v357
  %v359 = vrot.slane %v132, %v358
  %v360 = vlaneseq
  %v361 = vshrl.u32 %v360, 7
  %v362 = vsub.s32 0, %v361
  %v363 = vrot.slane %v133, %v362
  %v364 = vlaneseq
  %v365 = vshrl.u32 %v364, 7
  %v366 = vsub.s32 2, %v365
  %v367 = vrot.slane %v133, %v366
  %v368 = vlaneseq
  %v369 = vshrl.u32 %v368, 7
  %v370 = vsub.s32 4, %v369
  %v371 = vrot.slane %v133, %v370
  %v372 = vlaneseq
  %v373 = vshrl.u32 %v372, 7
  %v374 = vsub.s32 6, %v373
  %v375 = vrot.slane %v133, %v374
  %v376 = vlaneseq
  %v377 = vshrl.u32 %v376, 7
  %v378 = vsub.s32 0, %v377
  %v379 = vrot.slane %v134, %v378
  %v380 = vlaneseq
  %v381 = vshrl.u32 %v380, 7
  %v382 = vsub.s32 2, %v381
  %v383 = vrot.slane %v134, %v382
  %v384 = vlaneseq
  %v385 = vshrl.u32 %v384, 7
  %v386 = vsub.s32 4, %v385
  %v387 = vrot.slane %v134, %v386
  %v388 = vlaneseq
  %v389 = vshrl.u32 %v388, 7
  %v390 = vsub.s32 6, %v389
  %v391 = vrot.slane %v134, %v390
  %v392 = vlaneseq
  %v393 = vshrl.u32 %v392, 7
  %v394 = vsub.s32 0, %v393
  %v395 = vrot.slane %v135, %v394
  %v396 = vlaneseq
  %v397 = vshrl.u32 %v396, 7
  %v398 = vsub.s32 2, %v397
  %v399 = vrot.slane %v135, %v398
  %v400 = vlaneseq
  %v401 = vshrl.u32 %v400, 7
  %v402 = vsub.s32 4, %v401
  %v403 = vrot.slane %v135, %v402
  %v404 = vlaneseq
  %v405 = vshrl.u32 %v404, 7
  %v406 = vsub.s32 6, %v405
  %v407 = vrot.slane %v135, %v406
  %v472 = vlaneseq
  %v473 = vshrl.u32 %v472, 7
  %v474 = vsub.s32 0, %v473
  %v475 = vrot.slane %v155, %v474
  %v476 = vlaneseq
  %v477 = vshrl.u32 %v476, 7
  %v478 = vsub.s32 0, %v477
  %v479 = vrot.slane %v159, %v478
  %v480 = vlaneseq
  %v481 = vshrl.u32 %v480, 7
  %v482 = vsub.s32 0, %v481
  %v483 = vrot.slane %v163, %v482
  %v484 = vlaneseq
  %v485 = vshrl.u32 %v484, 7
  %v486 = vsub.s32 0, %v485
  %v487 = vrot.slane %v167, %v486
  %v488 = vlaneseq
  %v489 = vshrl.u32 %v488, 7
  %v490 = vsub.s32 0, %v489
  %v491 = vrot.slane %v171, %v490
  %v492 = vlaneseq
  %v493 = vshrl.u32 %v492, 7
  %v494 = vsub.s32 0, %v493
  %v495 = vrot.slane %v175, %v494
  %v496 = vlaneseq
  %v497 = vshrl.u32 %v496, 7
  %v498 = vsub.s32 0, %v497
  %v499 = vrot.slane %v179, %v498
  %v500 = vlaneseq
  %v501 = vshrl.u32 %v500, 7
  %v502 = vsub.s32 0, %v501
  %v503 = vrot.slane %v183, %v502
  %v504 = vlaneseq
  %v505 = vshrl.u32 %v504, 7
  %v506 = vsub.s32 0, %v505
  %v507 = vrot.slane %v187, %v506
  %v508 = vlaneseq
  %v509 = vshrl.u32 %v508, 7
  %v510 = vsub.s32 0, %v509
  %v511 = vrot.slane %v191, %v510
  %v512 = vlaneseq
  %v513 = vshrl.u32 %v512, 7
  %v514 = vsub.s32 0, %v513
  %v515 = vrot.slane %v195, %v514
  %v516 = vlaneseq
  %v517 = vshrl.u32 %v516, 7
  %v518 = vsub.s32 0, %v517
  %v519 = vrot.slane %v199, %v518
  %v520 = vlaneseq
  %v521 = vshrl.u32 %v520, 7
  %v522 = vsub.s32 0, %v521
  %v523 = vrot.slane %v203, %v522
  %v524 = vlaneseq
  %v525 = vshrl.u32 %v524, 7
  %v526 = vsub.s32 0, %v525
  %v527 = vrot.slane %v207, %v526
  %v528 = vlaneseq
  %v529 = vshrl.u32 %v528, 7
  %v530 = vsub.s32 0, %v529
  %v531 = vrot.slane %v211, %v530
  %v532 = vlaneseq
  %v533 = vshrl.u32 %v532, 7
  %v534 = vsub.s32 0, %v533
  %v535 = vrot.slane %v215, %v534
  %v536 = vlaneseq
  %v537 = vshrl.u32 %v536, 7
  %v538 = vsub.s32 0, %v537
  %v539 = vrot.slane %v219, %v538
  %v540 = vlaneseq
  %v541 = vshrl.u32 %v540, 7
  %v542 = vsub.s32 0, %v541
  %v543 = vrot.slane %v223, %v542
  %v544 = vlaneseq
  %v545 = vshrl.u32 %v544, 7
  %v546 = vsub.s32 0, %v545
  %v547 = vrot.slane %v227, %v546
  %v548 = vlaneseq
  %v549 = vshrl.u32 %v548, 7
  %v550 = vsub.s32 0, %v549
  %v551 = vrot.slane %v231, %v550
  %v552 = vlaneseq
  %v553 = vshrl.u32 %v552, 7
  %v554 = vsub.s32 0, %v553
  %v555 = vrot.slane %v235, %v554
  %v556 = vlaneseq
  %v557 = vshrl.u32 %v556, 7
  %v558 = vsub.s32 0, %v557
  %v559 = vrot.slane %v239, %v558
  %v560 = vlaneseq
  %v561 = vshrl.u32 %v560, 7
  %v562 = vsub.s32 0, %v561
  %v563 = vrot.slane %v243, %v562
  %v564 = vlaneseq
  %v565 = vshrl.u32 %v564, 7
  %v566 = vsub.s32 0, %v565
  %v567 = vrot.slane %v247, %v566
  %v568 = vlaneseq
  %v569 = vshrl.u32 %v568, 7
  %v570 = vsub.s32 0, %v569
  %v571 = vrot.slane %v251, %v570
  %v572 = vlaneseq
  %v573 = vshrl.u32 %v572, 7
  %v574 = vsub.s32 0, %v573
  %v575 = vrot.slane %v255, %v574
  %v576 = vlaneseq
  %v577 = vshrl.u32 %v576, 7
  %v578 = vsub.s32 0, %v577
  %v579 = vrot.slane %v259, %v578
  %v580 = vlaneseq
  %v581 = vshrl.u32 %v580, 7
  %v582 = vsub.s32 0, %v581
  %v583 = vrot.slane %v263, %v582
  %v584 = vlaneseq
  %v585 = vshrl.u32 %v584, 7
  %v586 = vsub.s32 0, %v585
  %v587 = vrot.slane %v267, %v586
  %v588 = vlaneseq
  %v589 = vshrl.u32 %v588, 7
  %v590 = vsub.s32 0, %v589
  %v591 = vrot.slane %v271, %v590
  %v592 = vlaneseq
  %v593 = vshrl.u32 %v592, 7
  %v594 = vsub.s32 0, %v593
  %v595 = vrot.slane %v275, %v594
  %v596 = vlaneseq
  %v597 = vshrl.u32 %v596, 7
  %v598 = vsub.s32 0, %v597
  %v599 = vrot.slane %v279, %v598
  %v600 = vlaneseq
  %v601 = vshrl.u32 %v600, 7
  %v602 = vsub.s32 0, %v601
  %v603 = vrot.slane %v283, %v602
  %v604 = vlaneseq
  %v605 = vshrl.u32 %v604, 7
  %v606 = vsub.s32 0, %v605
  %v607 = vrot.slane %v287, %v606
  %v608 = vlaneseq
  %v609 = vshrl.u32 %v608, 7
  %v610 = vsub.s32 0, %v609
  %v611 = vrot.slane %v291, %v610
  %v612 = vlaneseq
  %v613 = vshrl.u32 %v612, 7
  %v614 = vsub.s32 0, %v613
  %v615 = vrot.slane %v295, %v614
  %v616 = vlaneseq
  %v617 = vshrl.u32 %v616, 7
  %v618 = vsub.s32 0, %v617
  %v619 = vrot.slane %v299, %v618
  %v620 = vlaneseq
  %v621 = vshrl.u32 %v620, 7
  %v622 = vsub.s32 0, %v621
  %v623 = vrot.slane %v303, %v622
  %v624 = vlaneseq
  %v625 = vshrl.u32 %v624, 7
  %v626 = vsub.s32 0, %v625
  %v627 = vrot.slane %v307, %v626
  %v628 = vlaneseq
  %v629 = vshrl.u32 %v628, 7
  %v630 = vsub.s32 0, %v629
  %v631 = vrot.slane %v311, %v630
  %v632 = vlaneseq
  %v633 = vshrl.u32 %v632, 7
  %v634 = vsub.s32 0, %v633
  %v635 = vrot.slane %v315, %v634
  %v636 = vlaneseq
  %v637 = vshrl.u32 %v636, 7
  %v638 = vsub.s32 0, %v637
  %v639 = vrot.slane %v319, %v638
  %v640 = vlaneseq
  %v641 = vshrl.u32 %v640, 7
  %v642 = vsub.s32 0, %v641
  %v643 = vrot.slane %v323, %v642
  %v644 = vlaneseq
  %v645 = vshrl.u32 %v644, 7
  %v646 = vsub.s32 0, %v645
  %v647 = vrot.slane %v327, %v646
  %v648 = vlaneseq
  %v649 = vshrl.u32 %v648, 7
  %v650 = vsub.s32 0, %v649
  %v651 = vrot.slane %v331, %v650
  %v652 = vlaneseq
  %v653 = vshrl.u32 %v652, 7
  %v654 = vsub.s32 0, %v653
  %v655 = vrot.slane %v335, %v654
  %v656 = vlaneseq
  %v657 = vshrl.u32 %v656, 7
  %v658 = vsub.s32 0, %v657
  %v659 = vrot.slane %v339, %v658
  %v660 = vlaneseq
  %v661 = vshrl.u32 %v660, 7
  %v662 = vsub.s32 0, %v661
  %v663 = vrot.slane %v343, %v662
  %v664 = vlaneseq
  %v665 = vshrl.u32 %v664, 7
  %v666 = vsub.s32 0, %v665
  %v667 = vrot.slane %v347, %v666
  %v668 = vlaneseq
  %v669 = vshrl.u32 %v668, 7
  %v670 = vsub.s32 0, %v669
  %v671 = vrot.slane %v351, %v670
  %v672 = vlaneseq
  %v673 = vshrl.u32 %v672, 7
  %v674 = vsub.s32 0, %v673
  %v675 = vrot.slane %v355, %v674
  %v676 = vlaneseq
  %v677 = vshrl.u32 %v676, 7
  %v678 = vsub.s32 0, %v677
  %v679 = vrot.slane %v359, %v678
  %v680 = vlaneseq
  %v681 = vshrl.u32 %v680, 7
  %v682 = vsub.s32 0, %v681
  %v683 = vrot.slane %v363, %v682
  %v684 = vlaneseq
  %v685 = vshrl.u32 %v684, 7
  %v686 = vsub.s32 0, %v685
  %v687 = vrot.slane %v367, %v686
  %v688 = vlaneseq
  %v689 = vshrl.u32 %v688, 7
  %v690 = vsub.s32 0, %v689
  %v691 = vrot.slane %v371, %v690
  %v692 = vlaneseq
  %v693 = vshrl.u32 %v692, 7
  %v694 = vsub.s32 0, %v693
  %v695 = vrot.slane %v375, %v694
  %v696 = vlaneseq
  %v697 = vshrl.u32 %v696, 7
  %v698 = vsub.s32 0, %v697
  %v699 = vrot.slane %v379, %v698
  %v700 = vlaneseq
  %v701 = vshrl.u32 %v700, 7
  %v702 = vsub.s32 0, %v701
  %v703 = vrot.slane %v383, %v702
  %v704 = vlaneseq
  %v705 = vshrl.u32 %v704, 7
  %v706 = vsub.s32 0, %v705
  %v707 = vrot.slane %v387, %v706
  %v708 = vlaneseq
  %v709 = vshrl.u32 %v708, 7
  %v710 = vsub.s32 0, %v709
  %v711 = vrot.slane %v391, %v710
  %v712 = vlaneseq
  %v713 = vshrl.u32 %v712, 7
  %v714 = vsub.s32 0, %v713
  %v715 = vrot.slane %v395, %v714
  %v716 = vlaneseq
  %v717 = vshrl.u32 %v716, 7
  %v718 = vsub.s32 0, %v717
  %v719 = vrot.slane %v399, %v718
  %v720 = vlaneseq
  %v721 = vshrl.u32 %v720, 7
  %v722 = vsub.s32 0, %v721
  %v723 = vrot.slane %v403, %v722
  %v724 = vlaneseq
  %v725 = vshrl.u32 %v724, 7
  %v726 = vsub.s32 0, %v725
  %v727 = vrot.slane %v407, %v726
  %v792 = vcombine.low %v475, %v479
  %v793 = vcombine.low %v483, %v487
  %v794 = vcombine.low %v491, %v495
  %v795 = vcombine.low %v499, %v503
  %v796 = vcombine.low %v507, %v511
  %v797 = vcombine.low %v515, %v519
  %v798 = vcombine.low %v523, %v527
  %v799 = vcombine.low %v531, %v535
  %v800 = vcombine.low %v539, %v543
  %v801 = vcombine.low %v547, %v551
  %v802 = vcombine.low %v555, %v559
  %v803 = vcombine.low %v563, %v567
  %v804 = vcombine.low %v571, %v575
  %v805 = vcombine.low %v579, %v583
  %v806 = vcombine.low %v587, %v591
  %v807 = vcombine.low %v595, %v599
  %v808 = vcombine.low %v603, %v607
  %v809 = vcombine.low %v611, %v615
  %v810 = vcombine.low %v619, %v623
  %v811 = vcombine.low %v627, %v631
  %v812 = vcombine.low %v635, %v639
  %v813 = vcombine.low %v643, %v647
  %v814 = vcombine.low %v651, %v655
  %v815 = vcombine.low %v659, %v663
  %v816 = vcombine.low %v667, %v671
  %v817 = vcombine.low %v675, %v679
  %v818 = vcombine.low %v683, %v687
  %v819 = vcombine.low %v691, %v695
  %v820 = vcombine.low %v699, %v703
  %v821 = vcombine.low %v707, %v711
  %v822 = vcombine.low %v715, %v719
  %v823 = vcombine.low %v723, %v727
  %v856 = vmul.f32 %v48, %v792
  %v857 = vmul.f32 %v49, %v793
  %v858 = vmul.f32 %v50, %v794
  %v859 = vmul.f32 %v51, %v795
  %v860 = vmul.f32 %v52, %v796
  %v861 = vmul.f32 %v53, %v797
  %v862 = vmul.f32 %v54, %v798
  %v863 = vmul.f32 %v55, %v799
  %v864 = vmul.f32 %v56, %v800
  %v865 = vmul.f32 %v57, %v801
  %v866 = vmul.f32 %v58, %v802
  %v867 = vmul.f32 %v59, %v803
  %v868 = vmul.f32 %v60, %v804
  %v869 = vmul.f32 %v61, %v805
  %v870 = vmul.f32 %v62, %v806
  %v871 = vmul.f32 %v63, %v807
  %v872 = vmul.f32 %v64, %v808
  %v873 = vmul.f32 %v65, %v809
  %v874 = vmul.f32 %v66, %v810
  %v875 = vmul.f32 %v67, %v811
  %v876 = vmul.f32 %v68, %v812
  %v877 = vmul.f32 %v69, %v813
  %v878 = vmul.f32 %v70, %v814
  %v879 = vmul.f32 %v71, %v815
  %v880 = vmul.f32 %v72, %v816
  %v881 = vmul.f32 %v73, %v817
  %v882 = vmul.f32 %v74, %v818
  %v883 = vmul.f32 %v75, %v819
  %v884 = vmul.f32 %v76, %v820
  %v885 = vmul.f32 %v77, %v821
  %v886 = vmul.f32 %v78, %v822
  %v887 = vmul.f32 %v79, %v823
  %v888 = vmul.f32 %v80, %v792
  %v889 = vmul.f32 %v81, %v793
  %v890 = vmul.f32 %v82, %v794
  %v891 = vmul.f32 %v83, %v795
  %v892 = vmul.f32 %v84, %v796
  %v893 = vmul.f32 %v85, %v797
  %v894 = vmul.f32 %v86, %v798
  %v895 = vmul.f32 %v87, %v799
  %v896 = vmul.f32 %v88, %v800
  %v897 = vmul.f32 %v89, %v801
  %v898 = vmul.f32 %v90, %v802
  %v899 = vmul.f32 %v91, %v803
  %v900 = vmul.f32 %v92, %v804
  %v901 = vmul.f32 %v93, %v805
  %v902 = vmul.f32 %v94, %v806
  %v903 = vmul.f32 %v95, %v807
  %v904 = vmul.f32 %v96, %v808
  %v905 = vmul.f32 %v97, %v809
  %v906 = vmul.f32 %v98, %v810
  %v907 = vmul.f32 %v99, %v811
  %v908 = vmul.f32 %v100, %v812
  %v909 = vmul.f32 %v101, %v813
  %v910 = vmul.f32 %v102, %v814
  %v911 = vmul.f32 %v103, %v815
  %v912 = vmul.f32 %v104, %v816
  %v913 = vmul.f32 %v105, %v817
  %v914 = vmul.f32 %v106, %v818
  %v915 = vmul.f32 %v107, %v819
  %v916 = vmul.f32 %v108, %v820
  %v917 = vmul.f32 %v109, %v821
  %v918 = vmul.f32 %v110, %v822
  %v919 = vmul.f32 %v111, %v823
  %v984 = vcombine.high %v856, %v856
  %v985 = vcombine.high %v857, %v857
  %v986 = vcombine.high %v858, %v858
  %v987 = vcombine.high %v859, %v859
  %v988 = vcombine.high %v860, %v860
  %v989 = vcombine.high %v861, %v861
  %v990 = vcombine.high %v862, %v862
  %v991 = vcombine.high %v863, %v863
  %v992 = vcombine.high %v864, %v864
  %v993 = vcombine.high %v865, %v865
  %v994 = vcombine.high %v866, %v866
  %v995 = vcombine.high %v867, %v867
  %v996 = vcombine.high %v868, %v868
  %v997 = vcombine.high %v869, %v869
  %v998 = vcombine.high %v870, %v870
  %v999 = vcombine.high %v871, %v871
  %v1000 = vcombine.high %v872, %v872
  %v1001 = vcombine.high %v873, %v873
  %v1002 = vcombine.high %v874, %v874
  %v1003 = vcombine.high %v875, %v875
  %v1004 = vcombine.high %v876, %v876
  %v1005 = vcombine.high %v877, %v877
  %v1006 = vcombine.high %v878, %v878
  %v1007 = vcombine.high %v879, %v879
  %v1008 = vcombine.high %v880, %v880
  %v1009 = vcombine.high %v881, %v881
  %v1010 = vcombine.high %v882, %v882
  %v1011 = vcombine.high %v883, %v883
  %v1012 = vcombine.high %v884, %v884
  %v1013 = vcombine.high %v885, %v885
  %v1014 = vcombine.high %v886, %v886
  %v1015 = vcombine.high %v887, %v887
  %v1016 = vcombine.high %v888, %v888
  %v1017 = vcombine.high %v889, %v889
  %v1018 = vcombine.high %v890, %v890
  %v1019 = vcombine.high %v891, %v891
  %v1020 = vcombine.high %v892, %v892
  %v1021 = vcombine.high %v893, %v893
  %v1022 = vcombine.high %v894, %v894
  %v1023 = vcombine.high %v895, %v895
  %v1024 = vcombine.high %v896, %v896
  %v1025 = vcombine.high %v897, %v897
  %v1026 = vcombine.high %v898, %v898
  %v1027 = vcombine.high %v899, %v899
  %v1028 = vcombine.high %v900, %v900
  %v1029 = vcombine.high %v901, %v901
  %v1030 = vcombine.high %v902, %v902
  %v1031 = vcombine.high %v903, %v903
  %v1032 = vcombine.high %v904, %v904
  %v1033 = vcombine.high %v905, %v905
  %v1034 = vcombine.high %v906, %v906
  %v1035 = vcombine.high %v907, %v907
  %v1036 = vcombine.high %v908, %v908
  %v1037 = vcombine.high %v909, %v909
  %v1038 = vcombine.high %v910, %v910
  %v1039 = vcombine.high %v911, %v911
  %v1040 = vcombine.high %v912, %v912
  %v1041 = vcombine.high %v913, %v913
  %v1042 = vcombine.high %v914, %v914
  %v1043 = vcombine.high %v915, %v915
  %v1044 = vcombine.high %v916, %v916
  %v1045 = vcombine.high %v917, %v917
  %v1046 = vcombine.high %v918, %v918
  %v1047 = vcombine.high %v919, %v919
  %vm1112 = vcmask 1043456
  %v1113 = vsel %vm1112, %v856, 0.0
  %v1114 = vrot.slane %v1113, 4
  %v1115 = vadd.f32 %v1113, %v1114
  %v1116 = vrot.slane %v1115, 2
  %v1117 = vadd.f32 %v1115, %v1116
  %v1118 = vrot.slane %v1117, 1
  %v1119 = vadd.f32 %v1117, %v1118
  %v1120 = vsel %vm1112, %v984, 0.0
  %v1121 = vrot.slane %v1120, 4
  %v1122 = vadd.f32 %v1120, %v1121
  %v1123 = vrot.slane %v1122, 2
  %v1124 = vadd.f32 %v1122, %v1123
  %v1125 = vrot.slane %v1124, 1
  %v1126 = vadd.f32 %v1124, %v1125
  %v1127 = vsel %vm1112, %v857, 0.0
  %v1128 = vrot.slane %v1127, 4
  %v1129 = vadd.f32 %v1127, %v1128
  %v1130 = vrot.slane %v1129, 2
  %v1131 = vadd.f32 %v1129, %v1130
  %v1132 = vrot.slane %v1131, 1
  %v1133 = vadd.f32 %v1131, %v1132
  %v1134 = vsel %vm1112, %v985, 0.0
  %v1135 = vrot.slane %v1134, 4
  %v1136 = vadd.f32 %v1134, %v1135
  %v1137 = vrot.slane %v1136, 2
  %v1138 = vadd.f32 %v1136, %v1137
  %v1139 = vrot.slane %v1138, 1
  %v1140 = vadd.f32 %v1138, %v1139
  %v1141 = vsel %vm1112, %v858, 0.0
  %v1142 = vrot.slane %v1141, 4
  %v1143 = vadd.f32 %v1141, %v1142
  %v1144 = vrot.slane %v1143, 2
  %v1145 = vadd.f32 %v1143, %v1144
  %v1146 = vrot.slane %v1145, 1
  %v1147 = vadd.f32 %v1145, %v1146
  %v1148 = vsel %vm1112, %v986, 0.0
  %v1149 = vrot.slane %v1148, 4
  %v1150 = vadd.f32 %v1148, %v1149
  %v1151 = vrot.slane %v1150, 2
  %v1152 = vadd.f32 %v1150, %v1151
  %v1153 = vrot.slane %v1152, 1
  %v1154 = vadd.f32 %v1152, %v1153
  %v1155 = vsel %vm1112, %v859, 0.0
  %v1156 = vrot.slane %v1155, 4
  %v1157 = vadd.f32 %v1155, %v1156
  %v1158 = vrot.slane %v1157, 2
  %v1159 = vadd.f32 %v1157, %v1158
  %v1160 = vrot.slane %v1159, 1
  %v1161 = vadd.f32 %v1159, %v1160
  %v1162 = vsel %vm1112, %v987, 0.0
  %v1163 = vrot.slane %v1162, 4
  %v1164 = vadd.f32 %v1162, %v1163
  %v1165 = vrot.slane %v1164, 2
  %v1166 = vadd.f32 %v1164, %v1165
  %v1167 = vrot.slane %v1166, 1
  %v1168 = vadd.f32 %v1166, %v1167
  %v1169 = vsel %vm1112, %v860, 0.0
  %v1170 = vrot.slane %v1169, 4
  %v1171 = vadd.f32 %v1169, %v1170
  %v1172 = vrot.slane %v1171, 2
  %v1173 = vadd.f32 %v1171, %v1172
  %v1174 = vrot.slane %v1173, 1
  %v1175 = vadd.f32 %v1173, %v1174
  %v1176 = vsel %vm1112, %v988, 0.0
  %v1177 = vrot.slane %v1176, 4
  %v1178 = vadd.f32 %v1176, %v1177
  %v1179 = vrot.slane %v1178, 2
  %v1180 = vadd.f32 %v1178, %v1179
  %v1181 = vrot.slane %v1180, 1
  %v1182 = vadd.f32 %v1180, %v1181
  %v1183 = vsel %vm1112, %v861, 0.0
  %v1184 = vrot.slane %v1183, 4
  %v1185 = vadd.f32 %v1183, %v1184
  %v1186 = vrot.slane %v1185, 2
  %v1187 = vadd.f32 %v1185, %v1186
  %v1188 = vrot.slane %v1187, 1
  %v1189 = vadd.f32 %v1187, %v1188
  %v1190 = vsel %vm1112, %v989, 0.0
  %v1191 = vrot.slane %v1190, 4
  %v1192 = vadd.f32 %v1190, %v1191
  %v1193 = vrot.slane %v1192, 2
  %v1194 = vadd.f32 %v1192, %v1193
  %v1195 = vrot.slane %v1194, 1
  %v1196 = vadd.f32 %v1194, %v1195
  %v1197 = vsel %vm1112, %v862, 0.0
  %v1198 = vrot.slane %v1197, 4
  %v1199 = vadd.f32 %v1197, %v1198
  %v1200 = vrot.slane %v1199, 2
  %v1201 = vadd.f32 %v1199, %v1200
  %v1202 = vrot.slane %v1201, 1
  %v1203 = vadd.f32 %v1201, %v1202
  %v1204 = vsel %vm1112, %v990, 0.0
  %v1205 = vrot.slane %v1204, 4
  %v1206 = vadd.f32 %v1204, %v1205
  %v1207 = vrot.slane %v1206, 2
  %v1208 = vadd.f32 %v1206, %v1207
  %v1209 = vrot.slane %v1208, 1
  %v1210 = vadd.f32 %v1208, %v1209
  %v1211 = vsel %vm1112, %v863, 0.0
  %v1212 = vrot.slane %v1211, 4
  %v1213 = vadd.f32 %v1211, %v1212
  %v1214 = vrot.slane %v1213, 2
  %v1215 = vadd.f32 %v1213, %v1214
  %v1216 = vrot.slane %v1215, 1
  %v1217 = vadd.f32 %v1215, %v1216
  %v1218 = vsel %vm1112, %v991, 0.0
  %v1219 = vrot.slane %v1218, 4
  %v1220 = vadd.f32 %v1218, %v1219
  %v1221 = vrot.slane %v1220, 2
  %v1222 = vadd.f32 %v1220, %v1221
  %v1223 = vrot.slane %v1222, 1
  %v1224 = vadd.f32 %v1222, %v1223
  %v1225 = vsel %vm1112, %v864, 0.0
  %v1226 = vrot.slane %v1225, 4
  %v1227 = vadd.f32 %v1225, %v1226
  %v1228 = vrot.slane %v1227, 2
  %v1229 = vadd.f32 %v1227, %v1228
  %v1230 = vrot.slane %v1229, 1
  %v1231 = vadd.f32 %v1229, %v1230
  %v1232 = vsel %vm1112, %v992, 0.0
  %v1233 = vrot.slane %v1232, 4
  %v1234 = vadd.f32 %v1232, %v1233
  %v1235 = vrot.slane %v1234, 2
  %v1236 = vadd.f32 %v1234, %v1235
  %v1237 = vrot.slane %v1236, 1
  %v1238 = vadd.f32 %v1236, %v1237
  %v1239 = vsel %vm1112, %v865, 0.0
  %v1240 = vrot.slane %v1239, 4
  %v1241 = vadd.f32 %v1239, %v1240
  %v1242 = vrot.slane %v1241, 2
  %v1243 = vadd.f32 %v1241, %v1242
  %v1244 = vrot.slane %v1243, 1
  %v1245 = vadd.f32 %v1243, %v1244
  %v1246 = vsel %vm1112, %v993, 0.0
  %v1247 = vrot.slane %v1246, 4
  %v1248 = vadd.f32 %v1246, %v1247
  %v1249 = vrot.slane %v1248, 2
  %v1250 = vadd.f32 %v1248, %v1249
  %v1251 = vrot.slane %v1250, 1
  %v1252 = vadd.f32 %v1250, %v1251
  %v1253 = vsel %vm1112, %v866, 0.0
  %v1254 = vrot.slane %v1253, 4
  %v1255 = vadd.f32 %v1253, %v1254
  %v1256 = vrot.slane %v1255, 2
  %v1257 = vadd.f32 %v1255, %v1256
  %v1258 = vrot.slane %v1257, 1
  %v1259 = vadd.f32 %v1257, %v1258
  %v1260 = vsel %vm1112, %v994, 0.0
  %v1261 = vrot.slane %v1260, 4
  %v1262 = vadd.f32 %v1260, %v1261
  %v1263 = vrot.slane %v1262, 2
  %v1264 = vadd.f32 %v1262, %v1263
  %v1265 = vrot.slane %v1264, 1
  %v1266 = vadd.f32 %v1264, %v1265
  %v1267 = vsel %vm1112, %v867, 0.0
  %v1268 = vrot.slane %v1267, 4
  %v1269 = vadd.f32 %v1267, %v1268
  %v1270 = vrot.slane %v1269, 2
  %v1271 = vadd.f32 %v1269, %v1270
  %v1272 = vrot.slane %v1271, 1
  %v1273 = vadd.f32 %v1271, %v1272
  %v1274 = vsel %vm1112, %v995, 0.0
  %v1275 = vrot.slane %v1274, 4
  %v1276 = vadd.f32 %v1274, %v1275
  %v1277 = vrot.slane %v1276, 2
  %v1278 = vadd.f32 %v1276, %v1277
  %v1279 = vrot.slane %v1278, 1
  %v1280 = vadd.f32 %v1278, %v1279
  %v1281 = vsel %vm1112, %v868, 0.0
  %v1282 = vrot.slane %v1281, 4
  %v1283 = vadd.f32 %v1281, %v1282
  %v1284 = vrot.slane %v1283, 2
  %v1285 = vadd.f32 %v1283, %v1284
  %v1286 = vrot.slane %v1285, 1
  %v1287 = vadd.f32 %v1285, %v1286
  %v1288 = vsel %vm1112, %v996, 0.0
  %v1289 = vrot.slane %v1288, 4
  %v1290 = vadd.f32 %v1288, %v1289
  %v1291 = vrot.slane %v1290, 2
  %v1292 = vadd.f32 %v1290, %v1291
  %v1293 = vrot.slane %v1292, 1
  %v1294 = vadd.f32 %v1292, %v1293
  %v1295 = vsel %vm1112, %v869, 0.0
  %v1296 = vrot.slane %v1295, 4
  %v1297 = vadd.f32 %v1295, %v1296
  %v1298 = vrot.slane %v1297, 2
  %v1299 = vadd.f32 %v1297, %v1298
  %v1300 = vrot.slane %v1299, 1
  %v1301 = vadd.f32 %v1299, %v1300
  %v1302 = vsel %vm1112, %v997, 0.0
  %v1303 = vrot.slane %v1302, 4
  %v1304 = vadd.f32 %v1302, %v1303
  %v1305 = vrot.slane %v1304, 2
  %v1306 = vadd.f32 %v1304, %v1305
  %v1307 = vrot.slane %v1306, 1
  %v1308 = vadd.f32 %v1306, %v1307
  %v1309 = vsel %vm1112, %v870, 0.0
  %v1310 = vrot.slane %v1309, 4
  %v1311 = vadd.f32 %v1309, %v1310
  %v1312 = vrot.slane %v1311, 2
  %v1313 = vadd.f32 %v1311, %v1312
  %v1314 = vrot.slane %v1313, 1
  %v1315 = vadd.f32 %v1313, %v1314
  %v1316 = vsel %vm1112, %v998, 0.0
  %v1317 = vrot.slane %v1316, 4
  %v1318 = vadd.f32 %v1316, %v1317
  %v1319 = vrot.slane %v1318, 2
  %v1320 = vadd.f32 %v1318, %v1319
  %v1321 = vrot.slane %v1320, 1
  %v1322 = vadd.f32 %v1320, %v1321
  %v1323 = vsel %vm1112, %v871, 0.0
  %v1324 = vrot.slane %v1323, 4
  %v1325 = vadd.f32 %v1323, %v1324
  %v1326 = vrot.slane %v1325, 2
  %v1327 = vadd.f32 %v1325, %v1326
  %v1328 = vrot.slane %v1327, 1
  %v1329 = vadd.f32 %v1327, %v1328
  %v1330 = vsel %vm1112, %v999, 0.0
  %v1331 = vrot.slane %v1330, 4
  %v1332 = vadd.f32 %v1330, %v1331
  %v1333 = vrot.slane %v1332, 2
  %v1334 = vadd.f32 %v1332, %v1333
  %v1335 = vrot.slane %v1334, 1
  %v1336 = vadd.f32 %v1334, %v1335
  %v1337 = vsel %vm1112, %v872, 0.0
  %v1338 = vrot.slane %v1337, 4
  %v1339 = vadd.f32 %v1337, %v1338
  %v1340 = vrot.slane %v1339, 2
  %v1341 = vadd.f32 %v1339, %v1340
  %v1342 = vrot.slane %v1341, 1
  %v1343 = vadd.f32 %v1341, %v1342
  %v1344 = vsel %vm1112, %v1000, 0.0
  %v1345 = vrot.slane %v1344, 4
  %v1346 = vadd.f32 %v1344, %v1345
  %v1347 = vrot.slane %v1346, 2
  %v1348 = vadd.f32 %v1346, %v1347
  %v1349 = vrot.slane %v1348, 1
  %v1350 = vadd.f32 %v1348, %v1349
  %v1351 = vsel %vm1112, %v873, 0.0
  %v1352 = vrot.slane %v1351, 4
  %v1353 = vadd.f32 %v1351, %v1352
  %v1354 = vrot.slane %v1353, 2
  %v1355 = vadd.f32 %v1353, %v1354
  %v1356 = vrot.slane %v1355, 1
  %v1357 = vadd.f32 %v1355, %v1356
  %v1358 = vsel %vm1112, %v1001, 0.0
  %v1359 = vrot.slane %v1358, 4
  %v1360 = vadd.f32 %v1358, %v1359
  %v1361 = vrot.slane %v1360, 2
  %v1362 = vadd.f32 %v1360, %v1361
  %v1363 = vrot.slane %v1362, 1
  %v1364 = vadd.f32 %v1362, %v1363
  %v1365 = vsel %vm1112, %v874, 0.0
  %v1366 = vrot.slane %v1365, 4
  %v1367 = vadd.f32 %v1365, %v1366
  %v1368 = vrot.slane %v1367, 2
  %v1369 = vadd.f32 %v1367, %v1368
  %v1370 = vrot.slane %v1369, 1
  %v1371 = vadd.f32 %v1369, %v1370
  %v1372 = vsel %vm1112, %v1002, 0.0
  %v1373 = vrot.slane %v1372, 4
  %v1374 = vadd.f32 %v1372, %v1373
  %v1375 = vrot.slane %v1374, 2
  %v1376 = vadd.f32 %v1374, %v1375
  %v1377 = vrot.slane %v1376, 1
  %v1378 = vadd.f32 %v1376, %v1377
  %v1379 = vsel %vm1112, %v875, 0.0
  %v1380 = vrot.slane %v1379, 4
  %v1381 = vadd.f32 %v1379, %v1380
  %v1382 = vrot.slane %v1381, 2
  %v1383 = vadd.f32 %v1381, %v1382
  %v1384 = vrot.slane %v1383, 1
  %v1385 = vadd.f32 %v1383, %v1384
  %v1386 = vsel %vm1112, %v1003, 0.0
  %v1387 = vrot.slane %v1386, 4
  %v1388 = vadd.f32 %v1386, %v1387
  %v1389 = vrot.slane %v1388, 2
  %v1390 = vadd.f32 %v1388, %v1389
  %v1391 = vrot.slane %v1390, 1
  %v1392 = vadd.f32 %v1390, %v1391
  %v1393 = vsel %vm1112, %v876, 0.0
  %v1394 = vrot.slane %v1393, 4
  %v1395 = vadd.f32 %v1393, %v1394
  %v1396 = vrot.slane %v1395, 2
  %v1397 = vadd.f32 %v1395, %v1396
  %v1398 = vrot.slane %v1397, 1
  %v1399 = vadd.f32 %v1397, %v1398
  %v1400 = vsel %vm1112, %v1004, 0.0
  %v1401 = vrot.slane %v1400, 4
  %v1402 = vadd.f32 %v1400, %v1401
  %v1403 = vrot.slane %v1402, 2
  %v1404 = vadd.f32 %v1402, %v1403
  %v1405 = vrot.slane %v1404, 1
  %v1406 = vadd.f32 %v1404, %v1405
  %v1407 = vsel %vm1112, %v877, 0.0
  %v1408 = vrot.slane %v1407, 4
  %v1409 = vadd.f32 %v1407, %v1408
  %v1410 = vrot.slane %v1409, 2
  %v1411 = vadd.f32 %v1409, %v1410
  %v1412 = vrot.slane %v1411, 1
  %v1413 = vadd.f32 %v1411, %v1412
  %v1414 = vsel %vm1112, %v1005, 0.0
  %v1415 = vrot.slane %v1414, 4
  %v1416 = vadd.f32 %v1414, %v1415
  %v1417 = vrot.slane %v1416, 2
  %v1418 = vadd.f32 %v1416, %v1417
  %v1419 = vrot.slane %v1418, 1
  %v1420 = vadd.f32 %v1418, %v1419
  %v1421 = vsel %vm1112, %v878, 0.0
  %v1422 = vrot.slane %v1421, 4
  %v1423 = vadd.f32 %v1421, %v1422
  %v1424 = vrot.slane %v1423, 2
  %v1425 = vadd.f32 %v1423, %v1424
  %v1426 = vrot.slane %v1425, 1
  %v1427 = vadd.f32 %v1425, %v1426
  %v1428 = vsel %vm1112, %v1006, 0.0
  %v1429 = vrot.slane %v1428, 4
  %v1430 = vadd.f32 %v1428, %v1429
  %v1431 = vrot.slane %v1430, 2
  %v1432 = vadd.f32 %v1430, %v1431
  %v1433 = vrot.slane %v1432, 1
  %v1434 = vadd.f32 %v1432, %v1433
  %v1435 = vsel %vm1112, %v879, 0.0
  %v1436 = vrot.slane %v1435, 4
  %v1437 = vadd.f32 %v1435, %v1436
  %v1438 = vrot.slane %v1437, 2
  %v1439 = vadd.f32 %v1437, %v1438
  %v1440 = vrot.slane %v1439, 1
  %v1441 = vadd.f32 %v1439, %v1440
  %v1442 = vsel %vm1112, %v1007, 0.0
  %v1443 = vrot.slane %v1442, 4
  %v1444 = vadd.f32 %v1442, %v1443
  %v1445 = vrot.slane %v1444, 2
  %v1446 = vadd.f32 %v1444, %v1445
  %v1447 = vrot.slane %v1446, 1
  %v1448 = vadd.f32 %v1446, %v1447
  %v1449 = vsel %vm1112, %v880, 0.0
  %v1450 = vrot.slane %v1449, 4
  %v1451 = vadd.f32 %v1449, %v1450
  %v1452 = vrot.slane %v1451, 2
  %v1453 = vadd.f32 %v1451, %v1452
  %v1454 = vrot.slane %v1453, 1
  %v1455 = vadd.f32 %v1453, %v1454
  %v1456 = vsel %vm1112, %v1008, 0.0
  %v1457 = vrot.slane %v1456, 4
  %v1458 = vadd.f32 %v1456, %v1457
  %v1459 = vrot.slane %v1458, 2
  %v1460 = vadd.f32 %v1458, %v1459
  %v1461 = vrot.slane %v1460, 1
  %v1462 = vadd.f32 %v1460, %v1461
  %v1463 = vsel %vm1112, %v881, 0.0
  %v1464 = vrot.slane %v1463, 4
  %v1465 = vadd.f32 %v1463, %v1464
  %v1466 = vrot.slane %v1465, 2
  %v1467 = vadd.f32 %v1465, %v1466
  %v1468 = vrot.slane %v1467, 1
  %v1469 = vadd.f32 %v1467, %v1468
  %v1470 = vsel %vm1112, %v1009, 0.0
  %v1471 = vrot.slane %v1470, 4
  %v1472 = vadd.f32 %v1470, %v1471
  %v1473 = vrot.slane %v1472, 2
  %v1474 = vadd.f32 %v1472, %v1473
  %v1475 = vrot.slane %v1474, 1
  %v1476 = vadd.f32 %v1474, %v1475
  %v1477 = vsel %vm1112, %v882, 0.0
  %v1478 = vrot.slane %v1477, 4
  %v1479 = vadd.f32 %v1477, %v1478
  %v1480 = vrot.slane %v1479, 2
  %v1481 = vadd.f32 %v1479, %v1480
  %v1482 = vrot.slane %v1481, 1
  %v1483 = vadd.f32 %v1481, %v1482
  %v1484 = vsel %vm1112, %v1010, 0.0
  %v1485 = vrot.slane %v1484, 4
  %v1486 = vadd.f32 %v1484, %v1485
  %v1487 = vrot.slane %v1486, 2
  %v1488 = vadd.f32 %v1486, %v1487
  %v1489 = vrot.slane %v1488, 1
  %v1490 = vadd.f32 %v1488, %v1489
  %v1491 = vsel %vm1112, %v883, 0.0
  %v1492 = vrot.slane %v1491, 4
  %v1493 = vadd.f32 %v1491, %v1492
  %v1494 = vrot.slane %v1493, 2
  %v1495 = vadd.f32 %v1493, %v1494
  %v1496 = vrot.slane %v1495, 1
  %v1497 = vadd.f32 %v1495, %v1496
  %v1498 = vsel %vm1112, %v1011, 0.0
  %v1499 = vrot.slane %v1498, 4
  %v1500 = vadd.f32 %v1498, %v1499
  %v1501 = vrot.slane %v1500, 2
  %v1502 = vadd.f32 %v1500, %v1501
  %v1503 = vrot.slane %v1502, 1
  %v1504 = vadd.f32 %v1502, %v1503
  %v1505 = vsel %vm1112, %v884, 0.0
  %v1506 = vrot.slane %v1505, 4
  %v1507 = vadd.f32 %v1505, %v1506
  %v1508 = vrot.slane %v1507, 2
  %v1509 = vadd.f32 %v1507, %v1508
  %v1510 = vrot.slane %v1509, 1
  %v1511 = vadd.f32 %v1509, %v1510
  %v1512 = vsel %vm1112, %v1012, 0.0
  %v1513 = vrot.slane %v1512, 4
  %v1514 = vadd.f32 %v1512, %v1513
  %v1515 = vrot.slane %v1514, 2
  %v1516 = vadd.f32 %v1514, %v1515
  %v1517 = vrot.slane %v1516, 1
  %v1518 = vadd.f32 %v1516, %v1517
  %v1519 = vsel %vm1112, %v885, 0.0
  %v1520 = vrot.slane %v1519, 4
  %v1521 = vadd.f32 %v1519, %v1520
  %v1522 = vrot.slane %v1521, 2
  %v1523 = vadd.f32 %v1521, %v1522
  %v1524 = vrot.slane %v1523, 1
  %v1525 = vadd.f32 %v1523, %v1524
  %v1526 = vsel %vm1112, %v1013, 0.0
  %v1527 = vrot.slane %v1526, 4
  %v1528 = vadd.f32 %v1526, %v1527
  %v1529 = vrot.slane %v1528, 2
  %v1530 = vadd.f32 %v1528, %v1529
  %v1531 = vrot.slane %v1530, 1
  %v1532 = vadd.f32 %v1530, %v1531
  %v1533 = vsel %vm1112, %v886, 0.0
  %v1534 = vrot.slane %v1533, 4
  %v1535 = vadd.f32 %v1533, %v1534
  %v1536 = vrot.slane %v1535, 2
  %v1537 = vadd.f32 %v1535, %v1536
  %v1538 = vrot.slane %v1537, 1
  %v1539 = vadd.f32 %v1537, %v1538
  %v1540 = vsel %vm1112, %v1014, 0.0
  %v1541 = vrot.slane %v1540, 4
  %v1542 = vadd.f32 %v1540, %v1541
  %v1543 = vrot.slane %v1542, 2
  %v1544 = vadd.f32 %v1542, %v1543
  %v1545 = vrot.slane %v1544, 1
  %v1546 = vadd.f32 %v1544, %v1545
  %v1547 = vsel %vm1112, %v887, 0.0
  %v1548 = vrot.slane %v1547, 4
  %v1549 = vadd.f32 %v1547, %v1548
  %v1550 = vrot.slane %v1549, 2
  %v1551 = vadd.f32 %v1549, %v1550
  %v1552 = vrot.slane %v1551, 1
  %v1553 = vadd.f32 %v1551, %v1552
  %v1554 = vsel %vm1112, %v1015, 0.0
  %v1555 = vrot.slane %v1554, 4
  %v1556 = vadd.f32 %v1554, %v1555
  %v1557 = vrot.slane %v1556, 2
  %v1558 = vadd.f32 %v1556, %v1557
  %v1559 = vrot.slane %v1558, 1
  %v1560 = vadd.f32 %v1558, %v1559
  %v1561 = vsel %vm1112, %v888, 0.0
  %v1562 = vrot.slane %v1561, 4
  %v1563 = vadd.f32 %v1561, %v1562
  %v1564 = vrot.slane %v1563, 2
  %v1565 = vadd.f32 %v1563, %v1564
  %v1566 = vrot.slane %v1565, 1
  %v1567 = vadd.f32 %v1565, %v1566
  %v1568 = vsel %vm1112, %v1016, 0.0
  %v1569 = vrot.slane %v1568, 4
  %v1570 = vadd.f32 %v1568, %v1569
  %v1571 = vrot.slane %v1570, 2
  %v1572 = vadd.f32 %v1570, %v1571
  %v1573 = vrot.slane %v1572, 1
  %v1574 = vadd.f32 %v1572, %v1573
  %v1575 = vsel %vm1112, %v889, 0.0
  %v1576 = vrot.slane %v1575, 4
  %v1577 = vadd.f32 %v1575, %v1576
  %v1578 = vrot.slane %v1577, 2
  %v1579 = vadd.f32 %v1577, %v1578
  %v1580 = vrot.slane %v1579, 1
  %v1581 = vadd.f32 %v1579, %v1580
  %v1582 = vsel %vm1112, %v1017, 0.0
  %v1583 = vrot.slane %v1582, 4
  %v1584 = vadd.f32 %v1582, %v1583
  %v1585 = vrot.slane %v1584, 2
  %v1586 = vadd.f32 %v1584, %v1585
  %v1587 = vrot.slane %v1586, 1
  %v1588 = vadd.f32 %v1586, %v1587
  %v1589 = vsel %vm1112, %v890, 0.0
  %v1590 = vrot.slane %v1589, 4
  %v1591 = vadd.f32 %v1589, %v1590
  %v1592 = vrot.slane %v1591, 2
  %v1593 = vadd.f32 %v1591, %v1592
  %v1594 = vrot.slane %v1593, 1
  %v1595 = vadd.f32 %v1593, %v1594
  %v1596 = vsel %vm1112, %v1018, 0.0
  %v1597 = vrot.slane %v1596, 4
  %v1598 = vadd.f32 %v1596, %v1597
  %v1599 = vrot.slane %v1598, 2
  %v1600 = vadd.f32 %v1598, %v1599
  %v1601 = vrot.slane %v1600, 1
  %v1602 = vadd.f32 %v1600, %v1601
  %v1603 = vsel %vm1112, %v891, 0.0
  %v1604 = vrot.slane %v1603, 4
  %v1605 = vadd.f32 %v1603, %v1604
  %v1606 = vrot.slane %v1605, 2
  %v1607 = vadd.f32 %v1605, %v1606
  %v1608 = vrot.slane %v1607, 1
  %v1609 = vadd.f32 %v1607, %v1608
  %v1610 = vsel %vm1112, %v1019, 0.0
  %v1611 = vrot.slane %v1610, 4
  %v1612 = vadd.f32 %v1610, %v1611
  %v1613 = vrot.slane %v1612, 2
  %v1614 = vadd.f32 %v1612, %v1613
  %v1615 = vrot.slane %v1614, 1
  %v1616 = vadd.f32 %v1614, %v1615
  %v1617 = vsel %vm1112, %v892, 0.0
  %v1618 = vrot.slane %v1617, 4
  %v1619 = vadd.f32 %v1617, %v1618
  %v1620 = vrot.slane %v1619, 2
  %v1621 = vadd.f32 %v1619, %v1620
  %v1622 = vrot.slane %v1621, 1
  %v1623 = vadd.f32 %v1621, %v1622
  %v1624 = vsel %vm1112, %v1020, 0.0
  %v1625 = vrot.slane %v1624, 4
  %v1626 = vadd.f32 %v1624, %v1625
  %v1627 = vrot.slane %v1626, 2
  %v1628 = vadd.f32 %v1626, %v1627
  %v1629 = vrot.slane %v1628, 1
  %v1630 = vadd.f32 %v1628, %v1629
  %v1631 = vsel %vm1112, %v893, 0.0
  %v1632 = vrot.slane %v1631, 4
  %v1633 = vadd.f32 %v1631, %v1632
  %v1634 = vrot.slane %v1633, 2
  %v1635 = vadd.f32 %v1633, %v1634
  %v1636 = vrot.slane %v1635, 1
  %v1637 = vadd.f32 %v1635, %v1636
  %v1638 = vsel %vm1112, %v1021, 0.0
  %v1639 = vrot.slane %v1638, 4
  %v1640 = vadd.f32 %v1638, %v1639
  %v1641 = vrot.slane %v1640, 2
  %v1642 = vadd.f32 %v1640, %v1641
  %v1643 = vrot.slane %v1642, 1
  %v1644 = vadd.f32 %v1642, %v1643
  %v1645 = vsel %vm1112, %v894, 0.0
  %v1646 = vrot.slane %v1645, 4
  %v1647 = vadd.f32 %v1645, %v1646
  %v1648 = vrot.slane %v1647, 2
  %v1649 = vadd.f32 %v1647, %v1648
  %v1650 = vrot.slane %v1649, 1
  %v1651 = vadd.f32 %v1649, %v1650
  %v1652 = vsel %vm1112, %v1022, 0.0
  %v1653 = vrot.slane %v1652, 4
  %v1654 = vadd.f32 %v1652, %v1653
  %v1655 = vrot.slane %v1654, 2
  %v1656 = vadd.f32 %v1654, %v1655
  %v1657 = vrot.slane %v1656, 1
  %v1658 = vadd.f32 %v1656, %v1657
  %v1659 = vsel %vm1112, %v895, 0.0
  %v1660 = vrot.slane %v1659, 4
  %v1661 = vadd.f32 %v1659, %v1660
  %v1662 = vrot.slane %v1661, 2
  %v1663 = vadd.f32 %v1661, %v1662
  %v1664 = vrot.slane %v1663, 1
  %v1665 = vadd.f32 %v1663, %v1664
  %v1666 = vsel %vm1112, %v1023, 0.0
  %v1667 = vrot.slane %v1666, 4
  %v1668 = vadd.f32 %v1666, %v1667
  %v1669 = vrot.slane %v1668, 2
  %v1670 = vadd.f32 %v1668, %v1669
  %v1671 = vrot.slane %v1670, 1
  %v1672 = vadd.f32 %v1670, %v1671
  %v1673 = vsel %vm1112, %v896, 0.0
  %v1674 = vrot.slane %v1673, 4
  %v1675 = vadd.f32 %v1673, %v1674
  %v1676 = vrot.slane %v1675, 2
  %v1677 = vadd.f32 %v1675, %v1676
  %v1678 = vrot.slane %v1677, 1
  %v1679 = vadd.f32 %v1677, %v1678
  %v1680 = vsel %vm1112, %v1024, 0.0
  %v1681 = vrot.slane %v1680, 4
  %v1682 = vadd.f32 %v1680, %v1681
  %v1683 = vrot.slane %v1682, 2
  %v1684 = vadd.f32 %v1682, %v1683
  %v1685 = vrot.slane %v1684, 1
  %v1686 = vadd.f32 %v1684, %v1685
  %v1687 = vsel %vm1112, %v897, 0.0
  %v1688 = vrot.slane %v1687, 4
  %v1689 = vadd.f32 %v1687, %v1688
  %v1690 = vrot.slane %v1689, 2
  %v1691 = vadd.f32 %v1689, %v1690
  %v1692 = vrot.slane %v1691, 1
  %v1693 = vadd.f32 %v1691, %v1692
  %v1694 = vsel %vm1112, %v1025, 0.0
  %v1695 = vrot.slane %v1694, 4
  %v1696 = vadd.f32 %v1694, %v1695
  %v1697 = vrot.slane %v1696, 2
  %v1698 = vadd.f32 %v1696, %v1697
  %v1699 = vrot.slane %v1698, 1
  %v1700 = vadd.f32 %v1698, %v1699
  %v1701 = vsel %vm1112, %v898, 0.0
  %v1702 = vrot.slane %v1701, 4
  %v1703 = vadd.f32 %v1701, %v1702
  %v1704 = vrot.slane %v1703, 2
  %v1705 = vadd.f32 %v1703, %v1704
  %v1706 = vrot.slane %v1705, 1
  %v1707 = vadd.f32 %v1705, %v1706
  %v1708 = vsel %vm1112, %v1026, 0.0
  %v1709 = vrot.slane %v1708, 4
  %v1710 = vadd.f32 %v1708, %v1709
  %v1711 = vrot.slane %v1710, 2
  %v1712 = vadd.f32 %v1710, %v1711
  %v1713 = vrot.slane %v1712, 1
  %v1714 = vadd.f32 %v1712, %v1713
  %v1715 = vsel %vm1112, %v899, 0.0
  %v1716 = vrot.slane %v1715, 4
  %v1717 = vadd.f32 %v1715, %v1716
  %v1718 = vrot.slane %v1717, 2
  %v1719 = vadd.f32 %v1717, %v1718
  %v1720 = vrot.slane %v1719, 1
  %v1721 = vadd.f32 %v1719, %v1720
  %v1722 = vsel %vm1112, %v1027, 0.0
  %v1723 = vrot.slane %v1722, 4
  %v1724 = vadd.f32 %v1722, %v1723
  %v1725 = vrot.slane %v1724, 2
  %v1726 = vadd.f32 %v1724, %v1725
  %v1727 = vrot.slane %v1726, 1
  %v1728 = vadd.f32 %v1726, %v1727
  %v1729 = vsel %vm1112, %v900, 0.0
  %v1730 = vrot.slane %v1729, 4
  %v1731 = vadd.f32 %v1729, %v1730
  %v1732 = vrot.slane %v1731, 2
  %v1733 = vadd.f32 %v1731, %v1732
  %v1734 = vrot.slane %v1733, 1
  %v1735 = vadd.f32 %v1733, %v1734
  %v1736 = vsel %vm1112, %v1028, 0.0
  %v1737 = vrot.slane %v1736, 4
  %v1738 = vadd.f32 %v1736, %v1737
  %v1739 = vrot.slane %v1738, 2
  %v1740 = vadd.f32 %v1738, %v1739
  %v1741 = vrot.slane %v1740, 1
  %v1742 = vadd.f32 %v1740, %v1741
  %v1743 = vsel %vm1112, %v901, 0.0
  %v1744 = vrot.slane %v1743, 4
  %v1745 = vadd.f32 %v1743, %v1744
  %v1746 = vrot.slane %v1745, 2
  %v1747 = vadd.f32 %v1745, %v1746
  %v1748 = vrot.slane %v1747, 1
  %v1749 = vadd.f32 %v1747, %v1748
  %v1750 = vsel %vm1112, %v1029, 0.0
  %v1751 = vrot.slane %v1750, 4
  %v1752 = vadd.f32 %v1750, %v1751
  %v1753 = vrot.slane %v1752, 2
  %v1754 = vadd.f32 %v1752, %v1753
  %v1755 = vrot.slane %v1754, 1
  %v1756 = vadd.f32 %v1754, %v1755
  %v1757 = vsel %vm1112, %v902, 0.0
  %v1758 = vrot.slane %v1757, 4
  %v1759 = vadd.f32 %v1757, %v1758
  %v1760 = vrot.slane %v1759, 2
  %v1761 = vadd.f32 %v1759, %v1760
  %v1762 = vrot.slane %v1761, 1
  %v1763 = vadd.f32 %v1761, %v1762
  %v1764 = vsel %vm1112, %v1030, 0.0
  %v1765 = vrot.slane %v1764, 4
  %v1766 = vadd.f32 %v1764, %v1765
  %v1767 = vrot.slane %v1766, 2
  %v1768 = vadd.f32 %v1766, %v1767
  %v1769 = vrot.slane %v1768, 1
  %v1770 = vadd.f32 %v1768, %v1769
  %v1771 = vsel %vm1112, %v903, 0.0
  %v1772 = vrot.slane %v1771, 4
  %v1773 = vadd.f32 %v1771, %v1772
  %v1774 = vrot.slane %v1773, 2
  %v1775 = vadd.f32 %v1773, %v1774
  %v1776 = vrot.slane %v1775, 1
  %v1777 = vadd.f32 %v1775, %v1776
  %v1778 = vsel %vm1112, %v1031, 0.0
  %v1779 = vrot.slane %v1778, 4
  %v1780 = vadd.f32 %v1778, %v1779
  %v1781 = vrot.slane %v1780, 2
  %v1782 = vadd.f32 %v1780, %v1781
  %v1783 = vrot.slane %v1782, 1
  %v1784 = vadd.f32 %v1782, %v1783
  %v1785 = vsel %vm1112, %v904, 0.0
  %v1786 = vrot.slane %v1785, 4
  %v1787 = vadd.f32 %v1785, %v1786
  %v1788 = vrot.slane %v1787, 2
  %v1789 = vadd.f32 %v1787, %v1788
  %v1790 = vrot.slane %v1789, 1
  %v1791 = vadd.f32 %v1789, %v1790
  %v1792 = vsel %vm1112, %v1032, 0.0
  %v1793 = vrot.slane %v1792, 4
  %v1794 = vadd.f32 %v1792, %v1793
  %v1795 = vrot.slane %v1794, 2
  %v1796 = vadd.f32 %v1794, %v1795
  %v1797 = vrot.slane %v1796, 1
  %v1798 = vadd.f32 %v1796, %v1797
  %v1799 = vsel %vm1112, %v905, 0.0
  %v1800 = vrot.slane %v1799, 4
  %v1801 = vadd.f32 %v1799, %v1800
  %v1802 = vrot.slane %v1801, 2
  %v1803 = vadd.f32 %v1801, %v1802
  %v1804 = vrot.slane %v1803, 1
  %v1805 = vadd.f32 %v1803, %v1804
  %v1806 = vsel %vm1112, %v1033, 0.0
  %v1807 = vrot.slane %v1806, 4
  %v1808 = vadd.f32 %v1806, %v1807
  %v1809 = vrot.slane %v1808, 2
  %v1810 = vadd.f32 %v1808, %v1809
  %v1811 = vrot.slane %v1810, 1
  %v1812 = vadd.f32 %v1810, %v1811
  %v1813 = vsel %vm1112, %v906, 0.0
  %v1814 = vrot.slane %v1813, 4
  %v1815 = vadd.f32 %v1813, %v1814
  %v1816 = vrot.slane %v1815, 2
  %v1817 = vadd.f32 %v1815, %v1816
  %v1818 = vrot.slane %v1817, 1
  %v1819 = vadd.f32 %v1817, %v1818
  %v1820 = vsel %vm1112, %v1034, 0.0
  %v1821 = vrot.slane %v1820, 4
  %v1822 = vadd.f32 %v1820, %v1821
  %v1823 = vrot.slane %v1822, 2
  %v1824 = vadd.f32 %v1822, %v1823
  %v1825 = vrot.slane %v1824, 1
  %v1826 = vadd.f32 %v1824, %v1825
  %v1827 = vsel %vm1112, %v907, 0.0
  %v1828 = vrot.slane %v1827, 4
  %v1829 = vadd.f32 %v1827, %v1828
  %v1830 = vrot.slane %v1829, 2
  %v1831 = vadd.f32 %v1829, %v1830
  %v1832 = vrot.slane %v1831, 1
  %v1833 = vadd.f32 %v1831, %v1832
  %v1834 = vsel %vm1112, %v1035, 0.0
  %v1835 = vrot.slane %v1834, 4
  %v1836 = vadd.f32 %v1834, %v1835
  %v1837 = vrot.slane %v1836, 2
  %v1838 = vadd.f32 %v1836, %v1837
  %v1839 = vrot.slane %v1838, 1
  %v1840 = vadd.f32 %v1838, %v1839
  %v1841 = vsel %vm1112, %v908, 0.0
  %v1842 = vrot.slane %v1841, 4
  %v1843 = vadd.f32 %v1841, %v1842
  %v1844 = vrot.slane %v1843, 2
  %v1845 = vadd.f32 %v1843, %v1844
  %v1846 = vrot.slane %v1845, 1
  %v1847 = vadd.f32 %v1845, %v1846
  %v1848 = vsel %vm1112, %v1036, 0.0
  %v1849 = vrot.slane %v1848, 4
  %v1850 = vadd.f32 %v1848, %v1849
  %v1851 = vrot.slane %v1850, 2
  %v1852 = vadd.f32 %v1850, %v1851
  %v1853 = vrot.slane %v1852, 1
  %v1854 = vadd.f32 %v1852, %v1853
  %v1855 = vsel %vm1112, %v909, 0.0
  %v1856 = vrot.slane %v1855, 4
  %v1857 = vadd.f32 %v1855, %v1856
  %v1858 = vrot.slane %v1857, 2
  %v1859 = vadd.f32 %v1857, %v1858
  %v1860 = vrot.slane %v1859, 1
  %v1861 = vadd.f32 %v1859, %v1860
  %v1862 = vsel %vm1112, %v1037, 0.0
  %v1863 = vrot.slane %v1862, 4
  %v1864 = vadd.f32 %v1862, %v1863
  %v1865 = vrot.slane %v1864, 2
  %v1866 = vadd.f32 %v1864, %v1865
  %v1867 = vrot.slane %v1866, 1
  %v1868 = vadd.f32 %v1866, %v1867
  %v1869 = vsel %vm1112, %v910, 0.0
  %v1870 = vrot.slane %v1869, 4
  %v1871 = vadd.f32 %v1869, %v1870
  %v1872 = vrot.slane %v1871, 2
  %v1873 = vadd.f32 %v1871, %v1872
  %v1874 = vrot.slane %v1873, 1
  %v1875 = vadd.f32 %v1873, %v1874
  %v1876 = vsel %vm1112, %v1038, 0.0
  %v1877 = vrot.slane %v1876, 4
  %v1878 = vadd.f32 %v1876, %v1877
  %v1879 = vrot.slane %v1878, 2
  %v1880 = vadd.f32 %v1878, %v1879
  %v1881 = vrot.slane %v1880, 1
  %v1882 = vadd.f32 %v1880, %v1881
  %v1883 = vsel %vm1112, %v911, 0.0
  %v1884 = vrot.slane %v1883, 4
  %v1885 = vadd.f32 %v1883, %v1884
  %v1886 = vrot.slane %v1885, 2
  %v1887 = vadd.f32 %v1885, %v1886
  %v1888 = vrot.slane %v1887, 1
  %v1889 = vadd.f32 %v1887, %v1888
  %v1890 = vsel %vm1112, %v1039, 0.0
  %v1891 = vrot.slane %v1890, 4
  %v1892 = vadd.f32 %v1890, %v1891
  %v1893 = vrot.slane %v1892, 2
  %v1894 = vadd.f32 %v1892, %v1893
  %v1895 = vrot.slane %v1894, 1
  %v1896 = vadd.f32 %v1894, %v1895
  %v1897 = vsel %vm1112, %v912, 0.0
  %v1898 = vrot.slane %v1897, 4
  %v1899 = vadd.f32 %v1897, %v1898
  %v1900 = vrot.slane %v1899, 2
  %v1901 = vadd.f32 %v1899, %v1900
  %v1902 = vrot.slane %v1901, 1
  %v1903 = vadd.f32 %v1901, %v1902
  %v1904 = vsel %vm1112, %v1040, 0.0
  %v1905 = vrot.slane %v1904, 4
  %v1906 = vadd.f32 %v1904, %v1905
  %v1907 = vrot.slane %v1906, 2
  %v1908 = vadd.f32 %v1906, %v1907
  %v1909 = vrot.slane %v1908, 1
  %v1910 = vadd.f32 %v1908, %v1909
  %v1911 = vsel %vm1112, %v913, 0.0
  %v1912 = vrot.slane %v1911, 4
  %v1913 = vadd.f32 %v1911, %v1912
  %v1914 = vrot.slane %v1913, 2
  %v1915 = vadd.f32 %v1913, %v1914
  %v1916 = vrot.slane %v1915, 1
  %v1917 = vadd.f32 %v1915, %v1916
  %v1918 = vsel %vm1112, %v1041, 0.0
  %v1919 = vrot.slane %v1918, 4
  %v1920 = vadd.f32 %v1918, %v1919
  %v1921 = vrot.slane %v1920, 2
  %v1922 = vadd.f32 %v1920, %v1921
  %v1923 = vrot.slane %v1922, 1
  %v1924 = vadd.f32 %v1922, %v1923
  %v1925 = vsel %vm1112, %v914, 0.0
  %v1926 = vrot.slane %v1925, 4
  %v1927 = vadd.f32 %v1925, %v1926
  %v1928 = vrot.slane %v1927, 2
  %v1929 = vadd.f32 %v1927, %v1928
  %v1930 = vrot.slane %v1929, 1
  %v1931 = vadd.f32 %v1929, %v1930
  %v1932 = vsel %vm1112, %v1042, 0.0
  %v1933 = vrot.slane %v1932, 4
  %v1934 = vadd.f32 %v1932, %v1933
  %v1935 = vrot.slane %v1934, 2
  %v1936 = vadd.f32 %v1934, %v1935
  %v1937 = vrot.slane %v1936, 1
  %v1938 = vadd.f32 %v1936, %v1937
  %v1939 = vsel %vm1112, %v915, 0.0
  %v1940 = vrot.slane %v1939, 4
  %v1941 = vadd.f32 %v1939, %v1940
  %v1942 = vrot.slane %v1941, 2
  %v1943 = vadd.f32 %v1941, %v1942
  %v1944 = vrot.slane %v1943, 1
  %v1945 = vadd.f32 %v1943, %v1944
  %v1946 = vsel %vm1112, %v1043, 0.0
  %v1947 = vrot.slane %v1946, 4
  %v1948 = vadd.f32 %v1946, %v1947
  %v1949 = vrot.slane %v1948, 2
  %v1950 = vadd.f32 %v1948, %v1949
  %v1951 = vrot.slane %v1950, 1
  %v1952 = vadd.f32 %v1950, %v1951
  %v1953 = vsel %vm1112, %v916, 0.0
  %v1954 = vrot.slane %v1953, 4
  %v1955 = vadd.f32 %v1953, %v1954
  %v1956 = vrot.slane %v1955, 2
  %v1957 = vadd.f32 %v1955, %v1956
  %v1958 = vrot.slane %v1957, 1
  %v1959 = vadd.f32 %v1957, %v1958
  %v1960 = vsel %vm1112, %v1044, 0.0
  %v1961 = vrot.slane %v1960, 4
  %v1962 = vadd.f32 %v1960, %v1961
  %v1963 = vrot.slane %v1962, 2
  %v1964 = vadd.f32 %v1962, %v1963
  %v1965 = vrot.slane %v1964, 1
  %v1966 = vadd.f32 %v1964, %v1965
  %v1967 = vsel %vm1112, %v917, 0.0
  %v1968 = vrot.slane %v1967, 4
  %v1969 = vadd.f32 %v1967, %v1968
  %v1970 = vrot.slane %v1969, 2
  %v1971 = vadd.f32 %v1969, %v1970
  %v1972 = vrot.slane %v1971, 1
  %v1973 = vadd.f32 %v1971, %v1972
  %v1974 = vsel %vm1112, %v1045, 0.0
  %v1975 = vrot.slane %v1974, 4
  %v1976 = vadd.f32 %v1974, %v1975
  %v1977 = vrot.slane %v1976, 2
  %v1978 = vadd.f32 %v1976, %v1977
  %v1979 = vrot.slane %v1978, 1
  %v1980 = vadd.f32 %v1978, %v1979
  %v1981 = vsel %vm1112, %v918, 0.0
  %v1982 = vrot.slane %v1981, 4
  %v1983 = vadd.f32 %v1981, %v1982
  %v1984 = vrot.slane %v1983, 2
  %v1985 = vadd.f32 %v1983, %v1984
  %v1986 = vrot.slane %v1985, 1
  %v1987 = vadd.f32 %v1985, %v1986
  %v1988 = vsel %vm1112, %v1046, 0.0
  %v1989 = vrot.slane %v1988, 4
  %v1990 = vadd.f32 %v1988, %v1989
  %v1991 = vrot.slane %v1990, 2
  %v1992 = vadd.f32 %v1990, %v1991
  %v1993 = vrot.slane %v1992, 1
  %v1994 = vadd.f32 %v1992, %v1993
  %v1995 = vsel %vm1112, %v919, 0.0
  %v1996 = vrot.slane %v1995, 4
  %v1997 = vadd.f32 %v1995, %v1996
  %v1998 = vrot.slane %v1997, 2
  %v1999 = vadd.f32 %v1997, %v1998
  %v2000 = vrot.slane %v1999, 1
  %v2001 = vadd.f32 %v1999, %v2000
  %v2002 = vsel %vm1112, %v1047, 0.0
  %v2003 = vrot.slane %v2002, 4
  %v2004 = vadd.f32 %v2002, %v2003
  %v2005 = vrot.slane %v2004, 2
  %v2006 = vadd.f32 %v2004, %v2005
  %v2007 = vrot.slane %v2006, 1
  %v2008 = vadd.f32 %v2006, %v2007
  %vm2137 = vcmask 1041409
  %v2138 = vsel %vm2137, %v1567, %v1119
  %v2139 = vsel %vm2137, %v1574, %v1126
  %v2140 = vsel %vm2137, %v1581, %v1133
  %v2141 = vsel %vm2137, %v1588, %v1140
  %v2142 = vsel %vm2137, %v1595, %v1147
  %v2143 = vsel %vm2137, %v1602, %v1154
  %v2144 = vsel %vm2137, %v1609, %v1161
  %v2145 = vsel %vm2137, %v1616, %v1168
  %v2146 = vsel %vm2137, %v1623, %v1175
  %v2147 = vsel %vm2137, %v1630, %v1182
  %v2148 = vsel %vm2137, %v1637, %v1189
  %v2149 = vsel %vm2137, %v1644, %v1196
  %v2150 = vsel %vm2137, %v1651, %v1203
  %v2151 = vsel %vm2137, %v1658, %v1210
  %v2152 = vsel %vm2137, %v1665, %v1217
  %v2153 = vsel %vm2137, %v1672, %v1224
  %v2154 = vsel %vm2137, %v1679, %v1231
  %v2155 = vsel %vm2137, %v1686, %v1238
  %v2156 = vsel %vm2137, %v1693, %v1245
  %v2157 = vsel %vm2137, %v1700, %v1252
  %v2158 = vsel %vm2137, %v1707, %v1259
  %v2159 = vsel %vm2137, %v1714, %v1266
  %v2160 = vsel %vm2137, %v1721, %v1273
  %v2161 = vsel %vm2137, %v1728, %v1280
  %v2162 = vsel %vm2137, %v1735, %v1287
  %v2163 = vsel %vm2137, %v1742, %v1294
  %v2164 = vsel %vm2137, %v1749, %v1301
  %v2165 = vsel %vm2137, %v1756, %v1308
  %v2166 = vsel %vm2137, %v1763, %v1315
  %v2167 = vsel %vm2137, %v1770, %v1322
  %v2168 = vsel %vm2137, %v1777, %v1329
  %v2169 = vsel %vm2137, %v1784, %v1336
  %v2170 = vsel %vm2137, %v1791, %v1343
  %v2171 = vsel %vm2137, %v1798, %v1350
  %v2172 = vsel %vm2137, %v1805, %v1357
  %v2173 = vsel %vm2137, %v1812, %v1364
  %v2174 = vsel %vm2137, %v1819, %v1371
  %v2175 = vsel %vm2137, %v1826, %v1378
  %v2176 = vsel %vm2137, %v1833, %v1385
  %v2177 = vsel %vm2137, %v1840, %v1392
  %v2178 = vsel %vm2137, %v1847, %v1399
  %v2179 = vsel %vm2137, %v1854, %v1406
  %v2180 = vsel %vm2137, %v1861, %v1413
  %v2181 = vsel %vm2137, %v1868, %v1420
  %v2182 = vsel %vm2137, %v1875, %v1427
  %v2183 = vsel %vm2137, %v1882, %v1434
  %v2184 = vsel %vm2137, %v1889, %v1441
  %v2185 = vsel %vm2137, %v1896, %v1448
  %v2186 = vsel %vm2137, %v1903, %v1455
  %v2187 = vsel %vm2137, %v1910, %v1462
  %v2188 = vsel %vm2137, %v1917, %v1469
  %v2189 = vsel %vm2137, %v1924, %v1476
  %v2190 = vsel %vm2137, %v1931, %v1483
  %v2191 = vsel %vm2137, %v1938, %v1490
  %v2192 = vsel %vm2137, %v1945, %v1497
  %v2193 = vsel %vm2137, %v1952, %v1504
  %v2194 = vsel %vm2137, %v1959, %v1511
  %v2195 = vsel %vm2137, %v1966, %v1518
  %v2196 = vsel %vm2137, %v1973, %v1525
  %v2197 = vsel %vm2137, %v1980, %v1532
  %v2198 = vsel %vm2137, %v1987, %v1539
  %v2199 = vsel %vm2137, %v1994, %v1546
  %v2200 = vsel %vm2137, %v2001, %v1553
  %v2201 = vsel %vm2137, %v2008, %v1560
  %vm2266 = vcmask 1041408
  %v2267 = vsel %vm2266, %v2138, 0.0
  %v2268 = vsel %vm2266, %v2139, 0.0
  %v2269 = vadd.f32 %v2267, %v2268
  %v2270 = vsel %vm2266, %v2140, 0.0
  %v2271 = vadd.f32 %v2269, %v2270
  %v2272 = vsel %vm2266, %v2141, 0.0
  %v2273 = vadd.f32 %v2271, %v2272
  %v2274 = vsel %vm2266, %v2142, 0.0
  %v2275 = vadd.f32 %v2273, %v2274
  %v2276 = vsel %vm2266, %v2143, 0.0
  %v2277 = vadd.f32 %v2275, %v2276
  %v2278 = vsel %vm2266, %v2144, 0.0
  %v2279 = vadd.f32 %v2277, %v2278
  %v2280 = vsel %vm2266, %v2145, 0.0
  %v2281 = vadd.f32 %v2279, %v2280
  %v2282 = vsel %vm2266, %v2146, 0.0
  %v2283 = vadd.f32 %v2281, %v2282
  %v2284 = vsel %vm2266, %v2147, 0.0
  %v2285 = vadd.f32 %v2283, %v2284
  %v2286 = vsel %vm2266, %v2148, 0.0
  %v2287 = vadd.f32 %v2285, %v2286
  %v2288 = vsel %vm2266, %v2149, 0.0
  %v2289 = vadd.f32 %v2287, %v2288
  %v2290 = vsel %vm2266, %v2150, 0.0
  %v2291 = vadd.f32 %v2289, %v2290
  %v2292 = vsel %vm2266, %v2151, 0.0
  %v2293 = vadd.f32 %v2291, %v2292
  %v2294 = vsel %vm2266, %v2152, 0.0
  %v2295 = vadd.f32 %v2293, %v2294
  %v2296 = vsel %vm2266, %v2153, 0.0
  %v2297 = vadd.f32 %v2295, %v2296
  %v2298 = vsel %vm2266, %v2154, 0.0
  %v2299 = vadd.f32 %v2297, %v2298
  %v2300 = vsel %vm2266, %v2155, 0.0
  %v2301 = vadd.f32 %v2299, %v2300
  %v2302 = vsel %vm2266, %v2156, 0.0
  %v2303 = vadd.f32 %v2301, %v2302
  %v2304 = vsel %vm2266, %v2157, 0.0
  %v2305 = vadd.f32 %v2303, %v2304
  %v2306 = vsel %vm2266, %v2158, 0.0
  %v2307 = vadd.f32 %v2305, %v2306
  %v2308 = vsel %vm2266, %v2159, 0.0
  %v2309 = vadd.f32 %v2307, %v2308
  %v2310 = vsel %vm2266, %v2160, 0.0
  %v2311 = vadd.f32 %v2309, %v2310
  %v2312 = vsel %vm2266, %v2161, 0.0
  %v2313 = vadd.f32 %v2311, %v2312
  %v2314 = vsel %vm2266, %v2162, 0.0
  %v2315 = vadd.f32 %v2313, %v2314
  %v2316 = vsel %vm2266, %v2163, 0.0
  %v2317 = vadd.f32 %v2315, %v2316
  %v2318 = vsel %vm2266, %v2164, 0.0
  %v2319 = vadd.f32 %v2317, %v2318
  %v2320 = vsel %vm2266, %v2165, 0.0
  %v2321 = vadd.f32 %v2319, %v2320
  %v2322 = vsel %vm2266, %v2166, 0.0
  %v2323 = vadd.f32 %v2321, %v2322
  %v2324 = vsel %vm2266, %v2167, 0.0
  %v2325 = vadd.f32 %v2323, %v2324
  %v2326 = vsel %vm2266, %v2168, 0.0
  %v2327 = vadd.f32 %v2325, %v2326
  %v2328 = vsel %vm2266, %v2169, 0.0
  %v2329 = vadd.f32 %v2327, %v2328
  %v2330 = vsel %vm2266, %v2170, 0.0
  %v2331 = vadd.f32 %v2329, %v2330
  %v2332 = vsel %vm2266, %v2171, 0.0
  %v2333 = vadd.f32 %v2331, %v2332
  %v2334 = vsel %vm2266, %v2172, 0.0
  %v2335 = vadd.f32 %v2333, %v2334
  %v2336 = vsel %vm2266, %v2173, 0.0
  %v2337 = vadd.f32 %v2335, %v2336
  %v2338 = vsel %vm2266, %v2174, 0.0
  %v2339 = vadd.f32 %v2337, %v2338
  %v2340 = vsel %vm2266, %v2175, 0.0
  %v2341 = vadd.f32 %v2339, %v2340
  %v2342 = vsel %vm2266, %v2176, 0.0
  %v2343 = vadd.f32 %v2341, %v2342
  %v2344 = vsel %vm2266, %v2177, 0.0
  %v2345 = vadd.f32 %v2343, %v2344
  %v2346 = vsel %vm2266, %v2178, 0.0
  %v2347 = vadd.f32 %v2345, %v2346
  %v2348 = vsel %vm2266, %v2179, 0.0
  %v2349 = vadd.f32 %v2347, %v2348
  %v2350 = vsel %vm2266, %v2180, 0.0
  %v2351 = vadd.f32 %v2349, %v2350
  %v2352 = vsel %vm2266, %v2181, 0.0
  %v2353 = vadd.f32 %v2351, %v2352
  %v2354 = vsel %vm2266, %v2182, 0.0
  %v2355 = vadd.f32 %v2353, %v2354
  %v2356 = vsel %vm2266, %v2183, 0.0
  %v2357 = vadd.f32 %v2355, %v2356
  %v2358 = vsel %vm2266, %v2184, 0.0
  %v2359 = vadd.f32 %v2357, %v2358
  %v2360 = vsel %vm2266, %v2185, 0.0
  %v2361 = vadd.f32 %v2359, %v2360
  %v2362 = vsel %vm2266, %v2186, 0.0
  %v2363 = vadd.f32 %v2361, %v2362
  %v2364 = vsel %vm2266, %v2187, 0.0
  %v2365 = vadd.f32 %v2363, %v2364
  %v2366 = vsel %vm2266, %v2188, 0.0
  %v2367 = vadd.f32 %v2365, %v2366
  %v2368 = vsel %vm2266, %v2189, 0.0
  %v2369 = vadd.f32 %v2367, %v2368
  %v2370 = vsel %vm2266, %v2190, 0.0
  %v2371 = vadd.f32 %v2369, %v2370
  %v2372 = vsel %vm2266, %v2191, 0.0
  %v2373 = vadd.f32 %v2371, %v2372
  %v2374 = vsel %vm2266, %v2192, 0.0
  %v2375 = vadd.f32 %v2373, %v2374
  %v2376 = vsel %vm2266, %v2193, 0.0
  %v2377 = vadd.f32 %v2375, %v2376
  %v2378 = vsel %vm2266, %v2194, 0.0
  %v2379 = vadd.f32 %v2377, %v2378
  %v2380 = vsel %vm2266, %v2195, 0.0
  %v2381 = vadd.f32 %v2379, %v2380
  %v2382 = vsel %vm2266, %v2196, 0.0
  %v2383 = vadd.f32 %v2381, %v2382
  %v2384 = vsel %vm2266, %v2197, 0.0
  %v2385 = vadd.f32 %v2383, %v2384
  %v2386 = vsel %vm2266, %v2198, 0.0
  %v2387 = vadd.f32 %v2385, %v2386
  %v2388 = vsel %vm2266, %v2199, 0.0
  %v2389 = vadd.f32 %v2387, %v2388
  %v2390 = vsel %vm2266, %v2200, 0.0
  %v2391 = vadd.f32 %v2389, %v2390
  %v2392 = vsel %vm2266, %v2201, 0.0
  %v2393 = vadd.f32 %v2391, %v2392
  %2394 = vadd.xlane.f32.xlu0 %v2393
  %v2395 = vpop.xlane.xlu0 %2394
  %v2396 = vmul.f32 %v2395, 0.25
  %v2397 = vld [vmem:[#allocation2] sm:$0x1]
  %v2399 = vlaneseq
  %v2400 = vshrl.u32 %v2399, 7
  %v2401 = vsub.s32 0, %v2400
  %v2402 = vrot.slane %v2397, %v2401
  %v2404 = vadd.f32 %v2396, %v2402
  %vm2405 = vcmask 1024
  %2406 = vst.msk [vmem:[%s3] sm:$0x3] %vm2405, %v2404
  // Predicated region
  $region14: #{discriminator_forward.15} parent=0 // pred_check
    _
  $region15: #{discriminator_forward.15} parent=0 // pred_check_branch
    %2408 = sbr.rel (0) target = $region17
  $region16: #{discriminator_forward.15} parent=0 // pred_region
    _
  $region17: #{discriminator_forward.15} parent=0 // pred_fallthru
    _
  // Predicated region
  $region18: #{discriminator_forward.15} parent=0 // pred_check
    _
  $region19: #{discriminator_forward.15} parent=0 // pred_check_branch
    %2410 = sbr.rel (0) target = $region21
  $region20: #{discriminator_forward.15} parent=0 // pred_region
    _
  $region21: #{discriminator_forward.15} parent=0 // pred_fallthru
    _

</llo_original>
